<compile_context>
chip_gen: v6e
topology: v6e:2x2x1
jax: 0.10.0
libtpu: 0.0.40
codegen_flags: <defaults>
</compile_context>

<pallas_src>
import functools
import math

import jax
import jax.numpy as jnp
from jax.experimental import pallas as pl
from jax.experimental.pallas import tpu as pltpu


# ----------------------------------------------------------------------------
# Parameter (buffer) construction — mirrors PositionalEncoding.__init__
# ----------------------------------------------------------------------------
def make_pe_table(d_model: int, max_position: int = 366, T: float = 1000.0):
    assert d_model % 2 == 0, "d_model must be even (same assumption as the torch module)"
    position = jnp.arange(max_position, dtype=jnp.float32)[:, None]          # [P, 1]
    div_term = jnp.exp(
        jnp.arange(0, d_model, 2, dtype=jnp.float32) * (-math.log(T) / d_model)
    )                                                                         # [D/2]
    angles = position * div_term                                              # [P, D/2]
    pe = jnp.zeros((max_position, d_model), dtype=jnp.float32)
    pe = pe.at[:, 0::2].set(jnp.sin(angles))
    pe = pe.at[:, 1::2].set(jnp.cos(angles))
    return pe


def _round_up(x: int, m: int) -> int:
    return ((x + m - 1) // m) * m


# ----------------------------------------------------------------------------
# Pallas kernel: tiled one-hot MXU gather against a VMEM-resident table
# ----------------------------------------------------------------------------
def _gather_tile_kernel(pos_ref, pe_ref, out_ref, *, p_pad: int, pack: int):
    # pos_ref: (rows, pack) int32   — `pack` consecutive positions per output row
    # pe_ref : (pack*p_pad, pack*D) — block-diagonal packed pe table (VMEM-resident)
    # out_ref: (rows, pack*D)       — lane-dense packed output tile
    pos = pos_ref[...]
    rows = out_ref.shape[0]

    iota = jax.lax.broadcasted_iota(jnp.int32, (rows, p_pad), 1)
    cols = [(iota == pos[:, k:k + 1]).astype(pe_ref.dtype) for k in range(pack)]
    onehot = cols[0] if pack == 1 else jnp.concatenate(cols, axis=1)  # (rows, pack*p_pad)

    out_ref[...] = jnp.dot(
        onehot,
        pe_ref[...],
        preferred_element_type=jnp.float32,
        precision=jax.lax.Precision.HIGHEST,   # exact routing of f32 table values
    ).astype(out_ref.dtype)


def positional_encoding_forward(pe: jax.Array, positions: jax.Array,
                                *, block_rows: int = 512) -> jax.Array:
    """positions: [B, T] int -> [B, T, D] float32 (== pe[positions])."""
    B, T = positions.shape
    P, D = pe.shape
    N = B * T

    # How many gathered rows to pack into one 128-lane output row.
    if D % 128 == 0 or 128 % D != 0:
        pack = 1
    else:
        pack = 128 // D
    # Pad the table rows up to a multiple of 256 (MXU-friendly on v5e/v6e/v7x).
    p_pad = _round_up(max(P, 256), 256)
    # Keep the block-diagonal packed table modest; fall back to unpacked layout
    # for pathologically tiny D.
    if (pack * p_pad) * (pack * D) * 4 > 8 * 1024 * 1024:
        pack = 1

    row_align = 8 * pack
    tile_rows = _round_up(min(block_rows, N), row_align)
    n_pad = _round_up(N, tile_rows)
    grid = n_pad // tile_rows

    # Positions: clip (bounds safety), pad to the tile grid, arrange (n_pad//pack, pack).
    pos_flat = jnp.clip(positions.reshape(N).astype(jnp.int32), 0, P - 1)
    pos_flat = jnp.pad(pos_flat, (0, n_pad - N))
    pos_arr = pos_flat.reshape(n_pad // pack, pack)

    # Block-diagonal packed table: pe_packed[k*p_pad + p, k*D + d] = pe[p, d].
    pe_pad = jnp.zeros((p_pad, D), pe.dtype).at[:P, :].set(pe)
    if pack == 1:
        pe_packed = pe_pad
    else:
        pe_packed = jnp.zeros((pack * p_pad, pack * D), pe.dtype)
        for k in range(pack):
            pe_packed = pe_packed.at[k * p_pad:(k + 1) * p_pad,
                                     k * D:(k + 1) * D].set(pe_pad)

    kernel = functools.partial(_gather_tile_kernel, p_pad=p_pad, pack=pack)

    out_packed = pl.pallas_call(
        kernel,
        out_shape=jax.ShapeDtypeStruct((n_pad // pack, pack * D), pe.dtype),
        grid=(grid,),
        in_specs=[
            # Per-tile chunk of positions (VMEM; no whole-array SMEM prefetch).
            pl.BlockSpec((tile_rows // pack, pack), lambda i: (i, 0)),
            # Whole packed pe table, VMEM-resident (constant block index).
            pl.BlockSpec((pack * p_pad, pack * D), lambda i: (0, 0)),
        ],
        out_specs=pl.BlockSpec((tile_rows // pack, pack * D), lambda i: (i, 0)),
        compiler_params=pltpu.CompilerParams(
            dimension_semantics=("parallel",),   # each output block written exactly once
        ),
    )(pos_arr, pe_packed)

    # Undo the lane packing: (n_pad//pack, pack*D) row-major == (n_pad, D).
    return out_packed.reshape(n_pad, D)[:N].reshape(B, T, D)


# ----------------------------------------------------------------------------
# Demo / self-check
# ----------------------------------------------------------------------------
if __name__ == "__main__":
    d_model = 32
    max_position = 366
    T_const = 1000.0

    B, T = 2, 8

    key = jax.random.PRNGKey(0)
    positions = jax.random.randint(key, (B, T), 0, max_position, dtype=jnp.int32)

    pe = make_pe_table(d_model, max_position, T_const)

    out = positional_encoding_forward(pe, positions)
    out = jax.block_until_ready(out)

    # Reference check against plain-JAX gather (same semantics as torch pe[positions]).
    ref = pe[positions]
    assert out.shape == (B, T, d_model), out.shape
    assert jnp.allclose(out, ref, atol=1e-6, rtol=0.0), "mismatch vs reference gather"

    print("KERNEL_OK")
</pallas_src>

<mosaic_0001>
module attributes {stable_mosaic.version = 11 : i64} {
  func.func @_gather_tile_kernel(%arg0: i32, %arg1: memref<8x4xi32, #tpu.memory_space<vmem>>, %arg2: memref<2048x128xf32, #tpu.memory_space<vmem>>, %arg3: memref<8x128xf32, #tpu.memory_space<vmem>>) attributes {dimension_semantics = [#tpu.dimension_semantics<parallel>], iteration_bounds = array<i64: 1>, scalar_prefetch = 0 : i64, scratch_operands = 0 : i64, tpu.core_type = #tpu.core_type<tc>, window_params = [{transform_indices = @transform_0, window_bounds = array<i64: 8, 4>}, {pipeline_mode = #tpu.pipeline_mode<synchronous>, transform_indices = @transform_1, window_bounds = array<i64: 2048, 128>}, {transform_indices = @transform_2, window_bounds = array<i64: 8, 128>}]} {
    %c0 = arith.constant 0 : index
    %c0_0 = arith.constant 0 : index
    %0 = vector.load %arg1[%c0, %c0_0] : memref<8x4xi32, #tpu.memory_space<vmem>>, vector<8x4xi32>
    %1 = tpu.iota {dimensions = array<i32: 1>} : vector<8x512xi32>
    %2 = vector.extract_strided_slice %0 {offsets = [0, 0], sizes = [8, 1], strides = [1, 1]} : vector<8x4xi32> to vector<8x1xi32>
    %3 = vector.broadcast %2 : vector<8x1xi32> to vector<8x512xi32>
    %4 = arith.cmpi eq, %1, %3 : vector<8x512xi32>
    %5 = arith.extui %4 : vector<8x512xi1> to vector<8x512xi32>
    %6 = arith.sitofp %5 : vector<8x512xi32> to vector<8x512xf32>
    %7 = vector.extract_strided_slice %0 {offsets = [0, 1], sizes = [8, 1], strides = [1, 1]} : vector<8x4xi32> to vector<8x1xi32>
    %8 = vector.broadcast %7 : vector<8x1xi32> to vector<8x512xi32>
    %9 = arith.cmpi eq, %1, %8 : vector<8x512xi32>
    %10 = arith.extui %9 : vector<8x512xi1> to vector<8x512xi32>
    %11 = arith.sitofp %10 : vector<8x512xi32> to vector<8x512xf32>
    %12 = vector.extract_strided_slice %0 {offsets = [0, 2], sizes = [8, 1], strides = [1, 1]} : vector<8x4xi32> to vector<8x1xi32>
    %13 = vector.broadcast %12 : vector<8x1xi32> to vector<8x512xi32>
    %14 = arith.cmpi eq, %1, %13 : vector<8x512xi32>
    %15 = arith.extui %14 : vector<8x512xi1> to vector<8x512xi32>
    %16 = arith.sitofp %15 : vector<8x512xi32> to vector<8x512xf32>
    %17 = vector.extract_strided_slice %0 {offsets = [0, 3], sizes = [8, 1], strides = [1, 1]} : vector<8x4xi32> to vector<8x1xi32>
    %18 = vector.broadcast %17 : vector<8x1xi32> to vector<8x512xi32>
    %19 = arith.cmpi eq, %1, %18 : vector<8x512xi32>
    %20 = arith.extui %19 : vector<8x512xi1> to vector<8x512xi32>
    %21 = arith.sitofp %20 : vector<8x512xi32> to vector<8x512xf32>
    %22 = tpu.concatenate %6, %11, %16, %21 in 1 : vector<8x512xf32>, vector<8x512xf32>, vector<8x512xf32>, vector<8x512xf32> -> vector<8x2048xf32>
    %c0_1 = arith.constant 0 : index
    %c0_2 = arith.constant 0 : index
    %23 = vector.load %arg2[%c0_1, %c0_2] : memref<2048x128xf32, #tpu.memory_space<vmem>>, vector<2048x128xf32>
    %cst = arith.constant dense<0.000000e+00> : vector<8x128xf32>
    %24 = tpu.matmul %22, %23, %cst {dimension_numbers = #tpu.dot_dimension_numbers<[1], [0], [0], [1], [0, 0, 1, 1], [], []>, precision = #tpu.contract_precision<fp32>} : vector<8x2048xf32>, vector<2048x128xf32>, vector<8x128xf32> -> vector<8x128xf32>
    %c0_3 = arith.constant 0 : index
    %c0_4 = arith.constant 0 : index
    %25 = vector.load %arg3[%c0_3, %c0_4] : memref<8x128xf32, #tpu.memory_space<vmem>>, vector<8x128xf32>
    tpu.vector_store %arg3[%c0_3, %c0_4], %24 {strides = array<i32>} : memref<8x128xf32, #tpu.memory_space<vmem>>, vector<8x128xf32>,
    return
  }
  func.func @transform_0(%arg0: i32) -> (i32, i32) {
    %c0_i32 = arith.constant 0 : i32
    %c0_i32_0 = arith.constant 0 : i32
    return %arg0, %c0_i32 : i32, i32
  }
  func.func @transform_1(%arg0: i32) -> (i32, i32) {
    %c0_i32 = arith.constant 0 : i32
    %c0_i32_0 = arith.constant 0 : i32
    %c0_i32_1 = arith.constant 0 : i32
    return %c0_i32, %c0_i32_0 : i32, i32
  }
  func.func @transform_2(%arg0: i32) -> (i32, i32) {
    %c0_i32 = arith.constant 0 : i32
    %c0_i32_0 = arith.constant 0 : i32
    return %arg0, %c0_i32 : i32, i32
  }
}

</mosaic_0001>

<llo_original>
// kernel: tpu_custom_call.1
$region0: #{tpu_custom_call.1}
  #allocation0 [shape = 'u32[]', space=smem, size = 0x4, offset = 0x4, fixed_abs, tag = 'smem constant byte address 0x4 - core index']
  #allocation1 [shape = 'u32[144,128]{1,0:T(1,128)}', space=vmem, size = 0x12000, scoped, tag = 'internal scratch']
  %s0 = inlined_call_operand.vmem [shape: s32[8,4], index: 0, kind: input, shape index: {}]
  %s1 = inlined_call_operand.hbm [shape: f32[2048,128], index: 1, kind: input, shape index: {}]
  %s2 = inlined_call_operand.hbm [shape: f32[8,128], index: 2, kind: output, shape index: {}]
  %s3 = sld [smem:[#allocation0]]
  $region22: #{tpu_custom_call.1} parent=0
    _
  %s5 = ssub.s32 1, %s3
  %s6 = scalar_select 0, %s5, %s3
  $region1: #{tpu_custom_call.1} parent=0
    #allocation2 [shape = 'u8[1048576]{0}', space=vmem, size = 0x100000, scoped, tag = 'input window, operand 1, single buffered']
    #allocation3 [shape = 's32[1]{0}', space=sflag, size = 0x4, scoped, tag = 'scoped memory for tpu_custom_call.1']
    #allocation4 [shape = 's32[1]{0}', space=sflag, size = 0x4, scoped, tag = 'scoped memory for tpu_custom_call.1']
    #allocation5 [shape = 'u8[4096]{0}', space=vmem, size = 0x1000, scoped, tag = 'output window, operand 0, single buffered']
    %7 = vsyncpa [#allocation3], 0
    %8 = vsyncpa [#allocation4], 0
    // Predicated region
    $region2: #{tpu_custom_call.1} parent=1 // pred_check
      _
    $region3: #{tpu_custom_call.1} parent=1 // pred_check_branch
      %10 = sbr.rel (0) target = $region5
    $region4: #{tpu_custom_call.1} parent=1 // pred_region
      _
    $region5: #{tpu_custom_call.1} parent=1 // pred_fallthru
      _
    // Predicated region
    $region6: #{tpu_custom_call.1} parent=1 // pred_check
      _
    $region7: #{tpu_custom_call.1} parent=1 // pred_check_branch
      %12 = sbr.rel (0) target = $region9
    $region8: #{tpu_custom_call.1} parent=1 // pred_region
      %s14 = ssub.s32 32768, 32768
      %15 = vsyncadd [#allocation3], %s14
      %s16 = sshll.u32 [#allocation2], 4
      %s17 = int_to_ptr.vmem [resolvable:$true] %s16
      %22 = dma.hbm_to_vmem [thread:$0]  %s1, 32768, %s17, [#allocation3], 128, 128, 8
    $region9: #{tpu_custom_call.1} parent=1 // pred_fallthru
      _
    // Predicated region
    $region10: #{tpu_custom_call.1} parent=1 // pred_check
      _
    $region11: #{tpu_custom_call.1} parent=1 // pred_check_branch
      %24 = sbr.rel (0) target = $region13
    $region12: #{tpu_custom_call.1} parent=1 // pred_region
      %25 = dma.done [#allocation3], 32768
    $region13: #{tpu_custom_call.1} parent=1 // pred_fallthru
      _
    %v26 = vld [vmem:[%s0] sm:$0xff]
    %v27 = vlaneseq
    %v28 = vand.u32 %v27, 127
    %v29 = vadd.s32 %v28, 128
    %v30 = vadd.s32 %v28, 256
    %v31 = vadd.s32 %v28, 384
    %32 = vset.pattern.permute.xlu0 0
    %33 = vperm.xlu0 %32, %v26
    %v34 = vpop.permute.xlu0 %33
    %vm35 = vcmp.eq.s32.totalorder %v28, %v34
    %vm36 = vcmp.eq.s32.totalorder %v29, %v34
    %vm37 = vcmp.eq.s32.totalorder %v30, %v34
    %vm38 = vcmp.eq.s32.totalorder %v31, %v34
    %v39 = vsel %vm35, 1, 0
    %v40 = vsel %vm36, 1, 0
    %v41 = vsel %vm37, 1, 0
    %v42 = vsel %vm38, 1, 0
    %v43 = vcvt.s32.f32 %v39
    %v44 = vcvt.s32.f32 %v40
    %v45 = vcvt.s32.f32 %v41
    %v46 = vcvt.s32.f32 %v42
    %47 = vset.pattern.permute.xlu0 1
    %48 = vperm.xlu0 %47, %v26
    %v49 = vpop.permute.xlu0 %48
    %vm50 = vcmp.eq.s32.totalorder %v28, %v49
    %vm51 = vcmp.eq.s32.totalorder %v29, %v49
    %vm52 = vcmp.eq.s32.totalorder %v30, %v49
    %vm53 = vcmp.eq.s32.totalorder %v31, %v49
    %v54 = vsel %vm50, 1, 0
    %v55 = vsel %vm51, 1, 0
    %v56 = vsel %vm52, 1, 0
    %v57 = vsel %vm53, 1, 0
    %v58 = vcvt.s32.f32 %v54
    %v59 = vcvt.s32.f32 %v55
    %v60 = vcvt.s32.f32 %v56
    %v61 = vcvt.s32.f32 %v57
    %62 = vset.pattern.permute.xlu0 2
    %63 = vperm.xlu0 %62, %v26
    %v64 = vpop.permute.xlu0 %63
    %vm65 = vcmp.eq.s32.totalorder %v28, %v64
    %vm66 = vcmp.eq.s32.totalorder %v29, %v64
    %vm67 = vcmp.eq.s32.totalorder %v30, %v64
    %vm68 = vcmp.eq.s32.totalorder %v31, %v64
    %v69 = vsel %vm65, 1, 0
    %v70 = vsel %vm66, 1, 0
    %v71 = vsel %vm67, 1, 0
    %v72 = vsel %vm68, 1, 0
    %v73 = vcvt.s32.f32 %v69
    %v74 = vcvt.s32.f32 %v70
    %v75 = vcvt.s32.f32 %v71
    %v76 = vcvt.s32.f32 %v72
    %77 = vset.pattern.permute.xlu0 3
    %78 = vperm.xlu0 %77, %v26
    %v79 = vpop.permute.xlu0 %78
    %vm80 = vcmp.eq.s32.totalorder %v28, %v79
    %vm81 = vcmp.eq.s32.totalorder %v29, %v79
    %vm82 = vcmp.eq.s32.totalorder %v30, %v79
    %vm83 = vcmp.eq.s32.totalorder %v31, %v79
    %v84 = vsel %vm80, 1, 0
    %v85 = vsel %vm81, 1, 0
    %v86 = vsel %vm82, 1, 0
    %v87 = vsel %vm83, 1, 0
    %v88 = vcvt.s32.f32 %v84
    %v89 = vcvt.s32.f32 %v85
    %v90 = vcvt.s32.f32 %v86
    %v91 = vcvt.s32.f32 %v87
    %v92 = vld [vmem:[#allocation2] sm:$0xff]
    %v93 = vld [vmem:[#allocation2 + $0x8] sm:$0xff]
    %v94 = vld [vmem:[#allocation2 + $0x10] sm:$0xff]
    %v95 = vld [vmem:[#allocation2 + $0x18] sm:$0xff]
    %v96 = vld [vmem:[#allocation2 + $0x20] sm:$0xff]
    %v97 = vld [vmem:[#allocation2 + $0x28] sm:$0xff]
    %v98 = vld [vmem:[#allocation2 + $0x30] sm:$0xff]
    %v99 = vld [vmem:[#allocation2 + $0x38] sm:$0xff]
    %v100 = vld [vmem:[#allocation2 + $0x40] sm:$0xff]
    %v101 = vld [vmem:[#allocation2 + $0x48] sm:$0xff]
    %v102 = vld [vmem:[#allocation2 + $0x50] sm:$0xff]
    %v103 = vld [vmem:[#allocation2 + $0x58] sm:$0xff]
    %v104 = vld [vmem:[#allocation2 + $0x60] sm:$0xff]
    %v105 = vld [vmem:[#allocation2 + $0x68] sm:$0xff]
    %v106 = vld [vmem:[#allocation2 + $0x70] sm:$0xff]
    %v107 = vld [vmem:[#allocation2 + $0x78] sm:$0xff]
    %v108 = vld [vmem:[#allocation2 + $0x80] sm:$0xff]
    %v109 = vld [vmem:[#allocation2 + $0x88] sm:$0xff]
    %v110 = vld [vmem:[#allocation2 + $0x90] sm:$0xff]
    %v111 = vld [vmem:[#allocation2 + $0x98] sm:$0xff]
    %v112 = vld [vmem:[#allocation2 + $0xa0] sm:$0xff]
    %v113 = vld [vmem:[#allocation2 + $0xa8] sm:$0xff]
    %v114 = vld [vmem:[#allocation2 + $0xb0] sm:$0xff]
    %v115 = vld [vmem:[#allocation2 + $0xb8] sm:$0xff]
    %v116 = vld [vmem:[#allocation2 + $0xc0] sm:$0xff]
    %v117 = vld [vmem:[#allocation2 + $0xc8] sm:$0xff]
    %v118 = vld [vmem:[#allocation2 + $0xd0] sm:$0xff]
    %v119 = vld [vmem:[#allocation2 + $0xd8] sm:$0xff]
    %v120 = vld [vmem:[#allocation2 + $0xe0] sm:$0xff]
    %v121 = vld [vmem:[#allocation2 + $0xe8] sm:$0xff]
    %v122 = vld [vmem:[#allocation2 + $0xf0] sm:$0xff]
    %v123 = vld [vmem:[#allocation2 + $0xf8] sm:$0xff]
    %v124 = vld [vmem:[#allocation2 + $0x100] sm:$0xff]
    %v125 = vld [vmem:[#allocation2 + $0x108] sm:$0xff]
    %v126 = vld [vmem:[#allocation2 + $0x110] sm:$0xff]
    %v127 = vld [vmem:[#allocation2 + $0x118] sm:$0xff]
    %v128 = vld [vmem:[#allocation2 + $0x120] sm:$0xff]
    %v129 = vld [vmem:[#allocation2 + $0x128] sm:$0xff]
    %v130 = vld [vmem:[#allocation2 + $0x130] sm:$0xff]
    %v131 = vld [vmem:[#allocation2 + $0x138] sm:$0xff]
    %v132 = vld [vmem:[#allocation2 + $0x140] sm:$0xff]
    %v133 = vld [vmem:[#allocation2 + $0x148] sm:$0xff]
    %v134 = vld [vmem:[#allocation2 + $0x150] sm:$0xff]
    %v135 = vld [vmem:[#allocation2 + $0x158] sm:$0xff]
    %v136 = vld [vmem:[#allocation2 + $0x160] sm:$0xff]
    %v137 = vld [vmem:[#allocation2 + $0x168] sm:$0xff]
    %v138 = vld [vmem:[#allocation2 + $0x170] sm:$0xff]
    %v139 = vld [vmem:[#allocation2 + $0x178] sm:$0xff]
    %v140 = vld [vmem:[#allocation2 + $0x180] sm:$0xff]
    %v141 = vld [vmem:[#allocation2 + $0x188] sm:$0xff]
    %v142 = vld [vmem:[#allocation2 + $0x190] sm:$0xff]
    %v143 = vld [vmem:[#allocation2 + $0x198] sm:$0xff]
    %v144 = vld [vmem:[#allocation2 + $0x1a0] sm:$0xff]
    %v145 = vld [vmem:[#allocation2 + $0x1a8] sm:$0xff]
    %v146 = vld [vmem:[#allocation2 + $0x1b0] sm:$0xff]
    %v147 = vld [vmem:[#allocation2 + $0x1b8] sm:$0xff]
    %v148 = vld [vmem:[#allocation2 + $0x1c0] sm:$0xff]
    %v149 = vld [vmem:[#allocation2 + $0x1c8] sm:$0xff]
    %v150 = vld [vmem:[#allocation2 + $0x1d0] sm:$0xff]
    %v151 = vld [vmem:[#allocation2 + $0x1d8] sm:$0xff]
    %v152 = vld [vmem:[#allocation2 + $0x1e0] sm:$0xff]
    %v153 = vld [vmem:[#allocation2 + $0x1e8] sm:$0xff]
    %v154 = vld [vmem:[#allocation2 + $0x1f0] sm:$0xff]
    %v155 = vld [vmem:[#allocation2 + $0x1f8] sm:$0xff]
    %v156 = vld [vmem:[#allocation2 + $0x200] sm:$0xff]
    %v157 = vld [vmem:[#allocation2 + $0x208] sm:$0xff]
    %v158 = vld [vmem:[#allocation2 + $0x210] sm:$0xff]
    %v159 = vld [vmem:[#allocation2 + $0x218] sm:$0xff]
    %v160 = vld [vmem:[#allocation2 + $0x220] sm:$0xff]
    %v161 = vld [vmem:[#allocation2 + $0x228] sm:$0xff]
    %v162 = vld [vmem:[#allocation2 + $0x230] sm:$0xff]
    %v163 = vld [vmem:[#allocation2 + $0x238] sm:$0xff]
    %v164 = vld [vmem:[#allocation2 + $0x240] sm:$0xff]
    %v165 = vld [vmem:[#allocation2 + $0x248] sm:$0xff]
    %v166 = vld [vmem:[#allocation2 + $0x250] sm:$0xff]
    %v167 = vld [vmem:[#allocation2 + $0x258] sm:$0xff]
    %v168 = vld [vmem:[#allocation2 + $0x260] sm:$0xff]
    %v169 = vld [vmem:[#allocation2 + $0x268] sm:$0xff]
    %v170 = vld [vmem:[#allocation2 + $0x270] sm:$0xff]
    %v171 = vld [vmem:[#allocation2 + $0x278] sm:$0xff]
    %v172 = vld [vmem:[#allocation2 + $0x280] sm:$0xff]
    %v173 = vld [vmem:[#allocation2 + $0x288] sm:$0xff]
    %v174 = vld [vmem:[#allocation2 + $0x290] sm:$0xff]
    %v175 = vld [vmem:[#allocation2 + $0x298] sm:$0xff]
    %v176 = vld [vmem:[#allocation2 + $0x2a0] sm:$0xff]
    %v177 = vld [vmem:[#allocation2 + $0x2a8] sm:$0xff]
    %v178 = vld [vmem:[#allocation2 + $0x2b0] sm:$0xff]
    %v179 = vld [vmem:[#allocation2 + $0x2b8] sm:$0xff]
    %v180 = vld [vmem:[#allocation2 + $0x2c0] sm:$0xff]
    %v181 = vld [vmem:[#allocation2 + $0x2c8] sm:$0xff]
    %v182 = vld [vmem:[#allocation2 + $0x2d0] sm:$0xff]
    %v183 = vld [vmem:[#allocation2 + $0x2d8] sm:$0xff]
    %v184 = vld [vmem:[#allocation2 + $0x2e0] sm:$0xff]
    %v185 = vld [vmem:[#allocation2 + $0x2e8] sm:$0xff]
    %v186 = vld [vmem:[#allocation2 + $0x2f0] sm:$0xff]
    %v187 = vld [vmem:[#allocation2 + $0x2f8] sm:$0xff]
    %v188 = vld [vmem:[#allocation2 + $0x300] sm:$0xff]
    %v189 = vld [vmem:[#allocation2 + $0x308] sm:$0xff]
    %v190 = vld [vmem:[#allocation2 + $0x310] sm:$0xff]
    %v191 = vld [vmem:[#allocation2 + $0x318] sm:$0xff]
    %v192 = vld [vmem:[#allocation2 + $0x320] sm:$0xff]
    %v193 = vld [vmem:[#allocation2 + $0x328] sm:$0xff]
    %v194 = vld [vmem:[#allocation2 + $0x330] sm:$0xff]
    %v195 = vld [vmem:[#allocation2 + $0x338] sm:$0xff]
    %v196 = vld [vmem:[#allocation2 + $0x340] sm:$0xff]
    %v197 = vld [vmem:[#allocation2 + $0x348] sm:$0xff]
    %v198 = vld [vmem:[#allocation2 + $0x350] sm:$0xff]
    %v199 = vld [vmem:[#allocation2 + $0x358] sm:$0xff]
    %v200 = vld [vmem:[#allocation2 + $0x360] sm:$0xff]
    %v201 = vld [vmem:[#allocation2 + $0x368] sm:$0xff]
    %v202 = vld [vmem:[#allocation2 + $0x370] sm:$0xff]
    %v203 = vld [vmem:[#allocation2 + $0x378] sm:$0xff]
    %v204 = vld [vmem:[#allocation2 + $0x380] sm:$0xff]
    %v205 = vld [vmem:[#allocation2 + $0x388] sm:$0xff]
    %v206 = vld [vmem:[#allocation2 + $0x390] sm:$0xff]
    %v207 = vld [vmem:[#allocation2 + $0x398] sm:$0xff]
    %v208 = vld [vmem:[#allocation2 + $0x3a0] sm:$0xff]
    %v209 = vld [vmem:[#allocation2 + $0x3a8] sm:$0xff]
    %v210 = vld [vmem:[#allocation2 + $0x3b0] sm:$0xff]
    %v211 = vld [vmem:[#allocation2 + $0x3b8] sm:$0xff]
    %v212 = vld [vmem:[#allocation2 + $0x3c0] sm:$0xff]
    %v213 = vld [vmem:[#allocation2 + $0x3c8] sm:$0xff]
    %v214 = vld [vmem:[#allocation2 + $0x3d0] sm:$0xff]
    %v215 = vld [vmem:[#allocation2 + $0x3d8] sm:$0xff]
    %v216 = vld [vmem:[#allocation2 + $0x3e0] sm:$0xff]
    %v217 = vld [vmem:[#allocation2 + $0x3e8] sm:$0xff]
    %v218 = vld [vmem:[#allocation2 + $0x3f0] sm:$0xff]
    %v219 = vld [vmem:[#allocation2 + $0x3f8] sm:$0xff]
    %v220 = vld [vmem:[#allocation2 + $0x400] sm:$0xff]
    %v221 = vld [vmem:[#allocation2 + $0x408] sm:$0xff]
    %v222 = vld [vmem:[#allocation2 + $0x410] sm:$0xff]
    %v223 = vld [vmem:[#allocation2 + $0x418] sm:$0xff]
    %v224 = vld [vmem:[#allocation2 + $0x420] sm:$0xff]
    %v225 = vld [vmem:[#allocation2 + $0x428] sm:$0xff]
    %v226 = vld [vmem:[#allocation2 + $0x430] sm:$0xff]
    %v227 = vld [vmem:[#allocation2 + $0x438] sm:$0xff]
    %v228 = vld [vmem:[#allocation2 + $0x440] sm:$0xff]
    %v229 = vld [vmem:[#allocation2 + $0x448] sm:$0xff]
    %v230 = vld [vmem:[#allocation2 + $0x450] sm:$0xff]
    %v231 = vld [vmem:[#allocation2 + $0x458] sm:$0xff]
    %v232 = vld [vmem:[#allocation2 + $0x460] sm:$0xff]
    %v233 = vld [vmem:[#allocation2 + $0x468] sm:$0xff]
    %v234 = vld [vmem:[#allocation2 + $0x470] sm:$0xff]
    %v235 = vld [vmem:[#allocation2 + $0x478] sm:$0xff]
    %v236 = vld [vmem:[#allocation2 + $0x480] sm:$0xff]
    %v237 = vld [vmem:[#allocation2 + $0x488] sm:$0xff]
    %v238 = vld [vmem:[#allocation2 + $0x490] sm:$0xff]
    %v239 = vld [vmem:[#allocation2 + $0x498] sm:$0xff]
    %v240 = vld [vmem:[#allocation2 + $0x4a0] sm:$0xff]
    %v241 = vld [vmem:[#allocation2 + $0x4a8] sm:$0xff]
    %v242 = vld [vmem:[#allocation2 + $0x4b0] sm:$0xff]
    %v243 = vld [vmem:[#allocation2 + $0x4b8] sm:$0xff]
    %v244 = vld [vmem:[#allocation2 + $0x4c0] sm:$0xff]
    %v245 = vld [vmem:[#allocation2 + $0x4c8] sm:$0xff]
    %v246 = vld [vmem:[#allocation2 + $0x4d0] sm:$0xff]
    %v247 = vld [vmem:[#allocation2 + $0x4d8] sm:$0xff]
    %v248 = vld [vmem:[#allocation2 + $0x4e0] sm:$0xff]
    %v249 = vld [vmem:[#allocation2 + $0x4e8] sm:$0xff]
    %v250 = vld [vmem:[#allocation2 + $0x4f0] sm:$0xff]
    %v251 = vld [vmem:[#allocation2 + $0x4f8] sm:$0xff]
    %v252 = vld [vmem:[#allocation2 + $0x500] sm:$0xff]
    %v253 = vld [vmem:[#allocation2 + $0x508] sm:$0xff]
    %v254 = vld [vmem:[#allocation2 + $0x510] sm:$0xff]
    %v255 = vld [vmem:[#allocation2 + $0x518] sm:$0xff]
    %v256 = vld [vmem:[#allocation2 + $0x520] sm:$0xff]
    %v257 = vld [vmem:[#allocation2 + $0x528] sm:$0xff]
    %v258 = vld [vmem:[#allocation2 + $0x530] sm:$0xff]
    %v259 = vld [vmem:[#allocation2 + $0x538] sm:$0xff]
    %v260 = vld [vmem:[#allocation2 + $0x540] sm:$0xff]
    %v261 = vld [vmem:[#allocation2 + $0x548] sm:$0xff]
    %v262 = vld [vmem:[#allocation2 + $0x550] sm:$0xff]
    %v263 = vld [vmem:[#allocation2 + $0x558] sm:$0xff]
    %v264 = vld [vmem:[#allocation2 + $0x560] sm:$0xff]
    %v265 = vld [vmem:[#allocation2 + $0x568] sm:$0xff]
    %v266 = vld [vmem:[#allocation2 + $0x570] sm:$0xff]
    %v267 = vld [vmem:[#allocation2 + $0x578] sm:$0xff]
    %v268 = vld [vmem:[#allocation2 + $0x580] sm:$0xff]
    %v269 = vld [vmem:[#allocation2 + $0x588] sm:$0xff]
    %v270 = vld [vmem:[#allocation2 + $0x590] sm:$0xff]
    %v271 = vld [vmem:[#allocation2 + $0x598] sm:$0xff]
    %v272 = vld [vmem:[#allocation2 + $0x5a0] sm:$0xff]
    %v273 = vld [vmem:[#allocation2 + $0x5a8] sm:$0xff]
    %v274 = vld [vmem:[#allocation2 + $0x5b0] sm:$0xff]
    %v275 = vld [vmem:[#allocation2 + $0x5b8] sm:$0xff]
    %v276 = vld [vmem:[#allocation2 + $0x5c0] sm:$0xff]
    %v277 = vld [vmem:[#allocation2 + $0x5c8] sm:$0xff]
    %v278 = vld [vmem:[#allocation2 + $0x5d0] sm:$0xff]
    %v279 = vld [vmem:[#allocation2 + $0x5d8] sm:$0xff]
    %v280 = vld [vmem:[#allocation2 + $0x5e0] sm:$0xff]
    %v281 = vld [vmem:[#allocation2 + $0x5e8] sm:$0xff]
    %v282 = vld [vmem:[#allocation2 + $0x5f0] sm:$0xff]
    %v283 = vld [vmem:[#allocation2 + $0x5f8] sm:$0xff]
    %v284 = vld [vmem:[#allocation2 + $0x600] sm:$0xff]
    %v285 = vld [vmem:[#allocation2 + $0x608] sm:$0xff]
    %v286 = vld [vmem:[#allocation2 + $0x610] sm:$0xff]
    %v287 = vld [vmem:[#allocation2 + $0x618] sm:$0xff]
    %v288 = vld [vmem:[#allocation2 + $0x620] sm:$0xff]
    %v289 = vld [vmem:[#allocation2 + $0x628] sm:$0xff]
    %v290 = vld [vmem:[#allocation2 + $0x630] sm:$0xff]
    %v291 = vld [vmem:[#allocation2 + $0x638] sm:$0xff]
    %v292 = vld [vmem:[#allocation2 + $0x640] sm:$0xff]
    %v293 = vld [vmem:[#allocation2 + $0x648] sm:$0xff]
    %v294 = vld [vmem:[#allocation2 + $0x650] sm:$0xff]
    %v295 = vld [vmem:[#allocation2 + $0x658] sm:$0xff]
    %v296 = vld [vmem:[#allocation2 + $0x660] sm:$0xff]
    %v297 = vld [vmem:[#allocation2 + $0x668] sm:$0xff]
    %v298 = vld [vmem:[#allocation2 + $0x670] sm:$0xff]
    %v299 = vld [vmem:[#allocation2 + $0x678] sm:$0xff]
    %v300 = vld [vmem:[#allocation2 + $0x680] sm:$0xff]
    %v301 = vld [vmem:[#allocation2 + $0x688] sm:$0xff]
    %v302 = vld [vmem:[#allocation2 + $0x690] sm:$0xff]
    %v303 = vld [vmem:[#allocation2 + $0x698] sm:$0xff]
    %v304 = vld [vmem:[#allocation2 + $0x6a0] sm:$0xff]
    %v305 = vld [vmem:[#allocation2 + $0x6a8] sm:$0xff]
    %v306 = vld [vmem:[#allocation2 + $0x6b0] sm:$0xff]
    %v307 = vld [vmem:[#allocation2 + $0x6b8] sm:$0xff]
    %v308 = vld [vmem:[#allocation2 + $0x6c0] sm:$0xff]
    %v309 = vld [vmem:[#allocation2 + $0x6c8] sm:$0xff]
    %v310 = vld [vmem:[#allocation2 + $0x6d0] sm:$0xff]
    %v311 = vld [vmem:[#allocation2 + $0x6d8] sm:$0xff]
    %v312 = vld [vmem:[#allocation2 + $0x6e0] sm:$0xff]
    %v313 = vld [vmem:[#allocation2 + $0x6e8] sm:$0xff]
    %v314 = vld [vmem:[#allocation2 + $0x6f0] sm:$0xff]
    %v315 = vld [vmem:[#allocation2 + $0x6f8] sm:$0xff]
    %v316 = vld [vmem:[#allocation2 + $0x700] sm:$0xff]
    %v317 = vld [vmem:[#allocation2 + $0x708] sm:$0xff]
    %v318 = vld [vmem:[#allocation2 + $0x710] sm:$0xff]
    %v319 = vld [vmem:[#allocation2 + $0x718] sm:$0xff]
    %v320 = vld [vmem:[#allocation2 + $0x720] sm:$0xff]
    %v321 = vld [vmem:[#allocation2 + $0x728] sm:$0xff]
    %v322 = vld [vmem:[#allocation2 + $0x730] sm:$0xff]
    %v323 = vld [vmem:[#allocation2 + $0x738] sm:$0xff]
    %v324 = vld [vmem:[#allocation2 + $0x740] sm:$0xff]
    %v325 = vld [vmem:[#allocation2 + $0x748] sm:$0xff]
    %v326 = vld [vmem:[#allocation2 + $0x750] sm:$0xff]
    %v327 = vld [vmem:[#allocation2 + $0x758] sm:$0xff]
    %v328 = vld [vmem:[#allocation2 + $0x760] sm:$0xff]
    %v329 = vld [vmem:[#allocation2 + $0x768] sm:$0xff]
    %v330 = vld [vmem:[#allocation2 + $0x770] sm:$0xff]
    %v331 = vld [vmem:[#allocation2 + $0x778] sm:$0xff]
    %v332 = vld [vmem:[#allocation2 + $0x780] sm:$0xff]
    %v333 = vld [vmem:[#allocation2 + $0x788] sm:$0xff]
    %v334 = vld [vmem:[#allocation2 + $0x790] sm:$0xff]
    %v335 = vld [vmem:[#allocation2 + $0x798] sm:$0xff]
    %v336 = vld [vmem:[#allocation2 + $0x7a0] sm:$0xff]
    %v337 = vld [vmem:[#allocation2 + $0x7a8] sm:$0xff]
    %v338 = vld [vmem:[#allocation2 + $0x7b0] sm:$0xff]
    %v339 = vld [vmem:[#allocation2 + $0x7b8] sm:$0xff]
    %v340 = vld [vmem:[#allocation2 + $0x7c0] sm:$0xff]
    %v341 = vld [vmem:[#allocation2 + $0x7c8] sm:$0xff]
    %v342 = vld [vmem:[#allocation2 + $0x7d0] sm:$0xff]
    %v343 = vld [vmem:[#allocation2 + $0x7d8] sm:$0xff]
    %v344 = vld [vmem:[#allocation2 + $0x7e0] sm:$0xff]
    %v345 = vld [vmem:[#allocation2 + $0x7e8] sm:$0xff]
    %v346 = vld [vmem:[#allocation2 + $0x7f0] sm:$0xff]
    %v347 = vld [vmem:[#allocation2 + $0x7f8] sm:$0xff]
    %348 = vmatprep.subr.mxu0 0.0
    %v349 = vand.u32 %v107, 4294901760
    %350 = vmatpush1.msra.mxu0 %v349
    %351 = vmatprep.subr.mxu0 0.0
    %v352 = vand.u32 %v106, 4294901760
    %353 = vmatpush1.msra.mxu0 %v352
    %354 = vmatprep.subr.mxu0 0.0
    %v355 = vand.u32 %v105, 4294901760
    %356 = vmatpush1.msra.mxu0 %v355
    %357 = vmatprep.subr.mxu0 0.0
    %v358 = vand.u32 %v104, 4294901760
    %359 = vmatpush1.msra.mxu0 %v358
    %360 = vmatprep.subr.mxu0 0.0
    %v361 = vand.u32 %v103, 4294901760
    %362 = vmatpush1.msra.mxu0 %v361
    %363 = vmatprep.subr.mxu0 0.0
    %v364 = vand.u32 %v102, 4294901760
    %365 = vmatpush1.msra.mxu0 %v364
    %366 = vmatprep.subr.mxu0 0.0
    %v367 = vand.u32 %v101, 4294901760
    %368 = vmatpush1.msra.mxu0 %v367
    %369 = vmatprep.subr.mxu0 0.0
    %v370 = vand.u32 %v100, 4294901760
    %371 = vmatpush1.msra.mxu0 %v370
    %372 = vmatprep.subr.mxu0 0.0
    %v373 = vand.u32 %v99, 4294901760
    %374 = vmatpush1.msra.mxu0 %v373
    %375 = vmatprep.subr.mxu0 0.0
    %v376 = vand.u32 %v98, 4294901760
    %377 = vmatpush1.msra.mxu0 %v376
    %378 = vmatprep.subr.mxu0 0.0
    %v379 = vand.u32 %v97, 4294901760
    %380 = vmatpush1.msra.mxu0 %v379
    %381 = vmatprep.subr.mxu0 0.0
    %v382 = vand.u32 %v96, 4294901760
    %383 = vmatpush1.msra.mxu0 %v382
    %384 = vmatprep.subr.mxu0 0.0
    %v385 = vand.u32 %v95, 4294901760
    %386 = vmatpush1.msra.mxu0 %v385
    %387 = vmatprep.subr.mxu0 0.0
    %v388 = vand.u32 %v94, 4294901760
    %389 = vmatpush1.msra.mxu0 %v388
    %390 = vmatprep.subr.mxu0 0.0
    %v391 = vand.u32 %v93, 4294901760
    %392 = vmatpush1.msra.mxu0 %v391
    %393 = vmatprep.subr.mxu0 0.0
    %v394 = vand.u32 %v92, 4294901760
    %395 = vmatpush1.msra.mxu0 %v394
    %396 = vmatprep.subr.mxu0 0.0
    %v397 = vand.u32 %v123, 4294901760
    %398 = vmatpush2.msra.mxu0 %v397
    %399 = vmatprep.subr.mxu0 0.0
    %v400 = vand.u32 %v122, 4294901760
    %401 = vmatpush2.msra.mxu0 %v400
    %402 = vmatprep.subr.mxu0 0.0
    %v403 = vand.u32 %v121, 4294901760
    %404 = vmatpush2.msra.mxu0 %v403
    %405 = vmatprep.subr.mxu0 0.0
    %v406 = vand.u32 %v120, 4294901760
    %407 = vmatpush2.msra.mxu0 %v406
    %408 = vmatprep.subr.mxu0 0.0
    %v409 = vand.u32 %v119, 4294901760
    %410 = vmatpush2.msra.mxu0 %v409
    %411 = vmatprep.subr.mxu0 0.0
    %v412 = vand.u32 %v118, 4294901760
    %413 = vmatpush2.msra.mxu0 %v412
    %414 = vmatprep.subr.mxu0 0.0
    %v415 = vand.u32 %v117, 4294901760
    %416 = vmatpush2.msra.mxu0 %v415
    %417 = vmatprep.subr.mxu0 0.0
    %v418 = vand.u32 %v116, 4294901760
    %419 = vmatpush2.msra.mxu0 %v418
    %420 = vmatprep.subr.mxu0 0.0
    %v421 = vand.u32 %v115, 4294901760
    %422 = vmatpush2.msra.mxu0 %v421
    %423 = vmatprep.subr.mxu0 0.0
    %v424 = vand.u32 %v114, 4294901760
    %425 = vmatpush2.msra.mxu0 %v424
    %426 = vmatprep.subr.mxu0 0.0
    %v427 = vand.u32 %v113, 4294901760
    %428 = vmatpush2.msra.mxu0 %v427
    %429 = vmatprep.subr.mxu0 0.0
    %v430 = vand.u32 %v112, 4294901760
    %431 = vmatpush2.msra.mxu0 %v430
    %432 = vmatprep.subr.mxu0 0.0
    %v433 = vand.u32 %v111, 4294901760
    %434 = vmatpush2.msra.mxu0 %v433
    %435 = vmatprep.subr.mxu0 0.0
    %v436 = vand.u32 %v110, 4294901760
    %437 = vmatpush2.msra.mxu0 %v436
    %438 = vmatprep.subr.mxu0 0.0
    %v439 = vand.u32 %v109, 4294901760
    %440 = vmatpush2.msra.mxu0 %v439
    %441 = vmatprep.subr.mxu0 0.0
    %v442 = vand.u32 %v108, 4294901760
    %443 = vmatpush2.msra.mxu0 %v442
    %v444 = vand.u32 %v44, 4294901760
    %v445 = vsub.f32 %v44, %v444
    %v446 = vand.u32 %v445, 4294901760
    %v447 = vsub.f32 %v445, %v446
    %v448 = vand.u32 %v447, 4294901760
    %449 = vmatprep.mubr.f32.mxu0 %v448
    %v450 = vand.u32 %v43, 4294901760
    %v451 = vsub.f32 %v43, %v450
    %v452 = vand.u32 %v451, 4294901760
    %v453 = vsub.f32 %v451, %v452
    %v454 = vand.u32 %v453, 4294901760
    %455 = vmatmul.mubr.f32.gmra.mxu0 %v454
    %v456 = vpop.f32.mrf.mxu0
    %v457 = vadd.f32 0.0, %v456
    %v458 = vpop.f32.mrf.mxu0
    %459 = vdwg.mxu0
    %460 = vmatprep.subr.mxu0 0.0
    %v461 = vand.u32 %v107, 4294901760
    %v462 = vsub.f32 %v107, %v461
    %v463 = vand.u32 %v462, 4294901760
    %v464 = vsub.f32 %v462, %v463
    %v465 = vand.u32 %v464, 4294901760
    %466 = vmatpush1.msra.mxu0 %v465
    %467 = vmatprep.subr.mxu0 0.0
    %v468 = vand.u32 %v106, 4294901760
    %v469 = vsub.f32 %v106, %v468
    %v470 = vand.u32 %v469, 4294901760
    %v471 = vsub.f32 %v469, %v470
    %v472 = vand.u32 %v471, 4294901760
    %473 = vmatpush1.msra.mxu0 %v472
    %474 = vmatprep.subr.mxu0 0.0
    %v475 = vand.u32 %v105, 4294901760
    %v476 = vsub.f32 %v105, %v475
    %v477 = vand.u32 %v476, 4294901760
    %v478 = vsub.f32 %v476, %v477
    %v479 = vand.u32 %v478, 4294901760
    %480 = vmatpush1.msra.mxu0 %v479
    %481 = vmatprep.subr.mxu0 0.0
    %v482 = vand.u32 %v104, 4294901760
    %v483 = vsub.f32 %v104, %v482
    %v484 = vand.u32 %v483, 4294901760
    %v485 = vsub.f32 %v483, %v484
    %v486 = vand.u32 %v485, 4294901760
    %487 = vmatpush1.msra.mxu0 %v486
    %488 = vmatprep.subr.mxu0 0.0
    %v489 = vand.u32 %v103, 4294901760
    %v490 = vsub.f32 %v103, %v489
    %v491 = vand.u32 %v490, 4294901760
    %v492 = vsub.f32 %v490, %v491
    %v493 = vand.u32 %v492, 4294901760
    %494 = vmatpush1.msra.mxu0 %v493
    %495 = vmatprep.subr.mxu0 0.0
    %v496 = vand.u32 %v102, 4294901760
    %v497 = vsub.f32 %v102, %v496
    %v498 = vand.u32 %v497, 4294901760
    %v499 = vsub.f32 %v497, %v498
    %v500 = vand.u32 %v499, 4294901760
    %501 = vmatpush1.msra.mxu0 %v500
    %502 = vmatprep.subr.mxu0 0.0
    %v503 = vand.u32 %v101, 4294901760
    %v504 = vsub.f32 %v101, %v503
    %v505 = vand.u32 %v504, 4294901760
    %v506 = vsub.f32 %v504, %v505
    %v507 = vand.u32 %v506, 4294901760
    %508 = vmatpush1.msra.mxu0 %v507
    %509 = vmatprep.subr.mxu0 0.0
    %v510 = vand.u32 %v100, 4294901760
    %v511 = vsub.f32 %v100, %v510
    %v512 = vand.u32 %v511, 4294901760
    %v513 = vsub.f32 %v511, %v512
    %v514 = vand.u32 %v513, 4294901760
    %515 = vmatpush1.msra.mxu0 %v514
    %516 = vmatprep.subr.mxu0 0.0
    %v517 = vand.u32 %v99, 4294901760
    %v518 = vsub.f32 %v99, %v517
    %v519 = vand.u32 %v518, 4294901760
    %v520 = vsub.f32 %v518, %v519
    %v521 = vand.u32 %v520, 4294901760
    %522 = vmatpush1.msra.mxu0 %v521
    %523 = vmatprep.subr.mxu0 0.0
    %v524 = vand.u32 %v98, 4294901760
    %v525 = vsub.f32 %v98, %v524
    %v526 = vand.u32 %v525, 4294901760
    %v527 = vsub.f32 %v525, %v526
    %v528 = vand.u32 %v527, 4294901760
    %529 = vmatpush1.msra.mxu0 %v528
    %530 = vmatprep.subr.mxu0 0.0
    %v531 = vand.u32 %v97, 4294901760
    %v532 = vsub.f32 %v97, %v531
    %v533 = vand.u32 %v532, 4294901760
    %v534 = vsub.f32 %v532, %v533
    %v535 = vand.u32 %v534, 4294901760
    %536 = vmatpush1.msra.mxu0 %v535
    %537 = vmatprep.subr.mxu0 0.0
    %v538 = vand.u32 %v96, 4294901760
    %v539 = vsub.f32 %v96, %v538
    %v540 = vand.u32 %v539, 4294901760
    %v541 = vsub.f32 %v539, %v540
    %v542 = vand.u32 %v541, 4294901760
    %543 = vmatpush1.msra.mxu0 %v542
    %544 = vmatprep.subr.mxu0 0.0
    %v545 = vand.u32 %v95, 4294901760
    %v546 = vsub.f32 %v95, %v545
    %v547 = vand.u32 %v546, 4294901760
    %v548 = vsub.f32 %v546, %v547
    %v549 = vand.u32 %v548, 4294901760
    %550 = vmatpush1.msra.mxu0 %v549
    %551 = vmatprep.subr.mxu0 0.0
    %v552 = vand.u32 %v94, 4294901760
    %v553 = vsub.f32 %v94, %v552
    %v554 = vand.u32 %v553, 4294901760
    %v555 = vsub.f32 %v553, %v554
    %v556 = vand.u32 %v555, 4294901760
    %557 = vmatpush1.msra.mxu0 %v556
    %558 = vmatprep.subr.mxu0 0.0
    %v559 = vand.u32 %v93, 4294901760
    %v560 = vsub.f32 %v93, %v559
    %v561 = vand.u32 %v560, 4294901760
    %v562 = vsub.f32 %v560, %v561
    %v563 = vand.u32 %v562, 4294901760
    %564 = vmatpush1.msra.mxu0 %v563
    %565 = vmatprep.subr.mxu0 0.0
    %v566 = vand.u32 %v92, 4294901760
    %v567 = vsub.f32 %v92, %v566
    %v568 = vand.u32 %v567, 4294901760
    %v569 = vsub.f32 %v567, %v568
    %v570 = vand.u32 %v569, 4294901760
    %571 = vmatpush1.msra.mxu0 %v570
    %572 = vmatprep.subr.mxu0 0.0
    %v573 = vand.u32 %v123, 4294901760
    %v574 = vsub.f32 %v123, %v573
    %v575 = vand.u32 %v574, 4294901760
    %v576 = vsub.f32 %v574, %v575
    %v577 = vand.u32 %v576, 4294901760
    %578 = vmatpush2.msra.mxu0 %v577
    %579 = vmatprep.subr.mxu0 0.0
    %v580 = vand.u32 %v122, 4294901760
    %v581 = vsub.f32 %v122, %v580
    %v582 = vand.u32 %v581, 4294901760
    %v583 = vsub.f32 %v581, %v582
    %v584 = vand.u32 %v583, 4294901760
    %585 = vmatpush2.msra.mxu0 %v584
    %586 = vmatprep.subr.mxu0 0.0
    %v587 = vand.u32 %v121, 4294901760
    %v588 = vsub.f32 %v121, %v587
    %v589 = vand.u32 %v588, 4294901760
    %v590 = vsub.f32 %v588, %v589
    %v591 = vand.u32 %v590, 4294901760
    %592 = vmatpush2.msra.mxu0 %v591
    %593 = vmatprep.subr.mxu0 0.0
    %v594 = vand.u32 %v120, 4294901760
    %v595 = vsub.f32 %v120, %v594
    %v596 = vand.u32 %v595, 4294901760
    %v597 = vsub.f32 %v595, %v596
    %v598 = vand.u32 %v597, 4294901760
    %599 = vmatpush2.msra.mxu0 %v598
    %600 = vmatprep.subr.mxu0 0.0
    %v601 = vand.u32 %v119, 4294901760
    %v602 = vsub.f32 %v119, %v601
    %v603 = vand.u32 %v602, 4294901760
    %v604 = vsub.f32 %v602, %v603
    %v605 = vand.u32 %v604, 4294901760
    %606 = vmatpush2.msra.mxu0 %v605
    %607 = vmatprep.subr.mxu0 0.0
    %v608 = vand.u32 %v118, 4294901760
    %v609 = vsub.f32 %v118, %v608
    %v610 = vand.u32 %v609, 4294901760
    %v611 = vsub.f32 %v609, %v610
    %v612 = vand.u32 %v611, 4294901760
    %613 = vmatpush2.msra.mxu0 %v612
    %614 = vmatprep.subr.mxu0 0.0
    %v615 = vand.u32 %v117, 4294901760
    %v616 = vsub.f32 %v117, %v615
    %v617 = vand.u32 %v616, 4294901760
    %v618 = vsub.f32 %v616, %v617
    %v619 = vand.u32 %v618, 4294901760
    %620 = vmatpush2.msra.mxu0 %v619
    %621 = vmatprep.subr.mxu0 0.0
    %v622 = vand.u32 %v116, 4294901760
    %v623 = vsub.f32 %v116, %v622
    %v624 = vand.u32 %v623, 4294901760
    %v625 = vsub.f32 %v623, %v624
    %v626 = vand.u32 %v625, 4294901760
    %627 = vmatpush2.msra.mxu0 %v626
    %628 = vmatprep.subr.mxu0 0.0
    %v629 = vand.u32 %v115, 4294901760
    %v630 = vsub.f32 %v115, %v629
    %v631 = vand.u32 %v630, 4294901760
    %v632 = vsub.f32 %v630, %v631
    %v633 = vand.u32 %v632, 4294901760
    %634 = vmatpush2.msra.mxu0 %v633
    %635 = vmatprep.subr.mxu0 0.0
    %v636 = vand.u32 %v114, 4294901760
    %v637 = vsub.f32 %v114, %v636
    %v638 = vand.u32 %v637, 4294901760
    %v639 = vsub.f32 %v637, %v638
    %v640 = vand.u32 %v639, 4294901760
    %641 = vmatpush2.msra.mxu0 %v640
    %642 = vmatprep.subr.mxu0 0.0
    %v643 = vand.u32 %v113, 4294901760
    %v644 = vsub.f32 %v113, %v643
    %v645 = vand.u32 %v644, 4294901760
    %v646 = vsub.f32 %v644, %v645
    %v647 = vand.u32 %v646, 4294901760
    %648 = vmatpush2.msra.mxu0 %v647
    %649 = vmatprep.subr.mxu0 0.0
    %v650 = vand.u32 %v112, 4294901760
    %v651 = vsub.f32 %v112, %v650
    %v652 = vand.u32 %v651, 4294901760
    %v653 = vsub.f32 %v651, %v652
    %v654 = vand.u32 %v653, 4294901760
    %655 = vmatpush2.msra.mxu0 %v654
    %656 = vmatprep.subr.mxu0 0.0
    %v657 = vand.u32 %v111, 4294901760
    %v658 = vsub.f32 %v111, %v657
    %v659 = vand.u32 %v658, 4294901760
    %v660 = vsub.f32 %v658, %v659
    %v661 = vand.u32 %v660, 4294901760
    %662 = vmatpush2.msra.mxu0 %v661
    %663 = vmatprep.subr.mxu0 0.0
    %v664 = vand.u32 %v110, 4294901760
    %v665 = vsub.f32 %v110, %v664
    %v666 = vand.u32 %v665, 4294901760
    %v667 = vsub.f32 %v665, %v666
    %v668 = vand.u32 %v667, 4294901760
    %669 = vmatpush2.msra.mxu0 %v668
    %670 = vmatprep.subr.mxu0 0.0
    %v671 = vand.u32 %v109, 4294901760
    %v672 = vsub.f32 %v109, %v671
    %v673 = vand.u32 %v672, 4294901760
    %v674 = vsub.f32 %v672, %v673
    %v675 = vand.u32 %v674, 4294901760
    %676 = vmatpush2.msra.mxu0 %v675
    %677 = vmatprep.subr.mxu0 0.0
    %v678 = vand.u32 %v108, 4294901760
    %v679 = vsub.f32 %v108, %v678
    %v680 = vand.u32 %v679, 4294901760
    %v681 = vsub.f32 %v679, %v680
    %v682 = vand.u32 %v681, 4294901760
    %683 = vmatpush2.msra.mxu0 %v682
    %v684 = vand.u32 %v44, 4294901760
    %685 = vmatprep.mubr.f32.mxu0 %v684
    %v686 = vand.u32 %v43, 4294901760
    %687 = vmatmul.mubr.f32.gmra.mxu0 %v686
    %v688 = vpop.f32.mrf.mxu0
    %v689 = vadd.f32 %v457, %v688
    %v690 = vpop.f32.mrf.mxu0
    %691 = vdwg.mxu0
    %692 = vmatprep.subr.mxu0 0.0
    %v693 = vand.u32 %v107, 4294901760
    %v694 = vsub.f32 %v107, %v693
    %695 = vmatpush1.msra.mxu0 %v694
    %696 = vmatprep.subr.mxu0 0.0
    %v697 = vand.u32 %v106, 4294901760
    %v698 = vsub.f32 %v106, %v697
    %699 = vmatpush1.msra.mxu0 %v698
    %700 = vmatprep.subr.mxu0 0.0
    %v701 = vand.u32 %v105, 4294901760
    %v702 = vsub.f32 %v105, %v701
    %703 = vmatpush1.msra.mxu0 %v702
    %704 = vmatprep.subr.mxu0 0.0
    %v705 = vand.u32 %v104, 4294901760
    %v706 = vsub.f32 %v104, %v705
    %707 = vmatpush1.msra.mxu0 %v706
    %708 = vmatprep.subr.mxu0 0.0
    %v709 = vand.u32 %v103, 4294901760
    %v710 = vsub.f32 %v103, %v709
    %711 = vmatpush1.msra.mxu0 %v710
    %712 = vmatprep.subr.mxu0 0.0
    %v713 = vand.u32 %v102, 4294901760
    %v714 = vsub.f32 %v102, %v713
    %715 = vmatpush1.msra.mxu0 %v714
    %716 = vmatprep.subr.mxu0 0.0
    %v717 = vand.u32 %v101, 4294901760
    %v718 = vsub.f32 %v101, %v717
    %719 = vmatpush1.msra.mxu0 %v718
    %720 = vmatprep.subr.mxu0 0.0
    %v721 = vand.u32 %v100, 4294901760
    %v722 = vsub.f32 %v100, %v721
    %723 = vmatpush1.msra.mxu0 %v722
    %724 = vmatprep.subr.mxu0 0.0
    %v725 = vand.u32 %v99, 4294901760
    %v726 = vsub.f32 %v99, %v725
    %727 = vmatpush1.msra.mxu0 %v726
    %728 = vmatprep.subr.mxu0 0.0
    %v729 = vand.u32 %v98, 4294901760
    %v730 = vsub.f32 %v98, %v729
    %731 = vmatpush1.msra.mxu0 %v730
    %732 = vmatprep.subr.mxu0 0.0
    %v733 = vand.u32 %v97, 4294901760
    %v734 = vsub.f32 %v97, %v733
    %735 = vmatpush1.msra.mxu0 %v734
    %736 = vmatprep.subr.mxu0 0.0
    %v737 = vand.u32 %v96, 4294901760
    %v738 = vsub.f32 %v96, %v737
    %739 = vmatpush1.msra.mxu0 %v738
    %740 = vmatprep.subr.mxu0 0.0
    %v741 = vand.u32 %v95, 4294901760
    %v742 = vsub.f32 %v95, %v741
    %743 = vmatpush1.msra.mxu0 %v742
    %744 = vmatprep.subr.mxu0 0.0
    %v745 = vand.u32 %v94, 4294901760
    %v746 = vsub.f32 %v94, %v745
    %747 = vmatpush1.msra.mxu0 %v746
    %748 = vmatprep.subr.mxu0 0.0
    %v749 = vand.u32 %v93, 4294901760
    %v750 = vsub.f32 %v93, %v749
    %751 = vmatpush1.msra.mxu0 %v750
    %752 = vmatprep.subr.mxu0 0.0
    %v753 = vand.u32 %v92, 4294901760
    %v754 = vsub.f32 %v92, %v753
    %755 = vmatpush1.msra.mxu0 %v754
    %756 = vmatprep.subr.mxu0 0.0
    %v757 = vand.u32 %v123, 4294901760
    %v758 = vsub.f32 %v123, %v757
    %759 = vmatpush2.msra.mxu0 %v758
    %760 = vmatprep.subr.mxu0 0.0
    %v761 = vand.u32 %v122, 4294901760
    %v762 = vsub.f32 %v122, %v761
    %763 = vmatpush2.msra.mxu0 %v762
    %764 = vmatprep.subr.mxu0 0.0
    %v765 = vand.u32 %v121, 4294901760
    %v766 = vsub.f32 %v121, %v765
    %767 = vmatpush2.msra.mxu0 %v766
    %768 = vmatprep.subr.mxu0 0.0
    %v769 = vand.u32 %v120, 4294901760
    %v770 = vsub.f32 %v120, %v769
    %771 = vmatpush2.msra.mxu0 %v770
    %772 = vmatprep.subr.mxu0 0.0
    %v773 = vand.u32 %v119, 4294901760
    %v774 = vsub.f32 %v119, %v773
    %775 = vmatpush2.msra.mxu0 %v774
    %776 = vmatprep.subr.mxu0 0.0
    %v777 = vand.u32 %v118, 4294901760
    %v778 = vsub.f32 %v118, %v777
    %779 = vmatpush2.msra.mxu0 %v778
    %780 = vmatprep.subr.mxu0 0.0
    %v781 = vand.u32 %v117, 4294901760
    %v782 = vsub.f32 %v117, %v781
    %783 = vmatpush2.msra.mxu0 %v782
    %784 = vmatprep.subr.mxu0 0.0
    %v785 = vand.u32 %v116, 4294901760
    %v786 = vsub.f32 %v116, %v785
    %787 = vmatpush2.msra.mxu0 %v786
    %788 = vmatprep.subr.mxu0 0.0
    %v789 = vand.u32 %v115, 4294901760
    %v790 = vsub.f32 %v115, %v789
    %791 = vmatpush2.msra.mxu0 %v790
    %792 = vmatprep.subr.mxu0 0.0
    %v793 = vand.u32 %v114, 4294901760
    %v794 = vsub.f32 %v114, %v793
    %795 = vmatpush2.msra.mxu0 %v794
    %796 = vmatprep.subr.mxu0 0.0
    %v797 = vand.u32 %v113, 4294901760
    %v798 = vsub.f32 %v113, %v797
    %799 = vmatpush2.msra.mxu0 %v798
    %800 = vmatprep.subr.mxu0 0.0
    %v801 = vand.u32 %v112, 4294901760
    %v802 = vsub.f32 %v112, %v801
    %803 = vmatpush2.msra.mxu0 %v802
    %804 = vmatprep.subr.mxu0 0.0
    %v805 = vand.u32 %v111, 4294901760
    %v806 = vsub.f32 %v111, %v805
    %807 = vmatpush2.msra.mxu0 %v806
    %808 = vmatprep.subr.mxu0 0.0
    %v809 = vand.u32 %v110, 4294901760
    %v810 = vsub.f32 %v110, %v809
    %811 = vmatpush2.msra.mxu0 %v810
    %812 = vmatprep.subr.mxu0 0.0
    %v813 = vand.u32 %v109, 4294901760
    %v814 = vsub.f32 %v109, %v813
    %815 = vmatpush2.msra.mxu0 %v814
    %816 = vmatprep.subr.mxu0 0.0
    %v817 = vand.u32 %v108, 4294901760
    %v818 = vsub.f32 %v108, %v817
    %819 = vmatpush2.msra.mxu0 %v818
    %v820 = vand.u32 %v44, 4294901760
    %v821 = vsub.f32 %v44, %v820
    %822 = vmatprep.mubr.f32.mxu0 %v821
    %v823 = vand.u32 %v43, 4294901760
    %v824 = vsub.f32 %v43, %v823
    %825 = vmatmul.mubr.f32.gmra.mxu0 %v824
    %v826 = vpop.f32.mrf.mxu0
    %v827 = vadd.f32 %v689, %v826
    %v828 = vpop.f32.mrf.mxu0
    %829 = vdwg.mxu0
    %830 = vmatprep.subr.mxu0 0.0
    %v831 = vand.u32 %v107, 4294901760
    %832 = vmatpush1.msra.mxu0 %v831
    %833 = vmatprep.subr.mxu0 0.0
    %v834 = vand.u32 %v106, 4294901760
    %835 = vmatpush1.msra.mxu0 %v834
    %836 = vmatprep.subr.mxu0 0.0
    %v837 = vand.u32 %v105, 4294901760
    %838 = vmatpush1.msra.mxu0 %v837
    %839 = vmatprep.subr.mxu0 0.0
    %v840 = vand.u32 %v104, 4294901760
    %841 = vmatpush1.msra.mxu0 %v840
    %842 = vmatprep.subr.mxu0 0.0
    %v843 = vand.u32 %v103, 4294901760
    %844 = vmatpush1.msra.mxu0 %v843
    %845 = vmatprep.subr.mxu0 0.0
    %v846 = vand.u32 %v102, 4294901760
    %847 = vmatpush1.msra.mxu0 %v846
    %848 = vmatprep.subr.mxu0 0.0
    %v849 = vand.u32 %v101, 4294901760
    %850 = vmatpush1.msra.mxu0 %v849
    %851 = vmatprep.subr.mxu0 0.0
    %v852 = vand.u32 %v100, 4294901760
    %853 = vmatpush1.msra.mxu0 %v852
    %854 = vmatprep.subr.mxu0 0.0
    %v855 = vand.u32 %v99, 4294901760
    %856 = vmatpush1.msra.mxu0 %v855
    %857 = vmatprep.subr.mxu0 0.0
    %v858 = vand.u32 %v98, 4294901760
    %859 = vmatpush1.msra.mxu0 %v858
    %860 = vmatprep.subr.mxu0 0.0
    %v861 = vand.u32 %v97, 4294901760
    %862 = vmatpush1.msra.mxu0 %v861
    %863 = vmatprep.subr.mxu0 0.0
    %v864 = vand.u32 %v96, 4294901760
    %865 = vmatpush1.msra.mxu0 %v864
    %866 = vmatprep.subr.mxu0 0.0
    %v867 = vand.u32 %v95, 4294901760
    %868 = vmatpush1.msra.mxu0 %v867
    %869 = vmatprep.subr.mxu0 0.0
    %v870 = vand.u32 %v94, 4294901760
    %871 = vmatpush1.msra.mxu0 %v870
    %872 = vmatprep.subr.mxu0 0.0
    %v873 = vand.u32 %v93, 4294901760
    %874 = vmatpush1.msra.mxu0 %v873
    %875 = vmatprep.subr.mxu0 0.0
    %v876 = vand.u32 %v92, 4294901760
    %877 = vmatpush1.msra.mxu0 %v876
    %878 = vmatprep.subr.mxu0 0.0
    %v879 = vand.u32 %v123, 4294901760
    %880 = vmatpush2.msra.mxu0 %v879
    %881 = vmatprep.subr.mxu0 0.0
    %v882 = vand.u32 %v122, 4294901760
    %883 = vmatpush2.msra.mxu0 %v882
    %884 = vmatprep.subr.mxu0 0.0
    %v885 = vand.u32 %v121, 4294901760
    %886 = vmatpush2.msra.mxu0 %v885
    %887 = vmatprep.subr.mxu0 0.0
    %v888 = vand.u32 %v120, 4294901760
    %889 = vmatpush2.msra.mxu0 %v888
    %890 = vmatprep.subr.mxu0 0.0
    %v891 = vand.u32 %v119, 4294901760
    %892 = vmatpush2.msra.mxu0 %v891
    %893 = vmatprep.subr.mxu0 0.0
    %v894 = vand.u32 %v118, 4294901760
    %895 = vmatpush2.msra.mxu0 %v894
    %896 = vmatprep.subr.mxu0 0.0
    %v897 = vand.u32 %v117, 4294901760
    %898 = vmatpush2.msra.mxu0 %v897
    %899 = vmatprep.subr.mxu0 0.0
    %v900 = vand.u32 %v116, 4294901760
    %901 = vmatpush2.msra.mxu0 %v900
    %902 = vmatprep.subr.mxu0 0.0
    %v903 = vand.u32 %v115, 4294901760
    %904 = vmatpush2.msra.mxu0 %v903
    %905 = vmatprep.subr.mxu0 0.0
    %v906 = vand.u32 %v114, 4294901760
    %907 = vmatpush2.msra.mxu0 %v906
    %908 = vmatprep.subr.mxu0 0.0
    %v909 = vand.u32 %v113, 4294901760
    %910 = vmatpush2.msra.mxu0 %v909
    %911 = vmatprep.subr.mxu0 0.0
    %v912 = vand.u32 %v112, 4294901760
    %913 = vmatpush2.msra.mxu0 %v912
    %914 = vmatprep.subr.mxu0 0.0
    %v915 = vand.u32 %v111, 4294901760
    %916 = vmatpush2.msra.mxu0 %v915
    %917 = vmatprep.subr.mxu0 0.0
    %v918 = vand.u32 %v110, 4294901760
    %919 = vmatpush2.msra.mxu0 %v918
    %920 = vmatprep.subr.mxu0 0.0
    %v921 = vand.u32 %v109, 4294901760
    %922 = vmatpush2.msra.mxu0 %v921
    %923 = vmatprep.subr.mxu0 0.0
    %v924 = vand.u32 %v108, 4294901760
    %925 = vmatpush2.msra.mxu0 %v924
    %v926 = vand.u32 %v44, 4294901760
    %v927 = vsub.f32 %v44, %v926
    %v928 = vand.u32 %v927, 4294901760
    %929 = vmatprep.mubr.f32.mxu0 %v928
    %v930 = vand.u32 %v43, 4294901760
    %v931 = vsub.f32 %v43, %v930
    %v932 = vand.u32 %v931, 4294901760
    %933 = vmatmul.mubr.f32.gmra.mxu0 %v932
    %v934 = vpop.f32.mrf.mxu0
    %v935 = vadd.f32 %v827, %v934
    %v936 = vpop.f32.mrf.mxu0
    %937 = vdwg.mxu0
    %938 = vmatprep.subr.mxu0 0.0
    %v939 = vand.u32 %v107, 4294901760
    %v940 = vsub.f32 %v107, %v939
    %v941 = vand.u32 %v940, 4294901760
    %942 = vmatpush1.msra.mxu0 %v941
    %943 = vmatprep.subr.mxu0 0.0
    %v944 = vand.u32 %v106, 4294901760
    %v945 = vsub.f32 %v106, %v944
    %v946 = vand.u32 %v945, 4294901760
    %947 = vmatpush1.msra.mxu0 %v946
    %948 = vmatprep.subr.mxu0 0.0
    %v949 = vand.u32 %v105, 4294901760
    %v950 = vsub.f32 %v105, %v949
    %v951 = vand.u32 %v950, 4294901760
    %952 = vmatpush1.msra.mxu0 %v951
    %953 = vmatprep.subr.mxu0 0.0
    %v954 = vand.u32 %v104, 4294901760
    %v955 = vsub.f32 %v104, %v954
    %v956 = vand.u32 %v955, 4294901760
    %957 = vmatpush1.msra.mxu0 %v956
    %958 = vmatprep.subr.mxu0 0.0
    %v959 = vand.u32 %v103, 4294901760
    %v960 = vsub.f32 %v103, %v959
    %v961 = vand.u32 %v960, 4294901760
    %962 = vmatpush1.msra.mxu0 %v961
    %963 = vmatprep.subr.mxu0 0.0
    %v964 = vand.u32 %v102, 4294901760
    %v965 = vsub.f32 %v102, %v964
    %v966 = vand.u32 %v965, 4294901760
    %967 = vmatpush1.msra.mxu0 %v966
    %968 = vmatprep.subr.mxu0 0.0
    %v969 = vand.u32 %v101, 4294901760
    %v970 = vsub.f32 %v101, %v969
    %v971 = vand.u32 %v970, 4294901760
    %972 = vmatpush1.msra.mxu0 %v971
    %973 = vmatprep.subr.mxu0 0.0
    %v974 = vand.u32 %v100, 4294901760
    %v975 = vsub.f32 %v100, %v974
    %v976 = vand.u32 %v975, 4294901760
    %977 = vmatpush1.msra.mxu0 %v976
    %978 = vmatprep.subr.mxu0 0.0
    %v979 = vand.u32 %v99, 4294901760
    %v980 = vsub.f32 %v99, %v979
    %v981 = vand.u32 %v980, 4294901760
    %982 = vmatpush1.msra.mxu0 %v981
    %983 = vmatprep.subr.mxu0 0.0
    %v984 = vand.u32 %v98, 4294901760
    %v985 = vsub.f32 %v98, %v984
    %v986 = vand.u32 %v985, 4294901760
    %987 = vmatpush1.msra.mxu0 %v986
    %988 = vmatprep.subr.mxu0 0.0
    %v989 = vand.u32 %v97, 4294901760
    %v990 = vsub.f32 %v97, %v989
    %v991 = vand.u32 %v990, 4294901760
    %992 = vmatpush1.msra.mxu0 %v991
    %993 = vmatprep.subr.mxu0 0.0
    %v994 = vand.u32 %v96, 4294901760
    %v995 = vsub.f32 %v96, %v994
    %v996 = vand.u32 %v995, 4294901760
    %997 = vmatpush1.msra.mxu0 %v996
    %998 = vmatprep.subr.mxu0 0.0
    %v999 = vand.u32 %v95, 4294901760
    %v1000 = vsub.f32 %v95, %v999
    %v1001 = vand.u32 %v1000, 4294901760
    %1002 = vmatpush1.msra.mxu0 %v1001
    %1003 = vmatprep.subr.mxu0 0.0
    %v1004 = vand.u32 %v94, 4294901760
    %v1005 = vsub.f32 %v94, %v1004
    %v1006 = vand.u32 %v1005, 4294901760
    %1007 = vmatpush1.msra.mxu0 %v1006
    %1008 = vmatprep.subr.mxu0 0.0
    %v1009 = vand.u32 %v93, 4294901760
    %v1010 = vsub.f32 %v93, %v1009
    %v1011 = vand.u32 %v1010, 4294901760
    %1012 = vmatpush1.msra.mxu0 %v1011
    %1013 = vmatprep.subr.mxu0 0.0
    %v1014 = vand.u32 %v92, 4294901760
    %v1015 = vsub.f32 %v92, %v1014
    %v1016 = vand.u32 %v1015, 4294901760
    %1017 = vmatpush1.msra.mxu0 %v1016
    %1018 = vmatprep.subr.mxu0 0.0
    %v1019 = vand.u32 %v123, 4294901760
    %v1020 = vsub.f32 %v123, %v1019
    %v1021 = vand.u32 %v1020, 4294901760
    %1022 = vmatpush2.msra.mxu0 %v1021
    %1023 = vmatprep.subr.mxu0 0.0
    %v1024 = vand.u32 %v122, 4294901760
    %v1025 = vsub.f32 %v122, %v1024
    %v1026 = vand.u32 %v1025, 4294901760
    %1027 = vmatpush2.msra.mxu0 %v1026
    %1028 = vmatprep.subr.mxu0 0.0
    %v1029 = vand.u32 %v121, 4294901760
    %v1030 = vsub.f32 %v121, %v1029
    %v1031 = vand.u32 %v1030, 4294901760
    %1032 = vmatpush2.msra.mxu0 %v1031
    %1033 = vmatprep.subr.mxu0 0.0
    %v1034 = vand.u32 %v120, 4294901760
    %v1035 = vsub.f32 %v120, %v1034
    %v1036 = vand.u32 %v1035, 4294901760
    %1037 = vmatpush2.msra.mxu0 %v1036
    %1038 = vmatprep.subr.mxu0 0.0
    %v1039 = vand.u32 %v119, 4294901760
    %v1040 = vsub.f32 %v119, %v1039
    %v1041 = vand.u32 %v1040, 4294901760
    %1042 = vmatpush2.msra.mxu0 %v1041
    %1043 = vmatprep.subr.mxu0 0.0
    %v1044 = vand.u32 %v118, 4294901760
    %v1045 = vsub.f32 %v118, %v1044
    %v1046 = vand.u32 %v1045, 4294901760
    %1047 = vmatpush2.msra.mxu0 %v1046
    %1048 = vmatprep.subr.mxu0 0.0
    %v1049 = vand.u32 %v117, 4294901760
    %v1050 = vsub.f32 %v117, %v1049
    %v1051 = vand.u32 %v1050, 4294901760
    %1052 = vmatpush2.msra.mxu0 %v1051
    %1053 = vmatprep.subr.mxu0 0.0
    %v1054 = vand.u32 %v116, 4294901760
    %v1055 = vsub.f32 %v116, %v1054
    %v1056 = vand.u32 %v1055, 4294901760
    %1057 = vmatpush2.msra.mxu0 %v1056
    %1058 = vmatprep.subr.mxu0 0.0
    %v1059 = vand.u32 %v115, 4294901760
    %v1060 = vsub.f32 %v115, %v1059
    %v1061 = vand.u32 %v1060, 4294901760
    %1062 = vmatpush2.msra.mxu0 %v1061
    %1063 = vmatprep.subr.mxu0 0.0
    %v1064 = vand.u32 %v114, 4294901760
    %v1065 = vsub.f32 %v114, %v1064
    %v1066 = vand.u32 %v1065, 4294901760
    %1067 = vmatpush2.msra.mxu0 %v1066
    %1068 = vmatprep.subr.mxu0 0.0
    %v1069 = vand.u32 %v113, 4294901760
    %v1070 = vsub.f32 %v113, %v1069
    %v1071 = vand.u32 %v1070, 4294901760
    %1072 = vmatpush2.msra.mxu0 %v1071
    %1073 = vmatprep.subr.mxu0 0.0
    %v1074 = vand.u32 %v112, 4294901760
    %v1075 = vsub.f32 %v112, %v1074
    %v1076 = vand.u32 %v1075, 4294901760
    %1077 = vmatpush2.msra.mxu0 %v1076
    %1078 = vmatprep.subr.mxu0 0.0
    %v1079 = vand.u32 %v111, 4294901760
    %v1080 = vsub.f32 %v111, %v1079
    %v1081 = vand.u32 %v1080, 4294901760
    %1082 = vmatpush2.msra.mxu0 %v1081
    %1083 = vmatprep.subr.mxu0 0.0
    %v1084 = vand.u32 %v110, 4294901760
    %v1085 = vsub.f32 %v110, %v1084
    %v1086 = vand.u32 %v1085, 4294901760
    %1087 = vmatpush2.msra.mxu0 %v1086
    %1088 = vmatprep.subr.mxu0 0.0
    %v1089 = vand.u32 %v109, 4294901760
    %v1090 = vsub.f32 %v109, %v1089
    %v1091 = vand.u32 %v1090, 4294901760
    %1092 = vmatpush2.msra.mxu0 %v1091
    %1093 = vmatprep.subr.mxu0 0.0
    %v1094 = vand.u32 %v108, 4294901760
    %v1095 = vsub.f32 %v108, %v1094
    %v1096 = vand.u32 %v1095, 4294901760
    %1097 = vmatpush2.msra.mxu0 %v1096
    %v1098 = vand.u32 %v44, 4294901760
    %1099 = vmatprep.mubr.f32.mxu0 %v1098
    %v1100 = vand.u32 %v43, 4294901760
    %1101 = vmatmul.mubr.f32.gmra.mxu0 %v1100
    %v1102 = vpop.f32.mrf.mxu0
    %v1103 = vadd.f32 %v935, %v1102
    %v1104 = vpop.f32.mrf.mxu0
    %1105 = vdwg.mxu0
    %1106 = vmatprep.subr.mxu0 0.0
    %v1107 = vand.u32 %v107, 4294901760
    %1108 = vmatpush1.msra.mxu0 %v1107
    %1109 = vmatprep.subr.mxu0 0.0
    %v1110 = vand.u32 %v106, 4294901760
    %1111 = vmatpush1.msra.mxu0 %v1110
    %1112 = vmatprep.subr.mxu0 0.0
    %v1113 = vand.u32 %v105, 4294901760
    %1114 = vmatpush1.msra.mxu0 %v1113
    %1115 = vmatprep.subr.mxu0 0.0
    %v1116 = vand.u32 %v104, 4294901760
    %1117 = vmatpush1.msra.mxu0 %v1116
    %1118 = vmatprep.subr.mxu0 0.0
    %v1119 = vand.u32 %v103, 4294901760
    %1120 = vmatpush1.msra.mxu0 %v1119
    %1121 = vmatprep.subr.mxu0 0.0
    %v1122 = vand.u32 %v102, 4294901760
    %1123 = vmatpush1.msra.mxu0 %v1122
    %1124 = vmatprep.subr.mxu0 0.0
    %v1125 = vand.u32 %v101, 4294901760
    %1126 = vmatpush1.msra.mxu0 %v1125
    %1127 = vmatprep.subr.mxu0 0.0
    %v1128 = vand.u32 %v100, 4294901760
    %1129 = vmatpush1.msra.mxu0 %v1128
    %1130 = vmatprep.subr.mxu0 0.0
    %v1131 = vand.u32 %v99, 4294901760
    %1132 = vmatpush1.msra.mxu0 %v1131
    %1133 = vmatprep.subr.mxu0 0.0
    %v1134 = vand.u32 %v98, 4294901760
    %1135 = vmatpush1.msra.mxu0 %v1134
    %1136 = vmatprep.subr.mxu0 0.0
    %v1137 = vand.u32 %v97, 4294901760
    %1138 = vmatpush1.msra.mxu0 %v1137
    %1139 = vmatprep.subr.mxu0 0.0
    %v1140 = vand.u32 %v96, 4294901760
    %1141 = vmatpush1.msra.mxu0 %v1140
    %1142 = vmatprep.subr.mxu0 0.0
    %v1143 = vand.u32 %v95, 4294901760
    %1144 = vmatpush1.msra.mxu0 %v1143
    %1145 = vmatprep.subr.mxu0 0.0
    %v1146 = vand.u32 %v94, 4294901760
    %1147 = vmatpush1.msra.mxu0 %v1146
    %1148 = vmatprep.subr.mxu0 0.0
    %v1149 = vand.u32 %v93, 4294901760
    %1150 = vmatpush1.msra.mxu0 %v1149
    %1151 = vmatprep.subr.mxu0 0.0
    %v1152 = vand.u32 %v92, 4294901760
    %1153 = vmatpush1.msra.mxu0 %v1152
    %1154 = vmatprep.subr.mxu0 0.0
    %v1155 = vand.u32 %v123, 4294901760
    %1156 = vmatpush2.msra.mxu0 %v1155
    %1157 = vmatprep.subr.mxu0 0.0
    %v1158 = vand.u32 %v122, 4294901760
    %1159 = vmatpush2.msra.mxu0 %v1158
    %1160 = vmatprep.subr.mxu0 0.0
    %v1161 = vand.u32 %v121, 4294901760
    %1162 = vmatpush2.msra.mxu0 %v1161
    %1163 = vmatprep.subr.mxu0 0.0
    %v1164 = vand.u32 %v120, 4294901760
    %1165 = vmatpush2.msra.mxu0 %v1164
    %1166 = vmatprep.subr.mxu0 0.0
    %v1167 = vand.u32 %v119, 4294901760
    %1168 = vmatpush2.msra.mxu0 %v1167
    %1169 = vmatprep.subr.mxu0 0.0
    %v1170 = vand.u32 %v118, 4294901760
    %1171 = vmatpush2.msra.mxu0 %v1170
    %1172 = vmatprep.subr.mxu0 0.0
    %v1173 = vand.u32 %v117, 4294901760
    %1174 = vmatpush2.msra.mxu0 %v1173
    %1175 = vmatprep.subr.mxu0 0.0
    %v1176 = vand.u32 %v116, 4294901760
    %1177 = vmatpush2.msra.mxu0 %v1176
    %1178 = vmatprep.subr.mxu0 0.0
    %v1179 = vand.u32 %v115, 4294901760
    %1180 = vmatpush2.msra.mxu0 %v1179
    %1181 = vmatprep.subr.mxu0 0.0
    %v1182 = vand.u32 %v114, 4294901760
    %1183 = vmatpush2.msra.mxu0 %v1182
    %1184 = vmatprep.subr.mxu0 0.0
    %v1185 = vand.u32 %v113, 4294901760
    %1186 = vmatpush2.msra.mxu0 %v1185
    %1187 = vmatprep.subr.mxu0 0.0
    %v1188 = vand.u32 %v112, 4294901760
    %1189 = vmatpush2.msra.mxu0 %v1188
    %1190 = vmatprep.subr.mxu0 0.0
    %v1191 = vand.u32 %v111, 4294901760
    %1192 = vmatpush2.msra.mxu0 %v1191
    %1193 = vmatprep.subr.mxu0 0.0
    %v1194 = vand.u32 %v110, 4294901760
    %1195 = vmatpush2.msra.mxu0 %v1194
    %1196 = vmatprep.subr.mxu0 0.0
    %v1197 = vand.u32 %v109, 4294901760
    %1198 = vmatpush2.msra.mxu0 %v1197
    %1199 = vmatprep.subr.mxu0 0.0
    %v1200 = vand.u32 %v108, 4294901760
    %1201 = vmatpush2.msra.mxu0 %v1200
    %v1202 = vand.u32 %v44, 4294901760
    %1203 = vmatprep.mubr.f32.mxu0 %v1202
    %v1204 = vand.u32 %v43, 4294901760
    %1205 = vmatmul.mubr.f32.gmra.mxu0 %v1204
    %v1206 = vpop.f32.mrf.mxu0
    %v1207 = vadd.f32 %v1103, %v1206
    %v1208 = vpop.f32.mrf.mxu0
    %1209 = vdwg.mxu0
    %1210 = vmatprep.subr.mxu0 0.0
    %v1211 = vand.u32 %v139, 4294901760
    %1212 = vmatpush1.msra.mxu0 %v1211
    %1213 = vmatprep.subr.mxu0 0.0
    %v1214 = vand.u32 %v138, 4294901760
    %1215 = vmatpush1.msra.mxu0 %v1214
    %1216 = vmatprep.subr.mxu0 0.0
    %v1217 = vand.u32 %v137, 4294901760
    %1218 = vmatpush1.msra.mxu0 %v1217
    %1219 = vmatprep.subr.mxu0 0.0
    %v1220 = vand.u32 %v136, 4294901760
    %1221 = vmatpush1.msra.mxu0 %v1220
    %1222 = vmatprep.subr.mxu0 0.0
    %v1223 = vand.u32 %v135, 4294901760
    %1224 = vmatpush1.msra.mxu0 %v1223
    %1225 = vmatprep.subr.mxu0 0.0
    %v1226 = vand.u32 %v134, 4294901760
    %1227 = vmatpush1.msra.mxu0 %v1226
    %1228 = vmatprep.subr.mxu0 0.0
    %v1229 = vand.u32 %v133, 4294901760
    %1230 = vmatpush1.msra.mxu0 %v1229
    %1231 = vmatprep.subr.mxu0 0.0
    %v1232 = vand.u32 %v132, 4294901760
    %1233 = vmatpush1.msra.mxu0 %v1232
    %1234 = vmatprep.subr.mxu0 0.0
    %v1235 = vand.u32 %v131, 4294901760
    %1236 = vmatpush1.msra.mxu0 %v1235
    %1237 = vmatprep.subr.mxu0 0.0
    %v1238 = vand.u32 %v130, 4294901760
    %1239 = vmatpush1.msra.mxu0 %v1238
    %1240 = vmatprep.subr.mxu0 0.0
    %v1241 = vand.u32 %v129, 4294901760
    %1242 = vmatpush1.msra.mxu0 %v1241
    %1243 = vmatprep.subr.mxu0 0.0
    %v1244 = vand.u32 %v128, 4294901760
    %1245 = vmatpush1.msra.mxu0 %v1244
    %1246 = vmatprep.subr.mxu0 0.0
    %v1247 = vand.u32 %v127, 4294901760
    %1248 = vmatpush1.msra.mxu0 %v1247
    %1249 = vmatprep.subr.mxu0 0.0
    %v1250 = vand.u32 %v126, 4294901760
    %1251 = vmatpush1.msra.mxu0 %v1250
    %1252 = vmatprep.subr.mxu0 0.0
    %v1253 = vand.u32 %v125, 4294901760
    %1254 = vmatpush1.msra.mxu0 %v1253
    %1255 = vmatprep.subr.mxu0 0.0
    %v1256 = vand.u32 %v124, 4294901760
    %1257 = vmatpush1.msra.mxu0 %v1256
    %1258 = vmatprep.subr.mxu0 0.0
    %v1259 = vand.u32 %v155, 4294901760
    %1260 = vmatpush2.msra.mxu0 %v1259
    %1261 = vmatprep.subr.mxu0 0.0
    %v1262 = vand.u32 %v154, 4294901760
    %1263 = vmatpush2.msra.mxu0 %v1262
    %1264 = vmatprep.subr.mxu0 0.0
    %v1265 = vand.u32 %v153, 4294901760
    %1266 = vmatpush2.msra.mxu0 %v1265
    %1267 = vmatprep.subr.mxu0 0.0
    %v1268 = vand.u32 %v152, 4294901760
    %1269 = vmatpush2.msra.mxu0 %v1268
    %1270 = vmatprep.subr.mxu0 0.0
    %v1271 = vand.u32 %v151, 4294901760
    %1272 = vmatpush2.msra.mxu0 %v1271
    %1273 = vmatprep.subr.mxu0 0.0
    %v1274 = vand.u32 %v150, 4294901760
    %1275 = vmatpush2.msra.mxu0 %v1274
    %1276 = vmatprep.subr.mxu0 0.0
    %v1277 = vand.u32 %v149, 4294901760
    %1278 = vmatpush2.msra.mxu0 %v1277
    %1279 = vmatprep.subr.mxu0 0.0
    %v1280 = vand.u32 %v148, 4294901760
    %1281 = vmatpush2.msra.mxu0 %v1280
    %1282 = vmatprep.subr.mxu0 0.0
    %v1283 = vand.u32 %v147, 4294901760
    %1284 = vmatpush2.msra.mxu0 %v1283
    %1285 = vmatprep.subr.mxu0 0.0
    %v1286 = vand.u32 %v146, 4294901760
    %1287 = vmatpush2.msra.mxu0 %v1286
    %1288 = vmatprep.subr.mxu0 0.0
    %v1289 = vand.u32 %v145, 4294901760
    %1290 = vmatpush2.msra.mxu0 %v1289
    %1291 = vmatprep.subr.mxu0 0.0
    %v1292 = vand.u32 %v144, 4294901760
    %1293 = vmatpush2.msra.mxu0 %v1292
    %1294 = vmatprep.subr.mxu0 0.0
    %v1295 = vand.u32 %v143, 4294901760
    %1296 = vmatpush2.msra.mxu0 %v1295
    %1297 = vmatprep.subr.mxu0 0.0
    %v1298 = vand.u32 %v142, 4294901760
    %1299 = vmatpush2.msra.mxu0 %v1298
    %1300 = vmatprep.subr.mxu0 0.0
    %v1301 = vand.u32 %v141, 4294901760
    %1302 = vmatpush2.msra.mxu0 %v1301
    %1303 = vmatprep.subr.mxu0 0.0
    %v1304 = vand.u32 %v140, 4294901760
    %1305 = vmatpush2.msra.mxu0 %v1304
    %v1306 = vand.u32 %v46, 4294901760
    %v1307 = vsub.f32 %v46, %v1306
    %v1308 = vand.u32 %v1307, 4294901760
    %v1309 = vsub.f32 %v1307, %v1308
    %v1310 = vand.u32 %v1309, 4294901760
    %1311 = vmatprep.mubr.f32.mxu0 %v1310
    %v1312 = vand.u32 %v45, 4294901760
    %v1313 = vsub.f32 %v45, %v1312
    %v1314 = vand.u32 %v1313, 4294901760
    %v1315 = vsub.f32 %v1313, %v1314
    %v1316 = vand.u32 %v1315, 4294901760
    %1317 = vmatmul.mubr.f32.gmra.mxu0 %v1316
    %v1318 = vpop.f32.mrf.mxu0
    %v1319 = vadd.f32 %v1207, %v1318
    %v1320 = vpop.f32.mrf.mxu0
    %1321 = vdwg.mxu0
    %1322 = vmatprep.subr.mxu0 0.0
    %v1323 = vand.u32 %v139, 4294901760
    %v1324 = vsub.f32 %v139, %v1323
    %v1325 = vand.u32 %v1324, 4294901760
    %v1326 = vsub.f32 %v1324, %v1325
    %v1327 = vand.u32 %v1326, 4294901760
    %1328 = vmatpush1.msra.mxu0 %v1327
    %1329 = vmatprep.subr.mxu0 0.0
    %v1330 = vand.u32 %v138, 4294901760
    %v1331 = vsub.f32 %v138, %v1330
    %v1332 = vand.u32 %v1331, 4294901760
    %v1333 = vsub.f32 %v1331, %v1332
    %v1334 = vand.u32 %v1333, 4294901760
    %1335 = vmatpush1.msra.mxu0 %v1334
    %1336 = vmatprep.subr.mxu0 0.0
    %v1337 = vand.u32 %v137, 4294901760
    %v1338 = vsub.f32 %v137, %v1337
    %v1339 = vand.u32 %v1338, 4294901760
    %v1340 = vsub.f32 %v1338, %v1339
    %v1341 = vand.u32 %v1340, 4294901760
    %1342 = vmatpush1.msra.mxu0 %v1341
    %1343 = vmatprep.subr.mxu0 0.0
    %v1344 = vand.u32 %v136, 4294901760
    %v1345 = vsub.f32 %v136, %v1344
    %v1346 = vand.u32 %v1345, 4294901760
    %v1347 = vsub.f32 %v1345, %v1346
    %v1348 = vand.u32 %v1347, 4294901760
    %1349 = vmatpush1.msra.mxu0 %v1348
    %1350 = vmatprep.subr.mxu0 0.0
    %v1351 = vand.u32 %v135, 4294901760
    %v1352 = vsub.f32 %v135, %v1351
    %v1353 = vand.u32 %v1352, 4294901760
    %v1354 = vsub.f32 %v1352, %v1353
    %v1355 = vand.u32 %v1354, 4294901760
    %1356 = vmatpush1.msra.mxu0 %v1355
    %1357 = vmatprep.subr.mxu0 0.0
    %v1358 = vand.u32 %v134, 4294901760
    %v1359 = vsub.f32 %v134, %v1358
    %v1360 = vand.u32 %v1359, 4294901760
    %v1361 = vsub.f32 %v1359, %v1360
    %v1362 = vand.u32 %v1361, 4294901760
    %1363 = vmatpush1.msra.mxu0 %v1362
    %1364 = vmatprep.subr.mxu0 0.0
    %v1365 = vand.u32 %v133, 4294901760
    %v1366 = vsub.f32 %v133, %v1365
    %v1367 = vand.u32 %v1366, 4294901760
    %v1368 = vsub.f32 %v1366, %v1367
    %v1369 = vand.u32 %v1368, 4294901760
    %1370 = vmatpush1.msra.mxu0 %v1369
    %1371 = vmatprep.subr.mxu0 0.0
    %v1372 = vand.u32 %v132, 4294901760
    %v1373 = vsub.f32 %v132, %v1372
    %v1374 = vand.u32 %v1373, 4294901760
    %v1375 = vsub.f32 %v1373, %v1374
    %v1376 = vand.u32 %v1375, 4294901760
    %1377 = vmatpush1.msra.mxu0 %v1376
    %1378 = vmatprep.subr.mxu0 0.0
    %v1379 = vand.u32 %v131, 4294901760
    %v1380 = vsub.f32 %v131, %v1379
    %v1381 = vand.u32 %v1380, 4294901760
    %v1382 = vsub.f32 %v1380, %v1381
    %v1383 = vand.u32 %v1382, 4294901760
    %1384 = vmatpush1.msra.mxu0 %v1383
    %1385 = vmatprep.subr.mxu0 0.0
    %v1386 = vand.u32 %v130, 4294901760
    %v1387 = vsub.f32 %v130, %v1386
    %v1388 = vand.u32 %v1387, 4294901760
    %v1389 = vsub.f32 %v1387, %v1388
    %v1390 = vand.u32 %v1389, 4294901760
    %1391 = vmatpush1.msra.mxu0 %v1390
    %1392 = vmatprep.subr.mxu0 0.0
    %v1393 = vand.u32 %v129, 4294901760
    %v1394 = vsub.f32 %v129, %v1393
    %v1395 = vand.u32 %v1394, 4294901760
    %v1396 = vsub.f32 %v1394, %v1395
    %v1397 = vand.u32 %v1396, 4294901760
    %1398 = vmatpush1.msra.mxu0 %v1397
    %1399 = vmatprep.subr.mxu0 0.0
    %v1400 = vand.u32 %v128, 4294901760
    %v1401 = vsub.f32 %v128, %v1400
    %v1402 = vand.u32 %v1401, 4294901760
    %v1403 = vsub.f32 %v1401, %v1402
    %v1404 = vand.u32 %v1403, 4294901760
    %1405 = vmatpush1.msra.mxu0 %v1404
    %1406 = vmatprep.subr.mxu0 0.0
    %v1407 = vand.u32 %v127, 4294901760
    %v1408 = vsub.f32 %v127, %v1407
    %v1409 = vand.u32 %v1408, 4294901760
    %v1410 = vsub.f32 %v1408, %v1409
    %v1411 = vand.u32 %v1410, 4294901760
    %1412 = vmatpush1.msra.mxu0 %v1411
    %1413 = vmatprep.subr.mxu0 0.0
    %v1414 = vand.u32 %v126, 4294901760
    %v1415 = vsub.f32 %v126, %v1414
    %v1416 = vand.u32 %v1415, 4294901760
    %v1417 = vsub.f32 %v1415, %v1416
    %v1418 = vand.u32 %v1417, 4294901760
    %1419 = vmatpush1.msra.mxu0 %v1418
    %1420 = vmatprep.subr.mxu0 0.0
    %v1421 = vand.u32 %v125, 4294901760
    %v1422 = vsub.f32 %v125, %v1421
    %v1423 = vand.u32 %v1422, 4294901760
    %v1424 = vsub.f32 %v1422, %v1423
    %v1425 = vand.u32 %v1424, 4294901760
    %1426 = vmatpush1.msra.mxu0 %v1425
    %1427 = vmatprep.subr.mxu0 0.0
    %v1428 = vand.u32 %v124, 4294901760
    %v1429 = vsub.f32 %v124, %v1428
    %v1430 = vand.u32 %v1429, 4294901760
    %v1431 = vsub.f32 %v1429, %v1430
    %v1432 = vand.u32 %v1431, 4294901760
    %1433 = vmatpush1.msra.mxu0 %v1432
    %1434 = vmatprep.subr.mxu0 0.0
    %v1435 = vand.u32 %v155, 4294901760
    %v1436 = vsub.f32 %v155, %v1435
    %v1437 = vand.u32 %v1436, 4294901760
    %v1438 = vsub.f32 %v1436, %v1437
    %v1439 = vand.u32 %v1438, 4294901760
    %1440 = vmatpush2.msra.mxu0 %v1439
    %1441 = vmatprep.subr.mxu0 0.0
    %v1442 = vand.u32 %v154, 4294901760
    %v1443 = vsub.f32 %v154, %v1442
    %v1444 = vand.u32 %v1443, 4294901760
    %v1445 = vsub.f32 %v1443, %v1444
    %v1446 = vand.u32 %v1445, 4294901760
    %1447 = vmatpush2.msra.mxu0 %v1446
    %1448 = vmatprep.subr.mxu0 0.0
    %v1449 = vand.u32 %v153, 4294901760
    %v1450 = vsub.f32 %v153, %v1449
    %v1451 = vand.u32 %v1450, 4294901760
    %v1452 = vsub.f32 %v1450, %v1451
    %v1453 = vand.u32 %v1452, 4294901760
    %1454 = vmatpush2.msra.mxu0 %v1453
    %1455 = vmatprep.subr.mxu0 0.0
    %v1456 = vand.u32 %v152, 4294901760
    %v1457 = vsub.f32 %v152, %v1456
    %v1458 = vand.u32 %v1457, 4294901760
    %v1459 = vsub.f32 %v1457, %v1458
    %v1460 = vand.u32 %v1459, 4294901760
    %1461 = vmatpush2.msra.mxu0 %v1460
    %1462 = vmatprep.subr.mxu0 0.0
    %v1463 = vand.u32 %v151, 4294901760
    %v1464 = vsub.f32 %v151, %v1463
    %v1465 = vand.u32 %v1464, 4294901760
    %v1466 = vsub.f32 %v1464, %v1465
    %v1467 = vand.u32 %v1466, 4294901760
    %1468 = vmatpush2.msra.mxu0 %v1467
    %1469 = vmatprep.subr.mxu0 0.0
    %v1470 = vand.u32 %v150, 4294901760
    %v1471 = vsub.f32 %v150, %v1470
    %v1472 = vand.u32 %v1471, 4294901760
    %v1473 = vsub.f32 %v1471, %v1472
    %v1474 = vand.u32 %v1473, 4294901760
    %1475 = vmatpush2.msra.mxu0 %v1474
    %1476 = vmatprep.subr.mxu0 0.0
    %v1477 = vand.u32 %v149, 4294901760
    %v1478 = vsub.f32 %v149, %v1477
    %v1479 = vand.u32 %v1478, 4294901760
    %v1480 = vsub.f32 %v1478, %v1479
    %v1481 = vand.u32 %v1480, 4294901760
    %1482 = vmatpush2.msra.mxu0 %v1481
    %1483 = vmatprep.subr.mxu0 0.0
    %v1484 = vand.u32 %v148, 4294901760
    %v1485 = vsub.f32 %v148, %v1484
    %v1486 = vand.u32 %v1485, 4294901760
    %v1487 = vsub.f32 %v1485, %v1486
    %v1488 = vand.u32 %v1487, 4294901760
    %1489 = vmatpush2.msra.mxu0 %v1488
    %1490 = vmatprep.subr.mxu0 0.0
    %v1491 = vand.u32 %v147, 4294901760
    %v1492 = vsub.f32 %v147, %v1491
    %v1493 = vand.u32 %v1492, 4294901760
    %v1494 = vsub.f32 %v1492, %v1493
    %v1495 = vand.u32 %v1494, 4294901760
    %1496 = vmatpush2.msra.mxu0 %v1495
    %1497 = vmatprep.subr.mxu0 0.0
    %v1498 = vand.u32 %v146, 4294901760
    %v1499 = vsub.f32 %v146, %v1498
    %v1500 = vand.u32 %v1499, 4294901760
    %v1501 = vsub.f32 %v1499, %v1500
    %v1502 = vand.u32 %v1501, 4294901760
    %1503 = vmatpush2.msra.mxu0 %v1502
    %1504 = vmatprep.subr.mxu0 0.0
    %v1505 = vand.u32 %v145, 4294901760
    %v1506 = vsub.f32 %v145, %v1505
    %v1507 = vand.u32 %v1506, 4294901760
    %v1508 = vsub.f32 %v1506, %v1507
    %v1509 = vand.u32 %v1508, 4294901760
    %1510 = vmatpush2.msra.mxu0 %v1509
    %1511 = vmatprep.subr.mxu0 0.0
    %v1512 = vand.u32 %v144, 4294901760
    %v1513 = vsub.f32 %v144, %v1512
    %v1514 = vand.u32 %v1513, 4294901760
    %v1515 = vsub.f32 %v1513, %v1514
    %v1516 = vand.u32 %v1515, 4294901760
    %1517 = vmatpush2.msra.mxu0 %v1516
    %1518 = vmatprep.subr.mxu0 0.0
    %v1519 = vand.u32 %v143, 4294901760
    %v1520 = vsub.f32 %v143, %v1519
    %v1521 = vand.u32 %v1520, 4294901760
    %v1522 = vsub.f32 %v1520, %v1521
    %v1523 = vand.u32 %v1522, 4294901760
    %1524 = vmatpush2.msra.mxu0 %v1523
    %1525 = vmatprep.subr.mxu0 0.0
    %v1526 = vand.u32 %v142, 4294901760
    %v1527 = vsub.f32 %v142, %v1526
    %v1528 = vand.u32 %v1527, 4294901760
    %v1529 = vsub.f32 %v1527, %v1528
    %v1530 = vand.u32 %v1529, 4294901760
    %1531 = vmatpush2.msra.mxu0 %v1530
    %1532 = vmatprep.subr.mxu0 0.0
    %v1533 = vand.u32 %v141, 4294901760
    %v1534 = vsub.f32 %v141, %v1533
    %v1535 = vand.u32 %v1534, 4294901760
    %v1536 = vsub.f32 %v1534, %v1535
    %v1537 = vand.u32 %v1536, 4294901760
    %1538 = vmatpush2.msra.mxu0 %v1537
    %1539 = vmatprep.subr.mxu0 0.0
    %v1540 = vand.u32 %v140, 4294901760
    %v1541 = vsub.f32 %v140, %v1540
    %v1542 = vand.u32 %v1541, 4294901760
    %v1543 = vsub.f32 %v1541, %v1542
    %v1544 = vand.u32 %v1543, 4294901760
    %1545 = vmatpush2.msra.mxu0 %v1544
    %v1546 = vand.u32 %v46, 4294901760
    %1547 = vmatprep.mubr.f32.mxu0 %v1546
    %v1548 = vand.u32 %v45, 4294901760
    %1549 = vmatmul.mubr.f32.gmra.mxu0 %v1548
    %v1550 = vpop.f32.mrf.mxu0
    %v1551 = vadd.f32 %v1319, %v1550
    %v1552 = vpop.f32.mrf.mxu0
    %1553 = vdwg.mxu0
    %1554 = vmatprep.subr.mxu0 0.0
    %v1555 = vand.u32 %v139, 4294901760
    %v1556 = vsub.f32 %v139, %v1555
    %1557 = vmatpush1.msra.mxu0 %v1556
    %1558 = vmatprep.subr.mxu0 0.0
    %v1559 = vand.u32 %v138, 4294901760
    %v1560 = vsub.f32 %v138, %v1559
    %1561 = vmatpush1.msra.mxu0 %v1560
    %1562 = vmatprep.subr.mxu0 0.0
    %v1563 = vand.u32 %v137, 4294901760
    %v1564 = vsub.f32 %v137, %v1563
    %1565 = vmatpush1.msra.mxu0 %v1564
    %1566 = vmatprep.subr.mxu0 0.0
    %v1567 = vand.u32 %v136, 4294901760
    %v1568 = vsub.f32 %v136, %v1567
    %1569 = vmatpush1.msra.mxu0 %v1568
    %1570 = vmatprep.subr.mxu0 0.0
    %v1571 = vand.u32 %v135, 4294901760
    %v1572 = vsub.f32 %v135, %v1571
    %1573 = vmatpush1.msra.mxu0 %v1572
    %1574 = vmatprep.subr.mxu0 0.0
    %v1575 = vand.u32 %v134, 4294901760
    %v1576 = vsub.f32 %v134, %v1575
    %1577 = vmatpush1.msra.mxu0 %v1576
    %1578 = vmatprep.subr.mxu0 0.0
    %v1579 = vand.u32 %v133, 4294901760
    %v1580 = vsub.f32 %v133, %v1579
    %1581 = vmatpush1.msra.mxu0 %v1580
    %1582 = vmatprep.subr.mxu0 0.0
    %v1583 = vand.u32 %v132, 4294901760
    %v1584 = vsub.f32 %v132, %v1583
    %1585 = vmatpush1.msra.mxu0 %v1584
    %1586 = vmatprep.subr.mxu0 0.0
    %v1587 = vand.u32 %v131, 4294901760
    %v1588 = vsub.f32 %v131, %v1587
    %1589 = vmatpush1.msra.mxu0 %v1588
    %1590 = vmatprep.subr.mxu0 0.0
    %v1591 = vand.u32 %v130, 4294901760
    %v1592 = vsub.f32 %v130, %v1591
    %1593 = vmatpush1.msra.mxu0 %v1592
    %1594 = vmatprep.subr.mxu0 0.0
    %v1595 = vand.u32 %v129, 4294901760
    %v1596 = vsub.f32 %v129, %v1595
    %1597 = vmatpush1.msra.mxu0 %v1596
    %1598 = vmatprep.subr.mxu0 0.0
    %v1599 = vand.u32 %v128, 4294901760
    %v1600 = vsub.f32 %v128, %v1599
    %1601 = vmatpush1.msra.mxu0 %v1600
    %1602 = vmatprep.subr.mxu0 0.0
    %v1603 = vand.u32 %v127, 4294901760
    %v1604 = vsub.f32 %v127, %v1603
    %1605 = vmatpush1.msra.mxu0 %v1604
    %1606 = vmatprep.subr.mxu0 0.0
    %v1607 = vand.u32 %v126, 4294901760
    %v1608 = vsub.f32 %v126, %v1607
    %1609 = vmatpush1.msra.mxu0 %v1608
    %1610 = vmatprep.subr.mxu0 0.0
    %v1611 = vand.u32 %v125, 4294901760
    %v1612 = vsub.f32 %v125, %v1611
    %1613 = vmatpush1.msra.mxu0 %v1612
    %1614 = vmatprep.subr.mxu0 0.0
    %v1615 = vand.u32 %v124, 4294901760
    %v1616 = vsub.f32 %v124, %v1615
    %1617 = vmatpush1.msra.mxu0 %v1616
    %1618 = vmatprep.subr.mxu0 0.0
    %v1619 = vand.u32 %v155, 4294901760
    %v1620 = vsub.f32 %v155, %v1619
    %1621 = vmatpush2.msra.mxu0 %v1620
    %1622 = vmatprep.subr.mxu0 0.0
    %v1623 = vand.u32 %v154, 4294901760
    %v1624 = vsub.f32 %v154, %v1623
    %1625 = vmatpush2.msra.mxu0 %v1624
    %1626 = vmatprep.subr.mxu0 0.0
    %v1627 = vand.u32 %v153, 4294901760
    %v1628 = vsub.f32 %v153, %v1627
    %1629 = vmatpush2.msra.mxu0 %v1628
    %1630 = vmatprep.subr.mxu0 0.0
    %v1631 = vand.u32 %v152, 4294901760
    %v1632 = vsub.f32 %v152, %v1631
    %1633 = vmatpush2.msra.mxu0 %v1632
    %1634 = vmatprep.subr.mxu0 0.0
    %v1635 = vand.u32 %v151, 4294901760
    %v1636 = vsub.f32 %v151, %v1635
    %1637 = vmatpush2.msra.mxu0 %v1636
    %1638 = vmatprep.subr.mxu0 0.0
    %v1639 = vand.u32 %v150, 4294901760
    %v1640 = vsub.f32 %v150, %v1639
    %1641 = vmatpush2.msra.mxu0 %v1640
    %1642 = vmatprep.subr.mxu0 0.0
    %v1643 = vand.u32 %v149, 4294901760
    %v1644 = vsub.f32 %v149, %v1643
    %1645 = vmatpush2.msra.mxu0 %v1644
    %1646 = vmatprep.subr.mxu0 0.0
    %v1647 = vand.u32 %v148, 4294901760
    %v1648 = vsub.f32 %v148, %v1647
    %1649 = vmatpush2.msra.mxu0 %v1648
    %1650 = vmatprep.subr.mxu0 0.0
    %v1651 = vand.u32 %v147, 4294901760
    %v1652 = vsub.f32 %v147, %v1651
    %1653 = vmatpush2.msra.mxu0 %v1652
    %1654 = vmatprep.subr.mxu0 0.0
    %v1655 = vand.u32 %v146, 4294901760
    %v1656 = vsub.f32 %v146, %v1655
    %1657 = vmatpush2.msra.mxu0 %v1656
    %1658 = vmatprep.subr.mxu0 0.0
    %v1659 = vand.u32 %v145, 4294901760
    %v1660 = vsub.f32 %v145, %v1659
    %1661 = vmatpush2.msra.mxu0 %v1660
    %1662 = vmatprep.subr.mxu0 0.0
    %v1663 = vand.u32 %v144, 4294901760
    %v1664 = vsub.f32 %v144, %v1663
    %1665 = vmatpush2.msra.mxu0 %v1664
    %1666 = vmatprep.subr.mxu0 0.0
    %v1667 = vand.u32 %v143, 4294901760
    %v1668 = vsub.f32 %v143, %v1667
    %1669 = vmatpush2.msra.mxu0 %v1668
    %1670 = vmatprep.subr.mxu0 0.0
    %v1671 = vand.u32 %v142, 4294901760
    %v1672 = vsub.f32 %v142, %v1671
    %1673 = vmatpush2.msra.mxu0 %v1672
    %1674 = vmatprep.subr.mxu0 0.0
    %v1675 = vand.u32 %v141, 4294901760
    %v1676 = vsub.f32 %v141, %v1675
    %1677 = vmatpush2.msra.mxu0 %v1676
    %1678 = vmatprep.subr.mxu0 0.0
    %v1679 = vand.u32 %v140, 4294901760
    %v1680 = vsub.f32 %v140, %v1679
    %1681 = vmatpush2.msra.mxu0 %v1680
    %v1682 = vand.u32 %v46, 4294901760
    %v1683 = vsub.f32 %v46, %v1682
    %1684 = vmatprep.mubr.f32.mxu0 %v1683
    %v1685 = vand.u32 %v45, 4294901760
    %v1686 = vsub.f32 %v45, %v1685
    %1687 = vmatmul.mubr.f32.gmra.mxu0 %v1686
    %v1688 = vpop.f32.mrf.mxu0
    %v1689 = vadd.f32 %v1551, %v1688
    %v1690 = vpop.f32.mrf.mxu0
    %1691 = vdwg.mxu0
    %1692 = vmatprep.subr.mxu0 0.0
    %v1693 = vand.u32 %v139, 4294901760
    %1694 = vmatpush1.msra.mxu0 %v1693
    %1695 = vmatprep.subr.mxu0 0.0
    %v1696 = vand.u32 %v138, 4294901760
    %1697 = vmatpush1.msra.mxu0 %v1696
    %1698 = vmatprep.subr.mxu0 0.0
    %v1699 = vand.u32 %v137, 4294901760
    %1700 = vmatpush1.msra.mxu0 %v1699
    %1701 = vmatprep.subr.mxu0 0.0
    %v1702 = vand.u32 %v136, 4294901760
    %1703 = vmatpush1.msra.mxu0 %v1702
    %1704 = vmatprep.subr.mxu0 0.0
    %v1705 = vand.u32 %v135, 4294901760
    %1706 = vmatpush1.msra.mxu0 %v1705
    %1707 = vmatprep.subr.mxu0 0.0
    %v1708 = vand.u32 %v134, 4294901760
    %1709 = vmatpush1.msra.mxu0 %v1708
    %1710 = vmatprep.subr.mxu0 0.0
    %v1711 = vand.u32 %v133, 4294901760
    %1712 = vmatpush1.msra.mxu0 %v1711
    %1713 = vmatprep.subr.mxu0 0.0
    %v1714 = vand.u32 %v132, 4294901760
    %1715 = vmatpush1.msra.mxu0 %v1714
    %1716 = vmatprep.subr.mxu0 0.0
    %v1717 = vand.u32 %v131, 4294901760
    %1718 = vmatpush1.msra.mxu0 %v1717
    %1719 = vmatprep.subr.mxu0 0.0
    %v1720 = vand.u32 %v130, 4294901760
    %1721 = vmatpush1.msra.mxu0 %v1720
    %1722 = vmatprep.subr.mxu0 0.0
    %v1723 = vand.u32 %v129, 4294901760
    %1724 = vmatpush1.msra.mxu0 %v1723
    %1725 = vmatprep.subr.mxu0 0.0
    %v1726 = vand.u32 %v128, 4294901760
    %1727 = vmatpush1.msra.mxu0 %v1726
    %1728 = vmatprep.subr.mxu0 0.0
    %v1729 = vand.u32 %v127, 4294901760
    %1730 = vmatpush1.msra.mxu0 %v1729
    %1731 = vmatprep.subr.mxu0 0.0
    %v1732 = vand.u32 %v126, 4294901760
    %1733 = vmatpush1.msra.mxu0 %v1732
    %1734 = vmatprep.subr.mxu0 0.0
    %v1735 = vand.u32 %v125, 4294901760
    %1736 = vmatpush1.msra.mxu0 %v1735
    %1737 = vmatprep.subr.mxu0 0.0
    %v1738 = vand.u32 %v124, 4294901760
    %1739 = vmatpush1.msra.mxu0 %v1738
    %1740 = vmatprep.subr.mxu0 0.0
    %v1741 = vand.u32 %v155, 4294901760
    %1742 = vmatpush2.msra.mxu0 %v1741
    %1743 = vmatprep.subr.mxu0 0.0
    %v1744 = vand.u32 %v154, 4294901760
    %1745 = vmatpush2.msra.mxu0 %v1744
    %1746 = vmatprep.subr.mxu0 0.0
    %v1747 = vand.u32 %v153, 4294901760
    %1748 = vmatpush2.msra.mxu0 %v1747
    %1749 = vmatprep.subr.mxu0 0.0
    %v1750 = vand.u32 %v152, 4294901760
    %1751 = vmatpush2.msra.mxu0 %v1750
    %1752 = vmatprep.subr.mxu0 0.0
    %v1753 = vand.u32 %v151, 4294901760
    %1754 = vmatpush2.msra.mxu0 %v1753
    %1755 = vmatprep.subr.mxu0 0.0
    %v1756 = vand.u32 %v150, 4294901760
    %1757 = vmatpush2.msra.mxu0 %v1756
    %1758 = vmatprep.subr.mxu0 0.0
    %v1759 = vand.u32 %v149, 4294901760
    %1760 = vmatpush2.msra.mxu0 %v1759
    %1761 = vmatprep.subr.mxu0 0.0
    %v1762 = vand.u32 %v148, 4294901760
    %1763 = vmatpush2.msra.mxu0 %v1762
    %1764 = vmatprep.subr.mxu0 0.0
    %v1765 = vand.u32 %v147, 4294901760
    %1766 = vmatpush2.msra.mxu0 %v1765
    %1767 = vmatprep.subr.mxu0 0.0
    %v1768 = vand.u32 %v146, 4294901760
    %1769 = vmatpush2.msra.mxu0 %v1768
    %1770 = vmatprep.subr.mxu0 0.0
    %v1771 = vand.u32 %v145, 4294901760
    %1772 = vmatpush2.msra.mxu0 %v1771
    %1773 = vmatprep.subr.mxu0 0.0
    %v1774 = vand.u32 %v144, 4294901760
    %1775 = vmatpush2.msra.mxu0 %v1774
    %1776 = vmatprep.subr.mxu0 0.0
    %v1777 = vand.u32 %v143, 4294901760
    %1778 = vmatpush2.msra.mxu0 %v1777
    %1779 = vmatprep.subr.mxu0 0.0
    %v1780 = vand.u32 %v142, 4294901760
    %1781 = vmatpush2.msra.mxu0 %v1780
    %1782 = vmatprep.subr.mxu0 0.0
    %v1783 = vand.u32 %v141, 4294901760
    %1784 = vmatpush2.msra.mxu0 %v1783
    %1785 = vmatprep.subr.mxu0 0.0
    %v1786 = vand.u32 %v140, 4294901760
    %1787 = vmatpush2.msra.mxu0 %v1786
    %v1788 = vand.u32 %v46, 4294901760
    %v1789 = vsub.f32 %v46, %v1788
    %v1790 = vand.u32 %v1789, 4294901760
    %1791 = vmatprep.mubr.f32.mxu0 %v1790
    %v1792 = vand.u32 %v45, 4294901760
    %v1793 = vsub.f32 %v45, %v1792
    %v1794 = vand.u32 %v1793, 4294901760
    %1795 = vmatmul.mubr.f32.gmra.mxu0 %v1794
    %v1796 = vpop.f32.mrf.mxu0
    %v1797 = vadd.f32 %v1689, %v1796
    %v1798 = vpop.f32.mrf.mxu0
    %1799 = vdwg.mxu0
    %1800 = vmatprep.subr.mxu0 0.0
    %v1801 = vand.u32 %v139, 4294901760
    %v1802 = vsub.f32 %v139, %v1801
    %v1803 = vand.u32 %v1802, 4294901760
    %1804 = vmatpush1.msra.mxu0 %v1803
    %1805 = vmatprep.subr.mxu0 0.0
    %v1806 = vand.u32 %v138, 4294901760
    %v1807 = vsub.f32 %v138, %v1806
    %v1808 = vand.u32 %v1807, 4294901760
    %1809 = vmatpush1.msra.mxu0 %v1808
    %1810 = vmatprep.subr.mxu0 0.0
    %v1811 = vand.u32 %v137, 4294901760
    %v1812 = vsub.f32 %v137, %v1811
    %v1813 = vand.u32 %v1812, 4294901760
    %1814 = vmatpush1.msra.mxu0 %v1813
    %1815 = vmatprep.subr.mxu0 0.0
    %v1816 = vand.u32 %v136, 4294901760
    %v1817 = vsub.f32 %v136, %v1816
    %v1818 = vand.u32 %v1817, 4294901760
    %1819 = vmatpush1.msra.mxu0 %v1818
    %1820 = vmatprep.subr.mxu0 0.0
    %v1821 = vand.u32 %v135, 4294901760
    %v1822 = vsub.f32 %v135, %v1821
    %v1823 = vand.u32 %v1822, 4294901760
    %1824 = vmatpush1.msra.mxu0 %v1823
    %1825 = vmatprep.subr.mxu0 0.0
    %v1826 = vand.u32 %v134, 4294901760
    %v1827 = vsub.f32 %v134, %v1826
    %v1828 = vand.u32 %v1827, 4294901760
    %1829 = vmatpush1.msra.mxu0 %v1828
    %1830 = vmatprep.subr.mxu0 0.0
    %v1831 = vand.u32 %v133, 4294901760
    %v1832 = vsub.f32 %v133, %v1831
    %v1833 = vand.u32 %v1832, 4294901760
    %1834 = vmatpush1.msra.mxu0 %v1833
    %1835 = vmatprep.subr.mxu0 0.0
    %v1836 = vand.u32 %v132, 4294901760
    %v1837 = vsub.f32 %v132, %v1836
    %v1838 = vand.u32 %v1837, 4294901760
    %1839 = vmatpush1.msra.mxu0 %v1838
    %1840 = vmatprep.subr.mxu0 0.0
    %v1841 = vand.u32 %v131, 4294901760
    %v1842 = vsub.f32 %v131, %v1841
    %v1843 = vand.u32 %v1842, 4294901760
    %1844 = vmatpush1.msra.mxu0 %v1843
    %1845 = vmatprep.subr.mxu0 0.0
    %v1846 = vand.u32 %v130, 4294901760
    %v1847 = vsub.f32 %v130, %v1846
    %v1848 = vand.u32 %v1847, 4294901760
    %1849 = vmatpush1.msra.mxu0 %v1848
    %1850 = vmatprep.subr.mxu0 0.0
    %v1851 = vand.u32 %v129, 4294901760
    %v1852 = vsub.f32 %v129, %v1851
    %v1853 = vand.u32 %v1852, 4294901760
    %1854 = vmatpush1.msra.mxu0 %v1853
    %1855 = vmatprep.subr.mxu0 0.0
    %v1856 = vand.u32 %v128, 4294901760
    %v1857 = vsub.f32 %v128, %v1856
    %v1858 = vand.u32 %v1857, 4294901760
    %1859 = vmatpush1.msra.mxu0 %v1858
    %1860 = vmatprep.subr.mxu0 0.0
    %v1861 = vand.u32 %v127, 4294901760
    %v1862 = vsub.f32 %v127, %v1861
    %v1863 = vand.u32 %v1862, 4294901760
    %1864 = vmatpush1.msra.mxu0 %v1863
    %1865 = vmatprep.subr.mxu0 0.0
    %v1866 = vand.u32 %v126, 4294901760
    %v1867 = vsub.f32 %v126, %v1866
    %v1868 = vand.u32 %v1867, 4294901760
    %1869 = vmatpush1.msra.mxu0 %v1868
    %1870 = vmatprep.subr.mxu0 0.0
    %v1871 = vand.u32 %v125, 4294901760
    %v1872 = vsub.f32 %v125, %v1871
    %v1873 = vand.u32 %v1872, 4294901760
    %1874 = vmatpush1.msra.mxu0 %v1873
    %1875 = vmatprep.subr.mxu0 0.0
    %v1876 = vand.u32 %v124, 4294901760
    %v1877 = vsub.f32 %v124, %v1876
    %v1878 = vand.u32 %v1877, 4294901760
    %1879 = vmatpush1.msra.mxu0 %v1878
    %1880 = vmatprep.subr.mxu0 0.0
    %v1881 = vand.u32 %v155, 4294901760
    %v1882 = vsub.f32 %v155, %v1881
    %v1883 = vand.u32 %v1882, 4294901760
    %1884 = vmatpush2.msra.mxu0 %v1883
    %1885 = vmatprep.subr.mxu0 0.0
    %v1886 = vand.u32 %v154, 4294901760
    %v1887 = vsub.f32 %v154, %v1886
    %v1888 = vand.u32 %v1887, 4294901760
    %1889 = vmatpush2.msra.mxu0 %v1888
    %1890 = vmatprep.subr.mxu0 0.0
    %v1891 = vand.u32 %v153, 4294901760
    %v1892 = vsub.f32 %v153, %v1891
    %v1893 = vand.u32 %v1892, 4294901760
    %1894 = vmatpush2.msra.mxu0 %v1893
    %1895 = vmatprep.subr.mxu0 0.0
    %v1896 = vand.u32 %v152, 4294901760
    %v1897 = vsub.f32 %v152, %v1896
    %v1898 = vand.u32 %v1897, 4294901760
    %1899 = vmatpush2.msra.mxu0 %v1898
    %1900 = vmatprep.subr.mxu0 0.0
    %v1901 = vand.u32 %v151, 4294901760
    %v1902 = vsub.f32 %v151, %v1901
    %v1903 = vand.u32 %v1902, 4294901760
    %1904 = vmatpush2.msra.mxu0 %v1903
    %1905 = vmatprep.subr.mxu0 0.0
    %v1906 = vand.u32 %v150, 4294901760
    %v1907 = vsub.f32 %v150, %v1906
    %v1908 = vand.u32 %v1907, 4294901760
    %1909 = vmatpush2.msra.mxu0 %v1908
    %1910 = vmatprep.subr.mxu0 0.0
    %v1911 = vand.u32 %v149, 4294901760
    %v1912 = vsub.f32 %v149, %v1911
    %v1913 = vand.u32 %v1912, 4294901760
    %1914 = vmatpush2.msra.mxu0 %v1913
    %1915 = vmatprep.subr.mxu0 0.0
    %v1916 = vand.u32 %v148, 4294901760
    %v1917 = vsub.f32 %v148, %v1916
    %v1918 = vand.u32 %v1917, 4294901760
    %1919 = vmatpush2.msra.mxu0 %v1918
    %1920 = vmatprep.subr.mxu0 0.0
    %v1921 = vand.u32 %v147, 4294901760
    %v1922 = vsub.f32 %v147, %v1921
    %v1923 = vand.u32 %v1922, 4294901760
    %1924 = vmatpush2.msra.mxu0 %v1923
    %1925 = vmatprep.subr.mxu0 0.0
    %v1926 = vand.u32 %v146, 4294901760
    %v1927 = vsub.f32 %v146, %v1926
    %v1928 = vand.u32 %v1927, 4294901760
    %1929 = vmatpush2.msra.mxu0 %v1928
    %1930 = vmatprep.subr.mxu0 0.0
    %v1931 = vand.u32 %v145, 4294901760
    %v1932 = vsub.f32 %v145, %v1931
    %v1933 = vand.u32 %v1932, 4294901760
    %1934 = vmatpush2.msra.mxu0 %v1933
    %1935 = vmatprep.subr.mxu0 0.0
    %v1936 = vand.u32 %v144, 4294901760
    %v1937 = vsub.f32 %v144, %v1936
    %v1938 = vand.u32 %v1937, 4294901760
    %1939 = vmatpush2.msra.mxu0 %v1938
    %1940 = vmatprep.subr.mxu0 0.0
    %v1941 = vand.u32 %v143, 4294901760
    %v1942 = vsub.f32 %v143, %v1941
    %v1943 = vand.u32 %v1942, 4294901760
    %1944 = vmatpush2.msra.mxu0 %v1943
    %1945 = vmatprep.subr.mxu0 0.0
    %v1946 = vand.u32 %v142, 4294901760
    %v1947 = vsub.f32 %v142, %v1946
    %v1948 = vand.u32 %v1947, 4294901760
    %1949 = vmatpush2.msra.mxu0 %v1948
    %1950 = vmatprep.subr.mxu0 0.0
    %v1951 = vand.u32 %v141, 4294901760
    %v1952 = vsub.f32 %v141, %v1951
    %v1953 = vand.u32 %v1952, 4294901760
    %1954 = vmatpush2.msra.mxu0 %v1953
    %1955 = vmatprep.subr.mxu0 0.0
    %v1956 = vand.u32 %v140, 4294901760
    %v1957 = vsub.f32 %v140, %v1956
    %v1958 = vand.u32 %v1957, 4294901760
    %1959 = vmatpush2.msra.mxu0 %v1958
    %v1960 = vand.u32 %v46, 4294901760
    %1961 = vmatprep.mubr.f32.mxu0 %v1960
    %v1962 = vand.u32 %v45, 4294901760
    %1963 = vmatmul.mubr.f32.gmra.mxu0 %v1962
    %v1964 = vpop.f32.mrf.mxu0
    %v1965 = vadd.f32 %v1797, %v1964
    %v1966 = vpop.f32.mrf.mxu0
    %1967 = vdwg.mxu0
    %1968 = vmatprep.subr.mxu0 0.0
    %v1969 = vand.u32 %v139, 4294901760
    %1970 = vmatpush1.msra.mxu0 %v1969
    %1971 = vmatprep.subr.mxu0 0.0
    %v1972 = vand.u32 %v138, 4294901760
    %1973 = vmatpush1.msra.mxu0 %v1972
    %1974 = vmatprep.subr.mxu0 0.0
    %v1975 = vand.u32 %v137, 4294901760
    %1976 = vmatpush1.msra.mxu0 %v1975
    %1977 = vmatprep.subr.mxu0 0.0
    %v1978 = vand.u32 %v136, 4294901760
    %1979 = vmatpush1.msra.mxu0 %v1978
    %1980 = vmatprep.subr.mxu0 0.0
    %v1981 = vand.u32 %v135, 4294901760
    %1982 = vmatpush1.msra.mxu0 %v1981
    %1983 = vmatprep.subr.mxu0 0.0
    %v1984 = vand.u32 %v134, 4294901760
    %1985 = vmatpush1.msra.mxu0 %v1984
    %1986 = vmatprep.subr.mxu0 0.0
    %v1987 = vand.u32 %v133, 4294901760
    %1988 = vmatpush1.msra.mxu0 %v1987
    %1989 = vmatprep.subr.mxu0 0.0
    %v1990 = vand.u32 %v132, 4294901760
    %1991 = vmatpush1.msra.mxu0 %v1990
    %1992 = vmatprep.subr.mxu0 0.0
    %v1993 = vand.u32 %v131, 4294901760
    %1994 = vmatpush1.msra.mxu0 %v1993
    %1995 = vmatprep.subr.mxu0 0.0
    %v1996 = vand.u32 %v130, 4294901760
    %1997 = vmatpush1.msra.mxu0 %v1996
    %1998 = vmatprep.subr.mxu0 0.0
    %v1999 = vand.u32 %v129, 4294901760
    %2000 = vmatpush1.msra.mxu0 %v1999
    %2001 = vmatprep.subr.mxu0 0.0
    %v2002 = vand.u32 %v128, 4294901760
    %2003 = vmatpush1.msra.mxu0 %v2002
    %2004 = vmatprep.subr.mxu0 0.0
    %v2005 = vand.u32 %v127, 4294901760
    %2006 = vmatpush1.msra.mxu0 %v2005
    %2007 = vmatprep.subr.mxu0 0.0
    %v2008 = vand.u32 %v126, 4294901760
    %2009 = vmatpush1.msra.mxu0 %v2008
    %2010 = vmatprep.subr.mxu0 0.0
    %v2011 = vand.u32 %v125, 4294901760
    %2012 = vmatpush1.msra.mxu0 %v2011
    %2013 = vmatprep.subr.mxu0 0.0
    %v2014 = vand.u32 %v124, 4294901760
    %2015 = vmatpush1.msra.mxu0 %v2014
    %2016 = vmatprep.subr.mxu0 0.0
    %v2017 = vand.u32 %v155, 4294901760
    %2018 = vmatpush2.msra.mxu0 %v2017
    %2019 = vmatprep.subr.mxu0 0.0
    %v2020 = vand.u32 %v154, 4294901760
    %2021 = vmatpush2.msra.mxu0 %v2020
    %2022 = vmatprep.subr.mxu0 0.0
    %v2023 = vand.u32 %v153, 4294901760
    %2024 = vmatpush2.msra.mxu0 %v2023
    %2025 = vmatprep.subr.mxu0 0.0
    %v2026 = vand.u32 %v152, 4294901760
    %2027 = vmatpush2.msra.mxu0 %v2026
    %2028 = vmatprep.subr.mxu0 0.0
    %v2029 = vand.u32 %v151, 4294901760
    %2030 = vmatpush2.msra.mxu0 %v2029
    %2031 = vmatprep.subr.mxu0 0.0
    %v2032 = vand.u32 %v150, 4294901760
    %2033 = vmatpush2.msra.mxu0 %v2032
    %2034 = vmatprep.subr.mxu0 0.0
    %v2035 = vand.u32 %v149, 4294901760
    %2036 = vmatpush2.msra.mxu0 %v2035
    %2037 = vmatprep.subr.mxu0 0.0
    %v2038 = vand.u32 %v148, 4294901760
    %2039 = vmatpush2.msra.mxu0 %v2038
    %2040 = vmatprep.subr.mxu0 0.0
    %v2041 = vand.u32 %v147, 4294901760
    %2042 = vmatpush2.msra.mxu0 %v2041
    %2043 = vmatprep.subr.mxu0 0.0
    %v2044 = vand.u32 %v146, 4294901760
    %2045 = vmatpush2.msra.mxu0 %v2044
    %2046 = vmatprep.subr.mxu0 0.0
    %v2047 = vand.u32 %v145, 4294901760
    %2048 = vmatpush2.msra.mxu0 %v2047
    %2049 = vmatprep.subr.mxu0 0.0
    %v2050 = vand.u32 %v144, 4294901760
    %2051 = vmatpush2.msra.mxu0 %v2050
    %2052 = vmatprep.subr.mxu0 0.0
    %v2053 = vand.u32 %v143, 4294901760
    %2054 = vmatpush2.msra.mxu0 %v2053
    %2055 = vmatprep.subr.mxu0 0.0
    %v2056 = vand.u32 %v142, 4294901760
    %2057 = vmatpush2.msra.mxu0 %v2056
    %2058 = vmatprep.subr.mxu0 0.0
    %v2059 = vand.u32 %v141, 4294901760
    %2060 = vmatpush2.msra.mxu0 %v2059
    %2061 = vmatprep.subr.mxu0 0.0
    %v2062 = vand.u32 %v140, 4294901760
    %2063 = vmatpush2.msra.mxu0 %v2062
    %v2064 = vand.u32 %v46, 4294901760
    %2065 = vmatprep.mubr.f32.mxu0 %v2064
    %v2066 = vand.u32 %v45, 4294901760
    %2067 = vmatmul.mubr.f32.gmra.mxu0 %v2066
    %v2068 = vpop.f32.mrf.mxu0
    %v2069 = vadd.f32 %v1965, %v2068
    %v2070 = vpop.f32.mrf.mxu0
    %2071 = vdwg.mxu0
    %2072 = vmatprep.subr.mxu0 0.0
    %v2073 = vand.u32 %v171, 4294901760
    %2074 = vmatpush1.msra.mxu0 %v2073
    %2075 = vmatprep.subr.mxu0 0.0
    %v2076 = vand.u32 %v170, 4294901760
    %2077 = vmatpush1.msra.mxu0 %v2076
    %2078 = vmatprep.subr.mxu0 0.0
    %v2079 = vand.u32 %v169, 4294901760
    %2080 = vmatpush1.msra.mxu0 %v2079
    %2081 = vmatprep.subr.mxu0 0.0
    %v2082 = vand.u32 %v168, 4294901760
    %2083 = vmatpush1.msra.mxu0 %v2082
    %2084 = vmatprep.subr.mxu0 0.0
    %v2085 = vand.u32 %v167, 4294901760
    %2086 = vmatpush1.msra.mxu0 %v2085
    %2087 = vmatprep.subr.mxu0 0.0
    %v2088 = vand.u32 %v166, 4294901760
    %2089 = vmatpush1.msra.mxu0 %v2088
    %2090 = vmatprep.subr.mxu0 0.0
    %v2091 = vand.u32 %v165, 4294901760
    %2092 = vmatpush1.msra.mxu0 %v2091
    %2093 = vmatprep.subr.mxu0 0.0
    %v2094 = vand.u32 %v164, 4294901760
    %2095 = vmatpush1.msra.mxu0 %v2094
    %2096 = vmatprep.subr.mxu0 0.0
    %v2097 = vand.u32 %v163, 4294901760
    %2098 = vmatpush1.msra.mxu0 %v2097
    %2099 = vmatprep.subr.mxu0 0.0
    %v2100 = vand.u32 %v162, 4294901760
    %2101 = vmatpush1.msra.mxu0 %v2100
    %2102 = vmatprep.subr.mxu0 0.0
    %v2103 = vand.u32 %v161, 4294901760
    %2104 = vmatpush1.msra.mxu0 %v2103
    %2105 = vmatprep.subr.mxu0 0.0
    %v2106 = vand.u32 %v160, 4294901760
    %2107 = vmatpush1.msra.mxu0 %v2106
    %2108 = vmatprep.subr.mxu0 0.0
    %v2109 = vand.u32 %v159, 4294901760
    %2110 = vmatpush1.msra.mxu0 %v2109
    %2111 = vmatprep.subr.mxu0 0.0
    %v2112 = vand.u32 %v158, 4294901760
    %2113 = vmatpush1.msra.mxu0 %v2112
    %2114 = vmatprep.subr.mxu0 0.0
    %v2115 = vand.u32 %v157, 4294901760
    %2116 = vmatpush1.msra.mxu0 %v2115
    %2117 = vmatprep.subr.mxu0 0.0
    %v2118 = vand.u32 %v156, 4294901760
    %2119 = vmatpush1.msra.mxu0 %v2118
    %2120 = vmatprep.subr.mxu0 0.0
    %v2121 = vand.u32 %v187, 4294901760
    %2122 = vmatpush2.msra.mxu0 %v2121
    %2123 = vmatprep.subr.mxu0 0.0
    %v2124 = vand.u32 %v186, 4294901760
    %2125 = vmatpush2.msra.mxu0 %v2124
    %2126 = vmatprep.subr.mxu0 0.0
    %v2127 = vand.u32 %v185, 4294901760
    %2128 = vmatpush2.msra.mxu0 %v2127
    %2129 = vmatprep.subr.mxu0 0.0
    %v2130 = vand.u32 %v184, 4294901760
    %2131 = vmatpush2.msra.mxu0 %v2130
    %2132 = vmatprep.subr.mxu0 0.0
    %v2133 = vand.u32 %v183, 4294901760
    %2134 = vmatpush2.msra.mxu0 %v2133
    %2135 = vmatprep.subr.mxu0 0.0
    %v2136 = vand.u32 %v182, 4294901760
    %2137 = vmatpush2.msra.mxu0 %v2136
    %2138 = vmatprep.subr.mxu0 0.0
    %v2139 = vand.u32 %v181, 4294901760
    %2140 = vmatpush2.msra.mxu0 %v2139
    %2141 = vmatprep.subr.mxu0 0.0
    %v2142 = vand.u32 %v180, 4294901760
    %2143 = vmatpush2.msra.mxu0 %v2142
    %2144 = vmatprep.subr.mxu0 0.0
    %v2145 = vand.u32 %v179, 4294901760
    %2146 = vmatpush2.msra.mxu0 %v2145
    %2147 = vmatprep.subr.mxu0 0.0
    %v2148 = vand.u32 %v178, 4294901760
    %2149 = vmatpush2.msra.mxu0 %v2148
    %2150 = vmatprep.subr.mxu0 0.0
    %v2151 = vand.u32 %v177, 4294901760
    %2152 = vmatpush2.msra.mxu0 %v2151
    %2153 = vmatprep.subr.mxu0 0.0
    %v2154 = vand.u32 %v176, 4294901760
    %2155 = vmatpush2.msra.mxu0 %v2154
    %2156 = vmatprep.subr.mxu0 0.0
    %v2157 = vand.u32 %v175, 4294901760
    %2158 = vmatpush2.msra.mxu0 %v2157
    %2159 = vmatprep.subr.mxu0 0.0
    %v2160 = vand.u32 %v174, 4294901760
    %2161 = vmatpush2.msra.mxu0 %v2160
    %2162 = vmatprep.subr.mxu0 0.0
    %v2163 = vand.u32 %v173, 4294901760
    %2164 = vmatpush2.msra.mxu0 %v2163
    %2165 = vmatprep.subr.mxu0 0.0
    %v2166 = vand.u32 %v172, 4294901760
    %2167 = vmatpush2.msra.mxu0 %v2166
    %v2168 = vand.u32 %v59, 4294901760
    %v2169 = vsub.f32 %v59, %v2168
    %v2170 = vand.u32 %v2169, 4294901760
    %v2171 = vsub.f32 %v2169, %v2170
    %v2172 = vand.u32 %v2171, 4294901760
    %2173 = vmatprep.mubr.f32.mxu0 %v2172
    %v2174 = vand.u32 %v58, 4294901760
    %v2175 = vsub.f32 %v58, %v2174
    %v2176 = vand.u32 %v2175, 4294901760
    %v2177 = vsub.f32 %v2175, %v2176
    %v2178 = vand.u32 %v2177, 4294901760
    %2179 = vmatmul.mubr.f32.gmra.mxu0 %v2178
    %v2180 = vpop.f32.mrf.mxu0
    %v2181 = vadd.f32 %v2069, %v2180
    %v2182 = vpop.f32.mrf.mxu0
    %2183 = vdwg.mxu0
    %2184 = vmatprep.subr.mxu0 0.0
    %v2185 = vand.u32 %v171, 4294901760
    %v2186 = vsub.f32 %v171, %v2185
    %v2187 = vand.u32 %v2186, 4294901760
    %v2188 = vsub.f32 %v2186, %v2187
    %v2189 = vand.u32 %v2188, 4294901760
    %2190 = vmatpush1.msra.mxu0 %v2189
    %2191 = vmatprep.subr.mxu0 0.0
    %v2192 = vand.u32 %v170, 4294901760
    %v2193 = vsub.f32 %v170, %v2192
    %v2194 = vand.u32 %v2193, 4294901760
    %v2195 = vsub.f32 %v2193, %v2194
    %v2196 = vand.u32 %v2195, 4294901760
    %2197 = vmatpush1.msra.mxu0 %v2196
    %2198 = vmatprep.subr.mxu0 0.0
    %v2199 = vand.u32 %v169, 4294901760
    %v2200 = vsub.f32 %v169, %v2199
    %v2201 = vand.u32 %v2200, 4294901760
    %v2202 = vsub.f32 %v2200, %v2201
    %v2203 = vand.u32 %v2202, 4294901760
    %2204 = vmatpush1.msra.mxu0 %v2203
    %2205 = vmatprep.subr.mxu0 0.0
    %v2206 = vand.u32 %v168, 4294901760
    %v2207 = vsub.f32 %v168, %v2206
    %v2208 = vand.u32 %v2207, 4294901760
    %v2209 = vsub.f32 %v2207, %v2208
    %v2210 = vand.u32 %v2209, 4294901760
    %2211 = vmatpush1.msra.mxu0 %v2210
    %2212 = vmatprep.subr.mxu0 0.0
    %v2213 = vand.u32 %v167, 4294901760
    %v2214 = vsub.f32 %v167, %v2213
    %v2215 = vand.u32 %v2214, 4294901760
    %v2216 = vsub.f32 %v2214, %v2215
    %v2217 = vand.u32 %v2216, 4294901760
    %2218 = vmatpush1.msra.mxu0 %v2217
    %2219 = vmatprep.subr.mxu0 0.0
    %v2220 = vand.u32 %v166, 4294901760
    %v2221 = vsub.f32 %v166, %v2220
    %v2222 = vand.u32 %v2221, 4294901760
    %v2223 = vsub.f32 %v2221, %v2222
    %v2224 = vand.u32 %v2223, 4294901760
    %2225 = vmatpush1.msra.mxu0 %v2224
    %2226 = vmatprep.subr.mxu0 0.0
    %v2227 = vand.u32 %v165, 4294901760
    %v2228 = vsub.f32 %v165, %v2227
    %v2229 = vand.u32 %v2228, 4294901760
    %v2230 = vsub.f32 %v2228, %v2229
    %v2231 = vand.u32 %v2230, 4294901760
    %2232 = vmatpush1.msra.mxu0 %v2231
    %2233 = vmatprep.subr.mxu0 0.0
    %v2234 = vand.u32 %v164, 4294901760
    %v2235 = vsub.f32 %v164, %v2234
    %v2236 = vand.u32 %v2235, 4294901760
    %v2237 = vsub.f32 %v2235, %v2236
    %v2238 = vand.u32 %v2237, 4294901760
    %2239 = vmatpush1.msra.mxu0 %v2238
    %2240 = vmatprep.subr.mxu0 0.0
    %v2241 = vand.u32 %v163, 4294901760
    %v2242 = vsub.f32 %v163, %v2241
    %v2243 = vand.u32 %v2242, 4294901760
    %v2244 = vsub.f32 %v2242, %v2243
    %v2245 = vand.u32 %v2244, 4294901760
    %2246 = vmatpush1.msra.mxu0 %v2245
    %2247 = vmatprep.subr.mxu0 0.0
    %v2248 = vand.u32 %v162, 4294901760
    %v2249 = vsub.f32 %v162, %v2248
    %v2250 = vand.u32 %v2249, 4294901760
    %v2251 = vsub.f32 %v2249, %v2250
    %v2252 = vand.u32 %v2251, 4294901760
    %2253 = vmatpush1.msra.mxu0 %v2252
    %2254 = vmatprep.subr.mxu0 0.0
    %v2255 = vand.u32 %v161, 4294901760
    %v2256 = vsub.f32 %v161, %v2255
    %v2257 = vand.u32 %v2256, 4294901760
    %v2258 = vsub.f32 %v2256, %v2257
    %v2259 = vand.u32 %v2258, 4294901760
    %2260 = vmatpush1.msra.mxu0 %v2259
    %2261 = vmatprep.subr.mxu0 0.0
    %v2262 = vand.u32 %v160, 4294901760
    %v2263 = vsub.f32 %v160, %v2262
    %v2264 = vand.u32 %v2263, 4294901760
    %v2265 = vsub.f32 %v2263, %v2264
    %v2266 = vand.u32 %v2265, 4294901760
    %2267 = vmatpush1.msra.mxu0 %v2266
    %2268 = vmatprep.subr.mxu0 0.0
    %v2269 = vand.u32 %v159, 4294901760
    %v2270 = vsub.f32 %v159, %v2269
    %v2271 = vand.u32 %v2270, 4294901760
    %v2272 = vsub.f32 %v2270, %v2271
    %v2273 = vand.u32 %v2272, 4294901760
    %2274 = vmatpush1.msra.mxu0 %v2273
    %2275 = vmatprep.subr.mxu0 0.0
    %v2276 = vand.u32 %v158, 4294901760
    %v2277 = vsub.f32 %v158, %v2276
    %v2278 = vand.u32 %v2277, 4294901760
    %v2279 = vsub.f32 %v2277, %v2278
    %v2280 = vand.u32 %v2279, 4294901760
    %2281 = vmatpush1.msra.mxu0 %v2280
    %2282 = vmatprep.subr.mxu0 0.0
    %v2283 = vand.u32 %v157, 4294901760
    %v2284 = vsub.f32 %v157, %v2283
    %v2285 = vand.u32 %v2284, 4294901760
    %v2286 = vsub.f32 %v2284, %v2285
    %v2287 = vand.u32 %v2286, 4294901760
    %2288 = vmatpush1.msra.mxu0 %v2287
    %2289 = vmatprep.subr.mxu0 0.0
    %v2290 = vand.u32 %v156, 4294901760
    %v2291 = vsub.f32 %v156, %v2290
    %v2292 = vand.u32 %v2291, 4294901760
    %v2293 = vsub.f32 %v2291, %v2292
    %v2294 = vand.u32 %v2293, 4294901760
    %2295 = vmatpush1.msra.mxu0 %v2294
    %2296 = vmatprep.subr.mxu0 0.0
    %v2297 = vand.u32 %v187, 4294901760
    %v2298 = vsub.f32 %v187, %v2297
    %v2299 = vand.u32 %v2298, 4294901760
    %v2300 = vsub.f32 %v2298, %v2299
    %v2301 = vand.u32 %v2300, 4294901760
    %2302 = vmatpush2.msra.mxu0 %v2301
    %2303 = vmatprep.subr.mxu0 0.0
    %v2304 = vand.u32 %v186, 4294901760
    %v2305 = vsub.f32 %v186, %v2304
    %v2306 = vand.u32 %v2305, 4294901760
    %v2307 = vsub.f32 %v2305, %v2306
    %v2308 = vand.u32 %v2307, 4294901760
    %2309 = vmatpush2.msra.mxu0 %v2308
    %2310 = vmatprep.subr.mxu0 0.0
    %v2311 = vand.u32 %v185, 4294901760
    %v2312 = vsub.f32 %v185, %v2311
    %v2313 = vand.u32 %v2312, 4294901760
    %v2314 = vsub.f32 %v2312, %v2313
    %v2315 = vand.u32 %v2314, 4294901760
    %2316 = vmatpush2.msra.mxu0 %v2315
    %2317 = vmatprep.subr.mxu0 0.0
    %v2318 = vand.u32 %v184, 4294901760
    %v2319 = vsub.f32 %v184, %v2318
    %v2320 = vand.u32 %v2319, 4294901760
    %v2321 = vsub.f32 %v2319, %v2320
    %v2322 = vand.u32 %v2321, 4294901760
    %2323 = vmatpush2.msra.mxu0 %v2322
    %2324 = vmatprep.subr.mxu0 0.0
    %v2325 = vand.u32 %v183, 4294901760
    %v2326 = vsub.f32 %v183, %v2325
    %v2327 = vand.u32 %v2326, 4294901760
    %v2328 = vsub.f32 %v2326, %v2327
    %v2329 = vand.u32 %v2328, 4294901760
    %2330 = vmatpush2.msra.mxu0 %v2329
    %2331 = vmatprep.subr.mxu0 0.0
    %v2332 = vand.u32 %v182, 4294901760
    %v2333 = vsub.f32 %v182, %v2332
    %v2334 = vand.u32 %v2333, 4294901760
    %v2335 = vsub.f32 %v2333, %v2334
    %v2336 = vand.u32 %v2335, 4294901760
    %2337 = vmatpush2.msra.mxu0 %v2336
    %2338 = vmatprep.subr.mxu0 0.0
    %v2339 = vand.u32 %v181, 4294901760
    %v2340 = vsub.f32 %v181, %v2339
    %v2341 = vand.u32 %v2340, 4294901760
    %v2342 = vsub.f32 %v2340, %v2341
    %v2343 = vand.u32 %v2342, 4294901760
    %2344 = vmatpush2.msra.mxu0 %v2343
    %2345 = vmatprep.subr.mxu0 0.0
    %v2346 = vand.u32 %v180, 4294901760
    %v2347 = vsub.f32 %v180, %v2346
    %v2348 = vand.u32 %v2347, 4294901760
    %v2349 = vsub.f32 %v2347, %v2348
    %v2350 = vand.u32 %v2349, 4294901760
    %2351 = vmatpush2.msra.mxu0 %v2350
    %2352 = vmatprep.subr.mxu0 0.0
    %v2353 = vand.u32 %v179, 4294901760
    %v2354 = vsub.f32 %v179, %v2353
    %v2355 = vand.u32 %v2354, 4294901760
    %v2356 = vsub.f32 %v2354, %v2355
    %v2357 = vand.u32 %v2356, 4294901760
    %2358 = vmatpush2.msra.mxu0 %v2357
    %2359 = vmatprep.subr.mxu0 0.0
    %v2360 = vand.u32 %v178, 4294901760
    %v2361 = vsub.f32 %v178, %v2360
    %v2362 = vand.u32 %v2361, 4294901760
    %v2363 = vsub.f32 %v2361, %v2362
    %v2364 = vand.u32 %v2363, 4294901760
    %2365 = vmatpush2.msra.mxu0 %v2364
    %2366 = vmatprep.subr.mxu0 0.0
    %v2367 = vand.u32 %v177, 4294901760
    %v2368 = vsub.f32 %v177, %v2367
    %v2369 = vand.u32 %v2368, 4294901760
    %v2370 = vsub.f32 %v2368, %v2369
    %v2371 = vand.u32 %v2370, 4294901760
    %2372 = vmatpush2.msra.mxu0 %v2371
    %2373 = vmatprep.subr.mxu0 0.0
    %v2374 = vand.u32 %v176, 4294901760
    %v2375 = vsub.f32 %v176, %v2374
    %v2376 = vand.u32 %v2375, 4294901760
    %v2377 = vsub.f32 %v2375, %v2376
    %v2378 = vand.u32 %v2377, 4294901760
    %2379 = vmatpush2.msra.mxu0 %v2378
    %2380 = vmatprep.subr.mxu0 0.0
    %v2381 = vand.u32 %v175, 4294901760
    %v2382 = vsub.f32 %v175, %v2381
    %v2383 = vand.u32 %v2382, 4294901760
    %v2384 = vsub.f32 %v2382, %v2383
    %v2385 = vand.u32 %v2384, 4294901760
    %2386 = vmatpush2.msra.mxu0 %v2385
    %2387 = vmatprep.subr.mxu0 0.0
    %v2388 = vand.u32 %v174, 4294901760
    %v2389 = vsub.f32 %v174, %v2388
    %v2390 = vand.u32 %v2389, 4294901760
    %v2391 = vsub.f32 %v2389, %v2390
    %v2392 = vand.u32 %v2391, 4294901760
    %2393 = vmatpush2.msra.mxu0 %v2392
    %2394 = vmatprep.subr.mxu0 0.0
    %v2395 = vand.u32 %v173, 4294901760
    %v2396 = vsub.f32 %v173, %v2395
    %v2397 = vand.u32 %v2396, 4294901760
    %v2398 = vsub.f32 %v2396, %v2397
    %v2399 = vand.u32 %v2398, 4294901760
    %2400 = vmatpush2.msra.mxu0 %v2399
    %2401 = vmatprep.subr.mxu0 0.0
    %v2402 = vand.u32 %v172, 4294901760
    %v2403 = vsub.f32 %v172, %v2402
    %v2404 = vand.u32 %v2403, 4294901760
    %v2405 = vsub.f32 %v2403, %v2404
    %v2406 = vand.u32 %v2405, 4294901760
    %2407 = vmatpush2.msra.mxu0 %v2406
    %v2408 = vand.u32 %v59, 4294901760
    %2409 = vmatprep.mubr.f32.mxu0 %v2408
    %v2410 = vand.u32 %v58, 4294901760
    %2411 = vmatmul.mubr.f32.gmra.mxu0 %v2410
    %v2412 = vpop.f32.mrf.mxu0
    %v2413 = vadd.f32 %v2181, %v2412
    %v2414 = vpop.f32.mrf.mxu0
    %2415 = vdwg.mxu0
    %2416 = vmatprep.subr.mxu0 0.0
    %v2417 = vand.u32 %v171, 4294901760
    %v2418 = vsub.f32 %v171, %v2417
    %2419 = vmatpush1.msra.mxu0 %v2418
    %2420 = vmatprep.subr.mxu0 0.0
    %v2421 = vand.u32 %v170, 4294901760
    %v2422 = vsub.f32 %v170, %v2421
    %2423 = vmatpush1.msra.mxu0 %v2422
    %2424 = vmatprep.subr.mxu0 0.0
    %v2425 = vand.u32 %v169, 4294901760
    %v2426 = vsub.f32 %v169, %v2425
    %2427 = vmatpush1.msra.mxu0 %v2426
    %2428 = vmatprep.subr.mxu0 0.0
    %v2429 = vand.u32 %v168, 4294901760
    %v2430 = vsub.f32 %v168, %v2429
    %2431 = vmatpush1.msra.mxu0 %v2430
    %2432 = vmatprep.subr.mxu0 0.0
    %v2433 = vand.u32 %v167, 4294901760
    %v2434 = vsub.f32 %v167, %v2433
    %2435 = vmatpush1.msra.mxu0 %v2434
    %2436 = vmatprep.subr.mxu0 0.0
    %v2437 = vand.u32 %v166, 4294901760
    %v2438 = vsub.f32 %v166, %v2437
    %2439 = vmatpush1.msra.mxu0 %v2438
    %2440 = vmatprep.subr.mxu0 0.0
    %v2441 = vand.u32 %v165, 4294901760
    %v2442 = vsub.f32 %v165, %v2441
    %2443 = vmatpush1.msra.mxu0 %v2442
    %2444 = vmatprep.subr.mxu0 0.0
    %v2445 = vand.u32 %v164, 4294901760
    %v2446 = vsub.f32 %v164, %v2445
    %2447 = vmatpush1.msra.mxu0 %v2446
    %2448 = vmatprep.subr.mxu0 0.0
    %v2449 = vand.u32 %v163, 4294901760
    %v2450 = vsub.f32 %v163, %v2449
    %2451 = vmatpush1.msra.mxu0 %v2450
    %2452 = vmatprep.subr.mxu0 0.0
    %v2453 = vand.u32 %v162, 4294901760
    %v2454 = vsub.f32 %v162, %v2453
    %2455 = vmatpush1.msra.mxu0 %v2454
    %2456 = vmatprep.subr.mxu0 0.0
    %v2457 = vand.u32 %v161, 4294901760
    %v2458 = vsub.f32 %v161, %v2457
    %2459 = vmatpush1.msra.mxu0 %v2458
    %2460 = vmatprep.subr.mxu0 0.0
    %v2461 = vand.u32 %v160, 4294901760
    %v2462 = vsub.f32 %v160, %v2461
    %2463 = vmatpush1.msra.mxu0 %v2462
    %2464 = vmatprep.subr.mxu0 0.0
    %v2465 = vand.u32 %v159, 4294901760
    %v2466 = vsub.f32 %v159, %v2465
    %2467 = vmatpush1.msra.mxu0 %v2466
    %2468 = vmatprep.subr.mxu0 0.0
    %v2469 = vand.u32 %v158, 4294901760
    %v2470 = vsub.f32 %v158, %v2469
    %2471 = vmatpush1.msra.mxu0 %v2470
    %2472 = vmatprep.subr.mxu0 0.0
    %v2473 = vand.u32 %v157, 4294901760
    %v2474 = vsub.f32 %v157, %v2473
    %2475 = vmatpush1.msra.mxu0 %v2474
    %2476 = vmatprep.subr.mxu0 0.0
    %v2477 = vand.u32 %v156, 4294901760
    %v2478 = vsub.f32 %v156, %v2477
    %2479 = vmatpush1.msra.mxu0 %v2478
    %2480 = vmatprep.subr.mxu0 0.0
    %v2481 = vand.u32 %v187, 4294901760
    %v2482 = vsub.f32 %v187, %v2481
    %2483 = vmatpush2.msra.mxu0 %v2482
    %2484 = vmatprep.subr.mxu0 0.0
    %v2485 = vand.u32 %v186, 4294901760
    %v2486 = vsub.f32 %v186, %v2485
    %2487 = vmatpush2.msra.mxu0 %v2486
    %2488 = vmatprep.subr.mxu0 0.0
    %v2489 = vand.u32 %v185, 4294901760
    %v2490 = vsub.f32 %v185, %v2489
    %2491 = vmatpush2.msra.mxu0 %v2490
    %2492 = vmatprep.subr.mxu0 0.0
    %v2493 = vand.u32 %v184, 4294901760
    %v2494 = vsub.f32 %v184, %v2493
    %2495 = vmatpush2.msra.mxu0 %v2494
    %2496 = vmatprep.subr.mxu0 0.0
    %v2497 = vand.u32 %v183, 4294901760
    %v2498 = vsub.f32 %v183, %v2497
    %2499 = vmatpush2.msra.mxu0 %v2498
    %2500 = vmatprep.subr.mxu0 0.0
    %v2501 = vand.u32 %v182, 4294901760
    %v2502 = vsub.f32 %v182, %v2501
    %2503 = vmatpush2.msra.mxu0 %v2502
    %2504 = vmatprep.subr.mxu0 0.0
    %v2505 = vand.u32 %v181, 4294901760
    %v2506 = vsub.f32 %v181, %v2505
    %2507 = vmatpush2.msra.mxu0 %v2506
    %2508 = vmatprep.subr.mxu0 0.0
    %v2509 = vand.u32 %v180, 4294901760
    %v2510 = vsub.f32 %v180, %v2509
    %2511 = vmatpush2.msra.mxu0 %v2510
    %2512 = vmatprep.subr.mxu0 0.0
    %v2513 = vand.u32 %v179, 4294901760
    %v2514 = vsub.f32 %v179, %v2513
    %2515 = vmatpush2.msra.mxu0 %v2514
    %2516 = vmatprep.subr.mxu0 0.0
    %v2517 = vand.u32 %v178, 4294901760
    %v2518 = vsub.f32 %v178, %v2517
    %2519 = vmatpush2.msra.mxu0 %v2518
    %2520 = vmatprep.subr.mxu0 0.0
    %v2521 = vand.u32 %v177, 4294901760
    %v2522 = vsub.f32 %v177, %v2521
    %2523 = vmatpush2.msra.mxu0 %v2522
    %2524 = vmatprep.subr.mxu0 0.0
    %v2525 = vand.u32 %v176, 4294901760
    %v2526 = vsub.f32 %v176, %v2525
    %2527 = vmatpush2.msra.mxu0 %v2526
    %2528 = vmatprep.subr.mxu0 0.0
    %v2529 = vand.u32 %v175, 4294901760
    %v2530 = vsub.f32 %v175, %v2529
    %2531 = vmatpush2.msra.mxu0 %v2530
    %2532 = vmatprep.subr.mxu0 0.0
    %v2533 = vand.u32 %v174, 4294901760
    %v2534 = vsub.f32 %v174, %v2533
    %2535 = vmatpush2.msra.mxu0 %v2534
    %2536 = vmatprep.subr.mxu0 0.0
    %v2537 = vand.u32 %v173, 4294901760
    %v2538 = vsub.f32 %v173, %v2537
    %2539 = vmatpush2.msra.mxu0 %v2538
    %2540 = vmatprep.subr.mxu0 0.0
    %v2541 = vand.u32 %v172, 4294901760
    %v2542 = vsub.f32 %v172, %v2541
    %2543 = vmatpush2.msra.mxu0 %v2542
    %v2544 = vand.u32 %v59, 4294901760
    %v2545 = vsub.f32 %v59, %v2544
    %2546 = vmatprep.mubr.f32.mxu0 %v2545
    %v2547 = vand.u32 %v58, 4294901760
    %v2548 = vsub.f32 %v58, %v2547
    %2549 = vmatmul.mubr.f32.gmra.mxu0 %v2548
    %v2550 = vpop.f32.mrf.mxu0
    %v2551 = vadd.f32 %v2413, %v2550
    %v2552 = vpop.f32.mrf.mxu0
    %2553 = vdwg.mxu0
    %2554 = vmatprep.subr.mxu0 0.0
    %v2555 = vand.u32 %v171, 4294901760
    %2556 = vmatpush1.msra.mxu0 %v2555
    %2557 = vmatprep.subr.mxu0 0.0
    %v2558 = vand.u32 %v170, 4294901760
    %2559 = vmatpush1.msra.mxu0 %v2558
    %2560 = vmatprep.subr.mxu0 0.0
    %v2561 = vand.u32 %v169, 4294901760
    %2562 = vmatpush1.msra.mxu0 %v2561
    %2563 = vmatprep.subr.mxu0 0.0
    %v2564 = vand.u32 %v168, 4294901760
    %2565 = vmatpush1.msra.mxu0 %v2564
    %2566 = vmatprep.subr.mxu0 0.0
    %v2567 = vand.u32 %v167, 4294901760
    %2568 = vmatpush1.msra.mxu0 %v2567
    %2569 = vmatprep.subr.mxu0 0.0
    %v2570 = vand.u32 %v166, 4294901760
    %2571 = vmatpush1.msra.mxu0 %v2570
    %2572 = vmatprep.subr.mxu0 0.0
    %v2573 = vand.u32 %v165, 4294901760
    %2574 = vmatpush1.msra.mxu0 %v2573
    %2575 = vmatprep.subr.mxu0 0.0
    %v2576 = vand.u32 %v164, 4294901760
    %2577 = vmatpush1.msra.mxu0 %v2576
    %2578 = vmatprep.subr.mxu0 0.0
    %v2579 = vand.u32 %v163, 4294901760
    %2580 = vmatpush1.msra.mxu0 %v2579
    %2581 = vmatprep.subr.mxu0 0.0
    %v2582 = vand.u32 %v162, 4294901760
    %2583 = vmatpush1.msra.mxu0 %v2582
    %2584 = vmatprep.subr.mxu0 0.0
    %v2585 = vand.u32 %v161, 4294901760
    %2586 = vmatpush1.msra.mxu0 %v2585
    %2587 = vmatprep.subr.mxu0 0.0
    %v2588 = vand.u32 %v160, 4294901760
    %2589 = vmatpush1.msra.mxu0 %v2588
    %2590 = vmatprep.subr.mxu0 0.0
    %v2591 = vand.u32 %v159, 4294901760
    %2592 = vmatpush1.msra.mxu0 %v2591
    %2593 = vmatprep.subr.mxu0 0.0
    %v2594 = vand.u32 %v158, 4294901760
    %2595 = vmatpush1.msra.mxu0 %v2594
    %2596 = vmatprep.subr.mxu0 0.0
    %v2597 = vand.u32 %v157, 4294901760
    %2598 = vmatpush1.msra.mxu0 %v2597
    %2599 = vmatprep.subr.mxu0 0.0
    %v2600 = vand.u32 %v156, 4294901760
    %2601 = vmatpush1.msra.mxu0 %v2600
    %2602 = vmatprep.subr.mxu0 0.0
    %v2603 = vand.u32 %v187, 4294901760
    %2604 = vmatpush2.msra.mxu0 %v2603
    %2605 = vmatprep.subr.mxu0 0.0
    %v2606 = vand.u32 %v186, 4294901760
    %2607 = vmatpush2.msra.mxu0 %v2606
    %2608 = vmatprep.subr.mxu0 0.0
    %v2609 = vand.u32 %v185, 4294901760
    %2610 = vmatpush2.msra.mxu0 %v2609
    %2611 = vmatprep.subr.mxu0 0.0
    %v2612 = vand.u32 %v184, 4294901760
    %2613 = vmatpush2.msra.mxu0 %v2612
    %2614 = vmatprep.subr.mxu0 0.0
    %v2615 = vand.u32 %v183, 4294901760
    %2616 = vmatpush2.msra.mxu0 %v2615
    %2617 = vmatprep.subr.mxu0 0.0
    %v2618 = vand.u32 %v182, 4294901760
    %2619 = vmatpush2.msra.mxu0 %v2618
    %2620 = vmatprep.subr.mxu0 0.0
    %v2621 = vand.u32 %v181, 4294901760
    %2622 = vmatpush2.msra.mxu0 %v2621
    %2623 = vmatprep.subr.mxu0 0.0
    %v2624 = vand.u32 %v180, 4294901760
    %2625 = vmatpush2.msra.mxu0 %v2624
    %2626 = vmatprep.subr.mxu0 0.0
    %v2627 = vand.u32 %v179, 4294901760
    %2628 = vmatpush2.msra.mxu0 %v2627
    %2629 = vmatprep.subr.mxu0 0.0
    %v2630 = vand.u32 %v178, 4294901760
    %2631 = vmatpush2.msra.mxu0 %v2630
    %2632 = vmatprep.subr.mxu0 0.0
    %v2633 = vand.u32 %v177, 4294901760
    %2634 = vmatpush2.msra.mxu0 %v2633
    %2635 = vmatprep.subr.mxu0 0.0
    %v2636 = vand.u32 %v176, 4294901760
    %2637 = vmatpush2.msra.mxu0 %v2636
    %2638 = vmatprep.subr.mxu0 0.0
    %v2639 = vand.u32 %v175, 4294901760
    %2640 = vmatpush2.msra.mxu0 %v2639
    %2641 = vmatprep.subr.mxu0 0.0
    %v2642 = vand.u32 %v174, 4294901760
    %2643 = vmatpush2.msra.mxu0 %v2642
    %2644 = vmatprep.subr.mxu0 0.0
    %v2645 = vand.u32 %v173, 4294901760
    %2646 = vmatpush2.msra.mxu0 %v2645
    %2647 = vmatprep.subr.mxu0 0.0
    %v2648 = vand.u32 %v172, 4294901760
    %2649 = vmatpush2.msra.mxu0 %v2648
    %v2650 = vand.u32 %v59, 4294901760
    %v2651 = vsub.f32 %v59, %v2650
    %v2652 = vand.u32 %v2651, 4294901760
    %2653 = vmatprep.mubr.f32.mxu0 %v2652
    %v2654 = vand.u32 %v58, 4294901760
    %v2655 = vsub.f32 %v58, %v2654
    %v2656 = vand.u32 %v2655, 4294901760
    %2657 = vmatmul.mubr.f32.gmra.mxu0 %v2656
    %v2658 = vpop.f32.mrf.mxu0
    %v2659 = vadd.f32 %v2551, %v2658
    %v2660 = vpop.f32.mrf.mxu0
    %2661 = vdwg.mxu0
    %2662 = vmatprep.subr.mxu0 0.0
    %v2663 = vand.u32 %v171, 4294901760
    %v2664 = vsub.f32 %v171, %v2663
    %v2665 = vand.u32 %v2664, 4294901760
    %2666 = vmatpush1.msra.mxu0 %v2665
    %2667 = vmatprep.subr.mxu0 0.0
    %v2668 = vand.u32 %v170, 4294901760
    %v2669 = vsub.f32 %v170, %v2668
    %v2670 = vand.u32 %v2669, 4294901760
    %2671 = vmatpush1.msra.mxu0 %v2670
    %2672 = vmatprep.subr.mxu0 0.0
    %v2673 = vand.u32 %v169, 4294901760
    %v2674 = vsub.f32 %v169, %v2673
    %v2675 = vand.u32 %v2674, 4294901760
    %2676 = vmatpush1.msra.mxu0 %v2675
    %2677 = vmatprep.subr.mxu0 0.0
    %v2678 = vand.u32 %v168, 4294901760
    %v2679 = vsub.f32 %v168, %v2678
    %v2680 = vand.u32 %v2679, 4294901760
    %2681 = vmatpush1.msra.mxu0 %v2680
    %2682 = vmatprep.subr.mxu0 0.0
    %v2683 = vand.u32 %v167, 4294901760
    %v2684 = vsub.f32 %v167, %v2683
    %v2685 = vand.u32 %v2684, 4294901760
    %2686 = vmatpush1.msra.mxu0 %v2685
    %2687 = vmatprep.subr.mxu0 0.0
    %v2688 = vand.u32 %v166, 4294901760
    %v2689 = vsub.f32 %v166, %v2688
    %v2690 = vand.u32 %v2689, 4294901760
    %2691 = vmatpush1.msra.mxu0 %v2690
    %2692 = vmatprep.subr.mxu0 0.0
    %v2693 = vand.u32 %v165, 4294901760
    %v2694 = vsub.f32 %v165, %v2693
    %v2695 = vand.u32 %v2694, 4294901760
    %2696 = vmatpush1.msra.mxu0 %v2695
    %2697 = vmatprep.subr.mxu0 0.0
    %v2698 = vand.u32 %v164, 4294901760
    %v2699 = vsub.f32 %v164, %v2698
    %v2700 = vand.u32 %v2699, 4294901760
    %2701 = vmatpush1.msra.mxu0 %v2700
    %2702 = vmatprep.subr.mxu0 0.0
    %v2703 = vand.u32 %v163, 4294901760
    %v2704 = vsub.f32 %v163, %v2703
    %v2705 = vand.u32 %v2704, 4294901760
    %2706 = vmatpush1.msra.mxu0 %v2705
    %2707 = vmatprep.subr.mxu0 0.0
    %v2708 = vand.u32 %v162, 4294901760
    %v2709 = vsub.f32 %v162, %v2708
    %v2710 = vand.u32 %v2709, 4294901760
    %2711 = vmatpush1.msra.mxu0 %v2710
    %2712 = vmatprep.subr.mxu0 0.0
    %v2713 = vand.u32 %v161, 4294901760
    %v2714 = vsub.f32 %v161, %v2713
    %v2715 = vand.u32 %v2714, 4294901760
    %2716 = vmatpush1.msra.mxu0 %v2715
    %2717 = vmatprep.subr.mxu0 0.0
    %v2718 = vand.u32 %v160, 4294901760
    %v2719 = vsub.f32 %v160, %v2718
    %v2720 = vand.u32 %v2719, 4294901760
    %2721 = vmatpush1.msra.mxu0 %v2720
    %2722 = vmatprep.subr.mxu0 0.0
    %v2723 = vand.u32 %v159, 4294901760
    %v2724 = vsub.f32 %v159, %v2723
    %v2725 = vand.u32 %v2724, 4294901760
    %2726 = vmatpush1.msra.mxu0 %v2725
    %2727 = vmatprep.subr.mxu0 0.0
    %v2728 = vand.u32 %v158, 4294901760
    %v2729 = vsub.f32 %v158, %v2728
    %v2730 = vand.u32 %v2729, 4294901760
    %2731 = vmatpush1.msra.mxu0 %v2730
    %2732 = vmatprep.subr.mxu0 0.0
    %v2733 = vand.u32 %v157, 4294901760
    %v2734 = vsub.f32 %v157, %v2733
    %v2735 = vand.u32 %v2734, 4294901760
    %2736 = vmatpush1.msra.mxu0 %v2735
    %2737 = vmatprep.subr.mxu0 0.0
    %v2738 = vand.u32 %v156, 4294901760
    %v2739 = vsub.f32 %v156, %v2738
    %v2740 = vand.u32 %v2739, 4294901760
    %2741 = vmatpush1.msra.mxu0 %v2740
    %2742 = vmatprep.subr.mxu0 0.0
    %v2743 = vand.u32 %v187, 4294901760
    %v2744 = vsub.f32 %v187, %v2743
    %v2745 = vand.u32 %v2744, 4294901760
    %2746 = vmatpush2.msra.mxu0 %v2745
    %2747 = vmatprep.subr.mxu0 0.0
    %v2748 = vand.u32 %v186, 4294901760
    %v2749 = vsub.f32 %v186, %v2748
    %v2750 = vand.u32 %v2749, 4294901760
    %2751 = vmatpush2.msra.mxu0 %v2750
    %2752 = vmatprep.subr.mxu0 0.0
    %v2753 = vand.u32 %v185, 4294901760
    %v2754 = vsub.f32 %v185, %v2753
    %v2755 = vand.u32 %v2754, 4294901760
    %2756 = vmatpush2.msra.mxu0 %v2755
    %2757 = vmatprep.subr.mxu0 0.0
    %v2758 = vand.u32 %v184, 4294901760
    %v2759 = vsub.f32 %v184, %v2758
    %v2760 = vand.u32 %v2759, 4294901760
    %2761 = vmatpush2.msra.mxu0 %v2760
    %2762 = vmatprep.subr.mxu0 0.0
    %v2763 = vand.u32 %v183, 4294901760
    %v2764 = vsub.f32 %v183, %v2763
    %v2765 = vand.u32 %v2764, 4294901760
    %2766 = vmatpush2.msra.mxu0 %v2765
    %2767 = vmatprep.subr.mxu0 0.0
    %v2768 = vand.u32 %v182, 4294901760
    %v2769 = vsub.f32 %v182, %v2768
    %v2770 = vand.u32 %v2769, 4294901760
    %2771 = vmatpush2.msra.mxu0 %v2770
    %2772 = vmatprep.subr.mxu0 0.0
    %v2773 = vand.u32 %v181, 4294901760
    %v2774 = vsub.f32 %v181, %v2773
    %v2775 = vand.u32 %v2774, 4294901760
    %2776 = vmatpush2.msra.mxu0 %v2775
    %2777 = vmatprep.subr.mxu0 0.0
    %v2778 = vand.u32 %v180, 4294901760
    %v2779 = vsub.f32 %v180, %v2778
    %v2780 = vand.u32 %v2779, 4294901760
    %2781 = vmatpush2.msra.mxu0 %v2780
    %2782 = vmatprep.subr.mxu0 0.0
    %v2783 = vand.u32 %v179, 4294901760
    %v2784 = vsub.f32 %v179, %v2783
    %v2785 = vand.u32 %v2784, 4294901760
    %2786 = vmatpush2.msra.mxu0 %v2785
    %2787 = vmatprep.subr.mxu0 0.0
    %v2788 = vand.u32 %v178, 4294901760
    %v2789 = vsub.f32 %v178, %v2788
    %v2790 = vand.u32 %v2789, 4294901760
    %2791 = vmatpush2.msra.mxu0 %v2790
    %2792 = vmatprep.subr.mxu0 0.0
    %v2793 = vand.u32 %v177, 4294901760
    %v2794 = vsub.f32 %v177, %v2793
    %v2795 = vand.u32 %v2794, 4294901760
    %2796 = vmatpush2.msra.mxu0 %v2795
    %2797 = vmatprep.subr.mxu0 0.0
    %v2798 = vand.u32 %v176, 4294901760
    %v2799 = vsub.f32 %v176, %v2798
    %v2800 = vand.u32 %v2799, 4294901760
    %2801 = vmatpush2.msra.mxu0 %v2800
    %2802 = vmatprep.subr.mxu0 0.0
    %v2803 = vand.u32 %v175, 4294901760
    %v2804 = vsub.f32 %v175, %v2803
    %v2805 = vand.u32 %v2804, 4294901760
    %2806 = vmatpush2.msra.mxu0 %v2805
    %2807 = vmatprep.subr.mxu0 0.0
    %v2808 = vand.u32 %v174, 4294901760
    %v2809 = vsub.f32 %v174, %v2808
    %v2810 = vand.u32 %v2809, 4294901760
    %2811 = vmatpush2.msra.mxu0 %v2810
    %2812 = vmatprep.subr.mxu0 0.0
    %v2813 = vand.u32 %v173, 4294901760
    %v2814 = vsub.f32 %v173, %v2813
    %v2815 = vand.u32 %v2814, 4294901760
    %2816 = vmatpush2.msra.mxu0 %v2815
    %2817 = vmatprep.subr.mxu0 0.0
    %v2818 = vand.u32 %v172, 4294901760
    %v2819 = vsub.f32 %v172, %v2818
    %v2820 = vand.u32 %v2819, 4294901760
    %2821 = vmatpush2.msra.mxu0 %v2820
    %v2822 = vand.u32 %v59, 4294901760
    %2823 = vmatprep.mubr.f32.mxu0 %v2822
    %v2824 = vand.u32 %v58, 4294901760
    %2825 = vmatmul.mubr.f32.gmra.mxu0 %v2824
    %v2826 = vpop.f32.mrf.mxu0
    %v2827 = vadd.f32 %v2659, %v2826
    %v2828 = vpop.f32.mrf.mxu0
    %2829 = vdwg.mxu0
    %2830 = vmatprep.subr.mxu0 0.0
    %v2831 = vand.u32 %v171, 4294901760
    %2832 = vmatpush1.msra.mxu0 %v2831
    %2833 = vmatprep.subr.mxu0 0.0
    %v2834 = vand.u32 %v170, 4294901760
    %2835 = vmatpush1.msra.mxu0 %v2834
    %2836 = vmatprep.subr.mxu0 0.0
    %v2837 = vand.u32 %v169, 4294901760
    %2838 = vmatpush1.msra.mxu0 %v2837
    %2839 = vmatprep.subr.mxu0 0.0
    %v2840 = vand.u32 %v168, 4294901760
    %2841 = vmatpush1.msra.mxu0 %v2840
    %2842 = vmatprep.subr.mxu0 0.0
    %v2843 = vand.u32 %v167, 4294901760
    %2844 = vmatpush1.msra.mxu0 %v2843
    %2845 = vmatprep.subr.mxu0 0.0
    %v2846 = vand.u32 %v166, 4294901760
    %2847 = vmatpush1.msra.mxu0 %v2846
    %2848 = vmatprep.subr.mxu0 0.0
    %v2849 = vand.u32 %v165, 4294901760
    %2850 = vmatpush1.msra.mxu0 %v2849
    %2851 = vmatprep.subr.mxu0 0.0
    %v2852 = vand.u32 %v164, 4294901760
    %2853 = vmatpush1.msra.mxu0 %v2852
    %2854 = vmatprep.subr.mxu0 0.0
    %v2855 = vand.u32 %v163, 4294901760
    %2856 = vmatpush1.msra.mxu0 %v2855
    %2857 = vmatprep.subr.mxu0 0.0
    %v2858 = vand.u32 %v162, 4294901760
    %2859 = vmatpush1.msra.mxu0 %v2858
    %2860 = vmatprep.subr.mxu0 0.0
    %v2861 = vand.u32 %v161, 4294901760
    %2862 = vmatpush1.msra.mxu0 %v2861
    %2863 = vmatprep.subr.mxu0 0.0
    %v2864 = vand.u32 %v160, 4294901760
    %2865 = vmatpush1.msra.mxu0 %v2864
    %2866 = vmatprep.subr.mxu0 0.0
    %v2867 = vand.u32 %v159, 4294901760
    %2868 = vmatpush1.msra.mxu0 %v2867
    %2869 = vmatprep.subr.mxu0 0.0
    %v2870 = vand.u32 %v158, 4294901760
    %2871 = vmatpush1.msra.mxu0 %v2870
    %2872 = vmatprep.subr.mxu0 0.0
    %v2873 = vand.u32 %v157, 4294901760
    %2874 = vmatpush1.msra.mxu0 %v2873
    %2875 = vmatprep.subr.mxu0 0.0
    %v2876 = vand.u32 %v156, 4294901760
    %2877 = vmatpush1.msra.mxu0 %v2876
    %2878 = vmatprep.subr.mxu0 0.0
    %v2879 = vand.u32 %v187, 4294901760
    %2880 = vmatpush2.msra.mxu0 %v2879
    %2881 = vmatprep.subr.mxu0 0.0
    %v2882 = vand.u32 %v186, 4294901760
    %2883 = vmatpush2.msra.mxu0 %v2882
    %2884 = vmatprep.subr.mxu0 0.0
    %v2885 = vand.u32 %v185, 4294901760
    %2886 = vmatpush2.msra.mxu0 %v2885
    %2887 = vmatprep.subr.mxu0 0.0
    %v2888 = vand.u32 %v184, 4294901760
    %2889 = vmatpush2.msra.mxu0 %v2888
    %2890 = vmatprep.subr.mxu0 0.0
    %v2891 = vand.u32 %v183, 4294901760
    %2892 = vmatpush2.msra.mxu0 %v2891
    %2893 = vmatprep.subr.mxu0 0.0
    %v2894 = vand.u32 %v182, 4294901760
    %2895 = vmatpush2.msra.mxu0 %v2894
    %2896 = vmatprep.subr.mxu0 0.0
    %v2897 = vand.u32 %v181, 4294901760
    %2898 = vmatpush2.msra.mxu0 %v2897
    %2899 = vmatprep.subr.mxu0 0.0
    %v2900 = vand.u32 %v180, 4294901760
    %2901 = vmatpush2.msra.mxu0 %v2900
    %2902 = vmatprep.subr.mxu0 0.0
    %v2903 = vand.u32 %v179, 4294901760
    %2904 = vmatpush2.msra.mxu0 %v2903
    %2905 = vmatprep.subr.mxu0 0.0
    %v2906 = vand.u32 %v178, 4294901760
    %2907 = vmatpush2.msra.mxu0 %v2906
    %2908 = vmatprep.subr.mxu0 0.0
    %v2909 = vand.u32 %v177, 4294901760
    %2910 = vmatpush2.msra.mxu0 %v2909
    %2911 = vmatprep.subr.mxu0 0.0
    %v2912 = vand.u32 %v176, 4294901760
    %2913 = vmatpush2.msra.mxu0 %v2912
    %2914 = vmatprep.subr.mxu0 0.0
    %v2915 = vand.u32 %v175, 4294901760
    %2916 = vmatpush2.msra.mxu0 %v2915
    %2917 = vmatprep.subr.mxu0 0.0
    %v2918 = vand.u32 %v174, 4294901760
    %2919 = vmatpush2.msra.mxu0 %v2918
    %2920 = vmatprep.subr.mxu0 0.0
    %v2921 = vand.u32 %v173, 4294901760
    %2922 = vmatpush2.msra.mxu0 %v2921
    %2923 = vmatprep.subr.mxu0 0.0
    %v2924 = vand.u32 %v172, 4294901760
    %2925 = vmatpush2.msra.mxu0 %v2924
    %v2926 = vand.u32 %v59, 4294901760
    %2927 = vmatprep.mubr.f32.mxu0 %v2926
    %v2928 = vand.u32 %v58, 4294901760
    %2929 = vmatmul.mubr.f32.gmra.mxu0 %v2928
    %v2930 = vpop.f32.mrf.mxu0
    %v2931 = vadd.f32 %v2827, %v2930
    %v2932 = vpop.f32.mrf.mxu0
    %2933 = vdwg.mxu0
    %2934 = vmatprep.subr.mxu0 0.0
    %v2935 = vand.u32 %v203, 4294901760
    %2936 = vmatpush1.msra.mxu0 %v2935
    %2937 = vmatprep.subr.mxu0 0.0
    %v2938 = vand.u32 %v202, 4294901760
    %2939 = vmatpush1.msra.mxu0 %v2938
    %2940 = vmatprep.subr.mxu0 0.0
    %v2941 = vand.u32 %v201, 4294901760
    %2942 = vmatpush1.msra.mxu0 %v2941
    %2943 = vmatprep.subr.mxu0 0.0
    %v2944 = vand.u32 %v200, 4294901760
    %2945 = vmatpush1.msra.mxu0 %v2944
    %2946 = vmatprep.subr.mxu0 0.0
    %v2947 = vand.u32 %v199, 4294901760
    %2948 = vmatpush1.msra.mxu0 %v2947
    %2949 = vmatprep.subr.mxu0 0.0
    %v2950 = vand.u32 %v198, 4294901760
    %2951 = vmatpush1.msra.mxu0 %v2950
    %2952 = vmatprep.subr.mxu0 0.0
    %v2953 = vand.u32 %v197, 4294901760
    %2954 = vmatpush1.msra.mxu0 %v2953
    %2955 = vmatprep.subr.mxu0 0.0
    %v2956 = vand.u32 %v196, 4294901760
    %2957 = vmatpush1.msra.mxu0 %v2956
    %2958 = vmatprep.subr.mxu0 0.0
    %v2959 = vand.u32 %v195, 4294901760
    %2960 = vmatpush1.msra.mxu0 %v2959
    %2961 = vmatprep.subr.mxu0 0.0
    %v2962 = vand.u32 %v194, 4294901760
    %2963 = vmatpush1.msra.mxu0 %v2962
    %2964 = vmatprep.subr.mxu0 0.0
    %v2965 = vand.u32 %v193, 4294901760
    %2966 = vmatpush1.msra.mxu0 %v2965
    %2967 = vmatprep.subr.mxu0 0.0
    %v2968 = vand.u32 %v192, 4294901760
    %2969 = vmatpush1.msra.mxu0 %v2968
    %2970 = vmatprep.subr.mxu0 0.0
    %v2971 = vand.u32 %v191, 4294901760
    %2972 = vmatpush1.msra.mxu0 %v2971
    %2973 = vmatprep.subr.mxu0 0.0
    %v2974 = vand.u32 %v190, 4294901760
    %2975 = vmatpush1.msra.mxu0 %v2974
    %2976 = vmatprep.subr.mxu0 0.0
    %v2977 = vand.u32 %v189, 4294901760
    %2978 = vmatpush1.msra.mxu0 %v2977
    %2979 = vmatprep.subr.mxu0 0.0
    %v2980 = vand.u32 %v188, 4294901760
    %2981 = vmatpush1.msra.mxu0 %v2980
    %2982 = vmatprep.subr.mxu0 0.0
    %v2983 = vand.u32 %v219, 4294901760
    %2984 = vmatpush2.msra.mxu0 %v2983
    %2985 = vmatprep.subr.mxu0 0.0
    %v2986 = vand.u32 %v218, 4294901760
    %2987 = vmatpush2.msra.mxu0 %v2986
    %2988 = vmatprep.subr.mxu0 0.0
    %v2989 = vand.u32 %v217, 4294901760
    %2990 = vmatpush2.msra.mxu0 %v2989
    %2991 = vmatprep.subr.mxu0 0.0
    %v2992 = vand.u32 %v216, 4294901760
    %2993 = vmatpush2.msra.mxu0 %v2992
    %2994 = vmatprep.subr.mxu0 0.0
    %v2995 = vand.u32 %v215, 4294901760
    %2996 = vmatpush2.msra.mxu0 %v2995
    %2997 = vmatprep.subr.mxu0 0.0
    %v2998 = vand.u32 %v214, 4294901760
    %2999 = vmatpush2.msra.mxu0 %v2998
    %3000 = vmatprep.subr.mxu0 0.0
    %v3001 = vand.u32 %v213, 4294901760
    %3002 = vmatpush2.msra.mxu0 %v3001
    %3003 = vmatprep.subr.mxu0 0.0
    %v3004 = vand.u32 %v212, 4294901760
    %3005 = vmatpush2.msra.mxu0 %v3004
    %3006 = vmatprep.subr.mxu0 0.0
    %v3007 = vand.u32 %v211, 4294901760
    %3008 = vmatpush2.msra.mxu0 %v3007
    %3009 = vmatprep.subr.mxu0 0.0
    %v3010 = vand.u32 %v210, 4294901760
    %3011 = vmatpush2.msra.mxu0 %v3010
    %3012 = vmatprep.subr.mxu0 0.0
    %v3013 = vand.u32 %v209, 4294901760
    %3014 = vmatpush2.msra.mxu0 %v3013
    %3015 = vmatprep.subr.mxu0 0.0
    %v3016 = vand.u32 %v208, 4294901760
    %3017 = vmatpush2.msra.mxu0 %v3016
    %3018 = vmatprep.subr.mxu0 0.0
    %v3019 = vand.u32 %v207, 4294901760
    %3020 = vmatpush2.msra.mxu0 %v3019
    %3021 = vmatprep.subr.mxu0 0.0
    %v3022 = vand.u32 %v206, 4294901760
    %3023 = vmatpush2.msra.mxu0 %v3022
    %3024 = vmatprep.subr.mxu0 0.0
    %v3025 = vand.u32 %v205, 4294901760
    %3026 = vmatpush2.msra.mxu0 %v3025
    %3027 = vmatprep.subr.mxu0 0.0
    %v3028 = vand.u32 %v204, 4294901760
    %3029 = vmatpush2.msra.mxu0 %v3028
    %v3030 = vand.u32 %v61, 4294901760
    %v3031 = vsub.f32 %v61, %v3030
    %v3032 = vand.u32 %v3031, 4294901760
    %v3033 = vsub.f32 %v3031, %v3032
    %v3034 = vand.u32 %v3033, 4294901760
    %3035 = vmatprep.mubr.f32.mxu0 %v3034
    %v3036 = vand.u32 %v60, 4294901760
    %v3037 = vsub.f32 %v60, %v3036
    %v3038 = vand.u32 %v3037, 4294901760
    %v3039 = vsub.f32 %v3037, %v3038
    %v3040 = vand.u32 %v3039, 4294901760
    %3041 = vmatmul.mubr.f32.gmra.mxu0 %v3040
    %v3042 = vpop.f32.mrf.mxu0
    %v3043 = vadd.f32 %v2931, %v3042
    %v3044 = vpop.f32.mrf.mxu0
    %3045 = vdwg.mxu0
    %3046 = vmatprep.subr.mxu0 0.0
    %v3047 = vand.u32 %v203, 4294901760
    %v3048 = vsub.f32 %v203, %v3047
    %v3049 = vand.u32 %v3048, 4294901760
    %v3050 = vsub.f32 %v3048, %v3049
    %v3051 = vand.u32 %v3050, 4294901760
    %3052 = vmatpush1.msra.mxu0 %v3051
    %3053 = vmatprep.subr.mxu0 0.0
    %v3054 = vand.u32 %v202, 4294901760
    %v3055 = vsub.f32 %v202, %v3054
    %v3056 = vand.u32 %v3055, 4294901760
    %v3057 = vsub.f32 %v3055, %v3056
    %v3058 = vand.u32 %v3057, 4294901760
    %3059 = vmatpush1.msra.mxu0 %v3058
    %3060 = vmatprep.subr.mxu0 0.0
    %v3061 = vand.u32 %v201, 4294901760
    %v3062 = vsub.f32 %v201, %v3061
    %v3063 = vand.u32 %v3062, 4294901760
    %v3064 = vsub.f32 %v3062, %v3063
    %v3065 = vand.u32 %v3064, 4294901760
    %3066 = vmatpush1.msra.mxu0 %v3065
    %3067 = vmatprep.subr.mxu0 0.0
    %v3068 = vand.u32 %v200, 4294901760
    %v3069 = vsub.f32 %v200, %v3068
    %v3070 = vand.u32 %v3069, 4294901760
    %v3071 = vsub.f32 %v3069, %v3070
    %v3072 = vand.u32 %v3071, 4294901760
    %3073 = vmatpush1.msra.mxu0 %v3072
    %3074 = vmatprep.subr.mxu0 0.0
    %v3075 = vand.u32 %v199, 4294901760
    %v3076 = vsub.f32 %v199, %v3075
    %v3077 = vand.u32 %v3076, 4294901760
    %v3078 = vsub.f32 %v3076, %v3077
    %v3079 = vand.u32 %v3078, 4294901760
    %3080 = vmatpush1.msra.mxu0 %v3079
    %3081 = vmatprep.subr.mxu0 0.0
    %v3082 = vand.u32 %v198, 4294901760
    %v3083 = vsub.f32 %v198, %v3082
    %v3084 = vand.u32 %v3083, 4294901760
    %v3085 = vsub.f32 %v3083, %v3084
    %v3086 = vand.u32 %v3085, 4294901760
    %3087 = vmatpush1.msra.mxu0 %v3086
    %3088 = vmatprep.subr.mxu0 0.0
    %v3089 = vand.u32 %v197, 4294901760
    %v3090 = vsub.f32 %v197, %v3089
    %v3091 = vand.u32 %v3090, 4294901760
    %v3092 = vsub.f32 %v3090, %v3091
    %v3093 = vand.u32 %v3092, 4294901760
    %3094 = vmatpush1.msra.mxu0 %v3093
    %3095 = vmatprep.subr.mxu0 0.0
    %v3096 = vand.u32 %v196, 4294901760
    %v3097 = vsub.f32 %v196, %v3096
    %v3098 = vand.u32 %v3097, 4294901760
    %v3099 = vsub.f32 %v3097, %v3098
    %v3100 = vand.u32 %v3099, 4294901760
    %3101 = vmatpush1.msra.mxu0 %v3100
    %3102 = vmatprep.subr.mxu0 0.0
    %v3103 = vand.u32 %v195, 4294901760
    %v3104 = vsub.f32 %v195, %v3103
    %v3105 = vand.u32 %v3104, 4294901760
    %v3106 = vsub.f32 %v3104, %v3105
    %v3107 = vand.u32 %v3106, 4294901760
    %3108 = vmatpush1.msra.mxu0 %v3107
    %3109 = vmatprep.subr.mxu0 0.0
    %v3110 = vand.u32 %v194, 4294901760
    %v3111 = vsub.f32 %v194, %v3110
    %v3112 = vand.u32 %v3111, 4294901760
    %v3113 = vsub.f32 %v3111, %v3112
    %v3114 = vand.u32 %v3113, 4294901760
    %3115 = vmatpush1.msra.mxu0 %v3114
    %3116 = vmatprep.subr.mxu0 0.0
    %v3117 = vand.u32 %v193, 4294901760
    %v3118 = vsub.f32 %v193, %v3117
    %v3119 = vand.u32 %v3118, 4294901760
    %v3120 = vsub.f32 %v3118, %v3119
    %v3121 = vand.u32 %v3120, 4294901760
    %3122 = vmatpush1.msra.mxu0 %v3121
    %3123 = vmatprep.subr.mxu0 0.0
    %v3124 = vand.u32 %v192, 4294901760
    %v3125 = vsub.f32 %v192, %v3124
    %v3126 = vand.u32 %v3125, 4294901760
    %v3127 = vsub.f32 %v3125, %v3126
    %v3128 = vand.u32 %v3127, 4294901760
    %3129 = vmatpush1.msra.mxu0 %v3128
    %3130 = vmatprep.subr.mxu0 0.0
    %v3131 = vand.u32 %v191, 4294901760
    %v3132 = vsub.f32 %v191, %v3131
    %v3133 = vand.u32 %v3132, 4294901760
    %v3134 = vsub.f32 %v3132, %v3133
    %v3135 = vand.u32 %v3134, 4294901760
    %3136 = vmatpush1.msra.mxu0 %v3135
    %3137 = vmatprep.subr.mxu0 0.0
    %v3138 = vand.u32 %v190, 4294901760
    %v3139 = vsub.f32 %v190, %v3138
    %v3140 = vand.u32 %v3139, 4294901760
    %v3141 = vsub.f32 %v3139, %v3140
    %v3142 = vand.u32 %v3141, 4294901760
    %3143 = vmatpush1.msra.mxu0 %v3142
    %3144 = vmatprep.subr.mxu0 0.0
    %v3145 = vand.u32 %v189, 4294901760
    %v3146 = vsub.f32 %v189, %v3145
    %v3147 = vand.u32 %v3146, 4294901760
    %v3148 = vsub.f32 %v3146, %v3147
    %v3149 = vand.u32 %v3148, 4294901760
    %3150 = vmatpush1.msra.mxu0 %v3149
    %3151 = vmatprep.subr.mxu0 0.0
    %v3152 = vand.u32 %v188, 4294901760
    %v3153 = vsub.f32 %v188, %v3152
    %v3154 = vand.u32 %v3153, 4294901760
    %v3155 = vsub.f32 %v3153, %v3154
    %v3156 = vand.u32 %v3155, 4294901760
    %3157 = vmatpush1.msra.mxu0 %v3156
    %3158 = vmatprep.subr.mxu0 0.0
    %v3159 = vand.u32 %v219, 4294901760
    %v3160 = vsub.f32 %v219, %v3159
    %v3161 = vand.u32 %v3160, 4294901760
    %v3162 = vsub.f32 %v3160, %v3161
    %v3163 = vand.u32 %v3162, 4294901760
    %3164 = vmatpush2.msra.mxu0 %v3163
    %3165 = vmatprep.subr.mxu0 0.0
    %v3166 = vand.u32 %v218, 4294901760
    %v3167 = vsub.f32 %v218, %v3166
    %v3168 = vand.u32 %v3167, 4294901760
    %v3169 = vsub.f32 %v3167, %v3168
    %v3170 = vand.u32 %v3169, 4294901760
    %3171 = vmatpush2.msra.mxu0 %v3170
    %3172 = vmatprep.subr.mxu0 0.0
    %v3173 = vand.u32 %v217, 4294901760
    %v3174 = vsub.f32 %v217, %v3173
    %v3175 = vand.u32 %v3174, 4294901760
    %v3176 = vsub.f32 %v3174, %v3175
    %v3177 = vand.u32 %v3176, 4294901760
    %3178 = vmatpush2.msra.mxu0 %v3177
    %3179 = vmatprep.subr.mxu0 0.0
    %v3180 = vand.u32 %v216, 4294901760
    %v3181 = vsub.f32 %v216, %v3180
    %v3182 = vand.u32 %v3181, 4294901760
    %v3183 = vsub.f32 %v3181, %v3182
    %v3184 = vand.u32 %v3183, 4294901760
    %3185 = vmatpush2.msra.mxu0 %v3184
    %3186 = vmatprep.subr.mxu0 0.0
    %v3187 = vand.u32 %v215, 4294901760
    %v3188 = vsub.f32 %v215, %v3187
    %v3189 = vand.u32 %v3188, 4294901760
    %v3190 = vsub.f32 %v3188, %v3189
    %v3191 = vand.u32 %v3190, 4294901760
    %3192 = vmatpush2.msra.mxu0 %v3191
    %3193 = vmatprep.subr.mxu0 0.0
    %v3194 = vand.u32 %v214, 4294901760
    %v3195 = vsub.f32 %v214, %v3194
    %v3196 = vand.u32 %v3195, 4294901760
    %v3197 = vsub.f32 %v3195, %v3196
    %v3198 = vand.u32 %v3197, 4294901760
    %3199 = vmatpush2.msra.mxu0 %v3198
    %3200 = vmatprep.subr.mxu0 0.0
    %v3201 = vand.u32 %v213, 4294901760
    %v3202 = vsub.f32 %v213, %v3201
    %v3203 = vand.u32 %v3202, 4294901760
    %v3204 = vsub.f32 %v3202, %v3203
    %v3205 = vand.u32 %v3204, 4294901760
    %3206 = vmatpush2.msra.mxu0 %v3205
    %3207 = vmatprep.subr.mxu0 0.0
    %v3208 = vand.u32 %v212, 4294901760
    %v3209 = vsub.f32 %v212, %v3208
    %v3210 = vand.u32 %v3209, 4294901760
    %v3211 = vsub.f32 %v3209, %v3210
    %v3212 = vand.u32 %v3211, 4294901760
    %3213 = vmatpush2.msra.mxu0 %v3212
    %3214 = vmatprep.subr.mxu0 0.0
    %v3215 = vand.u32 %v211, 4294901760
    %v3216 = vsub.f32 %v211, %v3215
    %v3217 = vand.u32 %v3216, 4294901760
    %v3218 = vsub.f32 %v3216, %v3217
    %v3219 = vand.u32 %v3218, 4294901760
    %3220 = vmatpush2.msra.mxu0 %v3219
    %3221 = vmatprep.subr.mxu0 0.0
    %v3222 = vand.u32 %v210, 4294901760
    %v3223 = vsub.f32 %v210, %v3222
    %v3224 = vand.u32 %v3223, 4294901760
    %v3225 = vsub.f32 %v3223, %v3224
    %v3226 = vand.u32 %v3225, 4294901760
    %3227 = vmatpush2.msra.mxu0 %v3226
    %3228 = vmatprep.subr.mxu0 0.0
    %v3229 = vand.u32 %v209, 4294901760
    %v3230 = vsub.f32 %v209, %v3229
    %v3231 = vand.u32 %v3230, 4294901760
    %v3232 = vsub.f32 %v3230, %v3231
    %v3233 = vand.u32 %v3232, 4294901760
    %3234 = vmatpush2.msra.mxu0 %v3233
    %3235 = vmatprep.subr.mxu0 0.0
    %v3236 = vand.u32 %v208, 4294901760
    %v3237 = vsub.f32 %v208, %v3236
    %v3238 = vand.u32 %v3237, 4294901760
    %v3239 = vsub.f32 %v3237, %v3238
    %v3240 = vand.u32 %v3239, 4294901760
    %3241 = vmatpush2.msra.mxu0 %v3240
    %3242 = vmatprep.subr.mxu0 0.0
    %v3243 = vand.u32 %v207, 4294901760
    %v3244 = vsub.f32 %v207, %v3243
    %v3245 = vand.u32 %v3244, 4294901760
    %v3246 = vsub.f32 %v3244, %v3245
    %v3247 = vand.u32 %v3246, 4294901760
    %3248 = vmatpush2.msra.mxu0 %v3247
    %3249 = vmatprep.subr.mxu0 0.0
    %v3250 = vand.u32 %v206, 4294901760
    %v3251 = vsub.f32 %v206, %v3250
    %v3252 = vand.u32 %v3251, 4294901760
    %v3253 = vsub.f32 %v3251, %v3252
    %v3254 = vand.u32 %v3253, 4294901760
    %3255 = vmatpush2.msra.mxu0 %v3254
    %3256 = vmatprep.subr.mxu0 0.0
    %v3257 = vand.u32 %v205, 4294901760
    %v3258 = vsub.f32 %v205, %v3257
    %v3259 = vand.u32 %v3258, 4294901760
    %v3260 = vsub.f32 %v3258, %v3259
    %v3261 = vand.u32 %v3260, 4294901760
    %3262 = vmatpush2.msra.mxu0 %v3261
    %3263 = vmatprep.subr.mxu0 0.0
    %v3264 = vand.u32 %v204, 4294901760
    %v3265 = vsub.f32 %v204, %v3264
    %v3266 = vand.u32 %v3265, 4294901760
    %v3267 = vsub.f32 %v3265, %v3266
    %v3268 = vand.u32 %v3267, 4294901760
    %3269 = vmatpush2.msra.mxu0 %v3268
    %v3270 = vand.u32 %v61, 4294901760
    %3271 = vmatprep.mubr.f32.mxu0 %v3270
    %v3272 = vand.u32 %v60, 4294901760
    %3273 = vmatmul.mubr.f32.gmra.mxu0 %v3272
    %v3274 = vpop.f32.mrf.mxu0
    %v3275 = vadd.f32 %v3043, %v3274
    %v3276 = vpop.f32.mrf.mxu0
    %3277 = vdwg.mxu0
    %3278 = vmatprep.subr.mxu0 0.0
    %v3279 = vand.u32 %v203, 4294901760
    %v3280 = vsub.f32 %v203, %v3279
    %3281 = vmatpush1.msra.mxu0 %v3280
    %3282 = vmatprep.subr.mxu0 0.0
    %v3283 = vand.u32 %v202, 4294901760
    %v3284 = vsub.f32 %v202, %v3283
    %3285 = vmatpush1.msra.mxu0 %v3284
    %3286 = vmatprep.subr.mxu0 0.0
    %v3287 = vand.u32 %v201, 4294901760
    %v3288 = vsub.f32 %v201, %v3287
    %3289 = vmatpush1.msra.mxu0 %v3288
    %3290 = vmatprep.subr.mxu0 0.0
    %v3291 = vand.u32 %v200, 4294901760
    %v3292 = vsub.f32 %v200, %v3291
    %3293 = vmatpush1.msra.mxu0 %v3292
    %3294 = vmatprep.subr.mxu0 0.0
    %v3295 = vand.u32 %v199, 4294901760
    %v3296 = vsub.f32 %v199, %v3295
    %3297 = vmatpush1.msra.mxu0 %v3296
    %3298 = vmatprep.subr.mxu0 0.0
    %v3299 = vand.u32 %v198, 4294901760
    %v3300 = vsub.f32 %v198, %v3299
    %3301 = vmatpush1.msra.mxu0 %v3300
    %3302 = vmatprep.subr.mxu0 0.0
    %v3303 = vand.u32 %v197, 4294901760
    %v3304 = vsub.f32 %v197, %v3303
    %3305 = vmatpush1.msra.mxu0 %v3304
    %3306 = vmatprep.subr.mxu0 0.0
    %v3307 = vand.u32 %v196, 4294901760
    %v3308 = vsub.f32 %v196, %v3307
    %3309 = vmatpush1.msra.mxu0 %v3308
    %3310 = vmatprep.subr.mxu0 0.0
    %v3311 = vand.u32 %v195, 4294901760
    %v3312 = vsub.f32 %v195, %v3311
    %3313 = vmatpush1.msra.mxu0 %v3312
    %3314 = vmatprep.subr.mxu0 0.0
    %v3315 = vand.u32 %v194, 4294901760
    %v3316 = vsub.f32 %v194, %v3315
    %3317 = vmatpush1.msra.mxu0 %v3316
    %3318 = vmatprep.subr.mxu0 0.0
    %v3319 = vand.u32 %v193, 4294901760
    %v3320 = vsub.f32 %v193, %v3319
    %3321 = vmatpush1.msra.mxu0 %v3320
    %3322 = vmatprep.subr.mxu0 0.0
    %v3323 = vand.u32 %v192, 4294901760
    %v3324 = vsub.f32 %v192, %v3323
    %3325 = vmatpush1.msra.mxu0 %v3324
    %3326 = vmatprep.subr.mxu0 0.0
    %v3327 = vand.u32 %v191, 4294901760
    %v3328 = vsub.f32 %v191, %v3327
    %3329 = vmatpush1.msra.mxu0 %v3328
    %3330 = vmatprep.subr.mxu0 0.0
    %v3331 = vand.u32 %v190, 4294901760
    %v3332 = vsub.f32 %v190, %v3331
    %3333 = vmatpush1.msra.mxu0 %v3332
    %3334 = vmatprep.subr.mxu0 0.0
    %v3335 = vand.u32 %v189, 4294901760
    %v3336 = vsub.f32 %v189, %v3335
    %3337 = vmatpush1.msra.mxu0 %v3336
    %3338 = vmatprep.subr.mxu0 0.0
    %v3339 = vand.u32 %v188, 4294901760
    %v3340 = vsub.f32 %v188, %v3339
    %3341 = vmatpush1.msra.mxu0 %v3340
    %3342 = vmatprep.subr.mxu0 0.0
    %v3343 = vand.u32 %v219, 4294901760
    %v3344 = vsub.f32 %v219, %v3343
    %3345 = vmatpush2.msra.mxu0 %v3344
    %3346 = vmatprep.subr.mxu0 0.0
    %v3347 = vand.u32 %v218, 4294901760
    %v3348 = vsub.f32 %v218, %v3347
    %3349 = vmatpush2.msra.mxu0 %v3348
    %3350 = vmatprep.subr.mxu0 0.0
    %v3351 = vand.u32 %v217, 4294901760
    %v3352 = vsub.f32 %v217, %v3351
    %3353 = vmatpush2.msra.mxu0 %v3352
    %3354 = vmatprep.subr.mxu0 0.0
    %v3355 = vand.u32 %v216, 4294901760
    %v3356 = vsub.f32 %v216, %v3355
    %3357 = vmatpush2.msra.mxu0 %v3356
    %3358 = vmatprep.subr.mxu0 0.0
    %v3359 = vand.u32 %v215, 4294901760
    %v3360 = vsub.f32 %v215, %v3359
    %3361 = vmatpush2.msra.mxu0 %v3360
    %3362 = vmatprep.subr.mxu0 0.0
    %v3363 = vand.u32 %v214, 4294901760
    %v3364 = vsub.f32 %v214, %v3363
    %3365 = vmatpush2.msra.mxu0 %v3364
    %3366 = vmatprep.subr.mxu0 0.0
    %v3367 = vand.u32 %v213, 4294901760
    %v3368 = vsub.f32 %v213, %v3367
    %3369 = vmatpush2.msra.mxu0 %v3368
    %3370 = vmatprep.subr.mxu0 0.0
    %v3371 = vand.u32 %v212, 4294901760
    %v3372 = vsub.f32 %v212, %v3371
    %3373 = vmatpush2.msra.mxu0 %v3372
    %3374 = vmatprep.subr.mxu0 0.0
    %v3375 = vand.u32 %v211, 4294901760
    %v3376 = vsub.f32 %v211, %v3375
    %3377 = vmatpush2.msra.mxu0 %v3376
    %3378 = vmatprep.subr.mxu0 0.0
    %v3379 = vand.u32 %v210, 4294901760
    %v3380 = vsub.f32 %v210, %v3379
    %3381 = vmatpush2.msra.mxu0 %v3380
    %3382 = vmatprep.subr.mxu0 0.0
    %v3383 = vand.u32 %v209, 4294901760
    %v3384 = vsub.f32 %v209, %v3383
    %3385 = vmatpush2.msra.mxu0 %v3384
    %3386 = vmatprep.subr.mxu0 0.0
    %v3387 = vand.u32 %v208, 4294901760
    %v3388 = vsub.f32 %v208, %v3387
    %3389 = vmatpush2.msra.mxu0 %v3388
    %3390 = vmatprep.subr.mxu0 0.0
    %v3391 = vand.u32 %v207, 4294901760
    %v3392 = vsub.f32 %v207, %v3391
    %3393 = vmatpush2.msra.mxu0 %v3392
    %3394 = vmatprep.subr.mxu0 0.0
    %v3395 = vand.u32 %v206, 4294901760
    %v3396 = vsub.f32 %v206, %v3395
    %3397 = vmatpush2.msra.mxu0 %v3396
    %3398 = vmatprep.subr.mxu0 0.0
    %v3399 = vand.u32 %v205, 4294901760
    %v3400 = vsub.f32 %v205, %v3399
    %3401 = vmatpush2.msra.mxu0 %v3400
    %3402 = vmatprep.subr.mxu0 0.0
    %v3403 = vand.u32 %v204, 4294901760
    %v3404 = vsub.f32 %v204, %v3403
    %3405 = vmatpush2.msra.mxu0 %v3404
    %v3406 = vand.u32 %v61, 4294901760
    %v3407 = vsub.f32 %v61, %v3406
    %3408 = vmatprep.mubr.f32.mxu0 %v3407
    %v3409 = vand.u32 %v60, 4294901760
    %v3410 = vsub.f32 %v60, %v3409
    %3411 = vmatmul.mubr.f32.gmra.mxu0 %v3410
    %v3412 = vpop.f32.mrf.mxu0
    %v3413 = vadd.f32 %v3275, %v3412
    %v3414 = vpop.f32.mrf.mxu0
    %3415 = vdwg.mxu0
    %3416 = vmatprep.subr.mxu0 0.0
    %v3417 = vand.u32 %v203, 4294901760
    %3418 = vmatpush1.msra.mxu0 %v3417
    %3419 = vmatprep.subr.mxu0 0.0
    %v3420 = vand.u32 %v202, 4294901760
    %3421 = vmatpush1.msra.mxu0 %v3420
    %3422 = vmatprep.subr.mxu0 0.0
    %v3423 = vand.u32 %v201, 4294901760
    %3424 = vmatpush1.msra.mxu0 %v3423
    %3425 = vmatprep.subr.mxu0 0.0
    %v3426 = vand.u32 %v200, 4294901760
    %3427 = vmatpush1.msra.mxu0 %v3426
    %3428 = vmatprep.subr.mxu0 0.0
    %v3429 = vand.u32 %v199, 4294901760
    %3430 = vmatpush1.msra.mxu0 %v3429
    %3431 = vmatprep.subr.mxu0 0.0
    %v3432 = vand.u32 %v198, 4294901760
    %3433 = vmatpush1.msra.mxu0 %v3432
    %3434 = vmatprep.subr.mxu0 0.0
    %v3435 = vand.u32 %v197, 4294901760
    %3436 = vmatpush1.msra.mxu0 %v3435
    %3437 = vmatprep.subr.mxu0 0.0
    %v3438 = vand.u32 %v196, 4294901760
    %3439 = vmatpush1.msra.mxu0 %v3438
    %3440 = vmatprep.subr.mxu0 0.0
    %v3441 = vand.u32 %v195, 4294901760
    %3442 = vmatpush1.msra.mxu0 %v3441
    %3443 = vmatprep.subr.mxu0 0.0
    %v3444 = vand.u32 %v194, 4294901760
    %3445 = vmatpush1.msra.mxu0 %v3444
    %3446 = vmatprep.subr.mxu0 0.0
    %v3447 = vand.u32 %v193, 4294901760
    %3448 = vmatpush1.msra.mxu0 %v3447
    %3449 = vmatprep.subr.mxu0 0.0
    %v3450 = vand.u32 %v192, 4294901760
    %3451 = vmatpush1.msra.mxu0 %v3450
    %3452 = vmatprep.subr.mxu0 0.0
    %v3453 = vand.u32 %v191, 4294901760
    %3454 = vmatpush1.msra.mxu0 %v3453
    %3455 = vmatprep.subr.mxu0 0.0
    %v3456 = vand.u32 %v190, 4294901760
    %3457 = vmatpush1.msra.mxu0 %v3456
    %3458 = vmatprep.subr.mxu0 0.0
    %v3459 = vand.u32 %v189, 4294901760
    %3460 = vmatpush1.msra.mxu0 %v3459
    %3461 = vmatprep.subr.mxu0 0.0
    %v3462 = vand.u32 %v188, 4294901760
    %3463 = vmatpush1.msra.mxu0 %v3462
    %3464 = vmatprep.subr.mxu0 0.0
    %v3465 = vand.u32 %v219, 4294901760
    %3466 = vmatpush2.msra.mxu0 %v3465
    %3467 = vmatprep.subr.mxu0 0.0
    %v3468 = vand.u32 %v218, 4294901760
    %3469 = vmatpush2.msra.mxu0 %v3468
    %3470 = vmatprep.subr.mxu0 0.0
    %v3471 = vand.u32 %v217, 4294901760
    %3472 = vmatpush2.msra.mxu0 %v3471
    %3473 = vmatprep.subr.mxu0 0.0
    %v3474 = vand.u32 %v216, 4294901760
    %3475 = vmatpush2.msra.mxu0 %v3474
    %3476 = vmatprep.subr.mxu0 0.0
    %v3477 = vand.u32 %v215, 4294901760
    %3478 = vmatpush2.msra.mxu0 %v3477
    %3479 = vmatprep.subr.mxu0 0.0
    %v3480 = vand.u32 %v214, 4294901760
    %3481 = vmatpush2.msra.mxu0 %v3480
    %3482 = vmatprep.subr.mxu0 0.0
    %v3483 = vand.u32 %v213, 4294901760
    %3484 = vmatpush2.msra.mxu0 %v3483
    %3485 = vmatprep.subr.mxu0 0.0
    %v3486 = vand.u32 %v212, 4294901760
    %3487 = vmatpush2.msra.mxu0 %v3486
    %3488 = vmatprep.subr.mxu0 0.0
    %v3489 = vand.u32 %v211, 4294901760
    %3490 = vmatpush2.msra.mxu0 %v3489
    %3491 = vmatprep.subr.mxu0 0.0
    %v3492 = vand.u32 %v210, 4294901760
    %3493 = vmatpush2.msra.mxu0 %v3492
    %3494 = vmatprep.subr.mxu0 0.0
    %v3495 = vand.u32 %v209, 4294901760
    %3496 = vmatpush2.msra.mxu0 %v3495
    %3497 = vmatprep.subr.mxu0 0.0
    %v3498 = vand.u32 %v208, 4294901760
    %3499 = vmatpush2.msra.mxu0 %v3498
    %3500 = vmatprep.subr.mxu0 0.0
    %v3501 = vand.u32 %v207, 4294901760
    %3502 = vmatpush2.msra.mxu0 %v3501
    %3503 = vmatprep.subr.mxu0 0.0
    %v3504 = vand.u32 %v206, 4294901760
    %3505 = vmatpush2.msra.mxu0 %v3504
    %3506 = vmatprep.subr.mxu0 0.0
    %v3507 = vand.u32 %v205, 4294901760
    %3508 = vmatpush2.msra.mxu0 %v3507
    %3509 = vmatprep.subr.mxu0 0.0
    %v3510 = vand.u32 %v204, 4294901760
    %3511 = vmatpush2.msra.mxu0 %v3510
    %v3512 = vand.u32 %v61, 4294901760
    %v3513 = vsub.f32 %v61, %v3512
    %v3514 = vand.u32 %v3513, 4294901760
    %3515 = vmatprep.mubr.f32.mxu0 %v3514
    %v3516 = vand.u32 %v60, 4294901760
    %v3517 = vsub.f32 %v60, %v3516
    %v3518 = vand.u32 %v3517, 4294901760
    %3519 = vmatmul.mubr.f32.gmra.mxu0 %v3518
    %v3520 = vpop.f32.mrf.mxu0
    %v3521 = vadd.f32 %v3413, %v3520
    %v3522 = vpop.f32.mrf.mxu0
    %3523 = vdwg.mxu0
    %3524 = vmatprep.subr.mxu0 0.0
    %v3525 = vand.u32 %v203, 4294901760
    %v3526 = vsub.f32 %v203, %v3525
    %v3527 = vand.u32 %v3526, 4294901760
    %3528 = vmatpush1.msra.mxu0 %v3527
    %3529 = vmatprep.subr.mxu0 0.0
    %v3530 = vand.u32 %v202, 4294901760
    %v3531 = vsub.f32 %v202, %v3530
    %v3532 = vand.u32 %v3531, 4294901760
    %3533 = vmatpush1.msra.mxu0 %v3532
    %3534 = vmatprep.subr.mxu0 0.0
    %v3535 = vand.u32 %v201, 4294901760
    %v3536 = vsub.f32 %v201, %v3535
    %v3537 = vand.u32 %v3536, 4294901760
    %3538 = vmatpush1.msra.mxu0 %v3537
    %3539 = vmatprep.subr.mxu0 0.0
    %v3540 = vand.u32 %v200, 4294901760
    %v3541 = vsub.f32 %v200, %v3540
    %v3542 = vand.u32 %v3541, 4294901760
    %3543 = vmatpush1.msra.mxu0 %v3542
    %3544 = vmatprep.subr.mxu0 0.0
    %v3545 = vand.u32 %v199, 4294901760
    %v3546 = vsub.f32 %v199, %v3545
    %v3547 = vand.u32 %v3546, 4294901760
    %3548 = vmatpush1.msra.mxu0 %v3547
    %3549 = vmatprep.subr.mxu0 0.0
    %v3550 = vand.u32 %v198, 4294901760
    %v3551 = vsub.f32 %v198, %v3550
    %v3552 = vand.u32 %v3551, 4294901760
    %3553 = vmatpush1.msra.mxu0 %v3552
    %3554 = vmatprep.subr.mxu0 0.0
    %v3555 = vand.u32 %v197, 4294901760
    %v3556 = vsub.f32 %v197, %v3555
    %v3557 = vand.u32 %v3556, 4294901760
    %3558 = vmatpush1.msra.mxu0 %v3557
    %3559 = vmatprep.subr.mxu0 0.0
    %v3560 = vand.u32 %v196, 4294901760
    %v3561 = vsub.f32 %v196, %v3560
    %v3562 = vand.u32 %v3561, 4294901760
    %3563 = vmatpush1.msra.mxu0 %v3562
    %3564 = vmatprep.subr.mxu0 0.0
    %v3565 = vand.u32 %v195, 4294901760
    %v3566 = vsub.f32 %v195, %v3565
    %v3567 = vand.u32 %v3566, 4294901760
    %3568 = vmatpush1.msra.mxu0 %v3567
    %3569 = vmatprep.subr.mxu0 0.0
    %v3570 = vand.u32 %v194, 4294901760
    %v3571 = vsub.f32 %v194, %v3570
    %v3572 = vand.u32 %v3571, 4294901760
    %3573 = vmatpush1.msra.mxu0 %v3572
    %3574 = vmatprep.subr.mxu0 0.0
    %v3575 = vand.u32 %v193, 4294901760
    %v3576 = vsub.f32 %v193, %v3575
    %v3577 = vand.u32 %v3576, 4294901760
    %3578 = vmatpush1.msra.mxu0 %v3577
    %3579 = vmatprep.subr.mxu0 0.0
    %v3580 = vand.u32 %v192, 4294901760
    %v3581 = vsub.f32 %v192, %v3580
    %v3582 = vand.u32 %v3581, 4294901760
    %3583 = vmatpush1.msra.mxu0 %v3582
    %3584 = vmatprep.subr.mxu0 0.0
    %v3585 = vand.u32 %v191, 4294901760
    %v3586 = vsub.f32 %v191, %v3585
    %v3587 = vand.u32 %v3586, 4294901760
    %3588 = vmatpush1.msra.mxu0 %v3587
    %3589 = vmatprep.subr.mxu0 0.0
    %v3590 = vand.u32 %v190, 4294901760
    %v3591 = vsub.f32 %v190, %v3590
    %v3592 = vand.u32 %v3591, 4294901760
    %3593 = vmatpush1.msra.mxu0 %v3592
    %3594 = vmatprep.subr.mxu0 0.0
    %v3595 = vand.u32 %v189, 4294901760
    %v3596 = vsub.f32 %v189, %v3595
    %v3597 = vand.u32 %v3596, 4294901760
    %3598 = vmatpush1.msra.mxu0 %v3597
    %3599 = vmatprep.subr.mxu0 0.0
    %v3600 = vand.u32 %v188, 4294901760
    %v3601 = vsub.f32 %v188, %v3600
    %v3602 = vand.u32 %v3601, 4294901760
    %3603 = vmatpush1.msra.mxu0 %v3602
    %3604 = vmatprep.subr.mxu0 0.0
    %v3605 = vand.u32 %v219, 4294901760
    %v3606 = vsub.f32 %v219, %v3605
    %v3607 = vand.u32 %v3606, 4294901760
    %3608 = vmatpush2.msra.mxu0 %v3607
    %3609 = vmatprep.subr.mxu0 0.0
    %v3610 = vand.u32 %v218, 4294901760
    %v3611 = vsub.f32 %v218, %v3610
    %v3612 = vand.u32 %v3611, 4294901760
    %3613 = vmatpush2.msra.mxu0 %v3612
    %3614 = vmatprep.subr.mxu0 0.0
    %v3615 = vand.u32 %v217, 4294901760
    %v3616 = vsub.f32 %v217, %v3615
    %v3617 = vand.u32 %v3616, 4294901760
    %3618 = vmatpush2.msra.mxu0 %v3617
    %3619 = vmatprep.subr.mxu0 0.0
    %v3620 = vand.u32 %v216, 4294901760
    %v3621 = vsub.f32 %v216, %v3620
    %v3622 = vand.u32 %v3621, 4294901760
    %3623 = vmatpush2.msra.mxu0 %v3622
    %3624 = vmatprep.subr.mxu0 0.0
    %v3625 = vand.u32 %v215, 4294901760
    %v3626 = vsub.f32 %v215, %v3625
    %v3627 = vand.u32 %v3626, 4294901760
    %3628 = vmatpush2.msra.mxu0 %v3627
    %3629 = vmatprep.subr.mxu0 0.0
    %v3630 = vand.u32 %v214, 4294901760
    %v3631 = vsub.f32 %v214, %v3630
    %v3632 = vand.u32 %v3631, 4294901760
    %3633 = vmatpush2.msra.mxu0 %v3632
    %3634 = vmatprep.subr.mxu0 0.0
    %v3635 = vand.u32 %v213, 4294901760
    %v3636 = vsub.f32 %v213, %v3635
    %v3637 = vand.u32 %v3636, 4294901760
    %3638 = vmatpush2.msra.mxu0 %v3637
    %3639 = vmatprep.subr.mxu0 0.0
    %v3640 = vand.u32 %v212, 4294901760
    %v3641 = vsub.f32 %v212, %v3640
    %v3642 = vand.u32 %v3641, 4294901760
    %3643 = vmatpush2.msra.mxu0 %v3642
    %3644 = vmatprep.subr.mxu0 0.0
    %v3645 = vand.u32 %v211, 4294901760
    %v3646 = vsub.f32 %v211, %v3645
    %v3647 = vand.u32 %v3646, 4294901760
    %3648 = vmatpush2.msra.mxu0 %v3647
    %3649 = vmatprep.subr.mxu0 0.0
    %v3650 = vand.u32 %v210, 4294901760
    %v3651 = vsub.f32 %v210, %v3650
    %v3652 = vand.u32 %v3651, 4294901760
    %3653 = vmatpush2.msra.mxu0 %v3652
    %3654 = vmatprep.subr.mxu0 0.0
    %v3655 = vand.u32 %v209, 4294901760
    %v3656 = vsub.f32 %v209, %v3655
    %v3657 = vand.u32 %v3656, 4294901760
    %3658 = vmatpush2.msra.mxu0 %v3657
    %3659 = vmatprep.subr.mxu0 0.0
    %v3660 = vand.u32 %v208, 4294901760
    %v3661 = vsub.f32 %v208, %v3660
    %v3662 = vand.u32 %v3661, 4294901760
    %3663 = vmatpush2.msra.mxu0 %v3662
    %3664 = vmatprep.subr.mxu0 0.0
    %v3665 = vand.u32 %v207, 4294901760
    %v3666 = vsub.f32 %v207, %v3665
    %v3667 = vand.u32 %v3666, 4294901760
    %3668 = vmatpush2.msra.mxu0 %v3667
    %3669 = vmatprep.subr.mxu0 0.0
    %v3670 = vand.u32 %v206, 4294901760
    %v3671 = vsub.f32 %v206, %v3670
    %v3672 = vand.u32 %v3671, 4294901760
    %3673 = vmatpush2.msra.mxu0 %v3672
    %3674 = vmatprep.subr.mxu0 0.0
    %v3675 = vand.u32 %v205, 4294901760
    %v3676 = vsub.f32 %v205, %v3675
    %v3677 = vand.u32 %v3676, 4294901760
    %3678 = vmatpush2.msra.mxu0 %v3677
    %3679 = vmatprep.subr.mxu0 0.0
    %v3680 = vand.u32 %v204, 4294901760
    %v3681 = vsub.f32 %v204, %v3680
    %v3682 = vand.u32 %v3681, 4294901760
    %3683 = vmatpush2.msra.mxu0 %v3682
    %v3684 = vand.u32 %v61, 4294901760
    %3685 = vmatprep.mubr.f32.mxu0 %v3684
    %v3686 = vand.u32 %v60, 4294901760
    %3687 = vmatmul.mubr.f32.gmra.mxu0 %v3686
    %v3688 = vpop.f32.mrf.mxu0
    %v3689 = vadd.f32 %v3521, %v3688
    %v3690 = vpop.f32.mrf.mxu0
    %3691 = vdwg.mxu0
    %3692 = vmatprep.subr.mxu0 0.0
    %v3693 = vand.u32 %v203, 4294901760
    %3694 = vmatpush1.msra.mxu0 %v3693
    %3695 = vmatprep.subr.mxu0 0.0
    %v3696 = vand.u32 %v202, 4294901760
    %3697 = vmatpush1.msra.mxu0 %v3696
    %3698 = vmatprep.subr.mxu0 0.0
    %v3699 = vand.u32 %v201, 4294901760
    %3700 = vmatpush1.msra.mxu0 %v3699
    %3701 = vmatprep.subr.mxu0 0.0
    %v3702 = vand.u32 %v200, 4294901760
    %3703 = vmatpush1.msra.mxu0 %v3702
    %3704 = vmatprep.subr.mxu0 0.0
    %v3705 = vand.u32 %v199, 4294901760
    %3706 = vmatpush1.msra.mxu0 %v3705
    %3707 = vmatprep.subr.mxu0 0.0
    %v3708 = vand.u32 %v198, 4294901760
    %3709 = vmatpush1.msra.mxu0 %v3708
    %3710 = vmatprep.subr.mxu0 0.0
    %v3711 = vand.u32 %v197, 4294901760
    %3712 = vmatpush1.msra.mxu0 %v3711
    %3713 = vmatprep.subr.mxu0 0.0
    %v3714 = vand.u32 %v196, 4294901760
    %3715 = vmatpush1.msra.mxu0 %v3714
    %3716 = vmatprep.subr.mxu0 0.0
    %v3717 = vand.u32 %v195, 4294901760
    %3718 = vmatpush1.msra.mxu0 %v3717
    %3719 = vmatprep.subr.mxu0 0.0
    %v3720 = vand.u32 %v194, 4294901760
    %3721 = vmatpush1.msra.mxu0 %v3720
    %3722 = vmatprep.subr.mxu0 0.0
    %v3723 = vand.u32 %v193, 4294901760
    %3724 = vmatpush1.msra.mxu0 %v3723
    %3725 = vmatprep.subr.mxu0 0.0
    %v3726 = vand.u32 %v192, 4294901760
    %3727 = vmatpush1.msra.mxu0 %v3726
    %3728 = vmatprep.subr.mxu0 0.0
    %v3729 = vand.u32 %v191, 4294901760
    %3730 = vmatpush1.msra.mxu0 %v3729
    %3731 = vmatprep.subr.mxu0 0.0
    %v3732 = vand.u32 %v190, 4294901760
    %3733 = vmatpush1.msra.mxu0 %v3732
    %3734 = vmatprep.subr.mxu0 0.0
    %v3735 = vand.u32 %v189, 4294901760
    %3736 = vmatpush1.msra.mxu0 %v3735
    %3737 = vmatprep.subr.mxu0 0.0
    %v3738 = vand.u32 %v188, 4294901760
    %3739 = vmatpush1.msra.mxu0 %v3738
    %3740 = vmatprep.subr.mxu0 0.0
    %v3741 = vand.u32 %v219, 4294901760
    %3742 = vmatpush2.msra.mxu0 %v3741
    %3743 = vmatprep.subr.mxu0 0.0
    %v3744 = vand.u32 %v218, 4294901760
    %3745 = vmatpush2.msra.mxu0 %v3744
    %3746 = vmatprep.subr.mxu0 0.0
    %v3747 = vand.u32 %v217, 4294901760
    %3748 = vmatpush2.msra.mxu0 %v3747
    %3749 = vmatprep.subr.mxu0 0.0
    %v3750 = vand.u32 %v216, 4294901760
    %3751 = vmatpush2.msra.mxu0 %v3750
    %3752 = vmatprep.subr.mxu0 0.0
    %v3753 = vand.u32 %v215, 4294901760
    %3754 = vmatpush2.msra.mxu0 %v3753
    %3755 = vmatprep.subr.mxu0 0.0
    %v3756 = vand.u32 %v214, 4294901760
    %3757 = vmatpush2.msra.mxu0 %v3756
    %3758 = vmatprep.subr.mxu0 0.0
    %v3759 = vand.u32 %v213, 4294901760
    %3760 = vmatpush2.msra.mxu0 %v3759
    %3761 = vmatprep.subr.mxu0 0.0
    %v3762 = vand.u32 %v212, 4294901760
    %3763 = vmatpush2.msra.mxu0 %v3762
    %3764 = vmatprep.subr.mxu0 0.0
    %v3765 = vand.u32 %v211, 4294901760
    %3766 = vmatpush2.msra.mxu0 %v3765
    %3767 = vmatprep.subr.mxu0 0.0
    %v3768 = vand.u32 %v210, 4294901760
    %3769 = vmatpush2.msra.mxu0 %v3768
    %3770 = vmatprep.subr.mxu0 0.0
    %v3771 = vand.u32 %v209, 4294901760
    %3772 = vmatpush2.msra.mxu0 %v3771
    %3773 = vmatprep.subr.mxu0 0.0
    %v3774 = vand.u32 %v208, 4294901760
    %3775 = vmatpush2.msra.mxu0 %v3774
    %3776 = vmatprep.subr.mxu0 0.0
    %v3777 = vand.u32 %v207, 4294901760
    %3778 = vmatpush2.msra.mxu0 %v3777
    %3779 = vmatprep.subr.mxu0 0.0
    %v3780 = vand.u32 %v206, 4294901760
    %3781 = vmatpush2.msra.mxu0 %v3780
    %3782 = vmatprep.subr.mxu0 0.0
    %v3783 = vand.u32 %v205, 4294901760
    %3784 = vmatpush2.msra.mxu0 %v3783
    %3785 = vmatprep.subr.mxu0 0.0
    %v3786 = vand.u32 %v204, 4294901760
    %3787 = vmatpush2.msra.mxu0 %v3786
    %v3788 = vand.u32 %v61, 4294901760
    %3789 = vmatprep.mubr.f32.mxu0 %v3788
    %v3790 = vand.u32 %v60, 4294901760
    %3791 = vmatmul.mubr.f32.gmra.mxu0 %v3790
    %v3792 = vpop.f32.mrf.mxu0
    %v3793 = vadd.f32 %v3689, %v3792
    %v3794 = vpop.f32.mrf.mxu0
    %3795 = vdwg.mxu0
    %3796 = vmatprep.subr.mxu0 0.0
    %v3797 = vand.u32 %v235, 4294901760
    %3798 = vmatpush1.msra.mxu0 %v3797
    %3799 = vmatprep.subr.mxu0 0.0
    %v3800 = vand.u32 %v234, 4294901760
    %3801 = vmatpush1.msra.mxu0 %v3800
    %3802 = vmatprep.subr.mxu0 0.0
    %v3803 = vand.u32 %v233, 4294901760
    %3804 = vmatpush1.msra.mxu0 %v3803
    %3805 = vmatprep.subr.mxu0 0.0
    %v3806 = vand.u32 %v232, 4294901760
    %3807 = vmatpush1.msra.mxu0 %v3806
    %3808 = vmatprep.subr.mxu0 0.0
    %v3809 = vand.u32 %v231, 4294901760
    %3810 = vmatpush1.msra.mxu0 %v3809
    %3811 = vmatprep.subr.mxu0 0.0
    %v3812 = vand.u32 %v230, 4294901760
    %3813 = vmatpush1.msra.mxu0 %v3812
    %3814 = vmatprep.subr.mxu0 0.0
    %v3815 = vand.u32 %v229, 4294901760
    %3816 = vmatpush1.msra.mxu0 %v3815
    %3817 = vmatprep.subr.mxu0 0.0
    %v3818 = vand.u32 %v228, 4294901760
    %3819 = vmatpush1.msra.mxu0 %v3818
    %3820 = vmatprep.subr.mxu0 0.0
    %v3821 = vand.u32 %v227, 4294901760
    %3822 = vmatpush1.msra.mxu0 %v3821
    %3823 = vmatprep.subr.mxu0 0.0
    %v3824 = vand.u32 %v226, 4294901760
    %3825 = vmatpush1.msra.mxu0 %v3824
    %3826 = vmatprep.subr.mxu0 0.0
    %v3827 = vand.u32 %v225, 4294901760
    %3828 = vmatpush1.msra.mxu0 %v3827
    %3829 = vmatprep.subr.mxu0 0.0
    %v3830 = vand.u32 %v224, 4294901760
    %3831 = vmatpush1.msra.mxu0 %v3830
    %3832 = vmatprep.subr.mxu0 0.0
    %v3833 = vand.u32 %v223, 4294901760
    %3834 = vmatpush1.msra.mxu0 %v3833
    %3835 = vmatprep.subr.mxu0 0.0
    %v3836 = vand.u32 %v222, 4294901760
    %3837 = vmatpush1.msra.mxu0 %v3836
    %3838 = vmatprep.subr.mxu0 0.0
    %v3839 = vand.u32 %v221, 4294901760
    %3840 = vmatpush1.msra.mxu0 %v3839
    %3841 = vmatprep.subr.mxu0 0.0
    %v3842 = vand.u32 %v220, 4294901760
    %3843 = vmatpush1.msra.mxu0 %v3842
    %3844 = vmatprep.subr.mxu0 0.0
    %v3845 = vand.u32 %v251, 4294901760
    %3846 = vmatpush2.msra.mxu0 %v3845
    %3847 = vmatprep.subr.mxu0 0.0
    %v3848 = vand.u32 %v250, 4294901760
    %3849 = vmatpush2.msra.mxu0 %v3848
    %3850 = vmatprep.subr.mxu0 0.0
    %v3851 = vand.u32 %v249, 4294901760
    %3852 = vmatpush2.msra.mxu0 %v3851
    %3853 = vmatprep.subr.mxu0 0.0
    %v3854 = vand.u32 %v248, 4294901760
    %3855 = vmatpush2.msra.mxu0 %v3854
    %3856 = vmatprep.subr.mxu0 0.0
    %v3857 = vand.u32 %v247, 4294901760
    %3858 = vmatpush2.msra.mxu0 %v3857
    %3859 = vmatprep.subr.mxu0 0.0
    %v3860 = vand.u32 %v246, 4294901760
    %3861 = vmatpush2.msra.mxu0 %v3860
    %3862 = vmatprep.subr.mxu0 0.0
    %v3863 = vand.u32 %v245, 4294901760
    %3864 = vmatpush2.msra.mxu0 %v3863
    %3865 = vmatprep.subr.mxu0 0.0
    %v3866 = vand.u32 %v244, 4294901760
    %3867 = vmatpush2.msra.mxu0 %v3866
    %3868 = vmatprep.subr.mxu0 0.0
    %v3869 = vand.u32 %v243, 4294901760
    %3870 = vmatpush2.msra.mxu0 %v3869
    %3871 = vmatprep.subr.mxu0 0.0
    %v3872 = vand.u32 %v242, 4294901760
    %3873 = vmatpush2.msra.mxu0 %v3872
    %3874 = vmatprep.subr.mxu0 0.0
    %v3875 = vand.u32 %v241, 4294901760
    %3876 = vmatpush2.msra.mxu0 %v3875
    %3877 = vmatprep.subr.mxu0 0.0
    %v3878 = vand.u32 %v240, 4294901760
    %3879 = vmatpush2.msra.mxu0 %v3878
    %3880 = vmatprep.subr.mxu0 0.0
    %v3881 = vand.u32 %v239, 4294901760
    %3882 = vmatpush2.msra.mxu0 %v3881
    %3883 = vmatprep.subr.mxu0 0.0
    %v3884 = vand.u32 %v238, 4294901760
    %3885 = vmatpush2.msra.mxu0 %v3884
    %3886 = vmatprep.subr.mxu0 0.0
    %v3887 = vand.u32 %v237, 4294901760
    %3888 = vmatpush2.msra.mxu0 %v3887
    %3889 = vmatprep.subr.mxu0 0.0
    %v3890 = vand.u32 %v236, 4294901760
    %3891 = vmatpush2.msra.mxu0 %v3890
    %v3892 = vand.u32 %v74, 4294901760
    %v3893 = vsub.f32 %v74, %v3892
    %v3894 = vand.u32 %v3893, 4294901760
    %v3895 = vsub.f32 %v3893, %v3894
    %v3896 = vand.u32 %v3895, 4294901760
    %3897 = vmatprep.mubr.f32.mxu0 %v3896
    %v3898 = vand.u32 %v73, 4294901760
    %v3899 = vsub.f32 %v73, %v3898
    %v3900 = vand.u32 %v3899, 4294901760
    %v3901 = vsub.f32 %v3899, %v3900
    %v3902 = vand.u32 %v3901, 4294901760
    %3903 = vmatmul.mubr.f32.gmra.mxu0 %v3902
    %v3904 = vpop.f32.mrf.mxu0
    %v3905 = vadd.f32 %v3793, %v3904
    %v3906 = vpop.f32.mrf.mxu0
    %3907 = vdwg.mxu0
    %3908 = vmatprep.subr.mxu0 0.0
    %v3909 = vand.u32 %v235, 4294901760
    %v3910 = vsub.f32 %v235, %v3909
    %v3911 = vand.u32 %v3910, 4294901760
    %v3912 = vsub.f32 %v3910, %v3911
    %v3913 = vand.u32 %v3912, 4294901760
    %3914 = vmatpush1.msra.mxu0 %v3913
    %3915 = vmatprep.subr.mxu0 0.0
    %v3916 = vand.u32 %v234, 4294901760
    %v3917 = vsub.f32 %v234, %v3916
    %v3918 = vand.u32 %v3917, 4294901760
    %v3919 = vsub.f32 %v3917, %v3918
    %v3920 = vand.u32 %v3919, 4294901760
    %3921 = vmatpush1.msra.mxu0 %v3920
    %3922 = vmatprep.subr.mxu0 0.0
    %v3923 = vand.u32 %v233, 4294901760
    %v3924 = vsub.f32 %v233, %v3923
    %v3925 = vand.u32 %v3924, 4294901760
    %v3926 = vsub.f32 %v3924, %v3925
    %v3927 = vand.u32 %v3926, 4294901760
    %3928 = vmatpush1.msra.mxu0 %v3927
    %3929 = vmatprep.subr.mxu0 0.0
    %v3930 = vand.u32 %v232, 4294901760
    %v3931 = vsub.f32 %v232, %v3930
    %v3932 = vand.u32 %v3931, 4294901760
    %v3933 = vsub.f32 %v3931, %v3932
    %v3934 = vand.u32 %v3933, 4294901760
    %3935 = vmatpush1.msra.mxu0 %v3934
    %3936 = vmatprep.subr.mxu0 0.0
    %v3937 = vand.u32 %v231, 4294901760
    %v3938 = vsub.f32 %v231, %v3937
    %v3939 = vand.u32 %v3938, 4294901760
    %v3940 = vsub.f32 %v3938, %v3939
    %v3941 = vand.u32 %v3940, 4294901760
    %3942 = vmatpush1.msra.mxu0 %v3941
    %3943 = vmatprep.subr.mxu0 0.0
    %v3944 = vand.u32 %v230, 4294901760
    %v3945 = vsub.f32 %v230, %v3944
    %v3946 = vand.u32 %v3945, 4294901760
    %v3947 = vsub.f32 %v3945, %v3946
    %v3948 = vand.u32 %v3947, 4294901760
    %3949 = vmatpush1.msra.mxu0 %v3948
    %3950 = vmatprep.subr.mxu0 0.0
    %v3951 = vand.u32 %v229, 4294901760
    %v3952 = vsub.f32 %v229, %v3951
    %v3953 = vand.u32 %v3952, 4294901760
    %v3954 = vsub.f32 %v3952, %v3953
    %v3955 = vand.u32 %v3954, 4294901760
    %3956 = vmatpush1.msra.mxu0 %v3955
    %3957 = vmatprep.subr.mxu0 0.0
    %v3958 = vand.u32 %v228, 4294901760
    %v3959 = vsub.f32 %v228, %v3958
    %v3960 = vand.u32 %v3959, 4294901760
    %v3961 = vsub.f32 %v3959, %v3960
    %v3962 = vand.u32 %v3961, 4294901760
    %3963 = vmatpush1.msra.mxu0 %v3962
    %3964 = vmatprep.subr.mxu0 0.0
    %v3965 = vand.u32 %v227, 4294901760
    %v3966 = vsub.f32 %v227, %v3965
    %v3967 = vand.u32 %v3966, 4294901760
    %v3968 = vsub.f32 %v3966, %v3967
    %v3969 = vand.u32 %v3968, 4294901760
    %3970 = vmatpush1.msra.mxu0 %v3969
    %3971 = vmatprep.subr.mxu0 0.0
    %v3972 = vand.u32 %v226, 4294901760
    %v3973 = vsub.f32 %v226, %v3972
    %v3974 = vand.u32 %v3973, 4294901760
    %v3975 = vsub.f32 %v3973, %v3974
    %v3976 = vand.u32 %v3975, 4294901760
    %3977 = vmatpush1.msra.mxu0 %v3976
    %3978 = vmatprep.subr.mxu0 0.0
    %v3979 = vand.u32 %v225, 4294901760
    %v3980 = vsub.f32 %v225, %v3979
    %v3981 = vand.u32 %v3980, 4294901760
    %v3982 = vsub.f32 %v3980, %v3981
    %v3983 = vand.u32 %v3982, 4294901760
    %3984 = vmatpush1.msra.mxu0 %v3983
    %3985 = vmatprep.subr.mxu0 0.0
    %v3986 = vand.u32 %v224, 4294901760
    %v3987 = vsub.f32 %v224, %v3986
    %v3988 = vand.u32 %v3987, 4294901760
    %v3989 = vsub.f32 %v3987, %v3988
    %v3990 = vand.u32 %v3989, 4294901760
    %3991 = vmatpush1.msra.mxu0 %v3990
    %3992 = vmatprep.subr.mxu0 0.0
    %v3993 = vand.u32 %v223, 4294901760
    %v3994 = vsub.f32 %v223, %v3993
    %v3995 = vand.u32 %v3994, 4294901760
    %v3996 = vsub.f32 %v3994, %v3995
    %v3997 = vand.u32 %v3996, 4294901760
    %3998 = vmatpush1.msra.mxu0 %v3997
    %3999 = vmatprep.subr.mxu0 0.0
    %v4000 = vand.u32 %v222, 4294901760
    %v4001 = vsub.f32 %v222, %v4000
    %v4002 = vand.u32 %v4001, 4294901760
    %v4003 = vsub.f32 %v4001, %v4002
    %v4004 = vand.u32 %v4003, 4294901760
    %4005 = vmatpush1.msra.mxu0 %v4004
    %4006 = vmatprep.subr.mxu0 0.0
    %v4007 = vand.u32 %v221, 4294901760
    %v4008 = vsub.f32 %v221, %v4007
    %v4009 = vand.u32 %v4008, 4294901760
    %v4010 = vsub.f32 %v4008, %v4009
    %v4011 = vand.u32 %v4010, 4294901760
    %4012 = vmatpush1.msra.mxu0 %v4011
    %4013 = vmatprep.subr.mxu0 0.0
    %v4014 = vand.u32 %v220, 4294901760
    %v4015 = vsub.f32 %v220, %v4014
    %v4016 = vand.u32 %v4015, 4294901760
    %v4017 = vsub.f32 %v4015, %v4016
    %v4018 = vand.u32 %v4017, 4294901760
    %4019 = vmatpush1.msra.mxu0 %v4018
    %4020 = vmatprep.subr.mxu0 0.0
    %v4021 = vand.u32 %v251, 4294901760
    %v4022 = vsub.f32 %v251, %v4021
    %v4023 = vand.u32 %v4022, 4294901760
    %v4024 = vsub.f32 %v4022, %v4023
    %v4025 = vand.u32 %v4024, 4294901760
    %4026 = vmatpush2.msra.mxu0 %v4025
    %4027 = vmatprep.subr.mxu0 0.0
    %v4028 = vand.u32 %v250, 4294901760
    %v4029 = vsub.f32 %v250, %v4028
    %v4030 = vand.u32 %v4029, 4294901760
    %v4031 = vsub.f32 %v4029, %v4030
    %v4032 = vand.u32 %v4031, 4294901760
    %4033 = vmatpush2.msra.mxu0 %v4032
    %4034 = vmatprep.subr.mxu0 0.0
    %v4035 = vand.u32 %v249, 4294901760
    %v4036 = vsub.f32 %v249, %v4035
    %v4037 = vand.u32 %v4036, 4294901760
    %v4038 = vsub.f32 %v4036, %v4037
    %v4039 = vand.u32 %v4038, 4294901760
    %4040 = vmatpush2.msra.mxu0 %v4039
    %4041 = vmatprep.subr.mxu0 0.0
    %v4042 = vand.u32 %v248, 4294901760
    %v4043 = vsub.f32 %v248, %v4042
    %v4044 = vand.u32 %v4043, 4294901760
    %v4045 = vsub.f32 %v4043, %v4044
    %v4046 = vand.u32 %v4045, 4294901760
    %4047 = vmatpush2.msra.mxu0 %v4046
    %4048 = vmatprep.subr.mxu0 0.0
    %v4049 = vand.u32 %v247, 4294901760
    %v4050 = vsub.f32 %v247, %v4049
    %v4051 = vand.u32 %v4050, 4294901760
    %v4052 = vsub.f32 %v4050, %v4051
    %v4053 = vand.u32 %v4052, 4294901760
    %4054 = vmatpush2.msra.mxu0 %v4053
    %4055 = vmatprep.subr.mxu0 0.0
    %v4056 = vand.u32 %v246, 4294901760
    %v4057 = vsub.f32 %v246, %v4056
    %v4058 = vand.u32 %v4057, 4294901760
    %v4059 = vsub.f32 %v4057, %v4058
    %v4060 = vand.u32 %v4059, 4294901760
    %4061 = vmatpush2.msra.mxu0 %v4060
    %4062 = vmatprep.subr.mxu0 0.0
    %v4063 = vand.u32 %v245, 4294901760
    %v4064 = vsub.f32 %v245, %v4063
    %v4065 = vand.u32 %v4064, 4294901760
    %v4066 = vsub.f32 %v4064, %v4065
    %v4067 = vand.u32 %v4066, 4294901760
    %4068 = vmatpush2.msra.mxu0 %v4067
    %4069 = vmatprep.subr.mxu0 0.0
    %v4070 = vand.u32 %v244, 4294901760
    %v4071 = vsub.f32 %v244, %v4070
    %v4072 = vand.u32 %v4071, 4294901760
    %v4073 = vsub.f32 %v4071, %v4072
    %v4074 = vand.u32 %v4073, 4294901760
    %4075 = vmatpush2.msra.mxu0 %v4074
    %4076 = vmatprep.subr.mxu0 0.0
    %v4077 = vand.u32 %v243, 4294901760
    %v4078 = vsub.f32 %v243, %v4077
    %v4079 = vand.u32 %v4078, 4294901760
    %v4080 = vsub.f32 %v4078, %v4079
    %v4081 = vand.u32 %v4080, 4294901760
    %4082 = vmatpush2.msra.mxu0 %v4081
    %4083 = vmatprep.subr.mxu0 0.0
    %v4084 = vand.u32 %v242, 4294901760
    %v4085 = vsub.f32 %v242, %v4084
    %v4086 = vand.u32 %v4085, 4294901760
    %v4087 = vsub.f32 %v4085, %v4086
    %v4088 = vand.u32 %v4087, 4294901760
    %4089 = vmatpush2.msra.mxu0 %v4088
    %4090 = vmatprep.subr.mxu0 0.0
    %v4091 = vand.u32 %v241, 4294901760
    %v4092 = vsub.f32 %v241, %v4091
    %v4093 = vand.u32 %v4092, 4294901760
    %v4094 = vsub.f32 %v4092, %v4093
    %v4095 = vand.u32 %v4094, 4294901760
    %4096 = vmatpush2.msra.mxu0 %v4095
    %4097 = vmatprep.subr.mxu0 0.0
    %v4098 = vand.u32 %v240, 4294901760
    %v4099 = vsub.f32 %v240, %v4098
    %v4100 = vand.u32 %v4099, 4294901760
    %v4101 = vsub.f32 %v4099, %v4100
    %v4102 = vand.u32 %v4101, 4294901760
    %4103 = vmatpush2.msra.mxu0 %v4102
    %4104 = vmatprep.subr.mxu0 0.0
    %v4105 = vand.u32 %v239, 4294901760
    %v4106 = vsub.f32 %v239, %v4105
    %v4107 = vand.u32 %v4106, 4294901760
    %v4108 = vsub.f32 %v4106, %v4107
    %v4109 = vand.u32 %v4108, 4294901760
    %4110 = vmatpush2.msra.mxu0 %v4109
    %4111 = vmatprep.subr.mxu0 0.0
    %v4112 = vand.u32 %v238, 4294901760
    %v4113 = vsub.f32 %v238, %v4112
    %v4114 = vand.u32 %v4113, 4294901760
    %v4115 = vsub.f32 %v4113, %v4114
    %v4116 = vand.u32 %v4115, 4294901760
    %4117 = vmatpush2.msra.mxu0 %v4116
    %4118 = vmatprep.subr.mxu0 0.0
    %v4119 = vand.u32 %v237, 4294901760
    %v4120 = vsub.f32 %v237, %v4119
    %v4121 = vand.u32 %v4120, 4294901760
    %v4122 = vsub.f32 %v4120, %v4121
    %v4123 = vand.u32 %v4122, 4294901760
    %4124 = vmatpush2.msra.mxu0 %v4123
    %4125 = vmatprep.subr.mxu0 0.0
    %v4126 = vand.u32 %v236, 4294901760
    %v4127 = vsub.f32 %v236, %v4126
    %v4128 = vand.u32 %v4127, 4294901760
    %v4129 = vsub.f32 %v4127, %v4128
    %v4130 = vand.u32 %v4129, 4294901760
    %4131 = vmatpush2.msra.mxu0 %v4130
    %v4132 = vand.u32 %v74, 4294901760
    %4133 = vmatprep.mubr.f32.mxu0 %v4132
    %v4134 = vand.u32 %v73, 4294901760
    %4135 = vmatmul.mubr.f32.gmra.mxu0 %v4134
    %v4136 = vpop.f32.mrf.mxu0
    %v4137 = vadd.f32 %v3905, %v4136
    %v4138 = vpop.f32.mrf.mxu0
    %4139 = vdwg.mxu0
    %4140 = vmatprep.subr.mxu0 0.0
    %v4141 = vand.u32 %v235, 4294901760
    %v4142 = vsub.f32 %v235, %v4141
    %4143 = vmatpush1.msra.mxu0 %v4142
    %4144 = vmatprep.subr.mxu0 0.0
    %v4145 = vand.u32 %v234, 4294901760
    %v4146 = vsub.f32 %v234, %v4145
    %4147 = vmatpush1.msra.mxu0 %v4146
    %4148 = vmatprep.subr.mxu0 0.0
    %v4149 = vand.u32 %v233, 4294901760
    %v4150 = vsub.f32 %v233, %v4149
    %4151 = vmatpush1.msra.mxu0 %v4150
    %4152 = vmatprep.subr.mxu0 0.0
    %v4153 = vand.u32 %v232, 4294901760
    %v4154 = vsub.f32 %v232, %v4153
    %4155 = vmatpush1.msra.mxu0 %v4154
    %4156 = vmatprep.subr.mxu0 0.0
    %v4157 = vand.u32 %v231, 4294901760
    %v4158 = vsub.f32 %v231, %v4157
    %4159 = vmatpush1.msra.mxu0 %v4158
    %4160 = vmatprep.subr.mxu0 0.0
    %v4161 = vand.u32 %v230, 4294901760
    %v4162 = vsub.f32 %v230, %v4161
    %4163 = vmatpush1.msra.mxu0 %v4162
    %4164 = vmatprep.subr.mxu0 0.0
    %v4165 = vand.u32 %v229, 4294901760
    %v4166 = vsub.f32 %v229, %v4165
    %4167 = vmatpush1.msra.mxu0 %v4166
    %4168 = vmatprep.subr.mxu0 0.0
    %v4169 = vand.u32 %v228, 4294901760
    %v4170 = vsub.f32 %v228, %v4169
    %4171 = vmatpush1.msra.mxu0 %v4170
    %4172 = vmatprep.subr.mxu0 0.0
    %v4173 = vand.u32 %v227, 4294901760
    %v4174 = vsub.f32 %v227, %v4173
    %4175 = vmatpush1.msra.mxu0 %v4174
    %4176 = vmatprep.subr.mxu0 0.0
    %v4177 = vand.u32 %v226, 4294901760
    %v4178 = vsub.f32 %v226, %v4177
    %4179 = vmatpush1.msra.mxu0 %v4178
    %4180 = vmatprep.subr.mxu0 0.0
    %v4181 = vand.u32 %v225, 4294901760
    %v4182 = vsub.f32 %v225, %v4181
    %4183 = vmatpush1.msra.mxu0 %v4182
    %4184 = vmatprep.subr.mxu0 0.0
    %v4185 = vand.u32 %v224, 4294901760
    %v4186 = vsub.f32 %v224, %v4185
    %4187 = vmatpush1.msra.mxu0 %v4186
    %4188 = vmatprep.subr.mxu0 0.0
    %v4189 = vand.u32 %v223, 4294901760
    %v4190 = vsub.f32 %v223, %v4189
    %4191 = vmatpush1.msra.mxu0 %v4190
    %4192 = vmatprep.subr.mxu0 0.0
    %v4193 = vand.u32 %v222, 4294901760
    %v4194 = vsub.f32 %v222, %v4193
    %4195 = vmatpush1.msra.mxu0 %v4194
    %4196 = vmatprep.subr.mxu0 0.0
    %v4197 = vand.u32 %v221, 4294901760
    %v4198 = vsub.f32 %v221, %v4197
    %4199 = vmatpush1.msra.mxu0 %v4198
    %4200 = vmatprep.subr.mxu0 0.0
    %v4201 = vand.u32 %v220, 4294901760
    %v4202 = vsub.f32 %v220, %v4201
    %4203 = vmatpush1.msra.mxu0 %v4202
    %4204 = vmatprep.subr.mxu0 0.0
    %v4205 = vand.u32 %v251, 4294901760
    %v4206 = vsub.f32 %v251, %v4205
    %4207 = vmatpush2.msra.mxu0 %v4206
    %4208 = vmatprep.subr.mxu0 0.0
    %v4209 = vand.u32 %v250, 4294901760
    %v4210 = vsub.f32 %v250, %v4209
    %4211 = vmatpush2.msra.mxu0 %v4210
    %4212 = vmatprep.subr.mxu0 0.0
    %v4213 = vand.u32 %v249, 4294901760
    %v4214 = vsub.f32 %v249, %v4213
    %4215 = vmatpush2.msra.mxu0 %v4214
    %4216 = vmatprep.subr.mxu0 0.0
    %v4217 = vand.u32 %v248, 4294901760
    %v4218 = vsub.f32 %v248, %v4217
    %4219 = vmatpush2.msra.mxu0 %v4218
    %4220 = vmatprep.subr.mxu0 0.0
    %v4221 = vand.u32 %v247, 4294901760
    %v4222 = vsub.f32 %v247, %v4221
    %4223 = vmatpush2.msra.mxu0 %v4222
    %4224 = vmatprep.subr.mxu0 0.0
    %v4225 = vand.u32 %v246, 4294901760
    %v4226 = vsub.f32 %v246, %v4225
    %4227 = vmatpush2.msra.mxu0 %v4226
    %4228 = vmatprep.subr.mxu0 0.0
    %v4229 = vand.u32 %v245, 4294901760
    %v4230 = vsub.f32 %v245, %v4229
    %4231 = vmatpush2.msra.mxu0 %v4230
    %4232 = vmatprep.subr.mxu0 0.0
    %v4233 = vand.u32 %v244, 4294901760
    %v4234 = vsub.f32 %v244, %v4233
    %4235 = vmatpush2.msra.mxu0 %v4234
    %4236 = vmatprep.subr.mxu0 0.0
    %v4237 = vand.u32 %v243, 4294901760
    %v4238 = vsub.f32 %v243, %v4237
    %4239 = vmatpush2.msra.mxu0 %v4238
    %4240 = vmatprep.subr.mxu0 0.0
    %v4241 = vand.u32 %v242, 4294901760
    %v4242 = vsub.f32 %v242, %v4241
    %4243 = vmatpush2.msra.mxu0 %v4242
    %4244 = vmatprep.subr.mxu0 0.0
    %v4245 = vand.u32 %v241, 4294901760
    %v4246 = vsub.f32 %v241, %v4245
    %4247 = vmatpush2.msra.mxu0 %v4246
    %4248 = vmatprep.subr.mxu0 0.0
    %v4249 = vand.u32 %v240, 4294901760
    %v4250 = vsub.f32 %v240, %v4249
    %4251 = vmatpush2.msra.mxu0 %v4250
    %4252 = vmatprep.subr.mxu0 0.0
    %v4253 = vand.u32 %v239, 4294901760
    %v4254 = vsub.f32 %v239, %v4253
    %4255 = vmatpush2.msra.mxu0 %v4254
    %4256 = vmatprep.subr.mxu0 0.0
    %v4257 = vand.u32 %v238, 4294901760
    %v4258 = vsub.f32 %v238, %v4257
    %4259 = vmatpush2.msra.mxu0 %v4258
    %4260 = vmatprep.subr.mxu0 0.0
    %v4261 = vand.u32 %v237, 4294901760
    %v4262 = vsub.f32 %v237, %v4261
    %4263 = vmatpush2.msra.mxu0 %v4262
    %4264 = vmatprep.subr.mxu0 0.0
    %v4265 = vand.u32 %v236, 4294901760
    %v4266 = vsub.f32 %v236, %v4265
    %4267 = vmatpush2.msra.mxu0 %v4266
    %v4268 = vand.u32 %v74, 4294901760
    %v4269 = vsub.f32 %v74, %v4268
    %4270 = vmatprep.mubr.f32.mxu0 %v4269
    %v4271 = vand.u32 %v73, 4294901760
    %v4272 = vsub.f32 %v73, %v4271
    %4273 = vmatmul.mubr.f32.gmra.mxu0 %v4272
    %v4274 = vpop.f32.mrf.mxu0
    %v4275 = vadd.f32 %v4137, %v4274
    %v4276 = vpop.f32.mrf.mxu0
    %4277 = vdwg.mxu0
    %4278 = vmatprep.subr.mxu0 0.0
    %v4279 = vand.u32 %v235, 4294901760
    %4280 = vmatpush1.msra.mxu0 %v4279
    %4281 = vmatprep.subr.mxu0 0.0
    %v4282 = vand.u32 %v234, 4294901760
    %4283 = vmatpush1.msra.mxu0 %v4282
    %4284 = vmatprep.subr.mxu0 0.0
    %v4285 = vand.u32 %v233, 4294901760
    %4286 = vmatpush1.msra.mxu0 %v4285
    %4287 = vmatprep.subr.mxu0 0.0
    %v4288 = vand.u32 %v232, 4294901760
    %4289 = vmatpush1.msra.mxu0 %v4288
    %4290 = vmatprep.subr.mxu0 0.0
    %v4291 = vand.u32 %v231, 4294901760
    %4292 = vmatpush1.msra.mxu0 %v4291
    %4293 = vmatprep.subr.mxu0 0.0
    %v4294 = vand.u32 %v230, 4294901760
    %4295 = vmatpush1.msra.mxu0 %v4294
    %4296 = vmatprep.subr.mxu0 0.0
    %v4297 = vand.u32 %v229, 4294901760
    %4298 = vmatpush1.msra.mxu0 %v4297
    %4299 = vmatprep.subr.mxu0 0.0
    %v4300 = vand.u32 %v228, 4294901760
    %4301 = vmatpush1.msra.mxu0 %v4300
    %4302 = vmatprep.subr.mxu0 0.0
    %v4303 = vand.u32 %v227, 4294901760
    %4304 = vmatpush1.msra.mxu0 %v4303
    %4305 = vmatprep.subr.mxu0 0.0
    %v4306 = vand.u32 %v226, 4294901760
    %4307 = vmatpush1.msra.mxu0 %v4306
    %4308 = vmatprep.subr.mxu0 0.0
    %v4309 = vand.u32 %v225, 4294901760
    %4310 = vmatpush1.msra.mxu0 %v4309
    %4311 = vmatprep.subr.mxu0 0.0
    %v4312 = vand.u32 %v224, 4294901760
    %4313 = vmatpush1.msra.mxu0 %v4312
    %4314 = vmatprep.subr.mxu0 0.0
    %v4315 = vand.u32 %v223, 4294901760
    %4316 = vmatpush1.msra.mxu0 %v4315
    %4317 = vmatprep.subr.mxu0 0.0
    %v4318 = vand.u32 %v222, 4294901760
    %4319 = vmatpush1.msra.mxu0 %v4318
    %4320 = vmatprep.subr.mxu0 0.0
    %v4321 = vand.u32 %v221, 4294901760
    %4322 = vmatpush1.msra.mxu0 %v4321
    %4323 = vmatprep.subr.mxu0 0.0
    %v4324 = vand.u32 %v220, 4294901760
    %4325 = vmatpush1.msra.mxu0 %v4324
    %4326 = vmatprep.subr.mxu0 0.0
    %v4327 = vand.u32 %v251, 4294901760
    %4328 = vmatpush2.msra.mxu0 %v4327
    %4329 = vmatprep.subr.mxu0 0.0
    %v4330 = vand.u32 %v250, 4294901760
    %4331 = vmatpush2.msra.mxu0 %v4330
    %4332 = vmatprep.subr.mxu0 0.0
    %v4333 = vand.u32 %v249, 4294901760
    %4334 = vmatpush2.msra.mxu0 %v4333
    %4335 = vmatprep.subr.mxu0 0.0
    %v4336 = vand.u32 %v248, 4294901760
    %4337 = vmatpush2.msra.mxu0 %v4336
    %4338 = vmatprep.subr.mxu0 0.0
    %v4339 = vand.u32 %v247, 4294901760
    %4340 = vmatpush2.msra.mxu0 %v4339
    %4341 = vmatprep.subr.mxu0 0.0
    %v4342 = vand.u32 %v246, 4294901760
    %4343 = vmatpush2.msra.mxu0 %v4342
    %4344 = vmatprep.subr.mxu0 0.0
    %v4345 = vand.u32 %v245, 4294901760
    %4346 = vmatpush2.msra.mxu0 %v4345
    %4347 = vmatprep.subr.mxu0 0.0
    %v4348 = vand.u32 %v244, 4294901760
    %4349 = vmatpush2.msra.mxu0 %v4348
    %4350 = vmatprep.subr.mxu0 0.0
    %v4351 = vand.u32 %v243, 4294901760
    %4352 = vmatpush2.msra.mxu0 %v4351
    %4353 = vmatprep.subr.mxu0 0.0
    %v4354 = vand.u32 %v242, 4294901760
    %4355 = vmatpush2.msra.mxu0 %v4354
    %4356 = vmatprep.subr.mxu0 0.0
    %v4357 = vand.u32 %v241, 4294901760
    %4358 = vmatpush2.msra.mxu0 %v4357
    %4359 = vmatprep.subr.mxu0 0.0
    %v4360 = vand.u32 %v240, 4294901760
    %4361 = vmatpush2.msra.mxu0 %v4360
    %4362 = vmatprep.subr.mxu0 0.0
    %v4363 = vand.u32 %v239, 4294901760
    %4364 = vmatpush2.msra.mxu0 %v4363
    %4365 = vmatprep.subr.mxu0 0.0
    %v4366 = vand.u32 %v238, 4294901760
    %4367 = vmatpush2.msra.mxu0 %v4366
    %4368 = vmatprep.subr.mxu0 0.0
    %v4369 = vand.u32 %v237, 4294901760
    %4370 = vmatpush2.msra.mxu0 %v4369
    %4371 = vmatprep.subr.mxu0 0.0
    %v4372 = vand.u32 %v236, 4294901760
    %4373 = vmatpush2.msra.mxu0 %v4372
    %v4374 = vand.u32 %v74, 4294901760
    %v4375 = vsub.f32 %v74, %v4374
    %v4376 = vand.u32 %v4375, 4294901760
    %4377 = vmatprep.mubr.f32.mxu0 %v4376
    %v4378 = vand.u32 %v73, 4294901760
    %v4379 = vsub.f32 %v73, %v4378
    %v4380 = vand.u32 %v4379, 4294901760
    %4381 = vmatmul.mubr.f32.gmra.mxu0 %v4380
    %v4382 = vpop.f32.mrf.mxu0
    %v4383 = vadd.f32 %v4275, %v4382
    %v4384 = vpop.f32.mrf.mxu0
    %4385 = vdwg.mxu0
    %4386 = vmatprep.subr.mxu0 0.0
    %v4387 = vand.u32 %v235, 4294901760
    %v4388 = vsub.f32 %v235, %v4387
    %v4389 = vand.u32 %v4388, 4294901760
    %4390 = vmatpush1.msra.mxu0 %v4389
    %4391 = vmatprep.subr.mxu0 0.0
    %v4392 = vand.u32 %v234, 4294901760
    %v4393 = vsub.f32 %v234, %v4392
    %v4394 = vand.u32 %v4393, 4294901760
    %4395 = vmatpush1.msra.mxu0 %v4394
    %4396 = vmatprep.subr.mxu0 0.0
    %v4397 = vand.u32 %v233, 4294901760
    %v4398 = vsub.f32 %v233, %v4397
    %v4399 = vand.u32 %v4398, 4294901760
    %4400 = vmatpush1.msra.mxu0 %v4399
    %4401 = vmatprep.subr.mxu0 0.0
    %v4402 = vand.u32 %v232, 4294901760
    %v4403 = vsub.f32 %v232, %v4402
    %v4404 = vand.u32 %v4403, 4294901760
    %4405 = vmatpush1.msra.mxu0 %v4404
    %4406 = vmatprep.subr.mxu0 0.0
    %v4407 = vand.u32 %v231, 4294901760
    %v4408 = vsub.f32 %v231, %v4407
    %v4409 = vand.u32 %v4408, 4294901760
    %4410 = vmatpush1.msra.mxu0 %v4409
    %4411 = vmatprep.subr.mxu0 0.0
    %v4412 = vand.u32 %v230, 4294901760
    %v4413 = vsub.f32 %v230, %v4412
    %v4414 = vand.u32 %v4413, 4294901760
    %4415 = vmatpush1.msra.mxu0 %v4414
    %4416 = vmatprep.subr.mxu0 0.0
    %v4417 = vand.u32 %v229, 4294901760
    %v4418 = vsub.f32 %v229, %v4417
    %v4419 = vand.u32 %v4418, 4294901760
    %4420 = vmatpush1.msra.mxu0 %v4419
    %4421 = vmatprep.subr.mxu0 0.0
    %v4422 = vand.u32 %v228, 4294901760
    %v4423 = vsub.f32 %v228, %v4422
    %v4424 = vand.u32 %v4423, 4294901760
    %4425 = vmatpush1.msra.mxu0 %v4424
    %4426 = vmatprep.subr.mxu0 0.0
    %v4427 = vand.u32 %v227, 4294901760
    %v4428 = vsub.f32 %v227, %v4427
    %v4429 = vand.u32 %v4428, 4294901760
    %4430 = vmatpush1.msra.mxu0 %v4429
    %4431 = vmatprep.subr.mxu0 0.0
    %v4432 = vand.u32 %v226, 4294901760
    %v4433 = vsub.f32 %v226, %v4432
    %v4434 = vand.u32 %v4433, 4294901760
    %4435 = vmatpush1.msra.mxu0 %v4434
    %4436 = vmatprep.subr.mxu0 0.0
    %v4437 = vand.u32 %v225, 4294901760
    %v4438 = vsub.f32 %v225, %v4437
    %v4439 = vand.u32 %v4438, 4294901760
    %4440 = vmatpush1.msra.mxu0 %v4439
    %4441 = vmatprep.subr.mxu0 0.0
    %v4442 = vand.u32 %v224, 4294901760
    %v4443 = vsub.f32 %v224, %v4442
    %v4444 = vand.u32 %v4443, 4294901760
    %4445 = vmatpush1.msra.mxu0 %v4444
    %4446 = vmatprep.subr.mxu0 0.0
    %v4447 = vand.u32 %v223, 4294901760
    %v4448 = vsub.f32 %v223, %v4447
    %v4449 = vand.u32 %v4448, 4294901760
    %4450 = vmatpush1.msra.mxu0 %v4449
    %4451 = vmatprep.subr.mxu0 0.0
    %v4452 = vand.u32 %v222, 4294901760
    %v4453 = vsub.f32 %v222, %v4452
    %v4454 = vand.u32 %v4453, 4294901760
    %4455 = vmatpush1.msra.mxu0 %v4454
    %4456 = vmatprep.subr.mxu0 0.0
    %v4457 = vand.u32 %v221, 4294901760
    %v4458 = vsub.f32 %v221, %v4457
    %v4459 = vand.u32 %v4458, 4294901760
    %4460 = vmatpush1.msra.mxu0 %v4459
    %4461 = vmatprep.subr.mxu0 0.0
    %v4462 = vand.u32 %v220, 4294901760
    %v4463 = vsub.f32 %v220, %v4462
    %v4464 = vand.u32 %v4463, 4294901760
    %4465 = vmatpush1.msra.mxu0 %v4464
    %4466 = vmatprep.subr.mxu0 0.0
    %v4467 = vand.u32 %v251, 4294901760
    %v4468 = vsub.f32 %v251, %v4467
    %v4469 = vand.u32 %v4468, 4294901760
    %4470 = vmatpush2.msra.mxu0 %v4469
    %4471 = vmatprep.subr.mxu0 0.0
    %v4472 = vand.u32 %v250, 4294901760
    %v4473 = vsub.f32 %v250, %v4472
    %v4474 = vand.u32 %v4473, 4294901760
    %4475 = vmatpush2.msra.mxu0 %v4474
    %4476 = vmatprep.subr.mxu0 0.0
    %v4477 = vand.u32 %v249, 4294901760
    %v4478 = vsub.f32 %v249, %v4477
    %v4479 = vand.u32 %v4478, 4294901760
    %4480 = vmatpush2.msra.mxu0 %v4479
    %4481 = vmatprep.subr.mxu0 0.0
    %v4482 = vand.u32 %v248, 4294901760
    %v4483 = vsub.f32 %v248, %v4482
    %v4484 = vand.u32 %v4483, 4294901760
    %4485 = vmatpush2.msra.mxu0 %v4484
    %4486 = vmatprep.subr.mxu0 0.0
    %v4487 = vand.u32 %v247, 4294901760
    %v4488 = vsub.f32 %v247, %v4487
    %v4489 = vand.u32 %v4488, 4294901760
    %4490 = vmatpush2.msra.mxu0 %v4489
    %4491 = vmatprep.subr.mxu0 0.0
    %v4492 = vand.u32 %v246, 4294901760
    %v4493 = vsub.f32 %v246, %v4492
    %v4494 = vand.u32 %v4493, 4294901760
    %4495 = vmatpush2.msra.mxu0 %v4494
    %4496 = vmatprep.subr.mxu0 0.0
    %v4497 = vand.u32 %v245, 4294901760
    %v4498 = vsub.f32 %v245, %v4497
    %v4499 = vand.u32 %v4498, 4294901760
    %4500 = vmatpush2.msra.mxu0 %v4499
    %4501 = vmatprep.subr.mxu0 0.0
    %v4502 = vand.u32 %v244, 4294901760
    %v4503 = vsub.f32 %v244, %v4502
    %v4504 = vand.u32 %v4503, 4294901760
    %4505 = vmatpush2.msra.mxu0 %v4504
    %4506 = vmatprep.subr.mxu0 0.0
    %v4507 = vand.u32 %v243, 4294901760
    %v4508 = vsub.f32 %v243, %v4507
    %v4509 = vand.u32 %v4508, 4294901760
    %4510 = vmatpush2.msra.mxu0 %v4509
    %4511 = vmatprep.subr.mxu0 0.0
    %v4512 = vand.u32 %v242, 4294901760
    %v4513 = vsub.f32 %v242, %v4512
    %v4514 = vand.u32 %v4513, 4294901760
    %4515 = vmatpush2.msra.mxu0 %v4514
    %4516 = vmatprep.subr.mxu0 0.0
    %v4517 = vand.u32 %v241, 4294901760
    %v4518 = vsub.f32 %v241, %v4517
    %v4519 = vand.u32 %v4518, 4294901760
    %4520 = vmatpush2.msra.mxu0 %v4519
    %4521 = vmatprep.subr.mxu0 0.0
    %v4522 = vand.u32 %v240, 4294901760
    %v4523 = vsub.f32 %v240, %v4522
    %v4524 = vand.u32 %v4523, 4294901760
    %4525 = vmatpush2.msra.mxu0 %v4524
    %4526 = vmatprep.subr.mxu0 0.0
    %v4527 = vand.u32 %v239, 4294901760
    %v4528 = vsub.f32 %v239, %v4527
    %v4529 = vand.u32 %v4528, 4294901760
    %4530 = vmatpush2.msra.mxu0 %v4529
    %4531 = vmatprep.subr.mxu0 0.0
    %v4532 = vand.u32 %v238, 4294901760
    %v4533 = vsub.f32 %v238, %v4532
    %v4534 = vand.u32 %v4533, 4294901760
    %4535 = vmatpush2.msra.mxu0 %v4534
    %4536 = vmatprep.subr.mxu0 0.0
    %v4537 = vand.u32 %v237, 4294901760
    %v4538 = vsub.f32 %v237, %v4537
    %v4539 = vand.u32 %v4538, 4294901760
    %4540 = vmatpush2.msra.mxu0 %v4539
    %4541 = vmatprep.subr.mxu0 0.0
    %v4542 = vand.u32 %v236, 4294901760
    %v4543 = vsub.f32 %v236, %v4542
    %v4544 = vand.u32 %v4543, 4294901760
    %4545 = vmatpush2.msra.mxu0 %v4544
    %v4546 = vand.u32 %v74, 4294901760
    %4547 = vmatprep.mubr.f32.mxu0 %v4546
    %v4548 = vand.u32 %v73, 4294901760
    %4549 = vmatmul.mubr.f32.gmra.mxu0 %v4548
    %v4550 = vpop.f32.mrf.mxu0
    %v4551 = vadd.f32 %v4383, %v4550
    %v4552 = vpop.f32.mrf.mxu0
    %4553 = vdwg.mxu0
    %4554 = vmatprep.subr.mxu0 0.0
    %v4555 = vand.u32 %v235, 4294901760
    %4556 = vmatpush1.msra.mxu0 %v4555
    %4557 = vmatprep.subr.mxu0 0.0
    %v4558 = vand.u32 %v234, 4294901760
    %4559 = vmatpush1.msra.mxu0 %v4558
    %4560 = vmatprep.subr.mxu0 0.0
    %v4561 = vand.u32 %v233, 4294901760
    %4562 = vmatpush1.msra.mxu0 %v4561
    %4563 = vmatprep.subr.mxu0 0.0
    %v4564 = vand.u32 %v232, 4294901760
    %4565 = vmatpush1.msra.mxu0 %v4564
    %4566 = vmatprep.subr.mxu0 0.0
    %v4567 = vand.u32 %v231, 4294901760
    %4568 = vmatpush1.msra.mxu0 %v4567
    %4569 = vmatprep.subr.mxu0 0.0
    %v4570 = vand.u32 %v230, 4294901760
    %4571 = vmatpush1.msra.mxu0 %v4570
    %4572 = vmatprep.subr.mxu0 0.0
    %v4573 = vand.u32 %v229, 4294901760
    %4574 = vmatpush1.msra.mxu0 %v4573
    %4575 = vmatprep.subr.mxu0 0.0
    %v4576 = vand.u32 %v228, 4294901760
    %4577 = vmatpush1.msra.mxu0 %v4576
    %4578 = vmatprep.subr.mxu0 0.0
    %v4579 = vand.u32 %v227, 4294901760
    %4580 = vmatpush1.msra.mxu0 %v4579
    %4581 = vmatprep.subr.mxu0 0.0
    %v4582 = vand.u32 %v226, 4294901760
    %4583 = vmatpush1.msra.mxu0 %v4582
    %4584 = vmatprep.subr.mxu0 0.0
    %v4585 = vand.u32 %v225, 4294901760
    %4586 = vmatpush1.msra.mxu0 %v4585
    %4587 = vmatprep.subr.mxu0 0.0
    %v4588 = vand.u32 %v224, 4294901760
    %4589 = vmatpush1.msra.mxu0 %v4588
    %4590 = vmatprep.subr.mxu0 0.0
    %v4591 = vand.u32 %v223, 4294901760
    %4592 = vmatpush1.msra.mxu0 %v4591
    %4593 = vmatprep.subr.mxu0 0.0
    %v4594 = vand.u32 %v222, 4294901760
    %4595 = vmatpush1.msra.mxu0 %v4594
    %4596 = vmatprep.subr.mxu0 0.0
    %v4597 = vand.u32 %v221, 4294901760
    %4598 = vmatpush1.msra.mxu0 %v4597
    %4599 = vmatprep.subr.mxu0 0.0
    %v4600 = vand.u32 %v220, 4294901760
    %4601 = vmatpush1.msra.mxu0 %v4600
    %4602 = vmatprep.subr.mxu0 0.0
    %v4603 = vand.u32 %v251, 4294901760
    %4604 = vmatpush2.msra.mxu0 %v4603
    %4605 = vmatprep.subr.mxu0 0.0
    %v4606 = vand.u32 %v250, 4294901760
    %4607 = vmatpush2.msra.mxu0 %v4606
    %4608 = vmatprep.subr.mxu0 0.0
    %v4609 = vand.u32 %v249, 4294901760
    %4610 = vmatpush2.msra.mxu0 %v4609
    %4611 = vmatprep.subr.mxu0 0.0
    %v4612 = vand.u32 %v248, 4294901760
    %4613 = vmatpush2.msra.mxu0 %v4612
    %4614 = vmatprep.subr.mxu0 0.0
    %v4615 = vand.u32 %v247, 4294901760
    %4616 = vmatpush2.msra.mxu0 %v4615
    %4617 = vmatprep.subr.mxu0 0.0
    %v4618 = vand.u32 %v246, 4294901760
    %4619 = vmatpush2.msra.mxu0 %v4618
    %4620 = vmatprep.subr.mxu0 0.0
    %v4621 = vand.u32 %v245, 4294901760
    %4622 = vmatpush2.msra.mxu0 %v4621
    %4623 = vmatprep.subr.mxu0 0.0
    %v4624 = vand.u32 %v244, 4294901760
    %4625 = vmatpush2.msra.mxu0 %v4624
    %4626 = vmatprep.subr.mxu0 0.0
    %v4627 = vand.u32 %v243, 4294901760
    %4628 = vmatpush2.msra.mxu0 %v4627
    %4629 = vmatprep.subr.mxu0 0.0
    %v4630 = vand.u32 %v242, 4294901760
    %4631 = vmatpush2.msra.mxu0 %v4630
    %4632 = vmatprep.subr.mxu0 0.0
    %v4633 = vand.u32 %v241, 4294901760
    %4634 = vmatpush2.msra.mxu0 %v4633
    %4635 = vmatprep.subr.mxu0 0.0
    %v4636 = vand.u32 %v240, 4294901760
    %4637 = vmatpush2.msra.mxu0 %v4636
    %4638 = vmatprep.subr.mxu0 0.0
    %v4639 = vand.u32 %v239, 4294901760
    %4640 = vmatpush2.msra.mxu0 %v4639
    %4641 = vmatprep.subr.mxu0 0.0
    %v4642 = vand.u32 %v238, 4294901760
    %4643 = vmatpush2.msra.mxu0 %v4642
    %4644 = vmatprep.subr.mxu0 0.0
    %v4645 = vand.u32 %v237, 4294901760
    %4646 = vmatpush2.msra.mxu0 %v4645
    %4647 = vmatprep.subr.mxu0 0.0
    %v4648 = vand.u32 %v236, 4294901760
    %4649 = vmatpush2.msra.mxu0 %v4648
    %v4650 = vand.u32 %v74, 4294901760
    %4651 = vmatprep.mubr.f32.mxu0 %v4650
    %v4652 = vand.u32 %v73, 4294901760
    %4653 = vmatmul.mubr.f32.gmra.mxu0 %v4652
    %v4654 = vpop.f32.mrf.mxu0
    %v4655 = vadd.f32 %v4551, %v4654
    %v4656 = vpop.f32.mrf.mxu0
    %4657 = vdwg.mxu0
    %4658 = vmatprep.subr.mxu0 0.0
    %v4659 = vand.u32 %v267, 4294901760
    %4660 = vmatpush1.msra.mxu0 %v4659
    %4661 = vmatprep.subr.mxu0 0.0
    %v4662 = vand.u32 %v266, 4294901760
    %4663 = vmatpush1.msra.mxu0 %v4662
    %4664 = vmatprep.subr.mxu0 0.0
    %v4665 = vand.u32 %v265, 4294901760
    %4666 = vmatpush1.msra.mxu0 %v4665
    %4667 = vmatprep.subr.mxu0 0.0
    %v4668 = vand.u32 %v264, 4294901760
    %4669 = vmatpush1.msra.mxu0 %v4668
    %4670 = vmatprep.subr.mxu0 0.0
    %v4671 = vand.u32 %v263, 4294901760
    %4672 = vmatpush1.msra.mxu0 %v4671
    %4673 = vmatprep.subr.mxu0 0.0
    %v4674 = vand.u32 %v262, 4294901760
    %4675 = vmatpush1.msra.mxu0 %v4674
    %4676 = vmatprep.subr.mxu0 0.0
    %v4677 = vand.u32 %v261, 4294901760
    %4678 = vmatpush1.msra.mxu0 %v4677
    %4679 = vmatprep.subr.mxu0 0.0
    %v4680 = vand.u32 %v260, 4294901760
    %4681 = vmatpush1.msra.mxu0 %v4680
    %4682 = vmatprep.subr.mxu0 0.0
    %v4683 = vand.u32 %v259, 4294901760
    %4684 = vmatpush1.msra.mxu0 %v4683
    %4685 = vmatprep.subr.mxu0 0.0
    %v4686 = vand.u32 %v258, 4294901760
    %4687 = vmatpush1.msra.mxu0 %v4686
    %4688 = vmatprep.subr.mxu0 0.0
    %v4689 = vand.u32 %v257, 4294901760
    %4690 = vmatpush1.msra.mxu0 %v4689
    %4691 = vmatprep.subr.mxu0 0.0
    %v4692 = vand.u32 %v256, 4294901760
    %4693 = vmatpush1.msra.mxu0 %v4692
    %4694 = vmatprep.subr.mxu0 0.0
    %v4695 = vand.u32 %v255, 4294901760
    %4696 = vmatpush1.msra.mxu0 %v4695
    %4697 = vmatprep.subr.mxu0 0.0
    %v4698 = vand.u32 %v254, 4294901760
    %4699 = vmatpush1.msra.mxu0 %v4698
    %4700 = vmatprep.subr.mxu0 0.0
    %v4701 = vand.u32 %v253, 4294901760
    %4702 = vmatpush1.msra.mxu0 %v4701
    %4703 = vmatprep.subr.mxu0 0.0
    %v4704 = vand.u32 %v252, 4294901760
    %4705 = vmatpush1.msra.mxu0 %v4704
    %4706 = vmatprep.subr.mxu0 0.0
    %v4707 = vand.u32 %v283, 4294901760
    %4708 = vmatpush2.msra.mxu0 %v4707
    %4709 = vmatprep.subr.mxu0 0.0
    %v4710 = vand.u32 %v282, 4294901760
    %4711 = vmatpush2.msra.mxu0 %v4710
    %4712 = vmatprep.subr.mxu0 0.0
    %v4713 = vand.u32 %v281, 4294901760
    %4714 = vmatpush2.msra.mxu0 %v4713
    %4715 = vmatprep.subr.mxu0 0.0
    %v4716 = vand.u32 %v280, 4294901760
    %4717 = vmatpush2.msra.mxu0 %v4716
    %4718 = vmatprep.subr.mxu0 0.0
    %v4719 = vand.u32 %v279, 4294901760
    %4720 = vmatpush2.msra.mxu0 %v4719
    %4721 = vmatprep.subr.mxu0 0.0
    %v4722 = vand.u32 %v278, 4294901760
    %4723 = vmatpush2.msra.mxu0 %v4722
    %4724 = vmatprep.subr.mxu0 0.0
    %v4725 = vand.u32 %v277, 4294901760
    %4726 = vmatpush2.msra.mxu0 %v4725
    %4727 = vmatprep.subr.mxu0 0.0
    %v4728 = vand.u32 %v276, 4294901760
    %4729 = vmatpush2.msra.mxu0 %v4728
    %4730 = vmatprep.subr.mxu0 0.0
    %v4731 = vand.u32 %v275, 4294901760
    %4732 = vmatpush2.msra.mxu0 %v4731
    %4733 = vmatprep.subr.mxu0 0.0
    %v4734 = vand.u32 %v274, 4294901760
    %4735 = vmatpush2.msra.mxu0 %v4734
    %4736 = vmatprep.subr.mxu0 0.0
    %v4737 = vand.u32 %v273, 4294901760
    %4738 = vmatpush2.msra.mxu0 %v4737
    %4739 = vmatprep.subr.mxu0 0.0
    %v4740 = vand.u32 %v272, 4294901760
    %4741 = vmatpush2.msra.mxu0 %v4740
    %4742 = vmatprep.subr.mxu0 0.0
    %v4743 = vand.u32 %v271, 4294901760
    %4744 = vmatpush2.msra.mxu0 %v4743
    %4745 = vmatprep.subr.mxu0 0.0
    %v4746 = vand.u32 %v270, 4294901760
    %4747 = vmatpush2.msra.mxu0 %v4746
    %4748 = vmatprep.subr.mxu0 0.0
    %v4749 = vand.u32 %v269, 4294901760
    %4750 = vmatpush2.msra.mxu0 %v4749
    %4751 = vmatprep.subr.mxu0 0.0
    %v4752 = vand.u32 %v268, 4294901760
    %4753 = vmatpush2.msra.mxu0 %v4752
    %v4754 = vand.u32 %v76, 4294901760
    %v4755 = vsub.f32 %v76, %v4754
    %v4756 = vand.u32 %v4755, 4294901760
    %v4757 = vsub.f32 %v4755, %v4756
    %v4758 = vand.u32 %v4757, 4294901760
    %4759 = vmatprep.mubr.f32.mxu0 %v4758
    %v4760 = vand.u32 %v75, 4294901760
    %v4761 = vsub.f32 %v75, %v4760
    %v4762 = vand.u32 %v4761, 4294901760
    %v4763 = vsub.f32 %v4761, %v4762
    %v4764 = vand.u32 %v4763, 4294901760
    %4765 = vmatmul.mubr.f32.gmra.mxu0 %v4764
    %v4766 = vpop.f32.mrf.mxu0
    %v4767 = vadd.f32 %v4655, %v4766
    %v4768 = vpop.f32.mrf.mxu0
    %4769 = vdwg.mxu0
    %4770 = vmatprep.subr.mxu0 0.0
    %v4771 = vand.u32 %v267, 4294901760
    %v4772 = vsub.f32 %v267, %v4771
    %v4773 = vand.u32 %v4772, 4294901760
    %v4774 = vsub.f32 %v4772, %v4773
    %v4775 = vand.u32 %v4774, 4294901760
    %4776 = vmatpush1.msra.mxu0 %v4775
    %4777 = vmatprep.subr.mxu0 0.0
    %v4778 = vand.u32 %v266, 4294901760
    %v4779 = vsub.f32 %v266, %v4778
    %v4780 = vand.u32 %v4779, 4294901760
    %v4781 = vsub.f32 %v4779, %v4780
    %v4782 = vand.u32 %v4781, 4294901760
    %4783 = vmatpush1.msra.mxu0 %v4782
    %4784 = vmatprep.subr.mxu0 0.0
    %v4785 = vand.u32 %v265, 4294901760
    %v4786 = vsub.f32 %v265, %v4785
    %v4787 = vand.u32 %v4786, 4294901760
    %v4788 = vsub.f32 %v4786, %v4787
    %v4789 = vand.u32 %v4788, 4294901760
    %4790 = vmatpush1.msra.mxu0 %v4789
    %4791 = vmatprep.subr.mxu0 0.0
    %v4792 = vand.u32 %v264, 4294901760
    %v4793 = vsub.f32 %v264, %v4792
    %v4794 = vand.u32 %v4793, 4294901760
    %v4795 = vsub.f32 %v4793, %v4794
    %v4796 = vand.u32 %v4795, 4294901760
    %4797 = vmatpush1.msra.mxu0 %v4796
    %4798 = vmatprep.subr.mxu0 0.0
    %v4799 = vand.u32 %v263, 4294901760
    %v4800 = vsub.f32 %v263, %v4799
    %v4801 = vand.u32 %v4800, 4294901760
    %v4802 = vsub.f32 %v4800, %v4801
    %v4803 = vand.u32 %v4802, 4294901760
    %4804 = vmatpush1.msra.mxu0 %v4803
    %4805 = vmatprep.subr.mxu0 0.0
    %v4806 = vand.u32 %v262, 4294901760
    %v4807 = vsub.f32 %v262, %v4806
    %v4808 = vand.u32 %v4807, 4294901760
    %v4809 = vsub.f32 %v4807, %v4808
    %v4810 = vand.u32 %v4809, 4294901760
    %4811 = vmatpush1.msra.mxu0 %v4810
    %4812 = vmatprep.subr.mxu0 0.0
    %v4813 = vand.u32 %v261, 4294901760
    %v4814 = vsub.f32 %v261, %v4813
    %v4815 = vand.u32 %v4814, 4294901760
    %v4816 = vsub.f32 %v4814, %v4815
    %v4817 = vand.u32 %v4816, 4294901760
    %4818 = vmatpush1.msra.mxu0 %v4817
    %4819 = vmatprep.subr.mxu0 0.0
    %v4820 = vand.u32 %v260, 4294901760
    %v4821 = vsub.f32 %v260, %v4820
    %v4822 = vand.u32 %v4821, 4294901760
    %v4823 = vsub.f32 %v4821, %v4822
    %v4824 = vand.u32 %v4823, 4294901760
    %4825 = vmatpush1.msra.mxu0 %v4824
    %4826 = vmatprep.subr.mxu0 0.0
    %v4827 = vand.u32 %v259, 4294901760
    %v4828 = vsub.f32 %v259, %v4827
    %v4829 = vand.u32 %v4828, 4294901760
    %v4830 = vsub.f32 %v4828, %v4829
    %v4831 = vand.u32 %v4830, 4294901760
    %4832 = vmatpush1.msra.mxu0 %v4831
    %4833 = vmatprep.subr.mxu0 0.0
    %v4834 = vand.u32 %v258, 4294901760
    %v4835 = vsub.f32 %v258, %v4834
    %v4836 = vand.u32 %v4835, 4294901760
    %v4837 = vsub.f32 %v4835, %v4836
    %v4838 = vand.u32 %v4837, 4294901760
    %4839 = vmatpush1.msra.mxu0 %v4838
    %4840 = vmatprep.subr.mxu0 0.0
    %v4841 = vand.u32 %v257, 4294901760
    %v4842 = vsub.f32 %v257, %v4841
    %v4843 = vand.u32 %v4842, 4294901760
    %v4844 = vsub.f32 %v4842, %v4843
    %v4845 = vand.u32 %v4844, 4294901760
    %4846 = vmatpush1.msra.mxu0 %v4845
    %4847 = vmatprep.subr.mxu0 0.0
    %v4848 = vand.u32 %v256, 4294901760
    %v4849 = vsub.f32 %v256, %v4848
    %v4850 = vand.u32 %v4849, 4294901760
    %v4851 = vsub.f32 %v4849, %v4850
    %v4852 = vand.u32 %v4851, 4294901760
    %4853 = vmatpush1.msra.mxu0 %v4852
    %4854 = vmatprep.subr.mxu0 0.0
    %v4855 = vand.u32 %v255, 4294901760
    %v4856 = vsub.f32 %v255, %v4855
    %v4857 = vand.u32 %v4856, 4294901760
    %v4858 = vsub.f32 %v4856, %v4857
    %v4859 = vand.u32 %v4858, 4294901760
    %4860 = vmatpush1.msra.mxu0 %v4859
    %4861 = vmatprep.subr.mxu0 0.0
    %v4862 = vand.u32 %v254, 4294901760
    %v4863 = vsub.f32 %v254, %v4862
    %v4864 = vand.u32 %v4863, 4294901760
    %v4865 = vsub.f32 %v4863, %v4864
    %v4866 = vand.u32 %v4865, 4294901760
    %4867 = vmatpush1.msra.mxu0 %v4866
    %4868 = vmatprep.subr.mxu0 0.0
    %v4869 = vand.u32 %v253, 4294901760
    %v4870 = vsub.f32 %v253, %v4869
    %v4871 = vand.u32 %v4870, 4294901760
    %v4872 = vsub.f32 %v4870, %v4871
    %v4873 = vand.u32 %v4872, 4294901760
    %4874 = vmatpush1.msra.mxu0 %v4873
    %4875 = vmatprep.subr.mxu0 0.0
    %v4876 = vand.u32 %v252, 4294901760
    %v4877 = vsub.f32 %v252, %v4876
    %v4878 = vand.u32 %v4877, 4294901760
    %v4879 = vsub.f32 %v4877, %v4878
    %v4880 = vand.u32 %v4879, 4294901760
    %4881 = vmatpush1.msra.mxu0 %v4880
    %4882 = vmatprep.subr.mxu0 0.0
    %v4883 = vand.u32 %v283, 4294901760
    %v4884 = vsub.f32 %v283, %v4883
    %v4885 = vand.u32 %v4884, 4294901760
    %v4886 = vsub.f32 %v4884, %v4885
    %v4887 = vand.u32 %v4886, 4294901760
    %4888 = vmatpush2.msra.mxu0 %v4887
    %4889 = vmatprep.subr.mxu0 0.0
    %v4890 = vand.u32 %v282, 4294901760
    %v4891 = vsub.f32 %v282, %v4890
    %v4892 = vand.u32 %v4891, 4294901760
    %v4893 = vsub.f32 %v4891, %v4892
    %v4894 = vand.u32 %v4893, 4294901760
    %4895 = vmatpush2.msra.mxu0 %v4894
    %4896 = vmatprep.subr.mxu0 0.0
    %v4897 = vand.u32 %v281, 4294901760
    %v4898 = vsub.f32 %v281, %v4897
    %v4899 = vand.u32 %v4898, 4294901760
    %v4900 = vsub.f32 %v4898, %v4899
    %v4901 = vand.u32 %v4900, 4294901760
    %4902 = vmatpush2.msra.mxu0 %v4901
    %4903 = vmatprep.subr.mxu0 0.0
    %v4904 = vand.u32 %v280, 4294901760
    %v4905 = vsub.f32 %v280, %v4904
    %v4906 = vand.u32 %v4905, 4294901760
    %v4907 = vsub.f32 %v4905, %v4906
    %v4908 = vand.u32 %v4907, 4294901760
    %4909 = vmatpush2.msra.mxu0 %v4908
    %4910 = vmatprep.subr.mxu0 0.0
    %v4911 = vand.u32 %v279, 4294901760
    %v4912 = vsub.f32 %v279, %v4911
    %v4913 = vand.u32 %v4912, 4294901760
    %v4914 = vsub.f32 %v4912, %v4913
    %v4915 = vand.u32 %v4914, 4294901760
    %4916 = vmatpush2.msra.mxu0 %v4915
    %4917 = vmatprep.subr.mxu0 0.0
    %v4918 = vand.u32 %v278, 4294901760
    %v4919 = vsub.f32 %v278, %v4918
    %v4920 = vand.u32 %v4919, 4294901760
    %v4921 = vsub.f32 %v4919, %v4920
    %v4922 = vand.u32 %v4921, 4294901760
    %4923 = vmatpush2.msra.mxu0 %v4922
    %4924 = vmatprep.subr.mxu0 0.0
    %v4925 = vand.u32 %v277, 4294901760
    %v4926 = vsub.f32 %v277, %v4925
    %v4927 = vand.u32 %v4926, 4294901760
    %v4928 = vsub.f32 %v4926, %v4927
    %v4929 = vand.u32 %v4928, 4294901760
    %4930 = vmatpush2.msra.mxu0 %v4929
    %4931 = vmatprep.subr.mxu0 0.0
    %v4932 = vand.u32 %v276, 4294901760
    %v4933 = vsub.f32 %v276, %v4932
    %v4934 = vand.u32 %v4933, 4294901760
    %v4935 = vsub.f32 %v4933, %v4934
    %v4936 = vand.u32 %v4935, 4294901760
    %4937 = vmatpush2.msra.mxu0 %v4936
    %4938 = vmatprep.subr.mxu0 0.0
    %v4939 = vand.u32 %v275, 4294901760
    %v4940 = vsub.f32 %v275, %v4939
    %v4941 = vand.u32 %v4940, 4294901760
    %v4942 = vsub.f32 %v4940, %v4941
    %v4943 = vand.u32 %v4942, 4294901760
    %4944 = vmatpush2.msra.mxu0 %v4943
    %4945 = vmatprep.subr.mxu0 0.0
    %v4946 = vand.u32 %v274, 4294901760
    %v4947 = vsub.f32 %v274, %v4946
    %v4948 = vand.u32 %v4947, 4294901760
    %v4949 = vsub.f32 %v4947, %v4948
    %v4950 = vand.u32 %v4949, 4294901760
    %4951 = vmatpush2.msra.mxu0 %v4950
    %4952 = vmatprep.subr.mxu0 0.0
    %v4953 = vand.u32 %v273, 4294901760
    %v4954 = vsub.f32 %v273, %v4953
    %v4955 = vand.u32 %v4954, 4294901760
    %v4956 = vsub.f32 %v4954, %v4955
    %v4957 = vand.u32 %v4956, 4294901760
    %4958 = vmatpush2.msra.mxu0 %v4957
    %4959 = vmatprep.subr.mxu0 0.0
    %v4960 = vand.u32 %v272, 4294901760
    %v4961 = vsub.f32 %v272, %v4960
    %v4962 = vand.u32 %v4961, 4294901760
    %v4963 = vsub.f32 %v4961, %v4962
    %v4964 = vand.u32 %v4963, 4294901760
    %4965 = vmatpush2.msra.mxu0 %v4964
    %4966 = vmatprep.subr.mxu0 0.0
    %v4967 = vand.u32 %v271, 4294901760
    %v4968 = vsub.f32 %v271, %v4967
    %v4969 = vand.u32 %v4968, 4294901760
    %v4970 = vsub.f32 %v4968, %v4969
    %v4971 = vand.u32 %v4970, 4294901760
    %4972 = vmatpush2.msra.mxu0 %v4971
    %4973 = vmatprep.subr.mxu0 0.0
    %v4974 = vand.u32 %v270, 4294901760
    %v4975 = vsub.f32 %v270, %v4974
    %v4976 = vand.u32 %v4975, 4294901760
    %v4977 = vsub.f32 %v4975, %v4976
    %v4978 = vand.u32 %v4977, 4294901760
    %4979 = vmatpush2.msra.mxu0 %v4978
    %4980 = vmatprep.subr.mxu0 0.0
    %v4981 = vand.u32 %v269, 4294901760
    %v4982 = vsub.f32 %v269, %v4981
    %v4983 = vand.u32 %v4982, 4294901760
    %v4984 = vsub.f32 %v4982, %v4983
    %v4985 = vand.u32 %v4984, 4294901760
    %4986 = vmatpush2.msra.mxu0 %v4985
    %4987 = vmatprep.subr.mxu0 0.0
    %v4988 = vand.u32 %v268, 4294901760
    %v4989 = vsub.f32 %v268, %v4988
    %v4990 = vand.u32 %v4989, 4294901760
    %v4991 = vsub.f32 %v4989, %v4990
    %v4992 = vand.u32 %v4991, 4294901760
    %4993 = vmatpush2.msra.mxu0 %v4992
    %v4994 = vand.u32 %v76, 4294901760
    %4995 = vmatprep.mubr.f32.mxu0 %v4994
    %v4996 = vand.u32 %v75, 4294901760
    %4997 = vmatmul.mubr.f32.gmra.mxu0 %v4996
    %v4998 = vpop.f32.mrf.mxu0
    %v4999 = vadd.f32 %v4767, %v4998
    %v5000 = vpop.f32.mrf.mxu0
    %5001 = vdwg.mxu0
    %5002 = vmatprep.subr.mxu0 0.0
    %v5003 = vand.u32 %v267, 4294901760
    %v5004 = vsub.f32 %v267, %v5003
    %5005 = vmatpush1.msra.mxu0 %v5004
    %5006 = vmatprep.subr.mxu0 0.0
    %v5007 = vand.u32 %v266, 4294901760
    %v5008 = vsub.f32 %v266, %v5007
    %5009 = vmatpush1.msra.mxu0 %v5008
    %5010 = vmatprep.subr.mxu0 0.0
    %v5011 = vand.u32 %v265, 4294901760
    %v5012 = vsub.f32 %v265, %v5011
    %5013 = vmatpush1.msra.mxu0 %v5012
    %5014 = vmatprep.subr.mxu0 0.0
    %v5015 = vand.u32 %v264, 4294901760
    %v5016 = vsub.f32 %v264, %v5015
    %5017 = vmatpush1.msra.mxu0 %v5016
    %5018 = vmatprep.subr.mxu0 0.0
    %v5019 = vand.u32 %v263, 4294901760
    %v5020 = vsub.f32 %v263, %v5019
    %5021 = vmatpush1.msra.mxu0 %v5020
    %5022 = vmatprep.subr.mxu0 0.0
    %v5023 = vand.u32 %v262, 4294901760
    %v5024 = vsub.f32 %v262, %v5023
    %5025 = vmatpush1.msra.mxu0 %v5024
    %5026 = vmatprep.subr.mxu0 0.0
    %v5027 = vand.u32 %v261, 4294901760
    %v5028 = vsub.f32 %v261, %v5027
    %5029 = vmatpush1.msra.mxu0 %v5028
    %5030 = vmatprep.subr.mxu0 0.0
    %v5031 = vand.u32 %v260, 4294901760
    %v5032 = vsub.f32 %v260, %v5031
    %5033 = vmatpush1.msra.mxu0 %v5032
    %5034 = vmatprep.subr.mxu0 0.0
    %v5035 = vand.u32 %v259, 4294901760
    %v5036 = vsub.f32 %v259, %v5035
    %5037 = vmatpush1.msra.mxu0 %v5036
    %5038 = vmatprep.subr.mxu0 0.0
    %v5039 = vand.u32 %v258, 4294901760
    %v5040 = vsub.f32 %v258, %v5039
    %5041 = vmatpush1.msra.mxu0 %v5040
    %5042 = vmatprep.subr.mxu0 0.0
    %v5043 = vand.u32 %v257, 4294901760
    %v5044 = vsub.f32 %v257, %v5043
    %5045 = vmatpush1.msra.mxu0 %v5044
    %5046 = vmatprep.subr.mxu0 0.0
    %v5047 = vand.u32 %v256, 4294901760
    %v5048 = vsub.f32 %v256, %v5047
    %5049 = vmatpush1.msra.mxu0 %v5048
    %5050 = vmatprep.subr.mxu0 0.0
    %v5051 = vand.u32 %v255, 4294901760
    %v5052 = vsub.f32 %v255, %v5051
    %5053 = vmatpush1.msra.mxu0 %v5052
    %5054 = vmatprep.subr.mxu0 0.0
    %v5055 = vand.u32 %v254, 4294901760
    %v5056 = vsub.f32 %v254, %v5055
    %5057 = vmatpush1.msra.mxu0 %v5056
    %5058 = vmatprep.subr.mxu0 0.0
    %v5059 = vand.u32 %v253, 4294901760
    %v5060 = vsub.f32 %v253, %v5059
    %5061 = vmatpush1.msra.mxu0 %v5060
    %5062 = vmatprep.subr.mxu0 0.0
    %v5063 = vand.u32 %v252, 4294901760
    %v5064 = vsub.f32 %v252, %v5063
    %5065 = vmatpush1.msra.mxu0 %v5064
    %5066 = vmatprep.subr.mxu0 0.0
    %v5067 = vand.u32 %v283, 4294901760
    %v5068 = vsub.f32 %v283, %v5067
    %5069 = vmatpush2.msra.mxu0 %v5068
    %5070 = vmatprep.subr.mxu0 0.0
    %v5071 = vand.u32 %v282, 4294901760
    %v5072 = vsub.f32 %v282, %v5071
    %5073 = vmatpush2.msra.mxu0 %v5072
    %5074 = vmatprep.subr.mxu0 0.0
    %v5075 = vand.u32 %v281, 4294901760
    %v5076 = vsub.f32 %v281, %v5075
    %5077 = vmatpush2.msra.mxu0 %v5076
    %5078 = vmatprep.subr.mxu0 0.0
    %v5079 = vand.u32 %v280, 4294901760
    %v5080 = vsub.f32 %v280, %v5079
    %5081 = vmatpush2.msra.mxu0 %v5080
    %5082 = vmatprep.subr.mxu0 0.0
    %v5083 = vand.u32 %v279, 4294901760
    %v5084 = vsub.f32 %v279, %v5083
    %5085 = vmatpush2.msra.mxu0 %v5084
    %5086 = vmatprep.subr.mxu0 0.0
    %v5087 = vand.u32 %v278, 4294901760
    %v5088 = vsub.f32 %v278, %v5087
    %5089 = vmatpush2.msra.mxu0 %v5088
    %5090 = vmatprep.subr.mxu0 0.0
    %v5091 = vand.u32 %v277, 4294901760
    %v5092 = vsub.f32 %v277, %v5091
    %5093 = vmatpush2.msra.mxu0 %v5092
    %5094 = vmatprep.subr.mxu0 0.0
    %v5095 = vand.u32 %v276, 4294901760
    %v5096 = vsub.f32 %v276, %v5095
    %5097 = vmatpush2.msra.mxu0 %v5096
    %5098 = vmatprep.subr.mxu0 0.0
    %v5099 = vand.u32 %v275, 4294901760
    %v5100 = vsub.f32 %v275, %v5099
    %5101 = vmatpush2.msra.mxu0 %v5100
    %5102 = vmatprep.subr.mxu0 0.0
    %v5103 = vand.u32 %v274, 4294901760
    %v5104 = vsub.f32 %v274, %v5103
    %5105 = vmatpush2.msra.mxu0 %v5104
    %5106 = vmatprep.subr.mxu0 0.0
    %v5107 = vand.u32 %v273, 4294901760
    %v5108 = vsub.f32 %v273, %v5107
    %5109 = vmatpush2.msra.mxu0 %v5108
    %5110 = vmatprep.subr.mxu0 0.0
    %v5111 = vand.u32 %v272, 4294901760
    %v5112 = vsub.f32 %v272, %v5111
    %5113 = vmatpush2.msra.mxu0 %v5112
    %5114 = vmatprep.subr.mxu0 0.0
    %v5115 = vand.u32 %v271, 4294901760
    %v5116 = vsub.f32 %v271, %v5115
    %5117 = vmatpush2.msra.mxu0 %v5116
    %5118 = vmatprep.subr.mxu0 0.0
    %v5119 = vand.u32 %v270, 4294901760
    %v5120 = vsub.f32 %v270, %v5119
    %5121 = vmatpush2.msra.mxu0 %v5120
    %5122 = vmatprep.subr.mxu0 0.0
    %v5123 = vand.u32 %v269, 4294901760
    %v5124 = vsub.f32 %v269, %v5123
    %5125 = vmatpush2.msra.mxu0 %v5124
    %5126 = vmatprep.subr.mxu0 0.0
    %v5127 = vand.u32 %v268, 4294901760
    %v5128 = vsub.f32 %v268, %v5127
    %5129 = vmatpush2.msra.mxu0 %v5128
    %v5130 = vand.u32 %v76, 4294901760
    %v5131 = vsub.f32 %v76, %v5130
    %5132 = vmatprep.mubr.f32.mxu0 %v5131
    %v5133 = vand.u32 %v75, 4294901760
    %v5134 = vsub.f32 %v75, %v5133
    %5135 = vmatmul.mubr.f32.gmra.mxu0 %v5134
    %v5136 = vpop.f32.mrf.mxu0
    %v5137 = vadd.f32 %v4999, %v5136
    %v5138 = vpop.f32.mrf.mxu0
    %5139 = vdwg.mxu0
    %5140 = vmatprep.subr.mxu0 0.0
    %v5141 = vand.u32 %v267, 4294901760
    %5142 = vmatpush1.msra.mxu0 %v5141
    %5143 = vmatprep.subr.mxu0 0.0
    %v5144 = vand.u32 %v266, 4294901760
    %5145 = vmatpush1.msra.mxu0 %v5144
    %5146 = vmatprep.subr.mxu0 0.0
    %v5147 = vand.u32 %v265, 4294901760
    %5148 = vmatpush1.msra.mxu0 %v5147
    %5149 = vmatprep.subr.mxu0 0.0
    %v5150 = vand.u32 %v264, 4294901760
    %5151 = vmatpush1.msra.mxu0 %v5150
    %5152 = vmatprep.subr.mxu0 0.0
    %v5153 = vand.u32 %v263, 4294901760
    %5154 = vmatpush1.msra.mxu0 %v5153
    %5155 = vmatprep.subr.mxu0 0.0
    %v5156 = vand.u32 %v262, 4294901760
    %5157 = vmatpush1.msra.mxu0 %v5156
    %5158 = vmatprep.subr.mxu0 0.0
    %v5159 = vand.u32 %v261, 4294901760
    %5160 = vmatpush1.msra.mxu0 %v5159
    %5161 = vmatprep.subr.mxu0 0.0
    %v5162 = vand.u32 %v260, 4294901760
    %5163 = vmatpush1.msra.mxu0 %v5162
    %5164 = vmatprep.subr.mxu0 0.0
    %v5165 = vand.u32 %v259, 4294901760
    %5166 = vmatpush1.msra.mxu0 %v5165
    %5167 = vmatprep.subr.mxu0 0.0
    %v5168 = vand.u32 %v258, 4294901760
    %5169 = vmatpush1.msra.mxu0 %v5168
    %5170 = vmatprep.subr.mxu0 0.0
    %v5171 = vand.u32 %v257, 4294901760
    %5172 = vmatpush1.msra.mxu0 %v5171
    %5173 = vmatprep.subr.mxu0 0.0
    %v5174 = vand.u32 %v256, 4294901760
    %5175 = vmatpush1.msra.mxu0 %v5174
    %5176 = vmatprep.subr.mxu0 0.0
    %v5177 = vand.u32 %v255, 4294901760
    %5178 = vmatpush1.msra.mxu0 %v5177
    %5179 = vmatprep.subr.mxu0 0.0
    %v5180 = vand.u32 %v254, 4294901760
    %5181 = vmatpush1.msra.mxu0 %v5180
    %5182 = vmatprep.subr.mxu0 0.0
    %v5183 = vand.u32 %v253, 4294901760
    %5184 = vmatpush1.msra.mxu0 %v5183
    %5185 = vmatprep.subr.mxu0 0.0
    %v5186 = vand.u32 %v252, 4294901760
    %5187 = vmatpush1.msra.mxu0 %v5186
    %5188 = vmatprep.subr.mxu0 0.0
    %v5189 = vand.u32 %v283, 4294901760
    %5190 = vmatpush2.msra.mxu0 %v5189
    %5191 = vmatprep.subr.mxu0 0.0
    %v5192 = vand.u32 %v282, 4294901760
    %5193 = vmatpush2.msra.mxu0 %v5192
    %5194 = vmatprep.subr.mxu0 0.0
    %v5195 = vand.u32 %v281, 4294901760
    %5196 = vmatpush2.msra.mxu0 %v5195
    %5197 = vmatprep.subr.mxu0 0.0
    %v5198 = vand.u32 %v280, 4294901760
    %5199 = vmatpush2.msra.mxu0 %v5198
    %5200 = vmatprep.subr.mxu0 0.0
    %v5201 = vand.u32 %v279, 4294901760
    %5202 = vmatpush2.msra.mxu0 %v5201
    %5203 = vmatprep.subr.mxu0 0.0
    %v5204 = vand.u32 %v278, 4294901760
    %5205 = vmatpush2.msra.mxu0 %v5204
    %5206 = vmatprep.subr.mxu0 0.0
    %v5207 = vand.u32 %v277, 4294901760
    %5208 = vmatpush2.msra.mxu0 %v5207
    %5209 = vmatprep.subr.mxu0 0.0
    %v5210 = vand.u32 %v276, 4294901760
    %5211 = vmatpush2.msra.mxu0 %v5210
    %5212 = vmatprep.subr.mxu0 0.0
    %v5213 = vand.u32 %v275, 4294901760
    %5214 = vmatpush2.msra.mxu0 %v5213
    %5215 = vmatprep.subr.mxu0 0.0
    %v5216 = vand.u32 %v274, 4294901760
    %5217 = vmatpush2.msra.mxu0 %v5216
    %5218 = vmatprep.subr.mxu0 0.0
    %v5219 = vand.u32 %v273, 4294901760
    %5220 = vmatpush2.msra.mxu0 %v5219
    %5221 = vmatprep.subr.mxu0 0.0
    %v5222 = vand.u32 %v272, 4294901760
    %5223 = vmatpush2.msra.mxu0 %v5222
    %5224 = vmatprep.subr.mxu0 0.0
    %v5225 = vand.u32 %v271, 4294901760
    %5226 = vmatpush2.msra.mxu0 %v5225
    %5227 = vmatprep.subr.mxu0 0.0
    %v5228 = vand.u32 %v270, 4294901760
    %5229 = vmatpush2.msra.mxu0 %v5228
    %5230 = vmatprep.subr.mxu0 0.0
    %v5231 = vand.u32 %v269, 4294901760
    %5232 = vmatpush2.msra.mxu0 %v5231
    %5233 = vmatprep.subr.mxu0 0.0
    %v5234 = vand.u32 %v268, 4294901760
    %5235 = vmatpush2.msra.mxu0 %v5234
    %v5236 = vand.u32 %v76, 4294901760
    %v5237 = vsub.f32 %v76, %v5236
    %v5238 = vand.u32 %v5237, 4294901760
    %5239 = vmatprep.mubr.f32.mxu0 %v5238
    %v5240 = vand.u32 %v75, 4294901760
    %v5241 = vsub.f32 %v75, %v5240
    %v5242 = vand.u32 %v5241, 4294901760
    %5243 = vmatmul.mubr.f32.gmra.mxu0 %v5242
    %v5244 = vpop.f32.mrf.mxu0
    %v5245 = vadd.f32 %v5137, %v5244
    %v5246 = vpop.f32.mrf.mxu0
    %5247 = vdwg.mxu0
    %5248 = vmatprep.subr.mxu0 0.0
    %v5249 = vand.u32 %v267, 4294901760
    %v5250 = vsub.f32 %v267, %v5249
    %v5251 = vand.u32 %v5250, 4294901760
    %5252 = vmatpush1.msra.mxu0 %v5251
    %5253 = vmatprep.subr.mxu0 0.0
    %v5254 = vand.u32 %v266, 4294901760
    %v5255 = vsub.f32 %v266, %v5254
    %v5256 = vand.u32 %v5255, 4294901760
    %5257 = vmatpush1.msra.mxu0 %v5256
    %5258 = vmatprep.subr.mxu0 0.0
    %v5259 = vand.u32 %v265, 4294901760
    %v5260 = vsub.f32 %v265, %v5259
    %v5261 = vand.u32 %v5260, 4294901760
    %5262 = vmatpush1.msra.mxu0 %v5261
    %5263 = vmatprep.subr.mxu0 0.0
    %v5264 = vand.u32 %v264, 4294901760
    %v5265 = vsub.f32 %v264, %v5264
    %v5266 = vand.u32 %v5265, 4294901760
    %5267 = vmatpush1.msra.mxu0 %v5266
    %5268 = vmatprep.subr.mxu0 0.0
    %v5269 = vand.u32 %v263, 4294901760
    %v5270 = vsub.f32 %v263, %v5269
    %v5271 = vand.u32 %v5270, 4294901760
    %5272 = vmatpush1.msra.mxu0 %v5271
    %5273 = vmatprep.subr.mxu0 0.0
    %v5274 = vand.u32 %v262, 4294901760
    %v5275 = vsub.f32 %v262, %v5274
    %v5276 = vand.u32 %v5275, 4294901760
    %5277 = vmatpush1.msra.mxu0 %v5276
    %5278 = vmatprep.subr.mxu0 0.0
    %v5279 = vand.u32 %v261, 4294901760
    %v5280 = vsub.f32 %v261, %v5279
    %v5281 = vand.u32 %v5280, 4294901760
    %5282 = vmatpush1.msra.mxu0 %v5281
    %5283 = vmatprep.subr.mxu0 0.0
    %v5284 = vand.u32 %v260, 4294901760
    %v5285 = vsub.f32 %v260, %v5284
    %v5286 = vand.u32 %v5285, 4294901760
    %5287 = vmatpush1.msra.mxu0 %v5286
    %5288 = vmatprep.subr.mxu0 0.0
    %v5289 = vand.u32 %v259, 4294901760
    %v5290 = vsub.f32 %v259, %v5289
    %v5291 = vand.u32 %v5290, 4294901760
    %5292 = vmatpush1.msra.mxu0 %v5291
    %5293 = vmatprep.subr.mxu0 0.0
    %v5294 = vand.u32 %v258, 4294901760
    %v5295 = vsub.f32 %v258, %v5294
    %v5296 = vand.u32 %v5295, 4294901760
    %5297 = vmatpush1.msra.mxu0 %v5296
    %5298 = vmatprep.subr.mxu0 0.0
    %v5299 = vand.u32 %v257, 4294901760
    %v5300 = vsub.f32 %v257, %v5299
    %v5301 = vand.u32 %v5300, 4294901760
    %5302 = vmatpush1.msra.mxu0 %v5301
    %5303 = vmatprep.subr.mxu0 0.0
    %v5304 = vand.u32 %v256, 4294901760
    %v5305 = vsub.f32 %v256, %v5304
    %v5306 = vand.u32 %v5305, 4294901760
    %5307 = vmatpush1.msra.mxu0 %v5306
    %5308 = vmatprep.subr.mxu0 0.0
    %v5309 = vand.u32 %v255, 4294901760
    %v5310 = vsub.f32 %v255, %v5309
    %v5311 = vand.u32 %v5310, 4294901760
    %5312 = vmatpush1.msra.mxu0 %v5311
    %5313 = vmatprep.subr.mxu0 0.0
    %v5314 = vand.u32 %v254, 4294901760
    %v5315 = vsub.f32 %v254, %v5314
    %v5316 = vand.u32 %v5315, 4294901760
    %5317 = vmatpush1.msra.mxu0 %v5316
    %5318 = vmatprep.subr.mxu0 0.0
    %v5319 = vand.u32 %v253, 4294901760
    %v5320 = vsub.f32 %v253, %v5319
    %v5321 = vand.u32 %v5320, 4294901760
    %5322 = vmatpush1.msra.mxu0 %v5321
    %5323 = vmatprep.subr.mxu0 0.0
    %v5324 = vand.u32 %v252, 4294901760
    %v5325 = vsub.f32 %v252, %v5324
    %v5326 = vand.u32 %v5325, 4294901760
    %5327 = vmatpush1.msra.mxu0 %v5326
    %5328 = vmatprep.subr.mxu0 0.0
    %v5329 = vand.u32 %v283, 4294901760
    %v5330 = vsub.f32 %v283, %v5329
    %v5331 = vand.u32 %v5330, 4294901760
    %5332 = vmatpush2.msra.mxu0 %v5331
    %5333 = vmatprep.subr.mxu0 0.0
    %v5334 = vand.u32 %v282, 4294901760
    %v5335 = vsub.f32 %v282, %v5334
    %v5336 = vand.u32 %v5335, 4294901760
    %5337 = vmatpush2.msra.mxu0 %v5336
    %5338 = vmatprep.subr.mxu0 0.0
    %v5339 = vand.u32 %v281, 4294901760
    %v5340 = vsub.f32 %v281, %v5339
    %v5341 = vand.u32 %v5340, 4294901760
    %5342 = vmatpush2.msra.mxu0 %v5341
    %5343 = vmatprep.subr.mxu0 0.0
    %v5344 = vand.u32 %v280, 4294901760
    %v5345 = vsub.f32 %v280, %v5344
    %v5346 = vand.u32 %v5345, 4294901760
    %5347 = vmatpush2.msra.mxu0 %v5346
    %5348 = vmatprep.subr.mxu0 0.0
    %v5349 = vand.u32 %v279, 4294901760
    %v5350 = vsub.f32 %v279, %v5349
    %v5351 = vand.u32 %v5350, 4294901760
    %5352 = vmatpush2.msra.mxu0 %v5351
    %5353 = vmatprep.subr.mxu0 0.0
    %v5354 = vand.u32 %v278, 4294901760
    %v5355 = vsub.f32 %v278, %v5354
    %v5356 = vand.u32 %v5355, 4294901760
    %5357 = vmatpush2.msra.mxu0 %v5356
    %5358 = vmatprep.subr.mxu0 0.0
    %v5359 = vand.u32 %v277, 4294901760
    %v5360 = vsub.f32 %v277, %v5359
    %v5361 = vand.u32 %v5360, 4294901760
    %5362 = vmatpush2.msra.mxu0 %v5361
    %5363 = vmatprep.subr.mxu0 0.0
    %v5364 = vand.u32 %v276, 4294901760
    %v5365 = vsub.f32 %v276, %v5364
    %v5366 = vand.u32 %v5365, 4294901760
    %5367 = vmatpush2.msra.mxu0 %v5366
    %5368 = vmatprep.subr.mxu0 0.0
    %v5369 = vand.u32 %v275, 4294901760
    %v5370 = vsub.f32 %v275, %v5369
    %v5371 = vand.u32 %v5370, 4294901760
    %5372 = vmatpush2.msra.mxu0 %v5371
    %5373 = vmatprep.subr.mxu0 0.0
    %v5374 = vand.u32 %v274, 4294901760
    %v5375 = vsub.f32 %v274, %v5374
    %v5376 = vand.u32 %v5375, 4294901760
    %5377 = vmatpush2.msra.mxu0 %v5376
    %5378 = vmatprep.subr.mxu0 0.0
    %v5379 = vand.u32 %v273, 4294901760
    %v5380 = vsub.f32 %v273, %v5379
    %v5381 = vand.u32 %v5380, 4294901760
    %5382 = vmatpush2.msra.mxu0 %v5381
    %5383 = vmatprep.subr.mxu0 0.0
    %v5384 = vand.u32 %v272, 4294901760
    %v5385 = vsub.f32 %v272, %v5384
    %v5386 = vand.u32 %v5385, 4294901760
    %5387 = vmatpush2.msra.mxu0 %v5386
    %5388 = vmatprep.subr.mxu0 0.0
    %v5389 = vand.u32 %v271, 4294901760
    %v5390 = vsub.f32 %v271, %v5389
    %v5391 = vand.u32 %v5390, 4294901760
    %5392 = vmatpush2.msra.mxu0 %v5391
    %5393 = vmatprep.subr.mxu0 0.0
    %v5394 = vand.u32 %v270, 4294901760
    %v5395 = vsub.f32 %v270, %v5394
    %v5396 = vand.u32 %v5395, 4294901760
    %5397 = vmatpush2.msra.mxu0 %v5396
    %5398 = vmatprep.subr.mxu0 0.0
    %v5399 = vand.u32 %v269, 4294901760
    %v5400 = vsub.f32 %v269, %v5399
    %v5401 = vand.u32 %v5400, 4294901760
    %5402 = vmatpush2.msra.mxu0 %v5401
    %5403 = vmatprep.subr.mxu0 0.0
    %v5404 = vand.u32 %v268, 4294901760
    %v5405 = vsub.f32 %v268, %v5404
    %v5406 = vand.u32 %v5405, 4294901760
    %5407 = vmatpush2.msra.mxu0 %v5406
    %v5408 = vand.u32 %v76, 4294901760
    %5409 = vmatprep.mubr.f32.mxu0 %v5408
    %v5410 = vand.u32 %v75, 4294901760
    %5411 = vmatmul.mubr.f32.gmra.mxu0 %v5410
    %v5412 = vpop.f32.mrf.mxu0
    %v5413 = vadd.f32 %v5245, %v5412
    %v5414 = vpop.f32.mrf.mxu0
    %5415 = vdwg.mxu0
    %5416 = vmatprep.subr.mxu0 0.0
    %v5417 = vand.u32 %v267, 4294901760
    %5418 = vmatpush1.msra.mxu0 %v5417
    %5419 = vmatprep.subr.mxu0 0.0
    %v5420 = vand.u32 %v266, 4294901760
    %5421 = vmatpush1.msra.mxu0 %v5420
    %5422 = vmatprep.subr.mxu0 0.0
    %v5423 = vand.u32 %v265, 4294901760
    %5424 = vmatpush1.msra.mxu0 %v5423
    %5425 = vmatprep.subr.mxu0 0.0
    %v5426 = vand.u32 %v264, 4294901760
    %5427 = vmatpush1.msra.mxu0 %v5426
    %5428 = vmatprep.subr.mxu0 0.0
    %v5429 = vand.u32 %v263, 4294901760
    %5430 = vmatpush1.msra.mxu0 %v5429
    %5431 = vmatprep.subr.mxu0 0.0
    %v5432 = vand.u32 %v262, 4294901760
    %5433 = vmatpush1.msra.mxu0 %v5432
    %5434 = vmatprep.subr.mxu0 0.0
    %v5435 = vand.u32 %v261, 4294901760
    %5436 = vmatpush1.msra.mxu0 %v5435
    %5437 = vmatprep.subr.mxu0 0.0
    %v5438 = vand.u32 %v260, 4294901760
    %5439 = vmatpush1.msra.mxu0 %v5438
    %5440 = vmatprep.subr.mxu0 0.0
    %v5441 = vand.u32 %v259, 4294901760
    %5442 = vmatpush1.msra.mxu0 %v5441
    %5443 = vmatprep.subr.mxu0 0.0
    %v5444 = vand.u32 %v258, 4294901760
    %5445 = vmatpush1.msra.mxu0 %v5444
    %5446 = vmatprep.subr.mxu0 0.0
    %v5447 = vand.u32 %v257, 4294901760
    %5448 = vmatpush1.msra.mxu0 %v5447
    %5449 = vmatprep.subr.mxu0 0.0
    %v5450 = vand.u32 %v256, 4294901760
    %5451 = vmatpush1.msra.mxu0 %v5450
    %5452 = vmatprep.subr.mxu0 0.0
    %v5453 = vand.u32 %v255, 4294901760
    %5454 = vmatpush1.msra.mxu0 %v5453
    %5455 = vmatprep.subr.mxu0 0.0
    %v5456 = vand.u32 %v254, 4294901760
    %5457 = vmatpush1.msra.mxu0 %v5456
    %5458 = vmatprep.subr.mxu0 0.0
    %v5459 = vand.u32 %v253, 4294901760
    %5460 = vmatpush1.msra.mxu0 %v5459
    %5461 = vmatprep.subr.mxu0 0.0
    %v5462 = vand.u32 %v252, 4294901760
    %5463 = vmatpush1.msra.mxu0 %v5462
    %5464 = vmatprep.subr.mxu0 0.0
    %v5465 = vand.u32 %v283, 4294901760
    %5466 = vmatpush2.msra.mxu0 %v5465
    %5467 = vmatprep.subr.mxu0 0.0
    %v5468 = vand.u32 %v282, 4294901760
    %5469 = vmatpush2.msra.mxu0 %v5468
    %5470 = vmatprep.subr.mxu0 0.0
    %v5471 = vand.u32 %v281, 4294901760
    %5472 = vmatpush2.msra.mxu0 %v5471
    %5473 = vmatprep.subr.mxu0 0.0
    %v5474 = vand.u32 %v280, 4294901760
    %5475 = vmatpush2.msra.mxu0 %v5474
    %5476 = vmatprep.subr.mxu0 0.0
    %v5477 = vand.u32 %v279, 4294901760
    %5478 = vmatpush2.msra.mxu0 %v5477
    %5479 = vmatprep.subr.mxu0 0.0
    %v5480 = vand.u32 %v278, 4294901760
    %5481 = vmatpush2.msra.mxu0 %v5480
    %5482 = vmatprep.subr.mxu0 0.0
    %v5483 = vand.u32 %v277, 4294901760
    %5484 = vmatpush2.msra.mxu0 %v5483
    %5485 = vmatprep.subr.mxu0 0.0
    %v5486 = vand.u32 %v276, 4294901760
    %5487 = vmatpush2.msra.mxu0 %v5486
    %5488 = vmatprep.subr.mxu0 0.0
    %v5489 = vand.u32 %v275, 4294901760
    %5490 = vmatpush2.msra.mxu0 %v5489
    %5491 = vmatprep.subr.mxu0 0.0
    %v5492 = vand.u32 %v274, 4294901760
    %5493 = vmatpush2.msra.mxu0 %v5492
    %5494 = vmatprep.subr.mxu0 0.0
    %v5495 = vand.u32 %v273, 4294901760
    %5496 = vmatpush2.msra.mxu0 %v5495
    %5497 = vmatprep.subr.mxu0 0.0
    %v5498 = vand.u32 %v272, 4294901760
    %5499 = vmatpush2.msra.mxu0 %v5498
    %5500 = vmatprep.subr.mxu0 0.0
    %v5501 = vand.u32 %v271, 4294901760
    %5502 = vmatpush2.msra.mxu0 %v5501
    %5503 = vmatprep.subr.mxu0 0.0
    %v5504 = vand.u32 %v270, 4294901760
    %5505 = vmatpush2.msra.mxu0 %v5504
    %5506 = vmatprep.subr.mxu0 0.0
    %v5507 = vand.u32 %v269, 4294901760
    %5508 = vmatpush2.msra.mxu0 %v5507
    %5509 = vmatprep.subr.mxu0 0.0
    %v5510 = vand.u32 %v268, 4294901760
    %5511 = vmatpush2.msra.mxu0 %v5510
    %v5512 = vand.u32 %v76, 4294901760
    %5513 = vmatprep.mubr.f32.mxu0 %v5512
    %v5514 = vand.u32 %v75, 4294901760
    %5515 = vmatmul.mubr.f32.gmra.mxu0 %v5514
    %v5516 = vpop.f32.mrf.mxu0
    %v5517 = vadd.f32 %v5413, %v5516
    %v5518 = vpop.f32.mrf.mxu0
    %5519 = vdwg.mxu0
    %5520 = vmatprep.subr.mxu0 0.0
    %v5521 = vand.u32 %v299, 4294901760
    %5522 = vmatpush1.msra.mxu0 %v5521
    %5523 = vmatprep.subr.mxu0 0.0
    %v5524 = vand.u32 %v298, 4294901760
    %5525 = vmatpush1.msra.mxu0 %v5524
    %5526 = vmatprep.subr.mxu0 0.0
    %v5527 = vand.u32 %v297, 4294901760
    %5528 = vmatpush1.msra.mxu0 %v5527
    %5529 = vmatprep.subr.mxu0 0.0
    %v5530 = vand.u32 %v296, 4294901760
    %5531 = vmatpush1.msra.mxu0 %v5530
    %5532 = vmatprep.subr.mxu0 0.0
    %v5533 = vand.u32 %v295, 4294901760
    %5534 = vmatpush1.msra.mxu0 %v5533
    %5535 = vmatprep.subr.mxu0 0.0
    %v5536 = vand.u32 %v294, 4294901760
    %5537 = vmatpush1.msra.mxu0 %v5536
    %5538 = vmatprep.subr.mxu0 0.0
    %v5539 = vand.u32 %v293, 4294901760
    %5540 = vmatpush1.msra.mxu0 %v5539
    %5541 = vmatprep.subr.mxu0 0.0
    %v5542 = vand.u32 %v292, 4294901760
    %5543 = vmatpush1.msra.mxu0 %v5542
    %5544 = vmatprep.subr.mxu0 0.0
    %v5545 = vand.u32 %v291, 4294901760
    %5546 = vmatpush1.msra.mxu0 %v5545
    %5547 = vmatprep.subr.mxu0 0.0
    %v5548 = vand.u32 %v290, 4294901760
    %5549 = vmatpush1.msra.mxu0 %v5548
    %5550 = vmatprep.subr.mxu0 0.0
    %v5551 = vand.u32 %v289, 4294901760
    %5552 = vmatpush1.msra.mxu0 %v5551
    %5553 = vmatprep.subr.mxu0 0.0
    %v5554 = vand.u32 %v288, 4294901760
    %5555 = vmatpush1.msra.mxu0 %v5554
    %5556 = vmatprep.subr.mxu0 0.0
    %v5557 = vand.u32 %v287, 4294901760
    %5558 = vmatpush1.msra.mxu0 %v5557
    %5559 = vmatprep.subr.mxu0 0.0
    %v5560 = vand.u32 %v286, 4294901760
    %5561 = vmatpush1.msra.mxu0 %v5560
    %5562 = vmatprep.subr.mxu0 0.0
    %v5563 = vand.u32 %v285, 4294901760
    %5564 = vmatpush1.msra.mxu0 %v5563
    %5565 = vmatprep.subr.mxu0 0.0
    %v5566 = vand.u32 %v284, 4294901760
    %5567 = vmatpush1.msra.mxu0 %v5566
    %5568 = vmatprep.subr.mxu0 0.0
    %v5569 = vand.u32 %v315, 4294901760
    %5570 = vmatpush2.msra.mxu0 %v5569
    %5571 = vmatprep.subr.mxu0 0.0
    %v5572 = vand.u32 %v314, 4294901760
    %5573 = vmatpush2.msra.mxu0 %v5572
    %5574 = vmatprep.subr.mxu0 0.0
    %v5575 = vand.u32 %v313, 4294901760
    %5576 = vmatpush2.msra.mxu0 %v5575
    %5577 = vmatprep.subr.mxu0 0.0
    %v5578 = vand.u32 %v312, 4294901760
    %5579 = vmatpush2.msra.mxu0 %v5578
    %5580 = vmatprep.subr.mxu0 0.0
    %v5581 = vand.u32 %v311, 4294901760
    %5582 = vmatpush2.msra.mxu0 %v5581
    %5583 = vmatprep.subr.mxu0 0.0
    %v5584 = vand.u32 %v310, 4294901760
    %5585 = vmatpush2.msra.mxu0 %v5584
    %5586 = vmatprep.subr.mxu0 0.0
    %v5587 = vand.u32 %v309, 4294901760
    %5588 = vmatpush2.msra.mxu0 %v5587
    %5589 = vmatprep.subr.mxu0 0.0
    %v5590 = vand.u32 %v308, 4294901760
    %5591 = vmatpush2.msra.mxu0 %v5590
    %5592 = vmatprep.subr.mxu0 0.0
    %v5593 = vand.u32 %v307, 4294901760
    %5594 = vmatpush2.msra.mxu0 %v5593
    %5595 = vmatprep.subr.mxu0 0.0
    %v5596 = vand.u32 %v306, 4294901760
    %5597 = vmatpush2.msra.mxu0 %v5596
    %5598 = vmatprep.subr.mxu0 0.0
    %v5599 = vand.u32 %v305, 4294901760
    %5600 = vmatpush2.msra.mxu0 %v5599
    %5601 = vmatprep.subr.mxu0 0.0
    %v5602 = vand.u32 %v304, 4294901760
    %5603 = vmatpush2.msra.mxu0 %v5602
    %5604 = vmatprep.subr.mxu0 0.0
    %v5605 = vand.u32 %v303, 4294901760
    %5606 = vmatpush2.msra.mxu0 %v5605
    %5607 = vmatprep.subr.mxu0 0.0
    %v5608 = vand.u32 %v302, 4294901760
    %5609 = vmatpush2.msra.mxu0 %v5608
    %5610 = vmatprep.subr.mxu0 0.0
    %v5611 = vand.u32 %v301, 4294901760
    %5612 = vmatpush2.msra.mxu0 %v5611
    %5613 = vmatprep.subr.mxu0 0.0
    %v5614 = vand.u32 %v300, 4294901760
    %5615 = vmatpush2.msra.mxu0 %v5614
    %v5616 = vand.u32 %v89, 4294901760
    %v5617 = vsub.f32 %v89, %v5616
    %v5618 = vand.u32 %v5617, 4294901760
    %v5619 = vsub.f32 %v5617, %v5618
    %v5620 = vand.u32 %v5619, 4294901760
    %5621 = vmatprep.mubr.f32.mxu0 %v5620
    %v5622 = vand.u32 %v88, 4294901760
    %v5623 = vsub.f32 %v88, %v5622
    %v5624 = vand.u32 %v5623, 4294901760
    %v5625 = vsub.f32 %v5623, %v5624
    %v5626 = vand.u32 %v5625, 4294901760
    %5627 = vmatmul.mubr.f32.gmra.mxu0 %v5626
    %v5628 = vpop.f32.mrf.mxu0
    %v5629 = vadd.f32 %v5517, %v5628
    %v5630 = vpop.f32.mrf.mxu0
    %5631 = vdwg.mxu0
    %5632 = vmatprep.subr.mxu0 0.0
    %v5633 = vand.u32 %v299, 4294901760
    %v5634 = vsub.f32 %v299, %v5633
    %v5635 = vand.u32 %v5634, 4294901760
    %v5636 = vsub.f32 %v5634, %v5635
    %v5637 = vand.u32 %v5636, 4294901760
    %5638 = vmatpush1.msra.mxu0 %v5637
    %5639 = vmatprep.subr.mxu0 0.0
    %v5640 = vand.u32 %v298, 4294901760
    %v5641 = vsub.f32 %v298, %v5640
    %v5642 = vand.u32 %v5641, 4294901760
    %v5643 = vsub.f32 %v5641, %v5642
    %v5644 = vand.u32 %v5643, 4294901760
    %5645 = vmatpush1.msra.mxu0 %v5644
    %5646 = vmatprep.subr.mxu0 0.0
    %v5647 = vand.u32 %v297, 4294901760
    %v5648 = vsub.f32 %v297, %v5647
    %v5649 = vand.u32 %v5648, 4294901760
    %v5650 = vsub.f32 %v5648, %v5649
    %v5651 = vand.u32 %v5650, 4294901760
    %5652 = vmatpush1.msra.mxu0 %v5651
    %5653 = vmatprep.subr.mxu0 0.0
    %v5654 = vand.u32 %v296, 4294901760
    %v5655 = vsub.f32 %v296, %v5654
    %v5656 = vand.u32 %v5655, 4294901760
    %v5657 = vsub.f32 %v5655, %v5656
    %v5658 = vand.u32 %v5657, 4294901760
    %5659 = vmatpush1.msra.mxu0 %v5658
    %5660 = vmatprep.subr.mxu0 0.0
    %v5661 = vand.u32 %v295, 4294901760
    %v5662 = vsub.f32 %v295, %v5661
    %v5663 = vand.u32 %v5662, 4294901760
    %v5664 = vsub.f32 %v5662, %v5663
    %v5665 = vand.u32 %v5664, 4294901760
    %5666 = vmatpush1.msra.mxu0 %v5665
    %5667 = vmatprep.subr.mxu0 0.0
    %v5668 = vand.u32 %v294, 4294901760
    %v5669 = vsub.f32 %v294, %v5668
    %v5670 = vand.u32 %v5669, 4294901760
    %v5671 = vsub.f32 %v5669, %v5670
    %v5672 = vand.u32 %v5671, 4294901760
    %5673 = vmatpush1.msra.mxu0 %v5672
    %5674 = vmatprep.subr.mxu0 0.0
    %v5675 = vand.u32 %v293, 4294901760
    %v5676 = vsub.f32 %v293, %v5675
    %v5677 = vand.u32 %v5676, 4294901760
    %v5678 = vsub.f32 %v5676, %v5677
    %v5679 = vand.u32 %v5678, 4294901760
    %5680 = vmatpush1.msra.mxu0 %v5679
    %5681 = vmatprep.subr.mxu0 0.0
    %v5682 = vand.u32 %v292, 4294901760
    %v5683 = vsub.f32 %v292, %v5682
    %v5684 = vand.u32 %v5683, 4294901760
    %v5685 = vsub.f32 %v5683, %v5684
    %v5686 = vand.u32 %v5685, 4294901760
    %5687 = vmatpush1.msra.mxu0 %v5686
    %5688 = vmatprep.subr.mxu0 0.0
    %v5689 = vand.u32 %v291, 4294901760
    %v5690 = vsub.f32 %v291, %v5689
    %v5691 = vand.u32 %v5690, 4294901760
    %v5692 = vsub.f32 %v5690, %v5691
    %v5693 = vand.u32 %v5692, 4294901760
    %5694 = vmatpush1.msra.mxu0 %v5693
    %5695 = vmatprep.subr.mxu0 0.0
    %v5696 = vand.u32 %v290, 4294901760
    %v5697 = vsub.f32 %v290, %v5696
    %v5698 = vand.u32 %v5697, 4294901760
    %v5699 = vsub.f32 %v5697, %v5698
    %v5700 = vand.u32 %v5699, 4294901760
    %5701 = vmatpush1.msra.mxu0 %v5700
    %5702 = vmatprep.subr.mxu0 0.0
    %v5703 = vand.u32 %v289, 4294901760
    %v5704 = vsub.f32 %v289, %v5703
    %v5705 = vand.u32 %v5704, 4294901760
    %v5706 = vsub.f32 %v5704, %v5705
    %v5707 = vand.u32 %v5706, 4294901760
    %5708 = vmatpush1.msra.mxu0 %v5707
    %5709 = vmatprep.subr.mxu0 0.0
    %v5710 = vand.u32 %v288, 4294901760
    %v5711 = vsub.f32 %v288, %v5710
    %v5712 = vand.u32 %v5711, 4294901760
    %v5713 = vsub.f32 %v5711, %v5712
    %v5714 = vand.u32 %v5713, 4294901760
    %5715 = vmatpush1.msra.mxu0 %v5714
    %5716 = vmatprep.subr.mxu0 0.0
    %v5717 = vand.u32 %v287, 4294901760
    %v5718 = vsub.f32 %v287, %v5717
    %v5719 = vand.u32 %v5718, 4294901760
    %v5720 = vsub.f32 %v5718, %v5719
    %v5721 = vand.u32 %v5720, 4294901760
    %5722 = vmatpush1.msra.mxu0 %v5721
    %5723 = vmatprep.subr.mxu0 0.0
    %v5724 = vand.u32 %v286, 4294901760
    %v5725 = vsub.f32 %v286, %v5724
    %v5726 = vand.u32 %v5725, 4294901760
    %v5727 = vsub.f32 %v5725, %v5726
    %v5728 = vand.u32 %v5727, 4294901760
    %5729 = vmatpush1.msra.mxu0 %v5728
    %5730 = vmatprep.subr.mxu0 0.0
    %v5731 = vand.u32 %v285, 4294901760
    %v5732 = vsub.f32 %v285, %v5731
    %v5733 = vand.u32 %v5732, 4294901760
    %v5734 = vsub.f32 %v5732, %v5733
    %v5735 = vand.u32 %v5734, 4294901760
    %5736 = vmatpush1.msra.mxu0 %v5735
    %5737 = vmatprep.subr.mxu0 0.0
    %v5738 = vand.u32 %v284, 4294901760
    %v5739 = vsub.f32 %v284, %v5738
    %v5740 = vand.u32 %v5739, 4294901760
    %v5741 = vsub.f32 %v5739, %v5740
    %v5742 = vand.u32 %v5741, 4294901760
    %5743 = vmatpush1.msra.mxu0 %v5742
    %5744 = vmatprep.subr.mxu0 0.0
    %v5745 = vand.u32 %v315, 4294901760
    %v5746 = vsub.f32 %v315, %v5745
    %v5747 = vand.u32 %v5746, 4294901760
    %v5748 = vsub.f32 %v5746, %v5747
    %v5749 = vand.u32 %v5748, 4294901760
    %5750 = vmatpush2.msra.mxu0 %v5749
    %5751 = vmatprep.subr.mxu0 0.0
    %v5752 = vand.u32 %v314, 4294901760
    %v5753 = vsub.f32 %v314, %v5752
    %v5754 = vand.u32 %v5753, 4294901760
    %v5755 = vsub.f32 %v5753, %v5754
    %v5756 = vand.u32 %v5755, 4294901760
    %5757 = vmatpush2.msra.mxu0 %v5756
    %5758 = vmatprep.subr.mxu0 0.0
    %v5759 = vand.u32 %v313, 4294901760
    %v5760 = vsub.f32 %v313, %v5759
    %v5761 = vand.u32 %v5760, 4294901760
    %v5762 = vsub.f32 %v5760, %v5761
    %v5763 = vand.u32 %v5762, 4294901760
    %5764 = vmatpush2.msra.mxu0 %v5763
    %5765 = vmatprep.subr.mxu0 0.0
    %v5766 = vand.u32 %v312, 4294901760
    %v5767 = vsub.f32 %v312, %v5766
    %v5768 = vand.u32 %v5767, 4294901760
    %v5769 = vsub.f32 %v5767, %v5768
    %v5770 = vand.u32 %v5769, 4294901760
    %5771 = vmatpush2.msra.mxu0 %v5770
    %5772 = vmatprep.subr.mxu0 0.0
    %v5773 = vand.u32 %v311, 4294901760
    %v5774 = vsub.f32 %v311, %v5773
    %v5775 = vand.u32 %v5774, 4294901760
    %v5776 = vsub.f32 %v5774, %v5775
    %v5777 = vand.u32 %v5776, 4294901760
    %5778 = vmatpush2.msra.mxu0 %v5777
    %5779 = vmatprep.subr.mxu0 0.0
    %v5780 = vand.u32 %v310, 4294901760
    %v5781 = vsub.f32 %v310, %v5780
    %v5782 = vand.u32 %v5781, 4294901760
    %v5783 = vsub.f32 %v5781, %v5782
    %v5784 = vand.u32 %v5783, 4294901760
    %5785 = vmatpush2.msra.mxu0 %v5784
    %5786 = vmatprep.subr.mxu0 0.0
    %v5787 = vand.u32 %v309, 4294901760
    %v5788 = vsub.f32 %v309, %v5787
    %v5789 = vand.u32 %v5788, 4294901760
    %v5790 = vsub.f32 %v5788, %v5789
    %v5791 = vand.u32 %v5790, 4294901760
    %5792 = vmatpush2.msra.mxu0 %v5791
    %5793 = vmatprep.subr.mxu0 0.0
    %v5794 = vand.u32 %v308, 4294901760
    %v5795 = vsub.f32 %v308, %v5794
    %v5796 = vand.u32 %v5795, 4294901760
    %v5797 = vsub.f32 %v5795, %v5796
    %v5798 = vand.u32 %v5797, 4294901760
    %5799 = vmatpush2.msra.mxu0 %v5798
    %5800 = vmatprep.subr.mxu0 0.0
    %v5801 = vand.u32 %v307, 4294901760
    %v5802 = vsub.f32 %v307, %v5801
    %v5803 = vand.u32 %v5802, 4294901760
    %v5804 = vsub.f32 %v5802, %v5803
    %v5805 = vand.u32 %v5804, 4294901760
    %5806 = vmatpush2.msra.mxu0 %v5805
    %5807 = vmatprep.subr.mxu0 0.0
    %v5808 = vand.u32 %v306, 4294901760
    %v5809 = vsub.f32 %v306, %v5808
    %v5810 = vand.u32 %v5809, 4294901760
    %v5811 = vsub.f32 %v5809, %v5810
    %v5812 = vand.u32 %v5811, 4294901760
    %5813 = vmatpush2.msra.mxu0 %v5812
    %5814 = vmatprep.subr.mxu0 0.0
    %v5815 = vand.u32 %v305, 4294901760
    %v5816 = vsub.f32 %v305, %v5815
    %v5817 = vand.u32 %v5816, 4294901760
    %v5818 = vsub.f32 %v5816, %v5817
    %v5819 = vand.u32 %v5818, 4294901760
    %5820 = vmatpush2.msra.mxu0 %v5819
    %5821 = vmatprep.subr.mxu0 0.0
    %v5822 = vand.u32 %v304, 4294901760
    %v5823 = vsub.f32 %v304, %v5822
    %v5824 = vand.u32 %v5823, 4294901760
    %v5825 = vsub.f32 %v5823, %v5824
    %v5826 = vand.u32 %v5825, 4294901760
    %5827 = vmatpush2.msra.mxu0 %v5826
    %5828 = vmatprep.subr.mxu0 0.0
    %v5829 = vand.u32 %v303, 4294901760
    %v5830 = vsub.f32 %v303, %v5829
    %v5831 = vand.u32 %v5830, 4294901760
    %v5832 = vsub.f32 %v5830, %v5831
    %v5833 = vand.u32 %v5832, 4294901760
    %5834 = vmatpush2.msra.mxu0 %v5833
    %5835 = vmatprep.subr.mxu0 0.0
    %v5836 = vand.u32 %v302, 4294901760
    %v5837 = vsub.f32 %v302, %v5836
    %v5838 = vand.u32 %v5837, 4294901760
    %v5839 = vsub.f32 %v5837, %v5838
    %v5840 = vand.u32 %v5839, 4294901760
    %5841 = vmatpush2.msra.mxu0 %v5840
    %5842 = vmatprep.subr.mxu0 0.0
    %v5843 = vand.u32 %v301, 4294901760
    %v5844 = vsub.f32 %v301, %v5843
    %v5845 = vand.u32 %v5844, 4294901760
    %v5846 = vsub.f32 %v5844, %v5845
    %v5847 = vand.u32 %v5846, 4294901760
    %5848 = vmatpush2.msra.mxu0 %v5847
    %5849 = vmatprep.subr.mxu0 0.0
    %v5850 = vand.u32 %v300, 4294901760
    %v5851 = vsub.f32 %v300, %v5850
    %v5852 = vand.u32 %v5851, 4294901760
    %v5853 = vsub.f32 %v5851, %v5852
    %v5854 = vand.u32 %v5853, 4294901760
    %5855 = vmatpush2.msra.mxu0 %v5854
    %v5856 = vand.u32 %v89, 4294901760
    %5857 = vmatprep.mubr.f32.mxu0 %v5856
    %v5858 = vand.u32 %v88, 4294901760
    %5859 = vmatmul.mubr.f32.gmra.mxu0 %v5858
    %v5860 = vpop.f32.mrf.mxu0
    %v5861 = vadd.f32 %v5629, %v5860
    %v5862 = vpop.f32.mrf.mxu0
    %5863 = vdwg.mxu0
    %5864 = vmatprep.subr.mxu0 0.0
    %v5865 = vand.u32 %v299, 4294901760
    %v5866 = vsub.f32 %v299, %v5865
    %5867 = vmatpush1.msra.mxu0 %v5866
    %5868 = vmatprep.subr.mxu0 0.0
    %v5869 = vand.u32 %v298, 4294901760
    %v5870 = vsub.f32 %v298, %v5869
    %5871 = vmatpush1.msra.mxu0 %v5870
    %5872 = vmatprep.subr.mxu0 0.0
    %v5873 = vand.u32 %v297, 4294901760
    %v5874 = vsub.f32 %v297, %v5873
    %5875 = vmatpush1.msra.mxu0 %v5874
    %5876 = vmatprep.subr.mxu0 0.0
    %v5877 = vand.u32 %v296, 4294901760
    %v5878 = vsub.f32 %v296, %v5877
    %5879 = vmatpush1.msra.mxu0 %v5878
    %5880 = vmatprep.subr.mxu0 0.0
    %v5881 = vand.u32 %v295, 4294901760
    %v5882 = vsub.f32 %v295, %v5881
    %5883 = vmatpush1.msra.mxu0 %v5882
    %5884 = vmatprep.subr.mxu0 0.0
    %v5885 = vand.u32 %v294, 4294901760
    %v5886 = vsub.f32 %v294, %v5885
    %5887 = vmatpush1.msra.mxu0 %v5886
    %5888 = vmatprep.subr.mxu0 0.0
    %v5889 = vand.u32 %v293, 4294901760
    %v5890 = vsub.f32 %v293, %v5889
    %5891 = vmatpush1.msra.mxu0 %v5890
    %5892 = vmatprep.subr.mxu0 0.0
    %v5893 = vand.u32 %v292, 4294901760
    %v5894 = vsub.f32 %v292, %v5893
    %5895 = vmatpush1.msra.mxu0 %v5894
    %5896 = vmatprep.subr.mxu0 0.0
    %v5897 = vand.u32 %v291, 4294901760
    %v5898 = vsub.f32 %v291, %v5897
    %5899 = vmatpush1.msra.mxu0 %v5898
    %5900 = vmatprep.subr.mxu0 0.0
    %v5901 = vand.u32 %v290, 4294901760
    %v5902 = vsub.f32 %v290, %v5901
    %5903 = vmatpush1.msra.mxu0 %v5902
    %5904 = vmatprep.subr.mxu0 0.0
    %v5905 = vand.u32 %v289, 4294901760
    %v5906 = vsub.f32 %v289, %v5905
    %5907 = vmatpush1.msra.mxu0 %v5906
    %5908 = vmatprep.subr.mxu0 0.0
    %v5909 = vand.u32 %v288, 4294901760
    %v5910 = vsub.f32 %v288, %v5909
    %5911 = vmatpush1.msra.mxu0 %v5910
    %5912 = vmatprep.subr.mxu0 0.0
    %v5913 = vand.u32 %v287, 4294901760
    %v5914 = vsub.f32 %v287, %v5913
    %5915 = vmatpush1.msra.mxu0 %v5914
    %5916 = vmatprep.subr.mxu0 0.0
    %v5917 = vand.u32 %v286, 4294901760
    %v5918 = vsub.f32 %v286, %v5917
    %5919 = vmatpush1.msra.mxu0 %v5918
    %5920 = vmatprep.subr.mxu0 0.0
    %v5921 = vand.u32 %v285, 4294901760
    %v5922 = vsub.f32 %v285, %v5921
    %5923 = vmatpush1.msra.mxu0 %v5922
    %5924 = vmatprep.subr.mxu0 0.0
    %v5925 = vand.u32 %v284, 4294901760
    %v5926 = vsub.f32 %v284, %v5925
    %5927 = vmatpush1.msra.mxu0 %v5926
    %5928 = vmatprep.subr.mxu0 0.0
    %v5929 = vand.u32 %v315, 4294901760
    %v5930 = vsub.f32 %v315, %v5929
    %5931 = vmatpush2.msra.mxu0 %v5930
    %5932 = vmatprep.subr.mxu0 0.0
    %v5933 = vand.u32 %v314, 4294901760
    %v5934 = vsub.f32 %v314, %v5933
    %5935 = vmatpush2.msra.mxu0 %v5934
    %5936 = vmatprep.subr.mxu0 0.0
    %v5937 = vand.u32 %v313, 4294901760
    %v5938 = vsub.f32 %v313, %v5937
    %5939 = vmatpush2.msra.mxu0 %v5938
    %5940 = vmatprep.subr.mxu0 0.0
    %v5941 = vand.u32 %v312, 4294901760
    %v5942 = vsub.f32 %v312, %v5941
    %5943 = vmatpush2.msra.mxu0 %v5942
    %5944 = vmatprep.subr.mxu0 0.0
    %v5945 = vand.u32 %v311, 4294901760
    %v5946 = vsub.f32 %v311, %v5945
    %5947 = vmatpush2.msra.mxu0 %v5946
    %5948 = vmatprep.subr.mxu0 0.0
    %v5949 = vand.u32 %v310, 4294901760
    %v5950 = vsub.f32 %v310, %v5949
    %5951 = vmatpush2.msra.mxu0 %v5950
    %5952 = vmatprep.subr.mxu0 0.0
    %v5953 = vand.u32 %v309, 4294901760
    %v5954 = vsub.f32 %v309, %v5953
    %5955 = vmatpush2.msra.mxu0 %v5954
    %5956 = vmatprep.subr.mxu0 0.0
    %v5957 = vand.u32 %v308, 4294901760
    %v5958 = vsub.f32 %v308, %v5957
    %5959 = vmatpush2.msra.mxu0 %v5958
    %5960 = vmatprep.subr.mxu0 0.0
    %v5961 = vand.u32 %v307, 4294901760
    %v5962 = vsub.f32 %v307, %v5961
    %5963 = vmatpush2.msra.mxu0 %v5962
    %5964 = vmatprep.subr.mxu0 0.0
    %v5965 = vand.u32 %v306, 4294901760
    %v5966 = vsub.f32 %v306, %v5965
    %5967 = vmatpush2.msra.mxu0 %v5966
    %5968 = vmatprep.subr.mxu0 0.0
    %v5969 = vand.u32 %v305, 4294901760
    %v5970 = vsub.f32 %v305, %v5969
    %5971 = vmatpush2.msra.mxu0 %v5970
    %5972 = vmatprep.subr.mxu0 0.0
    %v5973 = vand.u32 %v304, 4294901760
    %v5974 = vsub.f32 %v304, %v5973
    %5975 = vmatpush2.msra.mxu0 %v5974
    %5976 = vmatprep.subr.mxu0 0.0
    %v5977 = vand.u32 %v303, 4294901760
    %v5978 = vsub.f32 %v303, %v5977
    %5979 = vmatpush2.msra.mxu0 %v5978
    %5980 = vmatprep.subr.mxu0 0.0
    %v5981 = vand.u32 %v302, 4294901760
    %v5982 = vsub.f32 %v302, %v5981
    %5983 = vmatpush2.msra.mxu0 %v5982
    %5984 = vmatprep.subr.mxu0 0.0
    %v5985 = vand.u32 %v301, 4294901760
    %v5986 = vsub.f32 %v301, %v5985
    %5987 = vmatpush2.msra.mxu0 %v5986
    %5988 = vmatprep.subr.mxu0 0.0
    %v5989 = vand.u32 %v300, 4294901760
    %v5990 = vsub.f32 %v300, %v5989
    %5991 = vmatpush2.msra.mxu0 %v5990
    %v5992 = vand.u32 %v89, 4294901760
    %v5993 = vsub.f32 %v89, %v5992
    %5994 = vmatprep.mubr.f32.mxu0 %v5993
    %v5995 = vand.u32 %v88, 4294901760
    %v5996 = vsub.f32 %v88, %v5995
    %5997 = vmatmul.mubr.f32.gmra.mxu0 %v5996
    %v5998 = vpop.f32.mrf.mxu0
    %v5999 = vadd.f32 %v5861, %v5998
    %v6000 = vpop.f32.mrf.mxu0
    %6001 = vdwg.mxu0
    %6002 = vmatprep.subr.mxu0 0.0
    %v6003 = vand.u32 %v299, 4294901760
    %6004 = vmatpush1.msra.mxu0 %v6003
    %6005 = vmatprep.subr.mxu0 0.0
    %v6006 = vand.u32 %v298, 4294901760
    %6007 = vmatpush1.msra.mxu0 %v6006
    %6008 = vmatprep.subr.mxu0 0.0
    %v6009 = vand.u32 %v297, 4294901760
    %6010 = vmatpush1.msra.mxu0 %v6009
    %6011 = vmatprep.subr.mxu0 0.0
    %v6012 = vand.u32 %v296, 4294901760
    %6013 = vmatpush1.msra.mxu0 %v6012
    %6014 = vmatprep.subr.mxu0 0.0
    %v6015 = vand.u32 %v295, 4294901760
    %6016 = vmatpush1.msra.mxu0 %v6015
    %6017 = vmatprep.subr.mxu0 0.0
    %v6018 = vand.u32 %v294, 4294901760
    %6019 = vmatpush1.msra.mxu0 %v6018
    %6020 = vmatprep.subr.mxu0 0.0
    %v6021 = vand.u32 %v293, 4294901760
    %6022 = vmatpush1.msra.mxu0 %v6021
    %6023 = vmatprep.subr.mxu0 0.0
    %v6024 = vand.u32 %v292, 4294901760
    %6025 = vmatpush1.msra.mxu0 %v6024
    %6026 = vmatprep.subr.mxu0 0.0
    %v6027 = vand.u32 %v291, 4294901760
    %6028 = vmatpush1.msra.mxu0 %v6027
    %6029 = vmatprep.subr.mxu0 0.0
    %v6030 = vand.u32 %v290, 4294901760
    %6031 = vmatpush1.msra.mxu0 %v6030
    %6032 = vmatprep.subr.mxu0 0.0
    %v6033 = vand.u32 %v289, 4294901760
    %6034 = vmatpush1.msra.mxu0 %v6033
    %6035 = vmatprep.subr.mxu0 0.0
    %v6036 = vand.u32 %v288, 4294901760
    %6037 = vmatpush1.msra.mxu0 %v6036
    %6038 = vmatprep.subr.mxu0 0.0
    %v6039 = vand.u32 %v287, 4294901760
    %6040 = vmatpush1.msra.mxu0 %v6039
    %6041 = vmatprep.subr.mxu0 0.0
    %v6042 = vand.u32 %v286, 4294901760
    %6043 = vmatpush1.msra.mxu0 %v6042
    %6044 = vmatprep.subr.mxu0 0.0
    %v6045 = vand.u32 %v285, 4294901760
    %6046 = vmatpush1.msra.mxu0 %v6045
    %6047 = vmatprep.subr.mxu0 0.0
    %v6048 = vand.u32 %v284, 4294901760
    %6049 = vmatpush1.msra.mxu0 %v6048
    %6050 = vmatprep.subr.mxu0 0.0
    %v6051 = vand.u32 %v315, 4294901760
    %6052 = vmatpush2.msra.mxu0 %v6051
    %6053 = vmatprep.subr.mxu0 0.0
    %v6054 = vand.u32 %v314, 4294901760
    %6055 = vmatpush2.msra.mxu0 %v6054
    %6056 = vmatprep.subr.mxu0 0.0
    %v6057 = vand.u32 %v313, 4294901760
    %6058 = vmatpush2.msra.mxu0 %v6057
    %6059 = vmatprep.subr.mxu0 0.0
    %v6060 = vand.u32 %v312, 4294901760
    %6061 = vmatpush2.msra.mxu0 %v6060
    %6062 = vmatprep.subr.mxu0 0.0
    %v6063 = vand.u32 %v311, 4294901760
    %6064 = vmatpush2.msra.mxu0 %v6063
    %6065 = vmatprep.subr.mxu0 0.0
    %v6066 = vand.u32 %v310, 4294901760
    %6067 = vmatpush2.msra.mxu0 %v6066
    %6068 = vmatprep.subr.mxu0 0.0
    %v6069 = vand.u32 %v309, 4294901760
    %6070 = vmatpush2.msra.mxu0 %v6069
    %6071 = vmatprep.subr.mxu0 0.0
    %v6072 = vand.u32 %v308, 4294901760
    %6073 = vmatpush2.msra.mxu0 %v6072
    %6074 = vmatprep.subr.mxu0 0.0
    %v6075 = vand.u32 %v307, 4294901760
    %6076 = vmatpush2.msra.mxu0 %v6075
    %6077 = vmatprep.subr.mxu0 0.0
    %v6078 = vand.u32 %v306, 4294901760
    %6079 = vmatpush2.msra.mxu0 %v6078
    %6080 = vmatprep.subr.mxu0 0.0
    %v6081 = vand.u32 %v305, 4294901760
    %6082 = vmatpush2.msra.mxu0 %v6081
    %6083 = vmatprep.subr.mxu0 0.0
    %v6084 = vand.u32 %v304, 4294901760
    %6085 = vmatpush2.msra.mxu0 %v6084
    %6086 = vmatprep.subr.mxu0 0.0
    %v6087 = vand.u32 %v303, 4294901760
    %6088 = vmatpush2.msra.mxu0 %v6087
    %6089 = vmatprep.subr.mxu0 0.0
    %v6090 = vand.u32 %v302, 4294901760
    %6091 = vmatpush2.msra.mxu0 %v6090
    %6092 = vmatprep.subr.mxu0 0.0
    %v6093 = vand.u32 %v301, 4294901760
    %6094 = vmatpush2.msra.mxu0 %v6093
    %6095 = vmatprep.subr.mxu0 0.0
    %v6096 = vand.u32 %v300, 4294901760
    %6097 = vmatpush2.msra.mxu0 %v6096
    %v6098 = vand.u32 %v89, 4294901760
    %v6099 = vsub.f32 %v89, %v6098
    %v6100 = vand.u32 %v6099, 4294901760
    %6101 = vmatprep.mubr.f32.mxu0 %v6100
    %v6102 = vand.u32 %v88, 4294901760
    %v6103 = vsub.f32 %v88, %v6102
    %v6104 = vand.u32 %v6103, 4294901760
    %6105 = vmatmul.mubr.f32.gmra.mxu0 %v6104
    %v6106 = vpop.f32.mrf.mxu0
    %v6107 = vadd.f32 %v5999, %v6106
    %v6108 = vpop.f32.mrf.mxu0
    %6109 = vdwg.mxu0
    %6110 = vmatprep.subr.mxu0 0.0
    %v6111 = vand.u32 %v299, 4294901760
    %v6112 = vsub.f32 %v299, %v6111
    %v6113 = vand.u32 %v6112, 4294901760
    %6114 = vmatpush1.msra.mxu0 %v6113
    %6115 = vmatprep.subr.mxu0 0.0
    %v6116 = vand.u32 %v298, 4294901760
    %v6117 = vsub.f32 %v298, %v6116
    %v6118 = vand.u32 %v6117, 4294901760
    %6119 = vmatpush1.msra.mxu0 %v6118
    %6120 = vmatprep.subr.mxu0 0.0
    %v6121 = vand.u32 %v297, 4294901760
    %v6122 = vsub.f32 %v297, %v6121
    %v6123 = vand.u32 %v6122, 4294901760
    %6124 = vmatpush1.msra.mxu0 %v6123
    %6125 = vmatprep.subr.mxu0 0.0
    %v6126 = vand.u32 %v296, 4294901760
    %v6127 = vsub.f32 %v296, %v6126
    %v6128 = vand.u32 %v6127, 4294901760
    %6129 = vmatpush1.msra.mxu0 %v6128
    %6130 = vmatprep.subr.mxu0 0.0
    %v6131 = vand.u32 %v295, 4294901760
    %v6132 = vsub.f32 %v295, %v6131
    %v6133 = vand.u32 %v6132, 4294901760
    %6134 = vmatpush1.msra.mxu0 %v6133
    %6135 = vmatprep.subr.mxu0 0.0
    %v6136 = vand.u32 %v294, 4294901760
    %v6137 = vsub.f32 %v294, %v6136
    %v6138 = vand.u32 %v6137, 4294901760
    %6139 = vmatpush1.msra.mxu0 %v6138
    %6140 = vmatprep.subr.mxu0 0.0
    %v6141 = vand.u32 %v293, 4294901760
    %v6142 = vsub.f32 %v293, %v6141
    %v6143 = vand.u32 %v6142, 4294901760
    %6144 = vmatpush1.msra.mxu0 %v6143
    %6145 = vmatprep.subr.mxu0 0.0
    %v6146 = vand.u32 %v292, 4294901760
    %v6147 = vsub.f32 %v292, %v6146
    %v6148 = vand.u32 %v6147, 4294901760
    %6149 = vmatpush1.msra.mxu0 %v6148
    %6150 = vmatprep.subr.mxu0 0.0
    %v6151 = vand.u32 %v291, 4294901760
    %v6152 = vsub.f32 %v291, %v6151
    %v6153 = vand.u32 %v6152, 4294901760
    %6154 = vmatpush1.msra.mxu0 %v6153
    %6155 = vmatprep.subr.mxu0 0.0
    %v6156 = vand.u32 %v290, 4294901760
    %v6157 = vsub.f32 %v290, %v6156
    %v6158 = vand.u32 %v6157, 4294901760
    %6159 = vmatpush1.msra.mxu0 %v6158
    %6160 = vmatprep.subr.mxu0 0.0
    %v6161 = vand.u32 %v289, 4294901760
    %v6162 = vsub.f32 %v289, %v6161
    %v6163 = vand.u32 %v6162, 4294901760
    %6164 = vmatpush1.msra.mxu0 %v6163
    %6165 = vmatprep.subr.mxu0 0.0
    %v6166 = vand.u32 %v288, 4294901760
    %v6167 = vsub.f32 %v288, %v6166
    %v6168 = vand.u32 %v6167, 4294901760
    %6169 = vmatpush1.msra.mxu0 %v6168
    %6170 = vmatprep.subr.mxu0 0.0
    %v6171 = vand.u32 %v287, 4294901760
    %v6172 = vsub.f32 %v287, %v6171
    %v6173 = vand.u32 %v6172, 4294901760
    %6174 = vmatpush1.msra.mxu0 %v6173
    %6175 = vmatprep.subr.mxu0 0.0
    %v6176 = vand.u32 %v286, 4294901760
    %v6177 = vsub.f32 %v286, %v6176
    %v6178 = vand.u32 %v6177, 4294901760
    %6179 = vmatpush1.msra.mxu0 %v6178
    %6180 = vmatprep.subr.mxu0 0.0
    %v6181 = vand.u32 %v285, 4294901760
    %v6182 = vsub.f32 %v285, %v6181
    %v6183 = vand.u32 %v6182, 4294901760
    %6184 = vmatpush1.msra.mxu0 %v6183
    %6185 = vmatprep.subr.mxu0 0.0
    %v6186 = vand.u32 %v284, 4294901760
    %v6187 = vsub.f32 %v284, %v6186
    %v6188 = vand.u32 %v6187, 4294901760
    %6189 = vmatpush1.msra.mxu0 %v6188
    %6190 = vmatprep.subr.mxu0 0.0
    %v6191 = vand.u32 %v315, 4294901760
    %v6192 = vsub.f32 %v315, %v6191
    %v6193 = vand.u32 %v6192, 4294901760
    %6194 = vmatpush2.msra.mxu0 %v6193
    %6195 = vmatprep.subr.mxu0 0.0
    %v6196 = vand.u32 %v314, 4294901760
    %v6197 = vsub.f32 %v314, %v6196
    %v6198 = vand.u32 %v6197, 4294901760
    %6199 = vmatpush2.msra.mxu0 %v6198
    %6200 = vmatprep.subr.mxu0 0.0
    %v6201 = vand.u32 %v313, 4294901760
    %v6202 = vsub.f32 %v313, %v6201
    %v6203 = vand.u32 %v6202, 4294901760
    %6204 = vmatpush2.msra.mxu0 %v6203
    %6205 = vmatprep.subr.mxu0 0.0
    %v6206 = vand.u32 %v312, 4294901760
    %v6207 = vsub.f32 %v312, %v6206
    %v6208 = vand.u32 %v6207, 4294901760
    %6209 = vmatpush2.msra.mxu0 %v6208
    %6210 = vmatprep.subr.mxu0 0.0
    %v6211 = vand.u32 %v311, 4294901760
    %v6212 = vsub.f32 %v311, %v6211
    %v6213 = vand.u32 %v6212, 4294901760
    %6214 = vmatpush2.msra.mxu0 %v6213
    %6215 = vmatprep.subr.mxu0 0.0
    %v6216 = vand.u32 %v310, 4294901760
    %v6217 = vsub.f32 %v310, %v6216
    %v6218 = vand.u32 %v6217, 4294901760
    %6219 = vmatpush2.msra.mxu0 %v6218
    %6220 = vmatprep.subr.mxu0 0.0
    %v6221 = vand.u32 %v309, 4294901760
    %v6222 = vsub.f32 %v309, %v6221
    %v6223 = vand.u32 %v6222, 4294901760
    %6224 = vmatpush2.msra.mxu0 %v6223
    %6225 = vmatprep.subr.mxu0 0.0
    %v6226 = vand.u32 %v308, 4294901760
    %v6227 = vsub.f32 %v308, %v6226
    %v6228 = vand.u32 %v6227, 4294901760
    %6229 = vmatpush2.msra.mxu0 %v6228
    %6230 = vmatprep.subr.mxu0 0.0
    %v6231 = vand.u32 %v307, 4294901760
    %v6232 = vsub.f32 %v307, %v6231
    %v6233 = vand.u32 %v6232, 4294901760
    %6234 = vmatpush2.msra.mxu0 %v6233
    %6235 = vmatprep.subr.mxu0 0.0
    %v6236 = vand.u32 %v306, 4294901760
    %v6237 = vsub.f32 %v306, %v6236
    %v6238 = vand.u32 %v6237, 4294901760
    %6239 = vmatpush2.msra.mxu0 %v6238
    %6240 = vmatprep.subr.mxu0 0.0
    %v6241 = vand.u32 %v305, 4294901760
    %v6242 = vsub.f32 %v305, %v6241
    %v6243 = vand.u32 %v6242, 4294901760
    %6244 = vmatpush2.msra.mxu0 %v6243
    %6245 = vmatprep.subr.mxu0 0.0
    %v6246 = vand.u32 %v304, 4294901760
    %v6247 = vsub.f32 %v304, %v6246
    %v6248 = vand.u32 %v6247, 4294901760
    %6249 = vmatpush2.msra.mxu0 %v6248
    %6250 = vmatprep.subr.mxu0 0.0
    %v6251 = vand.u32 %v303, 4294901760
    %v6252 = vsub.f32 %v303, %v6251
    %v6253 = vand.u32 %v6252, 4294901760
    %6254 = vmatpush2.msra.mxu0 %v6253
    %6255 = vmatprep.subr.mxu0 0.0
    %v6256 = vand.u32 %v302, 4294901760
    %v6257 = vsub.f32 %v302, %v6256
    %v6258 = vand.u32 %v6257, 4294901760
    %6259 = vmatpush2.msra.mxu0 %v6258
    %6260 = vmatprep.subr.mxu0 0.0
    %v6261 = vand.u32 %v301, 4294901760
    %v6262 = vsub.f32 %v301, %v6261
    %v6263 = vand.u32 %v6262, 4294901760
    %6264 = vmatpush2.msra.mxu0 %v6263
    %6265 = vmatprep.subr.mxu0 0.0
    %v6266 = vand.u32 %v300, 4294901760
    %v6267 = vsub.f32 %v300, %v6266
    %v6268 = vand.u32 %v6267, 4294901760
    %6269 = vmatpush2.msra.mxu0 %v6268
    %v6270 = vand.u32 %v89, 4294901760
    %6271 = vmatprep.mubr.f32.mxu0 %v6270
    %v6272 = vand.u32 %v88, 4294901760
    %6273 = vmatmul.mubr.f32.gmra.mxu0 %v6272
    %v6274 = vpop.f32.mrf.mxu0
    %v6275 = vadd.f32 %v6107, %v6274
    %v6276 = vpop.f32.mrf.mxu0
    %6277 = vdwg.mxu0
    %6278 = vmatprep.subr.mxu0 0.0
    %v6279 = vand.u32 %v299, 4294901760
    %6280 = vmatpush1.msra.mxu0 %v6279
    %6281 = vmatprep.subr.mxu0 0.0
    %v6282 = vand.u32 %v298, 4294901760
    %6283 = vmatpush1.msra.mxu0 %v6282
    %6284 = vmatprep.subr.mxu0 0.0
    %v6285 = vand.u32 %v297, 4294901760
    %6286 = vmatpush1.msra.mxu0 %v6285
    %6287 = vmatprep.subr.mxu0 0.0
    %v6288 = vand.u32 %v296, 4294901760
    %6289 = vmatpush1.msra.mxu0 %v6288
    %6290 = vmatprep.subr.mxu0 0.0
    %v6291 = vand.u32 %v295, 4294901760
    %6292 = vmatpush1.msra.mxu0 %v6291
    %6293 = vmatprep.subr.mxu0 0.0
    %v6294 = vand.u32 %v294, 4294901760
    %6295 = vmatpush1.msra.mxu0 %v6294
    %6296 = vmatprep.subr.mxu0 0.0
    %v6297 = vand.u32 %v293, 4294901760
    %6298 = vmatpush1.msra.mxu0 %v6297
    %6299 = vmatprep.subr.mxu0 0.0
    %v6300 = vand.u32 %v292, 4294901760
    %6301 = vmatpush1.msra.mxu0 %v6300
    %6302 = vmatprep.subr.mxu0 0.0
    %v6303 = vand.u32 %v291, 4294901760
    %6304 = vmatpush1.msra.mxu0 %v6303
    %6305 = vmatprep.subr.mxu0 0.0
    %v6306 = vand.u32 %v290, 4294901760
    %6307 = vmatpush1.msra.mxu0 %v6306
    %6308 = vmatprep.subr.mxu0 0.0
    %v6309 = vand.u32 %v289, 4294901760
    %6310 = vmatpush1.msra.mxu0 %v6309
    %6311 = vmatprep.subr.mxu0 0.0
    %v6312 = vand.u32 %v288, 4294901760
    %6313 = vmatpush1.msra.mxu0 %v6312
    %6314 = vmatprep.subr.mxu0 0.0
    %v6315 = vand.u32 %v287, 4294901760
    %6316 = vmatpush1.msra.mxu0 %v6315
    %6317 = vmatprep.subr.mxu0 0.0
    %v6318 = vand.u32 %v286, 4294901760
    %6319 = vmatpush1.msra.mxu0 %v6318
    %6320 = vmatprep.subr.mxu0 0.0
    %v6321 = vand.u32 %v285, 4294901760
    %6322 = vmatpush1.msra.mxu0 %v6321
    %6323 = vmatprep.subr.mxu0 0.0
    %v6324 = vand.u32 %v284, 4294901760
    %6325 = vmatpush1.msra.mxu0 %v6324
    %6326 = vmatprep.subr.mxu0 0.0
    %v6327 = vand.u32 %v315, 4294901760
    %6328 = vmatpush2.msra.mxu0 %v6327
    %6329 = vmatprep.subr.mxu0 0.0
    %v6330 = vand.u32 %v314, 4294901760
    %6331 = vmatpush2.msra.mxu0 %v6330
    %6332 = vmatprep.subr.mxu0 0.0
    %v6333 = vand.u32 %v313, 4294901760
    %6334 = vmatpush2.msra.mxu0 %v6333
    %6335 = vmatprep.subr.mxu0 0.0
    %v6336 = vand.u32 %v312, 4294901760
    %6337 = vmatpush2.msra.mxu0 %v6336
    %6338 = vmatprep.subr.mxu0 0.0
    %v6339 = vand.u32 %v311, 4294901760
    %6340 = vmatpush2.msra.mxu0 %v6339
    %6341 = vmatprep.subr.mxu0 0.0
    %v6342 = vand.u32 %v310, 4294901760
    %6343 = vmatpush2.msra.mxu0 %v6342
    %6344 = vmatprep.subr.mxu0 0.0
    %v6345 = vand.u32 %v309, 4294901760
    %6346 = vmatpush2.msra.mxu0 %v6345
    %6347 = vmatprep.subr.mxu0 0.0
    %v6348 = vand.u32 %v308, 4294901760
    %6349 = vmatpush2.msra.mxu0 %v6348
    %6350 = vmatprep.subr.mxu0 0.0
    %v6351 = vand.u32 %v307, 4294901760
    %6352 = vmatpush2.msra.mxu0 %v6351
    %6353 = vmatprep.subr.mxu0 0.0
    %v6354 = vand.u32 %v306, 4294901760
    %6355 = vmatpush2.msra.mxu0 %v6354
    %6356 = vmatprep.subr.mxu0 0.0
    %v6357 = vand.u32 %v305, 4294901760
    %6358 = vmatpush2.msra.mxu0 %v6357
    %6359 = vmatprep.subr.mxu0 0.0
    %v6360 = vand.u32 %v304, 4294901760
    %6361 = vmatpush2.msra.mxu0 %v6360
    %6362 = vmatprep.subr.mxu0 0.0
    %v6363 = vand.u32 %v303, 4294901760
    %6364 = vmatpush2.msra.mxu0 %v6363
    %6365 = vmatprep.subr.mxu0 0.0
    %v6366 = vand.u32 %v302, 4294901760
    %6367 = vmatpush2.msra.mxu0 %v6366
    %6368 = vmatprep.subr.mxu0 0.0
    %v6369 = vand.u32 %v301, 4294901760
    %6370 = vmatpush2.msra.mxu0 %v6369
    %6371 = vmatprep.subr.mxu0 0.0
    %v6372 = vand.u32 %v300, 4294901760
    %6373 = vmatpush2.msra.mxu0 %v6372
    %v6374 = vand.u32 %v89, 4294901760
    %6375 = vmatprep.mubr.f32.mxu0 %v6374
    %v6376 = vand.u32 %v88, 4294901760
    %6377 = vmatmul.mubr.f32.gmra.mxu0 %v6376
    %v6378 = vpop.f32.mrf.mxu0
    %v6379 = vadd.f32 %v6275, %v6378
    %v6380 = vpop.f32.mrf.mxu0
    %6381 = vdwg.mxu0
    %6382 = vmatprep.subr.mxu0 0.0
    %v6383 = vand.u32 %v331, 4294901760
    %6384 = vmatpush1.msra.mxu0 %v6383
    %6385 = vmatprep.subr.mxu0 0.0
    %v6386 = vand.u32 %v330, 4294901760
    %6387 = vmatpush1.msra.mxu0 %v6386
    %6388 = vmatprep.subr.mxu0 0.0
    %v6389 = vand.u32 %v329, 4294901760
    %6390 = vmatpush1.msra.mxu0 %v6389
    %6391 = vmatprep.subr.mxu0 0.0
    %v6392 = vand.u32 %v328, 4294901760
    %6393 = vmatpush1.msra.mxu0 %v6392
    %6394 = vmatprep.subr.mxu0 0.0
    %v6395 = vand.u32 %v327, 4294901760
    %6396 = vmatpush1.msra.mxu0 %v6395
    %6397 = vmatprep.subr.mxu0 0.0
    %v6398 = vand.u32 %v326, 4294901760
    %6399 = vmatpush1.msra.mxu0 %v6398
    %6400 = vmatprep.subr.mxu0 0.0
    %v6401 = vand.u32 %v325, 4294901760
    %6402 = vmatpush1.msra.mxu0 %v6401
    %6403 = vmatprep.subr.mxu0 0.0
    %v6404 = vand.u32 %v324, 4294901760
    %6405 = vmatpush1.msra.mxu0 %v6404
    %6406 = vmatprep.subr.mxu0 0.0
    %v6407 = vand.u32 %v323, 4294901760
    %6408 = vmatpush1.msra.mxu0 %v6407
    %6409 = vmatprep.subr.mxu0 0.0
    %v6410 = vand.u32 %v322, 4294901760
    %6411 = vmatpush1.msra.mxu0 %v6410
    %6412 = vmatprep.subr.mxu0 0.0
    %v6413 = vand.u32 %v321, 4294901760
    %6414 = vmatpush1.msra.mxu0 %v6413
    %6415 = vmatprep.subr.mxu0 0.0
    %v6416 = vand.u32 %v320, 4294901760
    %6417 = vmatpush1.msra.mxu0 %v6416
    %6418 = vmatprep.subr.mxu0 0.0
    %v6419 = vand.u32 %v319, 4294901760
    %6420 = vmatpush1.msra.mxu0 %v6419
    %6421 = vmatprep.subr.mxu0 0.0
    %v6422 = vand.u32 %v318, 4294901760
    %6423 = vmatpush1.msra.mxu0 %v6422
    %6424 = vmatprep.subr.mxu0 0.0
    %v6425 = vand.u32 %v317, 4294901760
    %6426 = vmatpush1.msra.mxu0 %v6425
    %6427 = vmatprep.subr.mxu0 0.0
    %v6428 = vand.u32 %v316, 4294901760
    %6429 = vmatpush1.msra.mxu0 %v6428
    %6430 = vmatprep.subr.mxu0 0.0
    %v6431 = vand.u32 %v347, 4294901760
    %6432 = vmatpush2.msra.mxu0 %v6431
    %6433 = vmatprep.subr.mxu0 0.0
    %v6434 = vand.u32 %v346, 4294901760
    %6435 = vmatpush2.msra.mxu0 %v6434
    %6436 = vmatprep.subr.mxu0 0.0
    %v6437 = vand.u32 %v345, 4294901760
    %6438 = vmatpush2.msra.mxu0 %v6437
    %6439 = vmatprep.subr.mxu0 0.0
    %v6440 = vand.u32 %v344, 4294901760
    %6441 = vmatpush2.msra.mxu0 %v6440
    %6442 = vmatprep.subr.mxu0 0.0
    %v6443 = vand.u32 %v343, 4294901760
    %6444 = vmatpush2.msra.mxu0 %v6443
    %6445 = vmatprep.subr.mxu0 0.0
    %v6446 = vand.u32 %v342, 4294901760
    %6447 = vmatpush2.msra.mxu0 %v6446
    %6448 = vmatprep.subr.mxu0 0.0
    %v6449 = vand.u32 %v341, 4294901760
    %6450 = vmatpush2.msra.mxu0 %v6449
    %6451 = vmatprep.subr.mxu0 0.0
    %v6452 = vand.u32 %v340, 4294901760
    %6453 = vmatpush2.msra.mxu0 %v6452
    %6454 = vmatprep.subr.mxu0 0.0
    %v6455 = vand.u32 %v339, 4294901760
    %6456 = vmatpush2.msra.mxu0 %v6455
    %6457 = vmatprep.subr.mxu0 0.0
    %v6458 = vand.u32 %v338, 4294901760
    %6459 = vmatpush2.msra.mxu0 %v6458
    %6460 = vmatprep.subr.mxu0 0.0
    %v6461 = vand.u32 %v337, 4294901760
    %6462 = vmatpush2.msra.mxu0 %v6461
    %6463 = vmatprep.subr.mxu0 0.0
    %v6464 = vand.u32 %v336, 4294901760
    %6465 = vmatpush2.msra.mxu0 %v6464
    %6466 = vmatprep.subr.mxu0 0.0
    %v6467 = vand.u32 %v335, 4294901760
    %6468 = vmatpush2.msra.mxu0 %v6467
    %6469 = vmatprep.subr.mxu0 0.0
    %v6470 = vand.u32 %v334, 4294901760
    %6471 = vmatpush2.msra.mxu0 %v6470
    %6472 = vmatprep.subr.mxu0 0.0
    %v6473 = vand.u32 %v333, 4294901760
    %6474 = vmatpush2.msra.mxu0 %v6473
    %6475 = vmatprep.subr.mxu0 0.0
    %v6476 = vand.u32 %v332, 4294901760
    %6477 = vmatpush2.msra.mxu0 %v6476
    %v6478 = vand.u32 %v91, 4294901760
    %v6479 = vsub.f32 %v91, %v6478
    %v6480 = vand.u32 %v6479, 4294901760
    %v6481 = vsub.f32 %v6479, %v6480
    %v6482 = vand.u32 %v6481, 4294901760
    %6483 = vmatprep.mubr.f32.mxu0 %v6482
    %v6484 = vand.u32 %v90, 4294901760
    %v6485 = vsub.f32 %v90, %v6484
    %v6486 = vand.u32 %v6485, 4294901760
    %v6487 = vsub.f32 %v6485, %v6486
    %v6488 = vand.u32 %v6487, 4294901760
    %6489 = vmatmul.mubr.f32.gmra.mxu0 %v6488
    %v6490 = vpop.f32.mrf.mxu0
    %v6491 = vadd.f32 %v6379, %v6490
    %v6492 = vpop.f32.mrf.mxu0
    %6493 = vdwg.mxu0
    %6494 = vmatprep.subr.mxu0 0.0
    %v6495 = vand.u32 %v331, 4294901760
    %v6496 = vsub.f32 %v331, %v6495
    %v6497 = vand.u32 %v6496, 4294901760
    %v6498 = vsub.f32 %v6496, %v6497
    %v6499 = vand.u32 %v6498, 4294901760
    %6500 = vmatpush1.msra.mxu0 %v6499
    %6501 = vmatprep.subr.mxu0 0.0
    %v6502 = vand.u32 %v330, 4294901760
    %v6503 = vsub.f32 %v330, %v6502
    %v6504 = vand.u32 %v6503, 4294901760
    %v6505 = vsub.f32 %v6503, %v6504
    %v6506 = vand.u32 %v6505, 4294901760
    %6507 = vmatpush1.msra.mxu0 %v6506
    %6508 = vmatprep.subr.mxu0 0.0
    %v6509 = vand.u32 %v329, 4294901760
    %v6510 = vsub.f32 %v329, %v6509
    %v6511 = vand.u32 %v6510, 4294901760
    %v6512 = vsub.f32 %v6510, %v6511
    %v6513 = vand.u32 %v6512, 4294901760
    %6514 = vmatpush1.msra.mxu0 %v6513
    %6515 = vmatprep.subr.mxu0 0.0
    %v6516 = vand.u32 %v328, 4294901760
    %v6517 = vsub.f32 %v328, %v6516
    %v6518 = vand.u32 %v6517, 4294901760
    %v6519 = vsub.f32 %v6517, %v6518
    %v6520 = vand.u32 %v6519, 4294901760
    %6521 = vmatpush1.msra.mxu0 %v6520
    %6522 = vmatprep.subr.mxu0 0.0
    %v6523 = vand.u32 %v327, 4294901760
    %v6524 = vsub.f32 %v327, %v6523
    %v6525 = vand.u32 %v6524, 4294901760
    %v6526 = vsub.f32 %v6524, %v6525
    %v6527 = vand.u32 %v6526, 4294901760
    %6528 = vmatpush1.msra.mxu0 %v6527
    %6529 = vmatprep.subr.mxu0 0.0
    %v6530 = vand.u32 %v326, 4294901760
    %v6531 = vsub.f32 %v326, %v6530
    %v6532 = vand.u32 %v6531, 4294901760
    %v6533 = vsub.f32 %v6531, %v6532
    %v6534 = vand.u32 %v6533, 4294901760
    %6535 = vmatpush1.msra.mxu0 %v6534
    %6536 = vmatprep.subr.mxu0 0.0
    %v6537 = vand.u32 %v325, 4294901760
    %v6538 = vsub.f32 %v325, %v6537
    %v6539 = vand.u32 %v6538, 4294901760
    %v6540 = vsub.f32 %v6538, %v6539
    %v6541 = vand.u32 %v6540, 4294901760
    %6542 = vmatpush1.msra.mxu0 %v6541
    %6543 = vmatprep.subr.mxu0 0.0
    %v6544 = vand.u32 %v324, 4294901760
    %v6545 = vsub.f32 %v324, %v6544
    %v6546 = vand.u32 %v6545, 4294901760
    %v6547 = vsub.f32 %v6545, %v6546
    %v6548 = vand.u32 %v6547, 4294901760
    %6549 = vmatpush1.msra.mxu0 %v6548
    %6550 = vmatprep.subr.mxu0 0.0
    %v6551 = vand.u32 %v323, 4294901760
    %v6552 = vsub.f32 %v323, %v6551
    %v6553 = vand.u32 %v6552, 4294901760
    %v6554 = vsub.f32 %v6552, %v6553
    %v6555 = vand.u32 %v6554, 4294901760
    %6556 = vmatpush1.msra.mxu0 %v6555
    %6557 = vmatprep.subr.mxu0 0.0
    %v6558 = vand.u32 %v322, 4294901760
    %v6559 = vsub.f32 %v322, %v6558
    %v6560 = vand.u32 %v6559, 4294901760
    %v6561 = vsub.f32 %v6559, %v6560
    %v6562 = vand.u32 %v6561, 4294901760
    %6563 = vmatpush1.msra.mxu0 %v6562
    %6564 = vmatprep.subr.mxu0 0.0
    %v6565 = vand.u32 %v321, 4294901760
    %v6566 = vsub.f32 %v321, %v6565
    %v6567 = vand.u32 %v6566, 4294901760
    %v6568 = vsub.f32 %v6566, %v6567
    %v6569 = vand.u32 %v6568, 4294901760
    %6570 = vmatpush1.msra.mxu0 %v6569
    %6571 = vmatprep.subr.mxu0 0.0
    %v6572 = vand.u32 %v320, 4294901760
    %v6573 = vsub.f32 %v320, %v6572
    %v6574 = vand.u32 %v6573, 4294901760
    %v6575 = vsub.f32 %v6573, %v6574
    %v6576 = vand.u32 %v6575, 4294901760
    %6577 = vmatpush1.msra.mxu0 %v6576
    %6578 = vmatprep.subr.mxu0 0.0
    %v6579 = vand.u32 %v319, 4294901760
    %v6580 = vsub.f32 %v319, %v6579
    %v6581 = vand.u32 %v6580, 4294901760
    %v6582 = vsub.f32 %v6580, %v6581
    %v6583 = vand.u32 %v6582, 4294901760
    %6584 = vmatpush1.msra.mxu0 %v6583
    %6585 = vmatprep.subr.mxu0 0.0
    %v6586 = vand.u32 %v318, 4294901760
    %v6587 = vsub.f32 %v318, %v6586
    %v6588 = vand.u32 %v6587, 4294901760
    %v6589 = vsub.f32 %v6587, %v6588
    %v6590 = vand.u32 %v6589, 4294901760
    %6591 = vmatpush1.msra.mxu0 %v6590
    %6592 = vmatprep.subr.mxu0 0.0
    %v6593 = vand.u32 %v317, 4294901760
    %v6594 = vsub.f32 %v317, %v6593
    %v6595 = vand.u32 %v6594, 4294901760
    %v6596 = vsub.f32 %v6594, %v6595
    %v6597 = vand.u32 %v6596, 4294901760
    %6598 = vmatpush1.msra.mxu0 %v6597
    %6599 = vmatprep.subr.mxu0 0.0
    %v6600 = vand.u32 %v316, 4294901760
    %v6601 = vsub.f32 %v316, %v6600
    %v6602 = vand.u32 %v6601, 4294901760
    %v6603 = vsub.f32 %v6601, %v6602
    %v6604 = vand.u32 %v6603, 4294901760
    %6605 = vmatpush1.msra.mxu0 %v6604
    %6606 = vmatprep.subr.mxu0 0.0
    %v6607 = vand.u32 %v347, 4294901760
    %v6608 = vsub.f32 %v347, %v6607
    %v6609 = vand.u32 %v6608, 4294901760
    %v6610 = vsub.f32 %v6608, %v6609
    %v6611 = vand.u32 %v6610, 4294901760
    %6612 = vmatpush2.msra.mxu0 %v6611
    %6613 = vmatprep.subr.mxu0 0.0
    %v6614 = vand.u32 %v346, 4294901760
    %v6615 = vsub.f32 %v346, %v6614
    %v6616 = vand.u32 %v6615, 4294901760
    %v6617 = vsub.f32 %v6615, %v6616
    %v6618 = vand.u32 %v6617, 4294901760
    %6619 = vmatpush2.msra.mxu0 %v6618
    %6620 = vmatprep.subr.mxu0 0.0
    %v6621 = vand.u32 %v345, 4294901760
    %v6622 = vsub.f32 %v345, %v6621
    %v6623 = vand.u32 %v6622, 4294901760
    %v6624 = vsub.f32 %v6622, %v6623
    %v6625 = vand.u32 %v6624, 4294901760
    %6626 = vmatpush2.msra.mxu0 %v6625
    %6627 = vmatprep.subr.mxu0 0.0
    %v6628 = vand.u32 %v344, 4294901760
    %v6629 = vsub.f32 %v344, %v6628
    %v6630 = vand.u32 %v6629, 4294901760
    %v6631 = vsub.f32 %v6629, %v6630
    %v6632 = vand.u32 %v6631, 4294901760
    %6633 = vmatpush2.msra.mxu0 %v6632
    %6634 = vmatprep.subr.mxu0 0.0
    %v6635 = vand.u32 %v343, 4294901760
    %v6636 = vsub.f32 %v343, %v6635
    %v6637 = vand.u32 %v6636, 4294901760
    %v6638 = vsub.f32 %v6636, %v6637
    %v6639 = vand.u32 %v6638, 4294901760
    %6640 = vmatpush2.msra.mxu0 %v6639
    %6641 = vmatprep.subr.mxu0 0.0
    %v6642 = vand.u32 %v342, 4294901760
    %v6643 = vsub.f32 %v342, %v6642
    %v6644 = vand.u32 %v6643, 4294901760
    %v6645 = vsub.f32 %v6643, %v6644
    %v6646 = vand.u32 %v6645, 4294901760
    %6647 = vmatpush2.msra.mxu0 %v6646
    %6648 = vmatprep.subr.mxu0 0.0
    %v6649 = vand.u32 %v341, 4294901760
    %v6650 = vsub.f32 %v341, %v6649
    %v6651 = vand.u32 %v6650, 4294901760
    %v6652 = vsub.f32 %v6650, %v6651
    %v6653 = vand.u32 %v6652, 4294901760
    %6654 = vmatpush2.msra.mxu0 %v6653
    %6655 = vmatprep.subr.mxu0 0.0
    %v6656 = vand.u32 %v340, 4294901760
    %v6657 = vsub.f32 %v340, %v6656
    %v6658 = vand.u32 %v6657, 4294901760
    %v6659 = vsub.f32 %v6657, %v6658
    %v6660 = vand.u32 %v6659, 4294901760
    %6661 = vmatpush2.msra.mxu0 %v6660
    %6662 = vmatprep.subr.mxu0 0.0
    %v6663 = vand.u32 %v339, 4294901760
    %v6664 = vsub.f32 %v339, %v6663
    %v6665 = vand.u32 %v6664, 4294901760
    %v6666 = vsub.f32 %v6664, %v6665
    %v6667 = vand.u32 %v6666, 4294901760
    %6668 = vmatpush2.msra.mxu0 %v6667
    %6669 = vmatprep.subr.mxu0 0.0
    %v6670 = vand.u32 %v338, 4294901760
    %v6671 = vsub.f32 %v338, %v6670
    %v6672 = vand.u32 %v6671, 4294901760
    %v6673 = vsub.f32 %v6671, %v6672
    %v6674 = vand.u32 %v6673, 4294901760
    %6675 = vmatpush2.msra.mxu0 %v6674
    %6676 = vmatprep.subr.mxu0 0.0
    %v6677 = vand.u32 %v337, 4294901760
    %v6678 = vsub.f32 %v337, %v6677
    %v6679 = vand.u32 %v6678, 4294901760
    %v6680 = vsub.f32 %v6678, %v6679
    %v6681 = vand.u32 %v6680, 4294901760
    %6682 = vmatpush2.msra.mxu0 %v6681
    %6683 = vmatprep.subr.mxu0 0.0
    %v6684 = vand.u32 %v336, 4294901760
    %v6685 = vsub.f32 %v336, %v6684
    %v6686 = vand.u32 %v6685, 4294901760
    %v6687 = vsub.f32 %v6685, %v6686
    %v6688 = vand.u32 %v6687, 4294901760
    %6689 = vmatpush2.msra.mxu0 %v6688
    %6690 = vmatprep.subr.mxu0 0.0
    %v6691 = vand.u32 %v335, 4294901760
    %v6692 = vsub.f32 %v335, %v6691
    %v6693 = vand.u32 %v6692, 4294901760
    %v6694 = vsub.f32 %v6692, %v6693
    %v6695 = vand.u32 %v6694, 4294901760
    %6696 = vmatpush2.msra.mxu0 %v6695
    %6697 = vmatprep.subr.mxu0 0.0
    %v6698 = vand.u32 %v334, 4294901760
    %v6699 = vsub.f32 %v334, %v6698
    %v6700 = vand.u32 %v6699, 4294901760
    %v6701 = vsub.f32 %v6699, %v6700
    %v6702 = vand.u32 %v6701, 4294901760
    %6703 = vmatpush2.msra.mxu0 %v6702
    %6704 = vmatprep.subr.mxu0 0.0
    %v6705 = vand.u32 %v333, 4294901760
    %v6706 = vsub.f32 %v333, %v6705
    %v6707 = vand.u32 %v6706, 4294901760
    %v6708 = vsub.f32 %v6706, %v6707
    %v6709 = vand.u32 %v6708, 4294901760
    %6710 = vmatpush2.msra.mxu0 %v6709
    %6711 = vmatprep.subr.mxu0 0.0
    %v6712 = vand.u32 %v332, 4294901760
    %v6713 = vsub.f32 %v332, %v6712
    %v6714 = vand.u32 %v6713, 4294901760
    %v6715 = vsub.f32 %v6713, %v6714
    %v6716 = vand.u32 %v6715, 4294901760
    %6717 = vmatpush2.msra.mxu0 %v6716
    %v6718 = vand.u32 %v91, 4294901760
    %6719 = vmatprep.mubr.f32.mxu0 %v6718
    %v6720 = vand.u32 %v90, 4294901760
    %6721 = vmatmul.mubr.f32.gmra.mxu0 %v6720
    %v6722 = vpop.f32.mrf.mxu0
    %v6723 = vadd.f32 %v6491, %v6722
    %v6724 = vpop.f32.mrf.mxu0
    %6725 = vdwg.mxu0
    %6726 = vmatprep.subr.mxu0 0.0
    %v6727 = vand.u32 %v331, 4294901760
    %v6728 = vsub.f32 %v331, %v6727
    %6729 = vmatpush1.msra.mxu0 %v6728
    %6730 = vmatprep.subr.mxu0 0.0
    %v6731 = vand.u32 %v330, 4294901760
    %v6732 = vsub.f32 %v330, %v6731
    %6733 = vmatpush1.msra.mxu0 %v6732
    %6734 = vmatprep.subr.mxu0 0.0
    %v6735 = vand.u32 %v329, 4294901760
    %v6736 = vsub.f32 %v329, %v6735
    %6737 = vmatpush1.msra.mxu0 %v6736
    %6738 = vmatprep.subr.mxu0 0.0
    %v6739 = vand.u32 %v328, 4294901760
    %v6740 = vsub.f32 %v328, %v6739
    %6741 = vmatpush1.msra.mxu0 %v6740
    %6742 = vmatprep.subr.mxu0 0.0
    %v6743 = vand.u32 %v327, 4294901760
    %v6744 = vsub.f32 %v327, %v6743
    %6745 = vmatpush1.msra.mxu0 %v6744
    %6746 = vmatprep.subr.mxu0 0.0
    %v6747 = vand.u32 %v326, 4294901760
    %v6748 = vsub.f32 %v326, %v6747
    %6749 = vmatpush1.msra.mxu0 %v6748
    %6750 = vmatprep.subr.mxu0 0.0
    %v6751 = vand.u32 %v325, 4294901760
    %v6752 = vsub.f32 %v325, %v6751
    %6753 = vmatpush1.msra.mxu0 %v6752
    %6754 = vmatprep.subr.mxu0 0.0
    %v6755 = vand.u32 %v324, 4294901760
    %v6756 = vsub.f32 %v324, %v6755
    %6757 = vmatpush1.msra.mxu0 %v6756
    %6758 = vmatprep.subr.mxu0 0.0
    %v6759 = vand.u32 %v323, 4294901760
    %v6760 = vsub.f32 %v323, %v6759
    %6761 = vmatpush1.msra.mxu0 %v6760
    %6762 = vmatprep.subr.mxu0 0.0
    %v6763 = vand.u32 %v322, 4294901760
    %v6764 = vsub.f32 %v322, %v6763
    %6765 = vmatpush1.msra.mxu0 %v6764
    %6766 = vmatprep.subr.mxu0 0.0
    %v6767 = vand.u32 %v321, 4294901760
    %v6768 = vsub.f32 %v321, %v6767
    %6769 = vmatpush1.msra.mxu0 %v6768
    %6770 = vmatprep.subr.mxu0 0.0
    %v6771 = vand.u32 %v320, 4294901760
    %v6772 = vsub.f32 %v320, %v6771
    %6773 = vmatpush1.msra.mxu0 %v6772
    %6774 = vmatprep.subr.mxu0 0.0
    %v6775 = vand.u32 %v319, 4294901760
    %v6776 = vsub.f32 %v319, %v6775
    %6777 = vmatpush1.msra.mxu0 %v6776
    %6778 = vmatprep.subr.mxu0 0.0
    %v6779 = vand.u32 %v318, 4294901760
    %v6780 = vsub.f32 %v318, %v6779
    %6781 = vmatpush1.msra.mxu0 %v6780
    %6782 = vmatprep.subr.mxu0 0.0
    %v6783 = vand.u32 %v317, 4294901760
    %v6784 = vsub.f32 %v317, %v6783
    %6785 = vmatpush1.msra.mxu0 %v6784
    %6786 = vmatprep.subr.mxu0 0.0
    %v6787 = vand.u32 %v316, 4294901760
    %v6788 = vsub.f32 %v316, %v6787
    %6789 = vmatpush1.msra.mxu0 %v6788
    %6790 = vmatprep.subr.mxu0 0.0
    %v6791 = vand.u32 %v347, 4294901760
    %v6792 = vsub.f32 %v347, %v6791
    %6793 = vmatpush2.msra.mxu0 %v6792
    %6794 = vmatprep.subr.mxu0 0.0
    %v6795 = vand.u32 %v346, 4294901760
    %v6796 = vsub.f32 %v346, %v6795
    %6797 = vmatpush2.msra.mxu0 %v6796
    %6798 = vmatprep.subr.mxu0 0.0
    %v6799 = vand.u32 %v345, 4294901760
    %v6800 = vsub.f32 %v345, %v6799
    %6801 = vmatpush2.msra.mxu0 %v6800
    %6802 = vmatprep.subr.mxu0 0.0
    %v6803 = vand.u32 %v344, 4294901760
    %v6804 = vsub.f32 %v344, %v6803
    %6805 = vmatpush2.msra.mxu0 %v6804
    %6806 = vmatprep.subr.mxu0 0.0
    %v6807 = vand.u32 %v343, 4294901760
    %v6808 = vsub.f32 %v343, %v6807
    %6809 = vmatpush2.msra.mxu0 %v6808
    %6810 = vmatprep.subr.mxu0 0.0
    %v6811 = vand.u32 %v342, 4294901760
    %v6812 = vsub.f32 %v342, %v6811
    %6813 = vmatpush2.msra.mxu0 %v6812
    %6814 = vmatprep.subr.mxu0 0.0
    %v6815 = vand.u32 %v341, 4294901760
    %v6816 = vsub.f32 %v341, %v6815
    %6817 = vmatpush2.msra.mxu0 %v6816
    %6818 = vmatprep.subr.mxu0 0.0
    %v6819 = vand.u32 %v340, 4294901760
    %v6820 = vsub.f32 %v340, %v6819
    %6821 = vmatpush2.msra.mxu0 %v6820
    %6822 = vmatprep.subr.mxu0 0.0
    %v6823 = vand.u32 %v339, 4294901760
    %v6824 = vsub.f32 %v339, %v6823
    %6825 = vmatpush2.msra.mxu0 %v6824
    %6826 = vmatprep.subr.mxu0 0.0
    %v6827 = vand.u32 %v338, 4294901760
    %v6828 = vsub.f32 %v338, %v6827
    %6829 = vmatpush2.msra.mxu0 %v6828
    %6830 = vmatprep.subr.mxu0 0.0
    %v6831 = vand.u32 %v337, 4294901760
    %v6832 = vsub.f32 %v337, %v6831
    %6833 = vmatpush2.msra.mxu0 %v6832
    %6834 = vmatprep.subr.mxu0 0.0
    %v6835 = vand.u32 %v336, 4294901760
    %v6836 = vsub.f32 %v336, %v6835
    %6837 = vmatpush2.msra.mxu0 %v6836
    %6838 = vmatprep.subr.mxu0 0.0
    %v6839 = vand.u32 %v335, 4294901760
    %v6840 = vsub.f32 %v335, %v6839
    %6841 = vmatpush2.msra.mxu0 %v6840
    %6842 = vmatprep.subr.mxu0 0.0
    %v6843 = vand.u32 %v334, 4294901760
    %v6844 = vsub.f32 %v334, %v6843
    %6845 = vmatpush2.msra.mxu0 %v6844
    %6846 = vmatprep.subr.mxu0 0.0
    %v6847 = vand.u32 %v333, 4294901760
    %v6848 = vsub.f32 %v333, %v6847
    %6849 = vmatpush2.msra.mxu0 %v6848
    %6850 = vmatprep.subr.mxu0 0.0
    %v6851 = vand.u32 %v332, 4294901760
    %v6852 = vsub.f32 %v332, %v6851
    %6853 = vmatpush2.msra.mxu0 %v6852
    %v6854 = vand.u32 %v91, 4294901760
    %v6855 = vsub.f32 %v91, %v6854
    %6856 = vmatprep.mubr.f32.mxu0 %v6855
    %v6857 = vand.u32 %v90, 4294901760
    %v6858 = vsub.f32 %v90, %v6857
    %6859 = vmatmul.mubr.f32.gmra.mxu0 %v6858
    %v6860 = vpop.f32.mrf.mxu0
    %v6861 = vadd.f32 %v6723, %v6860
    %v6862 = vpop.f32.mrf.mxu0
    %6863 = vdwg.mxu0
    %6864 = vmatprep.subr.mxu0 0.0
    %v6865 = vand.u32 %v331, 4294901760
    %6866 = vmatpush1.msra.mxu0 %v6865
    %6867 = vmatprep.subr.mxu0 0.0
    %v6868 = vand.u32 %v330, 4294901760
    %6869 = vmatpush1.msra.mxu0 %v6868
    %6870 = vmatprep.subr.mxu0 0.0
    %v6871 = vand.u32 %v329, 4294901760
    %6872 = vmatpush1.msra.mxu0 %v6871
    %6873 = vmatprep.subr.mxu0 0.0
    %v6874 = vand.u32 %v328, 4294901760
    %6875 = vmatpush1.msra.mxu0 %v6874
    %6876 = vmatprep.subr.mxu0 0.0
    %v6877 = vand.u32 %v327, 4294901760
    %6878 = vmatpush1.msra.mxu0 %v6877
    %6879 = vmatprep.subr.mxu0 0.0
    %v6880 = vand.u32 %v326, 4294901760
    %6881 = vmatpush1.msra.mxu0 %v6880
    %6882 = vmatprep.subr.mxu0 0.0
    %v6883 = vand.u32 %v325, 4294901760
    %6884 = vmatpush1.msra.mxu0 %v6883
    %6885 = vmatprep.subr.mxu0 0.0
    %v6886 = vand.u32 %v324, 4294901760
    %6887 = vmatpush1.msra.mxu0 %v6886
    %6888 = vmatprep.subr.mxu0 0.0
    %v6889 = vand.u32 %v323, 4294901760
    %6890 = vmatpush1.msra.mxu0 %v6889
    %6891 = vmatprep.subr.mxu0 0.0
    %v6892 = vand.u32 %v322, 4294901760
    %6893 = vmatpush1.msra.mxu0 %v6892
    %6894 = vmatprep.subr.mxu0 0.0
    %v6895 = vand.u32 %v321, 4294901760
    %6896 = vmatpush1.msra.mxu0 %v6895
    %6897 = vmatprep.subr.mxu0 0.0
    %v6898 = vand.u32 %v320, 4294901760
    %6899 = vmatpush1.msra.mxu0 %v6898
    %6900 = vmatprep.subr.mxu0 0.0
    %v6901 = vand.u32 %v319, 4294901760
    %6902 = vmatpush1.msra.mxu0 %v6901
    %6903 = vmatprep.subr.mxu0 0.0
    %v6904 = vand.u32 %v318, 4294901760
    %6905 = vmatpush1.msra.mxu0 %v6904
    %6906 = vmatprep.subr.mxu0 0.0
    %v6907 = vand.u32 %v317, 4294901760
    %6908 = vmatpush1.msra.mxu0 %v6907
    %6909 = vmatprep.subr.mxu0 0.0
    %v6910 = vand.u32 %v316, 4294901760
    %6911 = vmatpush1.msra.mxu0 %v6910
    %6912 = vmatprep.subr.mxu0 0.0
    %v6913 = vand.u32 %v347, 4294901760
    %6914 = vmatpush2.msra.mxu0 %v6913
    %6915 = vmatprep.subr.mxu0 0.0
    %v6916 = vand.u32 %v346, 4294901760
    %6917 = vmatpush2.msra.mxu0 %v6916
    %6918 = vmatprep.subr.mxu0 0.0
    %v6919 = vand.u32 %v345, 4294901760
    %6920 = vmatpush2.msra.mxu0 %v6919
    %6921 = vmatprep.subr.mxu0 0.0
    %v6922 = vand.u32 %v344, 4294901760
    %6923 = vmatpush2.msra.mxu0 %v6922
    %6924 = vmatprep.subr.mxu0 0.0
    %v6925 = vand.u32 %v343, 4294901760
    %6926 = vmatpush2.msra.mxu0 %v6925
    %6927 = vmatprep.subr.mxu0 0.0
    %v6928 = vand.u32 %v342, 4294901760
    %6929 = vmatpush2.msra.mxu0 %v6928
    %6930 = vmatprep.subr.mxu0 0.0
    %v6931 = vand.u32 %v341, 4294901760
    %6932 = vmatpush2.msra.mxu0 %v6931
    %6933 = vmatprep.subr.mxu0 0.0
    %v6934 = vand.u32 %v340, 4294901760
    %6935 = vmatpush2.msra.mxu0 %v6934
    %6936 = vmatprep.subr.mxu0 0.0
    %v6937 = vand.u32 %v339, 4294901760
    %6938 = vmatpush2.msra.mxu0 %v6937
    %6939 = vmatprep.subr.mxu0 0.0
    %v6940 = vand.u32 %v338, 4294901760
    %6941 = vmatpush2.msra.mxu0 %v6940
    %6942 = vmatprep.subr.mxu0 0.0
    %v6943 = vand.u32 %v337, 4294901760
    %6944 = vmatpush2.msra.mxu0 %v6943
    %6945 = vmatprep.subr.mxu0 0.0
    %v6946 = vand.u32 %v336, 4294901760
    %6947 = vmatpush2.msra.mxu0 %v6946
    %6948 = vmatprep.subr.mxu0 0.0
    %v6949 = vand.u32 %v335, 4294901760
    %6950 = vmatpush2.msra.mxu0 %v6949
    %6951 = vmatprep.subr.mxu0 0.0
    %v6952 = vand.u32 %v334, 4294901760
    %6953 = vmatpush2.msra.mxu0 %v6952
    %6954 = vmatprep.subr.mxu0 0.0
    %v6955 = vand.u32 %v333, 4294901760
    %6956 = vmatpush2.msra.mxu0 %v6955
    %6957 = vmatprep.subr.mxu0 0.0
    %v6958 = vand.u32 %v332, 4294901760
    %6959 = vmatpush2.msra.mxu0 %v6958
    %v6960 = vand.u32 %v91, 4294901760
    %v6961 = vsub.f32 %v91, %v6960
    %v6962 = vand.u32 %v6961, 4294901760
    %6963 = vmatprep.mubr.f32.mxu0 %v6962
    %v6964 = vand.u32 %v90, 4294901760
    %v6965 = vsub.f32 %v90, %v6964
    %v6966 = vand.u32 %v6965, 4294901760
    %6967 = vmatmul.mubr.f32.gmra.mxu0 %v6966
    %v6968 = vpop.f32.mrf.mxu0
    %v6969 = vadd.f32 %v6861, %v6968
    %v6970 = vpop.f32.mrf.mxu0
    %6971 = vdwg.mxu0
    %6972 = vmatprep.subr.mxu0 0.0
    %v6973 = vand.u32 %v331, 4294901760
    %v6974 = vsub.f32 %v331, %v6973
    %v6975 = vand.u32 %v6974, 4294901760
    %6976 = vmatpush1.msra.mxu0 %v6975
    %6977 = vmatprep.subr.mxu0 0.0
    %v6978 = vand.u32 %v330, 4294901760
    %v6979 = vsub.f32 %v330, %v6978
    %v6980 = vand.u32 %v6979, 4294901760
    %6981 = vmatpush1.msra.mxu0 %v6980
    %6982 = vmatprep.subr.mxu0 0.0
    %v6983 = vand.u32 %v329, 4294901760
    %v6984 = vsub.f32 %v329, %v6983
    %v6985 = vand.u32 %v6984, 4294901760
    %6986 = vmatpush1.msra.mxu0 %v6985
    %6987 = vmatprep.subr.mxu0 0.0
    %v6988 = vand.u32 %v328, 4294901760
    %v6989 = vsub.f32 %v328, %v6988
    %v6990 = vand.u32 %v6989, 4294901760
    %6991 = vmatpush1.msra.mxu0 %v6990
    %6992 = vmatprep.subr.mxu0 0.0
    %v6993 = vand.u32 %v327, 4294901760
    %v6994 = vsub.f32 %v327, %v6993
    %v6995 = vand.u32 %v6994, 4294901760
    %6996 = vmatpush1.msra.mxu0 %v6995
    %6997 = vmatprep.subr.mxu0 0.0
    %v6998 = vand.u32 %v326, 4294901760
    %v6999 = vsub.f32 %v326, %v6998
    %v7000 = vand.u32 %v6999, 4294901760
    %7001 = vmatpush1.msra.mxu0 %v7000
    %7002 = vmatprep.subr.mxu0 0.0
    %v7003 = vand.u32 %v325, 4294901760
    %v7004 = vsub.f32 %v325, %v7003
    %v7005 = vand.u32 %v7004, 4294901760
    %7006 = vmatpush1.msra.mxu0 %v7005
    %7007 = vmatprep.subr.mxu0 0.0
    %v7008 = vand.u32 %v324, 4294901760
    %v7009 = vsub.f32 %v324, %v7008
    %v7010 = vand.u32 %v7009, 4294901760
    %7011 = vmatpush1.msra.mxu0 %v7010
    %7012 = vmatprep.subr.mxu0 0.0
    %v7013 = vand.u32 %v323, 4294901760
    %v7014 = vsub.f32 %v323, %v7013
    %v7015 = vand.u32 %v7014, 4294901760
    %7016 = vmatpush1.msra.mxu0 %v7015
    %7017 = vmatprep.subr.mxu0 0.0
    %v7018 = vand.u32 %v322, 4294901760
    %v7019 = vsub.f32 %v322, %v7018
    %v7020 = vand.u32 %v7019, 4294901760
    %7021 = vmatpush1.msra.mxu0 %v7020
    %7022 = vmatprep.subr.mxu0 0.0
    %v7023 = vand.u32 %v321, 4294901760
    %v7024 = vsub.f32 %v321, %v7023
    %v7025 = vand.u32 %v7024, 4294901760
    %7026 = vmatpush1.msra.mxu0 %v7025
    %7027 = vmatprep.subr.mxu0 0.0
    %v7028 = vand.u32 %v320, 4294901760
    %v7029 = vsub.f32 %v320, %v7028
    %v7030 = vand.u32 %v7029, 4294901760
    %7031 = vmatpush1.msra.mxu0 %v7030
    %7032 = vmatprep.subr.mxu0 0.0
    %v7033 = vand.u32 %v319, 4294901760
    %v7034 = vsub.f32 %v319, %v7033
    %v7035 = vand.u32 %v7034, 4294901760
    %7036 = vmatpush1.msra.mxu0 %v7035
    %7037 = vmatprep.subr.mxu0 0.0
    %v7038 = vand.u32 %v318, 4294901760
    %v7039 = vsub.f32 %v318, %v7038
    %v7040 = vand.u32 %v7039, 4294901760
    %7041 = vmatpush1.msra.mxu0 %v7040
    %7042 = vmatprep.subr.mxu0 0.0
    %v7043 = vand.u32 %v317, 4294901760
    %v7044 = vsub.f32 %v317, %v7043
    %v7045 = vand.u32 %v7044, 4294901760
    %7046 = vmatpush1.msra.mxu0 %v7045
    %7047 = vmatprep.subr.mxu0 0.0
    %v7048 = vand.u32 %v316, 4294901760
    %v7049 = vsub.f32 %v316, %v7048
    %v7050 = vand.u32 %v7049, 4294901760
    %7051 = vmatpush1.msra.mxu0 %v7050
    %7052 = vmatprep.subr.mxu0 0.0
    %v7053 = vand.u32 %v347, 4294901760
    %v7054 = vsub.f32 %v347, %v7053
    %v7055 = vand.u32 %v7054, 4294901760
    %7056 = vmatpush2.msra.mxu0 %v7055
    %7057 = vmatprep.subr.mxu0 0.0
    %v7058 = vand.u32 %v346, 4294901760
    %v7059 = vsub.f32 %v346, %v7058
    %v7060 = vand.u32 %v7059, 4294901760
    %7061 = vmatpush2.msra.mxu0 %v7060
    %7062 = vmatprep.subr.mxu0 0.0
    %v7063 = vand.u32 %v345, 4294901760
    %v7064 = vsub.f32 %v345, %v7063
    %v7065 = vand.u32 %v7064, 4294901760
    %7066 = vmatpush2.msra.mxu0 %v7065
    %7067 = vmatprep.subr.mxu0 0.0
    %v7068 = vand.u32 %v344, 4294901760
    %v7069 = vsub.f32 %v344, %v7068
    %v7070 = vand.u32 %v7069, 4294901760
    %7071 = vmatpush2.msra.mxu0 %v7070
    %7072 = vmatprep.subr.mxu0 0.0
    %v7073 = vand.u32 %v343, 4294901760
    %v7074 = vsub.f32 %v343, %v7073
    %v7075 = vand.u32 %v7074, 4294901760
    %7076 = vmatpush2.msra.mxu0 %v7075
    %7077 = vmatprep.subr.mxu0 0.0
    %v7078 = vand.u32 %v342, 4294901760
    %v7079 = vsub.f32 %v342, %v7078
    %v7080 = vand.u32 %v7079, 4294901760
    %7081 = vmatpush2.msra.mxu0 %v7080
    %7082 = vmatprep.subr.mxu0 0.0
    %v7083 = vand.u32 %v341, 4294901760
    %v7084 = vsub.f32 %v341, %v7083
    %v7085 = vand.u32 %v7084, 4294901760
    %7086 = vmatpush2.msra.mxu0 %v7085
    %7087 = vmatprep.subr.mxu0 0.0
    %v7088 = vand.u32 %v340, 4294901760
    %v7089 = vsub.f32 %v340, %v7088
    %v7090 = vand.u32 %v7089, 4294901760
    %7091 = vmatpush2.msra.mxu0 %v7090
    %7092 = vmatprep.subr.mxu0 0.0
    %v7093 = vand.u32 %v339, 4294901760
    %v7094 = vsub.f32 %v339, %v7093
    %v7095 = vand.u32 %v7094, 4294901760
    %7096 = vmatpush2.msra.mxu0 %v7095
    %7097 = vmatprep.subr.mxu0 0.0
    %v7098 = vand.u32 %v338, 4294901760
    %v7099 = vsub.f32 %v338, %v7098
    %v7100 = vand.u32 %v7099, 4294901760
    %7101 = vmatpush2.msra.mxu0 %v7100
    %7102 = vmatprep.subr.mxu0 0.0
    %v7103 = vand.u32 %v337, 4294901760
    %v7104 = vsub.f32 %v337, %v7103
    %v7105 = vand.u32 %v7104, 4294901760
    %7106 = vmatpush2.msra.mxu0 %v7105
    %7107 = vmatprep.subr.mxu0 0.0
    %v7108 = vand.u32 %v336, 4294901760
    %v7109 = vsub.f32 %v336, %v7108
    %v7110 = vand.u32 %v7109, 4294901760
    %7111 = vmatpush2.msra.mxu0 %v7110
    %7112 = vmatprep.subr.mxu0 0.0
    %v7113 = vand.u32 %v335, 4294901760
    %v7114 = vsub.f32 %v335, %v7113
    %v7115 = vand.u32 %v7114, 4294901760
    %7116 = vmatpush2.msra.mxu0 %v7115
    %7117 = vmatprep.subr.mxu0 0.0
    %v7118 = vand.u32 %v334, 4294901760
    %v7119 = vsub.f32 %v334, %v7118
    %v7120 = vand.u32 %v7119, 4294901760
    %7121 = vmatpush2.msra.mxu0 %v7120
    %7122 = vmatprep.subr.mxu0 0.0
    %v7123 = vand.u32 %v333, 4294901760
    %v7124 = vsub.f32 %v333, %v7123
    %v7125 = vand.u32 %v7124, 4294901760
    %7126 = vmatpush2.msra.mxu0 %v7125
    %7127 = vmatprep.subr.mxu0 0.0
    %v7128 = vand.u32 %v332, 4294901760
    %v7129 = vsub.f32 %v332, %v7128
    %v7130 = vand.u32 %v7129, 4294901760
    %7131 = vmatpush2.msra.mxu0 %v7130
    %v7132 = vand.u32 %v91, 4294901760
    %7133 = vmatprep.mubr.f32.mxu0 %v7132
    %v7134 = vand.u32 %v90, 4294901760
    %7135 = vmatmul.mubr.f32.gmra.mxu0 %v7134
    %v7136 = vpop.f32.mrf.mxu0
    %v7137 = vadd.f32 %v6969, %v7136
    %v7138 = vpop.f32.mrf.mxu0
    %7139 = vdwg.mxu0
    %7140 = vmatprep.subr.mxu0 0.0
    %v7141 = vand.u32 %v331, 4294901760
    %7142 = vmatpush1.msra.mxu0 %v7141
    %7143 = vmatprep.subr.mxu0 0.0
    %v7144 = vand.u32 %v330, 4294901760
    %7145 = vmatpush1.msra.mxu0 %v7144
    %7146 = vmatprep.subr.mxu0 0.0
    %v7147 = vand.u32 %v329, 4294901760
    %7148 = vmatpush1.msra.mxu0 %v7147
    %7149 = vmatprep.subr.mxu0 0.0
    %v7150 = vand.u32 %v328, 4294901760
    %7151 = vmatpush1.msra.mxu0 %v7150
    %7152 = vmatprep.subr.mxu0 0.0
    %v7153 = vand.u32 %v327, 4294901760
    %7154 = vmatpush1.msra.mxu0 %v7153
    %7155 = vmatprep.subr.mxu0 0.0
    %v7156 = vand.u32 %v326, 4294901760
    %7157 = vmatpush1.msra.mxu0 %v7156
    %7158 = vmatprep.subr.mxu0 0.0
    %v7159 = vand.u32 %v325, 4294901760
    %7160 = vmatpush1.msra.mxu0 %v7159
    %7161 = vmatprep.subr.mxu0 0.0
    %v7162 = vand.u32 %v324, 4294901760
    %7163 = vmatpush1.msra.mxu0 %v7162
    %7164 = vmatprep.subr.mxu0 0.0
    %v7165 = vand.u32 %v323, 4294901760
    %7166 = vmatpush1.msra.mxu0 %v7165
    %7167 = vmatprep.subr.mxu0 0.0
    %v7168 = vand.u32 %v322, 4294901760
    %7169 = vmatpush1.msra.mxu0 %v7168
    %7170 = vmatprep.subr.mxu0 0.0
    %v7171 = vand.u32 %v321, 4294901760
    %7172 = vmatpush1.msra.mxu0 %v7171
    %7173 = vmatprep.subr.mxu0 0.0
    %v7174 = vand.u32 %v320, 4294901760
    %7175 = vmatpush1.msra.mxu0 %v7174
    %7176 = vmatprep.subr.mxu0 0.0
    %v7177 = vand.u32 %v319, 4294901760
    %7178 = vmatpush1.msra.mxu0 %v7177
    %7179 = vmatprep.subr.mxu0 0.0
    %v7180 = vand.u32 %v318, 4294901760
    %7181 = vmatpush1.msra.mxu0 %v7180
    %7182 = vmatprep.subr.mxu0 0.0
    %v7183 = vand.u32 %v317, 4294901760
    %7184 = vmatpush1.msra.mxu0 %v7183
    %7185 = vmatprep.subr.mxu0 0.0
    %v7186 = vand.u32 %v316, 4294901760
    %7187 = vmatpush1.msra.mxu0 %v7186
    %7188 = vmatprep.subr.mxu0 0.0
    %v7189 = vand.u32 %v347, 4294901760
    %7190 = vmatpush2.msra.mxu0 %v7189
    %7191 = vmatprep.subr.mxu0 0.0
    %v7192 = vand.u32 %v346, 4294901760
    %7193 = vmatpush2.msra.mxu0 %v7192
    %7194 = vmatprep.subr.mxu0 0.0
    %v7195 = vand.u32 %v345, 4294901760
    %7196 = vmatpush2.msra.mxu0 %v7195
    %7197 = vmatprep.subr.mxu0 0.0
    %v7198 = vand.u32 %v344, 4294901760
    %7199 = vmatpush2.msra.mxu0 %v7198
    %7200 = vmatprep.subr.mxu0 0.0
    %v7201 = vand.u32 %v343, 4294901760
    %7202 = vmatpush2.msra.mxu0 %v7201
    %7203 = vmatprep.subr.mxu0 0.0
    %v7204 = vand.u32 %v342, 4294901760
    %7205 = vmatpush2.msra.mxu0 %v7204
    %7206 = vmatprep.subr.mxu0 0.0
    %v7207 = vand.u32 %v341, 4294901760
    %7208 = vmatpush2.msra.mxu0 %v7207
    %7209 = vmatprep.subr.mxu0 0.0
    %v7210 = vand.u32 %v340, 4294901760
    %7211 = vmatpush2.msra.mxu0 %v7210
    %7212 = vmatprep.subr.mxu0 0.0
    %v7213 = vand.u32 %v339, 4294901760
    %7214 = vmatpush2.msra.mxu0 %v7213
    %7215 = vmatprep.subr.mxu0 0.0
    %v7216 = vand.u32 %v338, 4294901760
    %7217 = vmatpush2.msra.mxu0 %v7216
    %7218 = vmatprep.subr.mxu0 0.0
    %v7219 = vand.u32 %v337, 4294901760
    %7220 = vmatpush2.msra.mxu0 %v7219
    %7221 = vmatprep.subr.mxu0 0.0
    %v7222 = vand.u32 %v336, 4294901760
    %7223 = vmatpush2.msra.mxu0 %v7222
    %7224 = vmatprep.subr.mxu0 0.0
    %v7225 = vand.u32 %v335, 4294901760
    %7226 = vmatpush2.msra.mxu0 %v7225
    %7227 = vmatprep.subr.mxu0 0.0
    %v7228 = vand.u32 %v334, 4294901760
    %7229 = vmatpush2.msra.mxu0 %v7228
    %7230 = vmatprep.subr.mxu0 0.0
    %v7231 = vand.u32 %v333, 4294901760
    %7232 = vmatpush2.msra.mxu0 %v7231
    %7233 = vmatprep.subr.mxu0 0.0
    %v7234 = vand.u32 %v332, 4294901760
    %7235 = vmatpush2.msra.mxu0 %v7234
    %v7236 = vand.u32 %v91, 4294901760
    %7237 = vmatprep.mubr.f32.mxu0 %v7236
    %v7238 = vand.u32 %v90, 4294901760
    %7239 = vmatmul.mubr.f32.gmra.mxu0 %v7238
    %v7240 = vpop.f32.mrf.mxu0
    %v7241 = vadd.f32 %v7137, %v7240
    %v7242 = vpop.f32.mrf.mxu0
    %7243 = vdwg.mxu0
    %7244 = vst [vmem:[#allocation5] sm:$0xff] %v7241
    // Predicated region
    $region14: #{tpu_custom_call.1} parent=1 // pred_check
      _
    $region15: #{tpu_custom_call.1} parent=1 // pred_check_branch
      %7246 = sbr.rel (0) target = $region17
    $region16: #{tpu_custom_call.1} parent=1 // pred_region
      %s7248 = ssub.s32 128, 128
      %7249 = vsyncadd [#allocation4], %s7248
      %s7251 = sshll.u32 [#allocation5], 4
      %s7252 = int_to_ptr.vmem [resolvable:$true] %s7251
      %7254 = dma.vmem_to_hbm [thread:$0]  %s7252, 128, %s2, [#allocation4]
    $region17: #{tpu_custom_call.1} parent=1 // pred_fallthru
      _
    // Predicated region
    $region18: #{tpu_custom_call.1} parent=1 // pred_check
      _
    $region19: #{tpu_custom_call.1} parent=1 // pred_check_branch
      %7256 = sbr.rel (0) target = $region21
    $region20: #{tpu_custom_call.1} parent=1 // pred_region
      %7257 = dma.done [#allocation4], 128
    $region21: #{tpu_custom_call.1} parent=1 // pred_fallthru
      _
    %7258 = vsyncpa [#allocation3], 1
    %7259 = vsyncpa [#allocation4], 1

</llo_original>
